<compile_context>
chip_gen: v7x
topology: tpu7x:2x2x1
jax: 0.10.0
libtpu: 0.0.40
codegen_flags: <defaults>
</compile_context>

<pallas_src>
import functools

import jax
import jax.numpy as jnp
import numpy as np
from jax import lax
from jax.experimental import pallas as pl
from jax.experimental.pallas import tpu as pltpu

_RATES = (1, 3, 5)            # dilation rates of dilated_conv_block
_PAD = max(_RATES)            # one shared spatial zero-padding
_CP = pltpu.CompilerParams(dimension_semantics=("parallel",))


# ---------------------------------------------------------------- kernels ---

def _pre_kernel(fore_ref, back_ref, wf_ref, wb_ref, bias_ref, o_ref):
    """Fused 1x1 convs (pre_fore[0] & pre_back) + folded BN + ReLU.

    fore_ref/back_ref: (HW, ch); wf/wb: (ch, c2) with BN scale pre-folded;
    bias_ref: (1, 2*c2) = [bias_fore | bias_back]; o_ref: (HW, 2*c2) = [f1|b1].
    """
    yf = jnp.dot(fore_ref[...], wf_ref[...], preferred_element_type=jnp.float32)
    yb = jnp.dot(back_ref[...], wb_ref[...], preferred_element_type=jnp.float32)
    y = jnp.concatenate([yf, yb], axis=-1) + bias_ref[...]
    o_ref[...] = jnp.maximum(y, 0.0).astype(o_ref.dtype)


def _main_kernel(theta, H, W, c2,
                 xp_ref, w3_ref, b3_ref, wkv_ref, bkv_ref,
                 wk_ref, bk_ref, wv_ref, bv_ref, wo_ref, bo_ref, o_ref):
    """Fused 3x3 convs + dilated-GAP key/value + attention + out_conv + resid.

    xp_ref : (H+2P, W+2P, ch)  zero-padded [f1 | b1] map.
    w3_ref : (9*ch, ch)        block-diag rate-1 weights [pre_fore_k3|post_back].
    wkv_ref: (3, 9*ch, 2*c2)   per-rate fused key|value dconv weights
                               (zero rows for the f1 channels).
    wk/wv  : (3*c2, c2)        key_conv / value_conv 1x1 weights.
    wo     : (c2, ch)          out_conv weight with BN scale folded.
    o_ref  : (HW, ch)          final DaR output (flattened NHWC).
    """
    ch = 2 * c2
    HW = H * W
    xp = xp_ref[...]                                    # (H+2P, W+2P, ch)

    def taps(d):
        # in-VMEM im2col: 9 static shifted slices at dilation d, concatenated
        # along channels and flattened -> (HW, 9*ch).  Feeds ONE MXU matmul.
        cols = []
        for i in range(3):
            for j in range(3):
                r0 = _PAD + (i - 1) * d
                c0 = _PAD + (j - 1) * d
                cols.append(xp[r0:r0 + H, c0:c0 + W, :])
        return jnp.concatenate(cols, axis=-1).reshape(HW, 9 * ch)

    # rate-1 3x3 on [f1 | b1]: one block-diagonal matmul produces the residual
    # torch.cat([fore, post_back], channel) directly (lane-dense ch output).
    t1 = taps(1)                                        # (HW, 9*ch)
    resid = jnp.dot(t1, w3_ref[...], preferred_element_type=jnp.float32)
    resid = jnp.maximum(resid + b3_ref[...], 0.0)       # (HW, ch) f32

    # key / value dilated branches (6 convs fused into 3 matmuls) + GAP.
    means = []
    for r, d in enumerate(_RATES):
        td = t1 if d == 1 else taps(d)                  # reuse rate-1 taps
        y = jnp.dot(td, wkv_ref[r], preferred_element_type=jnp.float32)
        y = jnp.maximum(y + bkv_ref[r], 0.0)            # (HW, 2*c2) = [key|val]
        means.append(jnp.mean(y, axis=0, keepdims=True))           # (1, 2*c2)
    key_in = jnp.concatenate([m[:, :c2] for m in means], axis=-1)  # (1, 3*c2)
    val_in = jnp.concatenate([m[:, c2:] for m in means], axis=-1)  # (1, 3*c2)

    cdt = wk_ref.dtype
    key = jnp.maximum(
        jnp.dot(key_in.astype(cdt), wk_ref[...],
                preferred_element_type=jnp.float32) + bk_ref[...], 0.0)  # (1,c2)
    val = jnp.maximum(
        jnp.dot(val_in.astype(cdt), wv_ref[...],
                preferred_element_type=jnp.float32) + bv_ref[...], 0.0)  # (1,c2)
    # rank-1 rewrite: (sigmoid(q.key)*value) @ Wout == sigmoid(q.key)*(value@Wout)
    vw = jnp.dot(val.astype(cdt), wo_ref[...],
                 preferred_element_type=jnp.float32)                     # (1,ch)

    q = resid[:, :c2]                                   # query = fore features
    att = jax.nn.sigmoid(jnp.sum(q * key, axis=-1, keepdims=True))       # (HW,1)
    out = jnp.maximum(att * vw + bo_ref[...], 0.0)      # out_conv + BN + ReLU
    o_ref[...] = (out * theta + resid).astype(o_ref.dtype)


# ----------------------------------------------------- parameter folding ----

def _fold1(prm, cdt):
    w, s, b = prm                     # (cin, cout), (1, cout), (1, cout)
    return (w * s).astype(cdt), b


def _fold3(prm):
    w, s, b = prm                     # (9, cin, cout), (1, cout), (1, cout)
    return w * s[None], b


def _prep_params(p, c2, cdt):
    """Fold BN scales into conv weights and assemble the fused weight tensors."""
    ch = 2 * c2

    wf, bf = _fold1(p["pre_fore_k1"], cdt)
    wb, bb = _fold1(p["pre_back"], cdt)
    bias1 = jnp.concatenate([bf, bb], axis=-1)                        # (1, ch)

    # rate-1 3x3: block-diagonal [pre_fore_k3 ; post_back] weight.
    wf3, bf3 = _fold3(p["pre_fore_k3"])                               # (9,c2,c2)
    wb3, bb3 = _fold3(p["post_back"])
    w3 = jnp.zeros((9, ch, ch), jnp.float32)
    w3 = w3.at[:, :c2, :c2].set(wf3).at[:, c2:, c2:].set(wb3)
    w3 = w3.reshape(9 * ch, ch).astype(cdt)
    b3 = jnp.concatenate([bf3, bb3], axis=-1)                         # (1, ch)

    # per-rate fused key|value dconv weights acting on the b1 channel half.
    wkv, bkv = [], []
    for r in range(3):
        wk9, bk9 = _fold3(p["key_dconv"][r])                          # (9,c2,c2)
        wv9, bv9 = _fold3(p["value_dconv"][r])
        blk = jnp.zeros((9, ch, 2 * c2), jnp.float32)
        blk = blk.at[:, c2:, :c2].set(wk9).at[:, c2:, c2:].set(wv9)
        wkv.append(blk.reshape(9 * ch, 2 * c2))
        bkv.append(jnp.concatenate([bk9, bv9], axis=-1))              # (1, 2*c2)
    wkv = jnp.stack(wkv).astype(cdt)                                  # (3, 9*ch, 2*c2)
    bkv = jnp.stack(bkv)                                              # (3, 1, 2*c2)

    wk, bk = _fold1(p["key_conv"], cdt)
    wv, bv = _fold1(p["value_conv"], cdt)
    wo, bo = _fold1(p["out_conv"], cdt)
    return dict(wf=wf, wb=wb, bias1=bias1, w3=w3, b3=b3, wkv=wkv, bkv=bkv,
                wk=wk, bk=bk, wv=wv, bv=bv, wo=wo, bo=bo)


# ----------------------------------------------------------- full forward ---

def dar_forward(fore_nchw, back_nchw, p, theta=0.2,
                compute_dtype=jnp.bfloat16):
    # theta is fixed at module construction in PyTorch, so it is baked in
    # statically here (pass it via SMEM if it must vary at runtime).
    B, ch, H, W = fore_nchw.shape
    c2 = ch // 2
    HW = H * W
    cdt = compute_dtype
    w = _prep_params(p, c2, cdt)

    fore = jnp.transpose(fore_nchw, (0, 2, 3, 1)).reshape(B, HW, ch).astype(cdt)
    back = jnp.transpose(back_nchw, (0, 2, 3, 1)).reshape(B, HW, ch).astype(cdt)

    # --- kernel A: the two 1x1 convs, fused, lane-dense (HW, ch) output ------
    fb = pl.pallas_call(
        _pre_kernel,
        out_shape=jax.ShapeDtypeStruct((B, HW, ch), cdt),
        grid=(B,),
        in_specs=[
            pl.BlockSpec((None, HW, ch), lambda b: (b, 0, 0)),
            pl.BlockSpec((None, HW, ch), lambda b: (b, 0, 0)),
            pl.BlockSpec((ch, c2), lambda b: (0, 0)),
            pl.BlockSpec((ch, c2), lambda b: (0, 0)),
            pl.BlockSpec((1, ch), lambda b: (0, 0)),
        ],
        out_specs=pl.BlockSpec((None, HW, ch), lambda b: (b, 0, 0)),
        compiler_params=_CP,
    )(fore, back, w["wf"], w["wb"], w["bias1"])

    # one shared spatial zero-padding (max dilation); im2col taps are built
    # in-kernel from this single padded copy (no 9x HBM tap materialisation).
    xp = jnp.pad(fb.reshape(B, H, W, ch),
                 ((0, 0), (_PAD, _PAD), (_PAD, _PAD), (0, 0)))
    Hp, Wp = H + 2 * _PAD, W + 2 * _PAD

    # --- kernel B: everything else -------------------------------------------
    kern = functools.partial(_main_kernel, theta, H, W, c2)
    out = pl.pallas_call(
        kern,
        out_shape=jax.ShapeDtypeStruct((B, HW, ch), jnp.float32),
        grid=(B,),
        in_specs=[
            pl.BlockSpec((None, Hp, Wp, ch), lambda b: (b, 0, 0, 0)),
            pl.BlockSpec((9 * ch, ch), lambda b: (0, 0)),
            pl.BlockSpec((1, ch), lambda b: (0, 0)),
            pl.BlockSpec((3, 9 * ch, 2 * c2), lambda b: (0, 0, 0)),
            pl.BlockSpec((3, 1, 2 * c2), lambda b: (0, 0, 0)),
            pl.BlockSpec((3 * c2, c2), lambda b: (0, 0)),
            pl.BlockSpec((1, c2), lambda b: (0, 0)),
            pl.BlockSpec((3 * c2, c2), lambda b: (0, 0)),
            pl.BlockSpec((1, c2), lambda b: (0, 0)),
            pl.BlockSpec((c2, ch), lambda b: (0, 0)),
            pl.BlockSpec((1, ch), lambda b: (0, 0)),
        ],
        out_specs=pl.BlockSpec((None, HW, ch), lambda b: (b, 0, 0)),
        compiler_params=_CP,
    )(xp, w["w3"], w["b3"], w["wkv"], w["bkv"],
      w["wk"], w["bk"], w["wv"], w["bv"], w["wo"], w["bo"])

    return jnp.transpose(out.reshape(B, H, W, ch), (0, 3, 1, 2))


# ------------------------------------------------------------- parameters ---

def _init_k1(key, cin, cout):
    kw, ks, kb = jax.random.split(key, 3)
    w = jax.random.normal(kw, (cin, cout), jnp.float32) / np.sqrt(cin)
    scale = 1.0 + 0.1 * jax.random.normal(ks, (1, cout), jnp.float32)
    bias = 0.1 * jax.random.normal(kb, (1, cout), jnp.float32)
    return w, scale, bias


def _init_k3(key, cin, cout):
    kw, ks, kb = jax.random.split(key, 3)
    w = jax.random.normal(kw, (9, cin, cout), jnp.float32) / np.sqrt(9 * cin)
    scale = 1.0 + 0.1 * jax.random.normal(ks, (1, cout), jnp.float32)
    bias = 0.1 * jax.random.normal(kb, (1, cout), jnp.float32)
    return w, scale, bias


def init_dar_params(key, ch):
    c2 = ch // 2
    ks = jax.random.split(key, 13)
    return {
        "pre_fore_k1": _init_k1(ks[0], ch, c2),
        "pre_fore_k3": _init_k3(ks[1], c2, c2),
        "pre_back":    _init_k1(ks[2], ch, c2),
        "post_back":   _init_k3(ks[3], c2, c2),
        "key_dconv":   [_init_k3(ks[4 + r], c2, c2) for r in range(3)],
        "key_conv":    _init_k1(ks[7], 3 * c2, c2),
        "value_dconv": [_init_k3(ks[8 + r], c2, c2) for r in range(3)],
        "value_conv":  _init_k1(ks[11], 3 * c2, c2),
        "out_conv":    _init_k1(ks[12], c2, ch),
    }


# ---------------------------------------------------- pure-JAX reference ---

def _ref_k1(x_nhwc, w, scale, bias):
    y = jnp.einsum("...c,co->...o", x_nhwc, w,
                   precision=jax.lax.Precision.HIGHEST)
    return jnp.maximum(y * scale + bias, 0.0)


def _ref_k3(x_nhwc, w9, scale, bias, d):
    cin, cout = w9.shape[1], w9.shape[2]
    w_hwio = w9.reshape(3, 3, cin, cout)
    y = lax.conv_general_dilated(
        x_nhwc, w_hwio, window_strides=(1, 1),
        padding=[(d, d), (d, d)], rhs_dilation=(d, d),
        dimension_numbers=("NHWC", "HWIO", "NHWC"),
        precision=jax.lax.Precision.HIGHEST)
    return jnp.maximum(y * scale + bias, 0.0)


def dar_reference(fore_nchw, back_nchw, p, theta=0.2):
    B, ch, H, W = fore_nchw.shape
    c2 = ch // 2
    rates = _RATES
    fore = jnp.transpose(fore_nchw, (0, 2, 3, 1))
    back = jnp.transpose(back_nchw, (0, 2, 3, 1))
    f = _ref_k1(fore, *p["pre_fore_k1"])
    f = _ref_k3(f, *p["pre_fore_k3"], d=1)
    b = _ref_k1(back, *p["pre_back"])
    pb = _ref_k3(b, *p["post_back"], d=1)
    key_in = jnp.concatenate(
        [jnp.mean(_ref_k3(b, *p["key_dconv"][r], d=rates[r]),
                  axis=(1, 2), keepdims=True) for r in range(3)], axis=-1)
    key = _ref_k1(key_in, *p["key_conv"])[:, 0, 0, :]                    # (B,c2)
    val_in = jnp.concatenate(
        [jnp.mean(_ref_k3(b, *p["value_dconv"][r], d=rates[r]),
                  axis=(1, 2), keepdims=True) for r in range(3)], axis=-1)
    value = _ref_k1(val_in, *p["value_conv"])[:, 0, 0, :]                # (B,c2)
    q = f.reshape(B, H * W, c2)
    w_att = jax.nn.sigmoid(jnp.einsum("bqc,bc->bq", q, key,
                                      precision=jax.lax.Precision.HIGHEST))
    ctx = w_att[:, :, None] * value[:, None, :]
    wout, sout, bout = p["out_conv"]
    y = jnp.einsum("bqc,co->bqo", ctx, wout,
                   precision=jax.lax.Precision.HIGHEST)
    y = jnp.maximum(y * sout + bout, 0.0)
    out = y * theta + jnp.concatenate([q, pb.reshape(B, H * W, c2)], axis=-1)
    return jnp.transpose(out.reshape(B, H, W, ch), (0, 3, 1, 2))


# -------------------------------------------------------------------- main --

if __name__ == "__main__":
    B, ch, H, W = 2, 8, 16, 16
    theta = 0.2

    root = jax.random.PRNGKey(0)
    k_par, k_fore, k_back = jax.random.split(root, 3)
    params = init_dar_params(k_par, ch)
    fore = jax.random.normal(k_fore, (B, ch, H, W), jnp.float32)
    back = jax.random.normal(k_back, (B, ch, H, W), jnp.float32)

    fwd = jax.jit(functools.partial(dar_forward, theta=theta))
    out = jax.block_until_ready(fwd(fore, back, params))
    assert out.shape == (B, ch, H, W)

    ref = jax.block_until_ready(dar_reference(fore, back, params, theta))
    # bf16 MXU operands (f32 accumulation) vs. f32 HIGHEST-precision reference.
    np.testing.assert_allclose(np.asarray(out), np.asarray(ref),
                               rtol=2e-2, atol=2e-2)
    print("KERNEL_OK")
</pallas_src>

<mosaic_0001>
module attributes {stable_mosaic.version = 11 : i64} {
  func.func @_pre_kernel(%arg0: i32, %arg1: memref<1x256x8xbf16, #tpu.memory_space<vmem>>, %arg2: memref<1x256x8xbf16, #tpu.memory_space<vmem>>, %arg3: memref<8x4xbf16, #tpu.memory_space<vmem>>, %arg4: memref<8x4xbf16, #tpu.memory_space<vmem>>, %arg5: memref<1x8xf32, #tpu.memory_space<vmem>>, %arg6: memref<1x256x8xbf16, #tpu.memory_space<vmem>>) attributes {dimension_semantics = [#tpu.dimension_semantics<parallel>], iteration_bounds = array<i64: 2>, scalar_prefetch = 0 : i64, scratch_operands = 0 : i64, tpu.core_type = #tpu.core_type<tc>, window_params = [{transform_indices = @transform_0, window_bounds = array<i64: 1, 256, 8>}, {transform_indices = @transform_1, window_bounds = array<i64: 1, 256, 8>}, {pipeline_mode = #tpu.pipeline_mode<synchronous>, transform_indices = @transform_2, window_bounds = array<i64: 8, 4>}, {pipeline_mode = #tpu.pipeline_mode<synchronous>, transform_indices = @transform_3, window_bounds = array<i64: 8, 4>}, {pipeline_mode = #tpu.pipeline_mode<synchronous>, transform_indices = @transform_4, window_bounds = array<i64: 1, 8>}, {transform_indices = @transform_5, window_bounds = array<i64: 1, 256, 8>}]} {
    %c0 = arith.constant 0 : index
    %c0_0 = arith.constant 0 : index
    %c0_1 = arith.constant 0 : index
    %0 = vector.load %arg1[%c0, %c0_0, %c0_1] : memref<1x256x8xbf16, #tpu.memory_space<vmem>>, vector<1x256x8xbf16>
    %1 = vector.shape_cast %0 : vector<1x256x8xbf16> to vector<256x8xbf16>
    %c0_2 = arith.constant 0 : index
    %c0_3 = arith.constant 0 : index
    %2 = vector.load %arg3[%c0_2, %c0_3] : memref<8x4xbf16, #tpu.memory_space<vmem>>, vector<8x4xbf16>
    %cst = arith.constant dense<0.000000e+00> : vector<256x4xf32>
    %3 = tpu.matmul %1, %2, %cst {dimension_numbers = #tpu.dot_dimension_numbers<[1], [0], [0], [1], [0, 0, 1, 1], [], []>} : vector<256x8xbf16>, vector<8x4xbf16>, vector<256x4xf32> -> vector<256x4xf32>
    %c0_4 = arith.constant 0 : index
    %c0_5 = arith.constant 0 : index
    %c0_6 = arith.constant 0 : index
    %4 = vector.load %arg2[%c0_4, %c0_5, %c0_6] : memref<1x256x8xbf16, #tpu.memory_space<vmem>>, vector<1x256x8xbf16>
    %5 = vector.shape_cast %4 : vector<1x256x8xbf16> to vector<256x8xbf16>
    %c0_7 = arith.constant 0 : index
    %c0_8 = arith.constant 0 : index
    %6 = vector.load %arg4[%c0_7, %c0_8] : memref<8x4xbf16, #tpu.memory_space<vmem>>, vector<8x4xbf16>
    %cst_9 = arith.constant dense<0.000000e+00> : vector<256x4xf32>
    %7 = tpu.matmul %5, %6, %cst_9 {dimension_numbers = #tpu.dot_dimension_numbers<[1], [0], [0], [1], [0, 0, 1, 1], [], []>} : vector<256x8xbf16>, vector<8x4xbf16>, vector<256x4xf32> -> vector<256x4xf32>
    %8 = tpu.concatenate %3, %7 in 1 : vector<256x4xf32>, vector<256x4xf32> -> vector<256x8xf32>
    %c0_10 = arith.constant 0 : index
    %c0_11 = arith.constant 0 : index
    %9 = vector.load %arg5[%c0_10, %c0_11] : memref<1x8xf32, #tpu.memory_space<vmem>>, vector<1x8xf32>
    %10 = vector.broadcast %9 : vector<1x8xf32> to vector<256x8xf32>
    %11 = arith.addf %8, %10 : vector<256x8xf32>
    %cst_12 = arith.constant 0.000000e+00 : f32
    %12 = vector.broadcast %cst_12 : f32 to vector<256x8xf32>
    %13 = arith.maximumf %11, %12 : vector<256x8xf32>
    %14 = arith.truncf %13 : vector<256x8xf32> to vector<256x8xbf16>
    %c0_13 = arith.constant 0 : index
    %c0_14 = arith.constant 0 : index
    %c0_15 = arith.constant 0 : index
    %15 = vector.load %arg6[%c0_13, %c0_14, %c0_15] : memref<1x256x8xbf16, #tpu.memory_space<vmem>>, vector<1x256x8xbf16>
    %16 = vector.shape_cast %15 : vector<1x256x8xbf16> to vector<256x8xbf16>
    %17 = vector.shape_cast %14 : vector<256x8xbf16> to vector<1x256x8xbf16>
    tpu.vector_store %arg6[%c0_13, %c0_14, %c0_15], %17 {strides = array<i32>} : memref<1x256x8xbf16, #tpu.memory_space<vmem>>, vector<1x256x8xbf16>,
    return
  }
  func.func @transform_0(%arg0: i32) -> (i32, i32, i32) {
    %c0_i32 = arith.constant 0 : i32
    %c0_i32_0 = arith.constant 0 : i32
    %c0_i32_1 = arith.constant 0 : i32
    return %arg0, %c0_i32, %c0_i32_0 : i32, i32, i32
  }
  func.func @transform_1(%arg0: i32) -> (i32, i32, i32) {
    %c0_i32 = arith.constant 0 : i32
    %c0_i32_0 = arith.constant 0 : i32
    %c0_i32_1 = arith.constant 0 : i32
    return %arg0, %c0_i32, %c0_i32_0 : i32, i32, i32
  }
  func.func @transform_2(%arg0: i32) -> (i32, i32) {
    %c0_i32 = arith.constant 0 : i32
    %c0_i32_0 = arith.constant 0 : i32
    %c0_i32_1 = arith.constant 0 : i32
    return %c0_i32, %c0_i32_0 : i32, i32
  }
  func.func @transform_3(%arg0: i32) -> (i32, i32) {
    %c0_i32 = arith.constant 0 : i32
    %c0_i32_0 = arith.constant 0 : i32
    %c0_i32_1 = arith.constant 0 : i32
    return %c0_i32, %c0_i32_0 : i32, i32
  }
  func.func @transform_4(%arg0: i32) -> (i32, i32) {
    %c0_i32 = arith.constant 0 : i32
    %c0_i32_0 = arith.constant 0 : i32
    %c0_i32_1 = arith.constant 0 : i32
    return %c0_i32, %c0_i32_0 : i32, i32
  }
  func.func @transform_5(%arg0: i32) -> (i32, i32, i32) {
    %c0_i32 = arith.constant 0 : i32
    %c0_i32_0 = arith.constant 0 : i32
    %c0_i32_1 = arith.constant 0 : i32
    return %arg0, %c0_i32, %c0_i32_0 : i32, i32, i32
  }
}

module attributes {stable_mosaic.version = 11 : i64} {
  func.func @_main_kernel(%arg0: i32, %arg1: memref<1x26x26x8xbf16, #tpu.memory_space<vmem>>, %arg2: memref<72x8xbf16, #tpu.memory_space<vmem>>, %arg3: memref<1x8xf32, #tpu.memory_space<vmem>>, %arg4: memref<3x72x8xbf16, #tpu.memory_space<vmem>>, %arg5: memref<3x1x8xf32, #tpu.memory_space<vmem>>, %arg6: memref<12x4xbf16, #tpu.memory_space<vmem>>, %arg7: memref<1x4xf32, #tpu.memory_space<vmem>>, %arg8: memref<12x4xbf16, #tpu.memory_space<vmem>>, %arg9: memref<1x4xf32, #tpu.memory_space<vmem>>, %arg10: memref<4x8xbf16, #tpu.memory_space<vmem>>, %arg11: memref<1x8xf32, #tpu.memory_space<vmem>>, %arg12: memref<1x256x8xf32, #tpu.memory_space<vmem>>) attributes {dimension_semantics = [#tpu.dimension_semantics<parallel>], iteration_bounds = array<i64: 2>, scalar_prefetch = 0 : i64, scratch_operands = 0 : i64, tpu.core_type = #tpu.core_type<tc>, window_params = [{transform_indices = @transform_0, window_bounds = array<i64: 1, 26, 26, 8>}, {pipeline_mode = #tpu.pipeline_mode<synchronous>, transform_indices = @transform_1, window_bounds = array<i64: 72, 8>}, {pipeline_mode = #tpu.pipeline_mode<synchronous>, transform_indices = @transform_2, window_bounds = array<i64: 1, 8>}, {pipeline_mode = #tpu.pipeline_mode<synchronous>, transform_indices = @transform_3, window_bounds = array<i64: 3, 72, 8>}, {pipeline_mode = #tpu.pipeline_mode<synchronous>, transform_indices = @transform_4, window_bounds = array<i64: 3, 1, 8>}, {pipeline_mode = #tpu.pipeline_mode<synchronous>, transform_indices = @transform_5, window_bounds = array<i64: 12, 4>}, {pipeline_mode = #tpu.pipeline_mode<synchronous>, transform_indices = @transform_6, window_bounds = array<i64: 1, 4>}, {pipeline_mode = #tpu.pipeline_mode<synchronous>, transform_indices = @transform_7, window_bounds = array<i64: 12, 4>}, {pipeline_mode = #tpu.pipeline_mode<synchronous>, transform_indices = @transform_8, window_bounds = array<i64: 1, 4>}, {pipeline_mode = #tpu.pipeline_mode<synchronous>, transform_indices = @transform_9, window_bounds = array<i64: 4, 8>}, {pipeline_mode = #tpu.pipeline_mode<synchronous>, transform_indices = @transform_10, window_bounds = array<i64: 1, 8>}, {transform_indices = @transform_11, window_bounds = array<i64: 1, 256, 8>}]} {
    %c0 = arith.constant 0 : index
    %c0_0 = arith.constant 0 : index
    %c0_1 = arith.constant 0 : index
    %c0_2 = arith.constant 0 : index
    %0 = vector.load %arg1[%c0, %c0_0, %c0_1, %c0_2] : memref<1x26x26x8xbf16, #tpu.memory_space<vmem>>, vector<1x26x26x8xbf16>
    %1 = vector.shape_cast %0 : vector<1x26x26x8xbf16> to vector<26x26x8xbf16>
    %2 = vector.extract_strided_slice %1 {offsets = [4, 4, 0], sizes = [16, 16, 8], strides = [1, 1, 1]} : vector<26x26x8xbf16> to vector<16x16x8xbf16>
    %3 = vector.extract_strided_slice %1 {offsets = [4, 5, 0], sizes = [16, 16, 8], strides = [1, 1, 1]} : vector<26x26x8xbf16> to vector<16x16x8xbf16>
    %4 = vector.extract_strided_slice %1 {offsets = [4, 6, 0], sizes = [16, 16, 8], strides = [1, 1, 1]} : vector<26x26x8xbf16> to vector<16x16x8xbf16>
    %5 = vector.extract_strided_slice %1 {offsets = [5, 4, 0], sizes = [16, 16, 8], strides = [1, 1, 1]} : vector<26x26x8xbf16> to vector<16x16x8xbf16>
    %6 = vector.extract_strided_slice %1 {offsets = [5, 5, 0], sizes = [16, 16, 8], strides = [1, 1, 1]} : vector<26x26x8xbf16> to vector<16x16x8xbf16>
    %7 = vector.extract_strided_slice %1 {offsets = [5, 6, 0], sizes = [16, 16, 8], strides = [1, 1, 1]} : vector<26x26x8xbf16> to vector<16x16x8xbf16>
    %8 = vector.extract_strided_slice %1 {offsets = [6, 4, 0], sizes = [16, 16, 8], strides = [1, 1, 1]} : vector<26x26x8xbf16> to vector<16x16x8xbf16>
    %9 = vector.extract_strided_slice %1 {offsets = [6, 5, 0], sizes = [16, 16, 8], strides = [1, 1, 1]} : vector<26x26x8xbf16> to vector<16x16x8xbf16>
    %10 = vector.extract_strided_slice %1 {offsets = [6, 6, 0], sizes = [16, 16, 8], strides = [1, 1, 1]} : vector<26x26x8xbf16> to vector<16x16x8xbf16>
    %11 = tpu.concatenate %2, %3, %4, %5, %6, %7, %8, %9, %10 in 2 : vector<16x16x8xbf16>, vector<16x16x8xbf16>, vector<16x16x8xbf16>, vector<16x16x8xbf16>, vector<16x16x8xbf16>, vector<16x16x8xbf16>, vector<16x16x8xbf16>, vector<16x16x8xbf16>, vector<16x16x8xbf16> -> vector<16x16x72xbf16>
    %12 = vector.shape_cast %11 : vector<16x16x72xbf16> to vector<256x72xbf16>
    %c0_3 = arith.constant 0 : index
    %c0_4 = arith.constant 0 : index
    %13 = vector.load %arg2[%c0_3, %c0_4] : memref<72x8xbf16, #tpu.memory_space<vmem>>, vector<72x8xbf16>
    %cst = arith.constant dense<0.000000e+00> : vector<256x8xf32>
    %14 = tpu.matmul %12, %13, %cst {dimension_numbers = #tpu.dot_dimension_numbers<[1], [0], [0], [1], [0, 0, 1, 1], [], []>} : vector<256x72xbf16>, vector<72x8xbf16>, vector<256x8xf32> -> vector<256x8xf32>
    %c0_5 = arith.constant 0 : index
    %c0_6 = arith.constant 0 : index
    %15 = vector.load %arg3[%c0_5, %c0_6] : memref<1x8xf32, #tpu.memory_space<vmem>>, vector<1x8xf32>
    %16 = vector.broadcast %15 : vector<1x8xf32> to vector<256x8xf32>
    %17 = arith.addf %14, %16 : vector<256x8xf32>
    %cst_7 = arith.constant 0.000000e+00 : f32
    %18 = vector.broadcast %cst_7 : f32 to vector<256x8xf32>
    %19 = arith.maximumf %17, %18 : vector<256x8xf32>
    %c0_8 = arith.constant 0 : index
    %c0_9 = arith.constant 0 : index
    %c0_10 = arith.constant 0 : index
    %20 = vector.load %arg4[%c0_8, %c0_9, %c0_10] : memref<3x72x8xbf16, #tpu.memory_space<vmem>>, vector<1x72x8xbf16>
    %21 = vector.shape_cast %20 : vector<1x72x8xbf16> to vector<72x8xbf16>
    %cst_11 = arith.constant dense<0.000000e+00> : vector<256x8xf32>
    %22 = tpu.matmul %12, %21, %cst_11 {dimension_numbers = #tpu.dot_dimension_numbers<[1], [0], [0], [1], [0, 0, 1, 1], [], []>} : vector<256x72xbf16>, vector<72x8xbf16>, vector<256x8xf32> -> vector<256x8xf32>
    %c0_12 = arith.constant 0 : index
    %c0_13 = arith.constant 0 : index
    %c0_14 = arith.constant 0 : index
    %23 = vector.load %arg5[%c0_12, %c0_13, %c0_14] : memref<3x1x8xf32, #tpu.memory_space<vmem>>, vector<1x1x8xf32>
    %24 = vector.shape_cast %23 : vector<1x1x8xf32> to vector<1x8xf32>
    %25 = vector.broadcast %24 : vector<1x8xf32> to vector<256x8xf32>
    %26 = arith.addf %22, %25 : vector<256x8xf32>
    %cst_15 = arith.constant 0.000000e+00 : f32
    %27 = vector.broadcast %cst_15 : f32 to vector<256x8xf32>
    %28 = arith.maximumf %26, %27 : vector<256x8xf32>
    %cst_16 = arith.constant dense<0.000000e+00> : vector<8xf32>
    %29 = vector.multi_reduction <add>, %28, %cst_16 [0] : vector<256x8xf32> to vector<8xf32>
    %30 = vector.shape_cast %29 : vector<8xf32> to vector<1x8xf32>
    %cst_17 = arith.constant 2.560000e+02 : f32
    %31 = vector.broadcast %cst_17 : f32 to vector<1x8xf32>
    %32 = arith.divf %30, %31 : vector<1x8xf32>
    %33 = vector.extract_strided_slice %1 {offsets = [2, 2, 0], sizes = [16, 16, 8], strides = [1, 1, 1]} : vector<26x26x8xbf16> to vector<16x16x8xbf16>
    %34 = vector.extract_strided_slice %1 {offsets = [2, 5, 0], sizes = [16, 16, 8], strides = [1, 1, 1]} : vector<26x26x8xbf16> to vector<16x16x8xbf16>
    %35 = vector.extract_strided_slice %1 {offsets = [2, 8, 0], sizes = [16, 16, 8], strides = [1, 1, 1]} : vector<26x26x8xbf16> to vector<16x16x8xbf16>
    %36 = vector.extract_strided_slice %1 {offsets = [5, 2, 0], sizes = [16, 16, 8], strides = [1, 1, 1]} : vector<26x26x8xbf16> to vector<16x16x8xbf16>
    %37 = vector.extract_strided_slice %1 {offsets = [5, 5, 0], sizes = [16, 16, 8], strides = [1, 1, 1]} : vector<26x26x8xbf16> to vector<16x16x8xbf16>
    %38 = vector.extract_strided_slice %1 {offsets = [5, 8, 0], sizes = [16, 16, 8], strides = [1, 1, 1]} : vector<26x26x8xbf16> to vector<16x16x8xbf16>
    %39 = vector.extract_strided_slice %1 {offsets = [8, 2, 0], sizes = [16, 16, 8], strides = [1, 1, 1]} : vector<26x26x8xbf16> to vector<16x16x8xbf16>
    %40 = vector.extract_strided_slice %1 {offsets = [8, 5, 0], sizes = [16, 16, 8], strides = [1, 1, 1]} : vector<26x26x8xbf16> to vector<16x16x8xbf16>
    %41 = vector.extract_strided_slice %1 {offsets = [8, 8, 0], sizes = [16, 16, 8], strides = [1, 1, 1]} : vector<26x26x8xbf16> to vector<16x16x8xbf16>
    %42 = tpu.concatenate %33, %34, %35, %36, %37, %38, %39, %40, %41 in 2 : vector<16x16x8xbf16>, vector<16x16x8xbf16>, vector<16x16x8xbf16>, vector<16x16x8xbf16>, vector<16x16x8xbf16>, vector<16x16x8xbf16>, vector<16x16x8xbf16>, vector<16x16x8xbf16>, vector<16x16x8xbf16> -> vector<16x16x72xbf16>
    %43 = vector.shape_cast %42 : vector<16x16x72xbf16> to vector<256x72xbf16>
    %c1 = arith.constant 1 : index
    %c0_18 = arith.constant 0 : index
    %c0_19 = arith.constant 0 : index
    %44 = vector.load %arg4[%c1, %c0_18, %c0_19] : memref<3x72x8xbf16, #tpu.memory_space<vmem>>, vector<1x72x8xbf16>
    %45 = vector.shape_cast %44 : vector<1x72x8xbf16> to vector<72x8xbf16>
    %cst_20 = arith.constant dense<0.000000e+00> : vector<256x8xf32>
    %46 = tpu.matmul %43, %45, %cst_20 {dimension_numbers = #tpu.dot_dimension_numbers<[1], [0], [0], [1], [0, 0, 1, 1], [], []>} : vector<256x72xbf16>, vector<72x8xbf16>, vector<256x8xf32> -> vector<256x8xf32>
    %c1_21 = arith.constant 1 : index
    %c0_22 = arith.constant 0 : index
    %c0_23 = arith.constant 0 : index
    %47 = vector.load %arg5[%c1_21, %c0_22, %c0_23] : memref<3x1x8xf32, #tpu.memory_space<vmem>>, vector<1x1x8xf32>
    %48 = vector.shape_cast %47 : vector<1x1x8xf32> to vector<1x8xf32>
    %49 = vector.broadcast %48 : vector<1x8xf32> to vector<256x8xf32>
    %50 = arith.addf %46, %49 : vector<256x8xf32>
    %cst_24 = arith.constant 0.000000e+00 : f32
    %51 = vector.broadcast %cst_24 : f32 to vector<256x8xf32>
    %52 = arith.maximumf %50, %51 : vector<256x8xf32>
    %cst_25 = arith.constant dense<0.000000e+00> : vector<8xf32>
    %53 = vector.multi_reduction <add>, %52, %cst_25 [0] : vector<256x8xf32> to vector<8xf32>
    %54 = vector.shape_cast %53 : vector<8xf32> to vector<1x8xf32>
    %cst_26 = arith.constant 2.560000e+02 : f32
    %55 = vector.broadcast %cst_26 : f32 to vector<1x8xf32>
    %56 = arith.divf %54, %55 : vector<1x8xf32>
    %57 = vector.extract_strided_slice %1 {offsets = [0, 0, 0], sizes = [16, 16, 8], strides = [1, 1, 1]} : vector<26x26x8xbf16> to vector<16x16x8xbf16>
    %58 = vector.extract_strided_slice %1 {offsets = [0, 5, 0], sizes = [16, 16, 8], strides = [1, 1, 1]} : vector<26x26x8xbf16> to vector<16x16x8xbf16>
    %59 = vector.extract_strided_slice %1 {offsets = [0, 10, 0], sizes = [16, 16, 8], strides = [1, 1, 1]} : vector<26x26x8xbf16> to vector<16x16x8xbf16>
    %60 = vector.extract_strided_slice %1 {offsets = [5, 0, 0], sizes = [16, 16, 8], strides = [1, 1, 1]} : vector<26x26x8xbf16> to vector<16x16x8xbf16>
    %61 = vector.extract_strided_slice %1 {offsets = [5, 5, 0], sizes = [16, 16, 8], strides = [1, 1, 1]} : vector<26x26x8xbf16> to vector<16x16x8xbf16>
    %62 = vector.extract_strided_slice %1 {offsets = [5, 10, 0], sizes = [16, 16, 8], strides = [1, 1, 1]} : vector<26x26x8xbf16> to vector<16x16x8xbf16>
    %63 = vector.extract_strided_slice %1 {offsets = [10, 0, 0], sizes = [16, 16, 8], strides = [1, 1, 1]} : vector<26x26x8xbf16> to vector<16x16x8xbf16>
    %64 = vector.extract_strided_slice %1 {offsets = [10, 5, 0], sizes = [16, 16, 8], strides = [1, 1, 1]} : vector<26x26x8xbf16> to vector<16x16x8xbf16>
    %65 = vector.extract_strided_slice %1 {offsets = [10, 10, 0], sizes = [16, 16, 8], strides = [1, 1, 1]} : vector<26x26x8xbf16> to vector<16x16x8xbf16>
    %66 = tpu.concatenate %57, %58, %59, %60, %61, %62, %63, %64, %65 in 2 : vector<16x16x8xbf16>, vector<16x16x8xbf16>, vector<16x16x8xbf16>, vector<16x16x8xbf16>, vector<16x16x8xbf16>, vector<16x16x8xbf16>, vector<16x16x8xbf16>, vector<16x16x8xbf16>, vector<16x16x8xbf16> -> vector<16x16x72xbf16>
    %67 = vector.shape_cast %66 : vector<16x16x72xbf16> to vector<256x72xbf16>
    %c2 = arith.constant 2 : index
    %c0_27 = arith.constant 0 : index
    %c0_28 = arith.constant 0 : index
    %68 = vector.load %arg4[%c2, %c0_27, %c0_28] : memref<3x72x8xbf16, #tpu.memory_space<vmem>>, vector<1x72x8xbf16>
    %69 = vector.shape_cast %68 : vector<1x72x8xbf16> to vector<72x8xbf16>
    %cst_29 = arith.constant dense<0.000000e+00> : vector<256x8xf32>
    %70 = tpu.matmul %67, %69, %cst_29 {dimension_numbers = #tpu.dot_dimension_numbers<[1], [0], [0], [1], [0, 0, 1, 1], [], []>} : vector<256x72xbf16>, vector<72x8xbf16>, vector<256x8xf32> -> vector<256x8xf32>
    %c2_30 = arith.constant 2 : index
    %c0_31 = arith.constant 0 : index
    %c0_32 = arith.constant 0 : index
    %71 = vector.load %arg5[%c2_30, %c0_31, %c0_32] : memref<3x1x8xf32, #tpu.memory_space<vmem>>, vector<1x1x8xf32>
    %72 = vector.shape_cast %71 : vector<1x1x8xf32> to vector<1x8xf32>
    %73 = vector.broadcast %72 : vector<1x8xf32> to vector<256x8xf32>
    %74 = arith.addf %70, %73 : vector<256x8xf32>
    %cst_33 = arith.constant 0.000000e+00 : f32
    %75 = vector.broadcast %cst_33 : f32 to vector<256x8xf32>
    %76 = arith.maximumf %74, %75 : vector<256x8xf32>
    %cst_34 = arith.constant dense<0.000000e+00> : vector<8xf32>
    %77 = vector.multi_reduction <add>, %76, %cst_34 [0] : vector<256x8xf32> to vector<8xf32>
    %78 = vector.shape_cast %77 : vector<8xf32> to vector<1x8xf32>
    %cst_35 = arith.constant 2.560000e+02 : f32
    %79 = vector.broadcast %cst_35 : f32 to vector<1x8xf32>
    %80 = arith.divf %78, %79 : vector<1x8xf32>
    %81 = vector.extract_strided_slice %32 {offsets = [0, 0], sizes = [1, 4], strides = [1, 1]} : vector<1x8xf32> to vector<1x4xf32>
    %82 = vector.extract_strided_slice %56 {offsets = [0, 0], sizes = [1, 4], strides = [1, 1]} : vector<1x8xf32> to vector<1x4xf32>
    %83 = vector.extract_strided_slice %80 {offsets = [0, 0], sizes = [1, 4], strides = [1, 1]} : vector<1x8xf32> to vector<1x4xf32>
    %84 = tpu.concatenate %81, %82, %83 in 1 : vector<1x4xf32>, vector<1x4xf32>, vector<1x4xf32> -> vector<1x12xf32>
    %85 = vector.extract_strided_slice %32 {offsets = [0, 4], sizes = [1, 4], strides = [1, 1]} : vector<1x8xf32> to vector<1x4xf32>
    %86 = vector.extract_strided_slice %56 {offsets = [0, 4], sizes = [1, 4], strides = [1, 1]} : vector<1x8xf32> to vector<1x4xf32>
    %87 = vector.extract_strided_slice %80 {offsets = [0, 4], sizes = [1, 4], strides = [1, 1]} : vector<1x8xf32> to vector<1x4xf32>
    %88 = tpu.concatenate %85, %86, %87 in 1 : vector<1x4xf32>, vector<1x4xf32>, vector<1x4xf32> -> vector<1x12xf32>
    %89 = arith.truncf %84 : vector<1x12xf32> to vector<1x12xbf16>
    %c0_36 = arith.constant 0 : index
    %c0_37 = arith.constant 0 : index
    %90 = vector.load %arg6[%c0_36, %c0_37] : memref<12x4xbf16, #tpu.memory_space<vmem>>, vector<12x4xbf16>
    %cst_38 = arith.constant dense<0.000000e+00> : vector<1x4xf32>
    %91 = tpu.matmul %89, %90, %cst_38 {dimension_numbers = #tpu.dot_dimension_numbers<[1], [0], [0], [1], [0, 0, 1, 1], [], []>} : vector<1x12xbf16>, vector<12x4xbf16>, vector<1x4xf32> -> vector<1x4xf32>
    %c0_39 = arith.constant 0 : index
    %c0_40 = arith.constant 0 : index
    %92 = vector.load %arg7[%c0_39, %c0_40] : memref<1x4xf32, #tpu.memory_space<vmem>>, vector<1x4xf32>
    %93 = arith.addf %91, %92 : vector<1x4xf32>
    %cst_41 = arith.constant 0.000000e+00 : f32
    %94 = vector.broadcast %cst_41 : f32 to vector<1x4xf32>
    %95 = arith.maximumf %93, %94 : vector<1x4xf32>
    %96 = arith.truncf %88 : vector<1x12xf32> to vector<1x12xbf16>
    %c0_42 = arith.constant 0 : index
    %c0_43 = arith.constant 0 : index
    %97 = vector.load %arg8[%c0_42, %c0_43] : memref<12x4xbf16, #tpu.memory_space<vmem>>, vector<12x4xbf16>
    %cst_44 = arith.constant dense<0.000000e+00> : vector<1x4xf32>
    %98 = tpu.matmul %96, %97, %cst_44 {dimension_numbers = #tpu.dot_dimension_numbers<[1], [0], [0], [1], [0, 0, 1, 1], [], []>} : vector<1x12xbf16>, vector<12x4xbf16>, vector<1x4xf32> -> vector<1x4xf32>
    %c0_45 = arith.constant 0 : index
    %c0_46 = arith.constant 0 : index
    %99 = vector.load %arg9[%c0_45, %c0_46] : memref<1x4xf32, #tpu.memory_space<vmem>>, vector<1x4xf32>
    %100 = arith.addf %98, %99 : vector<1x4xf32>
    %cst_47 = arith.constant 0.000000e+00 : f32
    %101 = vector.broadcast %cst_47 : f32 to vector<1x4xf32>
    %102 = arith.maximumf %100, %101 : vector<1x4xf32>
    %103 = arith.truncf %102 : vector<1x4xf32> to vector<1x4xbf16>
    %c0_48 = arith.constant 0 : index
    %c0_49 = arith.constant 0 : index
    %104 = vector.load %arg10[%c0_48, %c0_49] : memref<4x8xbf16, #tpu.memory_space<vmem>>, vector<4x8xbf16>
    %cst_50 = arith.constant dense<0.000000e+00> : vector<1x8xf32>
    %105 = tpu.matmul %103, %104, %cst_50 {dimension_numbers = #tpu.dot_dimension_numbers<[1], [0], [0], [1], [0, 0, 1, 1], [], []>} : vector<1x4xbf16>, vector<4x8xbf16>, vector<1x8xf32> -> vector<1x8xf32>
    %106 = vector.extract_strided_slice %19 {offsets = [0, 0], sizes = [256, 4], strides = [1, 1]} : vector<256x8xf32> to vector<256x4xf32>
    %107 = vector.broadcast %95 : vector<1x4xf32> to vector<256x4xf32>
    %108 = arith.mulf %106, %107 : vector<256x4xf32>
    %cst_51 = arith.constant dense<0.000000e+00> : vector<256xf32>
    %109 = vector.multi_reduction <add>, %108, %cst_51 [1] : vector<256x4xf32> to vector<256xf32>
    %110 = vector.shape_cast %109 : vector<256xf32> to vector<256x1xf32>
    %111 = arith.negf %110 : vector<256x1xf32>
    %112 = math.exp %111 : vector<256x1xf32>
    %cst_52 = arith.constant 1.000000e+00 : f32
    %113 = vector.broadcast %cst_52 : f32 to vector<256x1xf32>
    %114 = arith.addf %113, %112 : vector<256x1xf32>
    %115 = arith.divf %113, %114 : vector<256x1xf32>
    %116 = vector.broadcast %115 : vector<256x1xf32> to vector<256x8xf32>
    %117 = vector.broadcast %105 : vector<1x8xf32> to vector<256x8xf32>
    %118 = arith.mulf %116, %117 : vector<256x8xf32>
    %c0_53 = arith.constant 0 : index
    %c0_54 = arith.constant 0 : index
    %119 = vector.load %arg11[%c0_53, %c0_54] : memref<1x8xf32, #tpu.memory_space<vmem>>, vector<1x8xf32>
    %120 = vector.broadcast %119 : vector<1x8xf32> to vector<256x8xf32>
    %121 = arith.addf %118, %120 : vector<256x8xf32>
    %cst_55 = arith.constant 0.000000e+00 : f32
    %122 = vector.broadcast %cst_55 : f32 to vector<256x8xf32>
    %123 = arith.maximumf %121, %122 : vector<256x8xf32>
    %cst_56 = arith.constant 2.000000e-01 : f32
    %124 = vector.broadcast %cst_56 : f32 to vector<256x8xf32>
    %125 = arith.mulf %123, %124 : vector<256x8xf32>
    %126 = arith.addf %125, %19 : vector<256x8xf32>
    %c0_57 = arith.constant 0 : index
    %c0_58 = arith.constant 0 : index
    %c0_59 = arith.constant 0 : index
    %127 = vector.load %arg12[%c0_57, %c0_58, %c0_59] : memref<1x256x8xf32, #tpu.memory_space<vmem>>, vector<1x256x8xf32>
    %128 = vector.shape_cast %127 : vector<1x256x8xf32> to vector<256x8xf32>
    %129 = vector.shape_cast %126 : vector<256x8xf32> to vector<1x256x8xf32>
    tpu.vector_store %arg12[%c0_57, %c0_58, %c0_59], %129 {strides = array<i32>} : memref<1x256x8xf32, #tpu.memory_space<vmem>>, vector<1x256x8xf32>,
    return
  }
  func.func @transform_0(%arg0: i32) -> (i32, i32, i32, i32) {
    %c0_i32 = arith.constant 0 : i32
    %c0_i32_0 = arith.constant 0 : i32
    %c0_i32_1 = arith.constant 0 : i32
    %c0_i32_2 = arith.constant 0 : i32
    return %arg0, %c0_i32, %c0_i32_0, %c0_i32_1 : i32, i32, i32, i32
  }
  func.func @transform_1(%arg0: i32) -> (i32, i32) {
    %c0_i32 = arith.constant 0 : i32
    %c0_i32_0 = arith.constant 0 : i32
    %c0_i32_1 = arith.constant 0 : i32
    return %c0_i32, %c0_i32_0 : i32, i32
  }
  func.func @transform_2(%arg0: i32) -> (i32, i32) {
    %c0_i32 = arith.constant 0 : i32
    %c0_i32_0 = arith.constant 0 : i32
    %c0_i32_1 = arith.constant 0 : i32
    return %c0_i32, %c0_i32_0 : i32, i32
  }
  func.func @transform_3(%arg0: i32) -> (i32, i32, i32) {
    %c0_i32 = arith.constant 0 : i32
    %c0_i32_0 = arith.constant 0 : i32
    %c0_i32_1 = arith.constant 0 : i32
    %c0_i32_2 = arith.constant 0 : i32
    return %c0_i32, %c0_i32_0, %c0_i32_1 : i32, i32, i32
  }
  func.func @transform_4(%arg0: i32) -> (i32, i32, i32) {
    %c0_i32 = arith.constant 0 : i32
    %c0_i32_0 = arith.constant 0 : i32
    %c0_i32_1 = arith.constant 0 : i32
    %c0_i32_2 = arith.constant 0 : i32
    return %c0_i32, %c0_i32_0, %c0_i32_1 : i32, i32, i32
  }
  func.func @transform_5(%arg0: i32) -> (i32, i32) {
    %c0_i32 = arith.constant 0 : i32
    %c0_i32_0 = arith.constant 0 : i32
    %c0_i32_1 = arith.constant 0 : i32
    return %c0_i32, %c0_i32_0 : i32, i32
  }
  func.func @transform_6(%arg0: i32) -> (i32, i32) {
    %c0_i32 = arith.constant 0 : i32
    %c0_i32_0 = arith.constant 0 : i32
    %c0_i32_1 = arith.constant 0 : i32
    return %c0_i32, %c0_i32_0 : i32, i32
  }
  func.func @transform_7(%arg0: i32) -> (i32, i32) {
    %c0_i32 = arith.constant 0 : i32
    %c0_i32_0 = arith.constant 0 : i32
    %c0_i32_1 = arith.constant 0 : i32
    return %c0_i32, %c0_i32_0 : i32, i32
  }
  func.func @transform_8(%arg0: i32) -> (i32, i32) {
    %c0_i32 = arith.constant 0 : i32
    %c0_i32_0 = arith.constant 0 : i32
    %c0_i32_1 = arith.constant 0 : i32
    return %c0_i32, %c0_i32_0 : i32, i32
  }
  func.func @transform_9(%arg0: i32) -> (i32, i32) {
    %c0_i32 = arith.constant 0 : i32
    %c0_i32_0 = arith.constant 0 : i32
    %c0_i32_1 = arith.constant 0 : i32
    return %c0_i32, %c0_i32_0 : i32, i32
  }
  func.func @transform_10(%arg0: i32) -> (i32, i32) {
    %c0_i32 = arith.constant 0 : i32
    %c0_i32_0 = arith.constant 0 : i32
    %c0_i32_1 = arith.constant 0 : i32
    return %c0_i32, %c0_i32_0 : i32, i32
  }
  func.func @transform_11(%arg0: i32) -> (i32, i32, i32) {
    %c0_i32 = arith.constant 0 : i32
    %c0_i32_0 = arith.constant 0 : i32
    %c0_i32_1 = arith.constant 0 : i32
    return %arg0, %c0_i32, %c0_i32_0 : i32, i32, i32
  }
}

</mosaic_0001>

<llo_original>
// kernel: dar_forward.2
$region0: #{dar_forward.2}
  #allocation0 [shape = 'u32[]', space=smem, size = 0x4, offset = 0x4, fixed_abs, tag = 'smem constant byte address 0x4 - core index']
  #allocation1 [shape = 'u32[144,128]{1,0:T(1,128)}', space=vmem, size = 0x12000, scoped, tag = 'internal scratch']
  %s0 = inlined_call_operand.vmem [shape: bf16[2,256,8], index: 0, kind: input, shape index: {}]
  %s1 = inlined_call_operand.vmem [shape: bf16[2,256,8], index: 1, kind: input, shape index: {}]
  %s2 = inlined_call_operand.vmem [shape: bf16[8,4], index: 2, kind: input, shape index: {}]
  %s3 = inlined_call_operand.vmem [shape: bf16[8,4], index: 3, kind: input, shape index: {}]
  %s4 = inlined_call_operand.vmem [shape: f32[1,8], index: 4, kind: input, shape index: {}]
  %s5 = inlined_call_operand.vmem [shape: bf16[2,256,8], index: 5, kind: output, shape index: {}]
  %s6 = sld [smem:[#allocation0]]
  $region53: #{dar_forward.2} parent=0
    _
  %s8 = ssub.s32 1, %s6
  %s9 = scalar_select 0, %s8, %s6
  loop: start=0, step=1, limit=4
  $region2: #{dar_forward.2} parent=0 // loop_pre_header
    _
  $region3: #{dar_forward.2} parent=0 // loop_header
    %s11 = sphi 0, %s15
    %p12 = scmp.ge.s32.totalorder %s11, 4
    %s21 = sphi 0, %s23
    %s24 = sphi 0, %s21
    %s25 = sphi 0, %s24
    %s41 = sphi 0, %s25
    %s47 = sphi 0, %s49
    %s50 = sphi 0, %s47
    %s51 = sphi 0, %s50
    %s67 = sphi 0, %s51
    %s71 = sphi 0, %s71
    %s73 = sphi 0, %s71
    %s74 = sphi 0, %s73
    %s88 = sphi 0, %s74
    %s92 = sphi 0, %s92
    %s94 = sphi 0, %s92
    %s95 = sphi 0, %s94
    %s109 = sphi 0, %s95
    %s113 = sphi 0, %s113
    %s115 = sphi 0, %s113
    %s116 = sphi 0, %s115
    %s130 = sphi 0, %s116
    %s136 = sphi 0, %s138
    %s139 = sphi 0, %s136
    %s140 = sphi 0, %s139
    %s156 = sphi 0, %s140
  $region4: #{dar_forward.2} parent=0 // loop_header_branch
    %14 = sbr.rel (%p12) target = $region8
  $region5: #{dar_forward.2} parent=0 // loop_body
    %s16 = ssub.s32 %s11, 1
    %s17 = ssub.s32 %s11, 2
    %s18 = sadd.s32 %s11, 1
    %s19 = ssub.s32 %s11, %s18
    %p20 = scmp.eq.s32.totalorder %s19, 0
    %s22 = sadd.s32 %s21, 1
    %s23 = scalar_select %p20, %s21, %s22
    %p26 = pneg %p20
    %p27 = scmp.eq.s32.totalorder %s11, 1
    %p28 = por %p26, %p27
    %p29 = scmp.ne.s32.totalorder %s21, %s24
    %p30 = scmp.eq.s32.totalorder %s11, 0
    %p31 = por %p29, %p30
    %p32 = scmp.ne.s32.totalorder %s21, %s24
    %p33 = scmp.eq.s32.totalorder %s16, 1
    %p34 = por %p32, %p33
    %p35 = scmp.ne.s32.totalorder %s24, %s25
    %p36 = scmp.eq.s32.totalorder %s16, 0
    %p37 = por %p35, %p36
    %p38 = scmp.ne.s32.totalorder %s24, %s25
    %p39 = scmp.eq.s32.totalorder %s17, 1
    %p40 = por %p38, %p39
    %p42 = scmp.ne.s32.totalorder %s25, %s41
    %p43 = scmp.eq.s32.totalorder %s17, 0
    %p44 = por %p42, %p43
    %s45 = ssub.s32 %s11, %s18
    %p46 = scmp.eq.s32.totalorder %s45, 0
    %s48 = sadd.s32 %s47, 1
    %s49 = scalar_select %p46, %s47, %s48
    %p52 = pneg %p46
    %p53 = scmp.eq.s32.totalorder %s11, 1
    %p54 = por %p52, %p53
    %p55 = scmp.ne.s32.totalorder %s47, %s50
    %p56 = scmp.eq.s32.totalorder %s11, 0
    %p57 = por %p55, %p56
    %p58 = scmp.ne.s32.totalorder %s47, %s50
    %p59 = scmp.eq.s32.totalorder %s16, 1
    %p60 = por %p58, %p59
    %p61 = scmp.ne.s32.totalorder %s50, %s51
    %p62 = scmp.eq.s32.totalorder %s16, 0
    %p63 = por %p61, %p62
    %p64 = scmp.ne.s32.totalorder %s50, %s51
    %p65 = scmp.eq.s32.totalorder %s17, 1
    %p66 = por %p64, %p65
    %p68 = scmp.ne.s32.totalorder %s51, %s67
    %p69 = scmp.eq.s32.totalorder %s17, 0
    %p70 = por %p68, %p69
    %s72 = sadd.s32 %s71, 1
    %p75 = scmp.eq.s32.totalorder %s11, 1
    %p76 = scmp.ne.s32.totalorder %s71, %s73
    %p77 = scmp.eq.s32.totalorder %s11, 0
    %p78 = por %p76, %p77
    %p79 = scmp.ne.s32.totalorder %s71, %s73
    %p80 = scmp.eq.s32.totalorder %s16, 1
    %p81 = por %p79, %p80
    %p82 = scmp.ne.s32.totalorder %s73, %s74
    %p83 = scmp.eq.s32.totalorder %s16, 0
    %p84 = por %p82, %p83
    %p85 = scmp.ne.s32.totalorder %s73, %s74
    %p86 = scmp.eq.s32.totalorder %s17, 1
    %p87 = por %p85, %p86
    %p89 = scmp.ne.s32.totalorder %s74, %s88
    %p90 = scmp.eq.s32.totalorder %s17, 0
    %p91 = por %p89, %p90
    %s93 = sadd.s32 %s92, 1
    %p96 = scmp.eq.s32.totalorder %s11, 1
    %p97 = scmp.ne.s32.totalorder %s92, %s94
    %p98 = scmp.eq.s32.totalorder %s11, 0
    %p99 = por %p97, %p98
    %p100 = scmp.ne.s32.totalorder %s92, %s94
    %p101 = scmp.eq.s32.totalorder %s16, 1
    %p102 = por %p100, %p101
    %p103 = scmp.ne.s32.totalorder %s94, %s95
    %p104 = scmp.eq.s32.totalorder %s16, 0
    %p105 = por %p103, %p104
    %p106 = scmp.ne.s32.totalorder %s94, %s95
    %p107 = scmp.eq.s32.totalorder %s17, 1
    %p108 = por %p106, %p107
    %p110 = scmp.ne.s32.totalorder %s95, %s109
    %p111 = scmp.eq.s32.totalorder %s17, 0
    %p112 = por %p110, %p111
    %s114 = sadd.s32 %s113, 1
    %p117 = scmp.eq.s32.totalorder %s11, 1
    %p118 = scmp.ne.s32.totalorder %s113, %s115
    %p119 = scmp.eq.s32.totalorder %s11, 0
    %p120 = por %p118, %p119
    %p121 = scmp.ne.s32.totalorder %s113, %s115
    %p122 = scmp.eq.s32.totalorder %s16, 1
    %p123 = por %p121, %p122
    %p124 = scmp.ne.s32.totalorder %s115, %s116
    %p125 = scmp.eq.s32.totalorder %s16, 0
    %p126 = por %p124, %p125
    %p127 = scmp.ne.s32.totalorder %s115, %s116
    %p128 = scmp.eq.s32.totalorder %s17, 1
    %p129 = por %p127, %p128
    %p131 = scmp.ne.s32.totalorder %s116, %s130
    %p132 = scmp.eq.s32.totalorder %s17, 0
    %p133 = por %p131, %p132
    %s134 = ssub.s32 %s11, %s18
    %p135 = scmp.eq.s32.totalorder %s134, 0
    %s137 = sadd.s32 %s136, 1
    %s138 = scalar_select %p135, %s136, %s137
    %p141 = pneg %p135
    %p142 = scmp.eq.s32.totalorder %s11, 1
    %p143 = por %p141, %p142
    %p144 = scmp.ne.s32.totalorder %s136, %s139
    %p145 = scmp.eq.s32.totalorder %s11, 0
    %p146 = por %p144, %p145
    %p147 = scmp.ne.s32.totalorder %s136, %s139
    %p148 = scmp.eq.s32.totalorder %s16, 1
    %p149 = por %p147, %p148
    %p150 = scmp.ne.s32.totalorder %s139, %s140
    %p151 = scmp.eq.s32.totalorder %s16, 0
    %p152 = por %p150, %p151
    %p153 = scmp.ne.s32.totalorder %s139, %s140
    %p154 = scmp.eq.s32.totalorder %s17, 1
    %p155 = por %p153, %p154
    %p157 = scmp.ne.s32.totalorder %s140, %s156
    %p158 = scmp.eq.s32.totalorder %s17, 0
    %p159 = por %p157, %p158
    %p160 = scmp.le.s32.totalorder 1, %s11
    %p161 = scmp.lt.s32.totalorder %s11, 3
    %p162 = pnand %p160, %p161
    %p163 = pneg %p162
    // Predicated region
    $region9: #{dar_forward.2} parent=5 // pred_check
      _
    $region10: #{dar_forward.2} parent=5 // pred_check_branch
      %165 = sbr.rel (%p162) target = $region12
    $region11: #{dar_forward.2} parent=5 // pred_region
      %s166 = ssub.s32 %s11, 1
      // Predicated region
      $region13: #{dar_forward.2} parent=11 // pred_check
        %p167 = pneg %p84
      $region14: #{dar_forward.2} parent=11 // pred_check_branch
        %169 = sbr.rel (%p167) target = $region16
      $region15: #{dar_forward.2} parent=11 // pred_region
        _
      $region16: #{dar_forward.2} parent=11 // pred_fallthru
        _
      // Predicated region
      $region17: #{dar_forward.2} parent=11 // pred_check
        %p170 = pneg %p105
      $region18: #{dar_forward.2} parent=11 // pred_check_branch
        %172 = sbr.rel (%p170) target = $region20
      $region19: #{dar_forward.2} parent=11 // pred_region
        _
      $region20: #{dar_forward.2} parent=11 // pred_fallthru
        _
      // Predicated region
      $region21: #{dar_forward.2} parent=11 // pred_check
        %p173 = pneg %p126
      $region22: #{dar_forward.2} parent=11 // pred_check_branch
        %175 = sbr.rel (%p173) target = $region24
      $region23: #{dar_forward.2} parent=11 // pred_region
        _
      $region24: #{dar_forward.2} parent=11 // pred_fallthru
        _
    $region12: #{dar_forward.2} parent=5 // pred_fallthru
      _
    %p176 = scmp.lt.s32.totalorder %s11, 2
    // Predicated region
    $region25: #{dar_forward.2} parent=5 // pred_check
      %p177 = pneg %p176
    $region26: #{dar_forward.2} parent=5 // pred_check_branch
      %179 = sbr.rel (%p177) target = $region28
    $region27: #{dar_forward.2} parent=5 // pred_region
      // Predicated region
      $region29: #{dar_forward.2} parent=27 // pred_check
        %p180 = pneg %p31
      $region30: #{dar_forward.2} parent=27 // pred_check_branch
        %182 = sbr.rel (%p180) target = $region32
      $region31: #{dar_forward.2} parent=27 // pred_region
        %p183 = scmp.lt.s32.totalorder %s11, 1
        %s184 = scalar_select %p183, %s11, 1
        %s185 = smul.addr %s184, 32
        %s186 = smul.addr %s185, 4
        %s187 = scalar_lea.vmem %s0, %s186
      $region32: #{dar_forward.2} parent=27 // pred_fallthru
        _
      // Predicated region
      $region33: #{dar_forward.2} parent=27 // pred_check
        %p188 = pneg %p57
      $region34: #{dar_forward.2} parent=27 // pred_check_branch
        %190 = sbr.rel (%p188) target = $region36
      $region35: #{dar_forward.2} parent=27 // pred_region
        %p191 = scmp.lt.s32.totalorder %s11, 1
        %s192 = scalar_select %p191, %s11, 1
        %s193 = smul.addr %s192, 32
        %s194 = smul.addr %s193, 4
        %s195 = scalar_lea.vmem %s1, %s194
      $region36: #{dar_forward.2} parent=27 // pred_fallthru
        _
    $region28: #{dar_forward.2} parent=5 // pred_fallthru
      _
    %p196 = scmp.le.s32.totalorder 1, %s11
    %p197 = scmp.lt.s32.totalorder %s11, 3
    %p198 = pnand %p196, %p197
    %p199 = pneg %p198
    // Predicated region
    $region37: #{dar_forward.2} parent=5 // pred_check
      _
    $region38: #{dar_forward.2} parent=5 // pred_check_branch
      %201 = sbr.rel (%p198) target = $region40
    $region39: #{dar_forward.2} parent=5 // pred_region
      %s202 = ssub.s32 %s11, 1
      %p203 = scmp.lt.s32.totalorder %s16, 1
      %s204 = scalar_select %p203, %s16, 1
      %s205 = smul.addr %s204, 32
      %s206 = smul.addr %s205, 4
      %s207 = scalar_lea.vmem %s0, %s206
      %p208 = pneg %p37
      %p209 = pneg %p34
      %p210 = scmp.lt.s32.totalorder %s16, 1
      %s211 = scalar_select %p210, %s16, 1
      %s212 = smul.addr %s211, 32
      %s213 = smul.addr %s212, 4
      %s214 = scalar_lea.vmem %s1, %s213
      %p215 = pneg %p63
      %p216 = pneg %p60
      %p217 = pneg %p84
      %p218 = pneg %p81
      %p219 = pneg %p105
      %p220 = pneg %p102
      %p221 = pneg %p126
      %p222 = pneg %p123
      %p223 = pneg %p152
      %p224 = pneg %p149
      %p225 = scmp.lt.s32.totalorder %s16, 1
      %s226 = scalar_select %p225, %s16, 1
      %s227 = smul.addr %s226, 32
      %s228 = smul.addr %s227, 4
      %s229 = scalar_lea.vmem %s5, %s228
      %p230 = scmp.lt.s32.totalorder %s16, 1
      %s231 = scalar_select %p230, %s16, 1
      %s232 = smul.addr %s231, 32
      %s233 = smul.addr %s232, 4
      %s234 = scalar_lea.vmem %s0, %s233
      %p235 = scmp.lt.s32.totalorder %s16, 1
      %s236 = scalar_select %p235, %s16, 1
      %s237 = smul.addr %s236, 32
      %s238 = smul.addr %s237, 4
      %s239 = scalar_lea.vmem %s1, %s238
      %p240 = scmp.lt.s32.totalorder %s16, 1
      %s241 = scalar_select %p240, %s16, 1
      %s242 = smul.addr %s241, 32
      %s243 = smul.addr %s242, 4
      %s244 = scalar_lea.vmem %s5, %s243
      %v246 = vld [vmem:[%s234] sm:$0xf]
      %v247 = vld [vmem:[%s234 + $0x4] sm:$0xf]
      %v248 = vld [vmem:[%s234 + $0x8] sm:$0xf]
      %v249 = vld [vmem:[%s234 + $0xc] sm:$0xf]
      %v250 = vld [vmem:[%s234 + $0x10] sm:$0xf]
      %v251 = vld [vmem:[%s234 + $0x14] sm:$0xf]
      %v252 = vld [vmem:[%s234 + $0x18] sm:$0xf]
      %v253 = vld [vmem:[%s234 + $0x1c] sm:$0xf]
      %v254 = vld [vmem:[%s234 + $0x20] sm:$0xf]
      %v255 = vld [vmem:[%s234 + $0x24] sm:$0xf]
      %v256 = vld [vmem:[%s234 + $0x28] sm:$0xf]
      %v257 = vld [vmem:[%s234 + $0x2c] sm:$0xf]
      %v258 = vld [vmem:[%s234 + $0x30] sm:$0xf]
      %v259 = vld [vmem:[%s234 + $0x34] sm:$0xf]
      %v260 = vld [vmem:[%s234 + $0x38] sm:$0xf]
      %v261 = vld [vmem:[%s234 + $0x3c] sm:$0xf]
      %v262 = vld [vmem:[%s234 + $0x40] sm:$0xf]
      %v263 = vld [vmem:[%s234 + $0x44] sm:$0xf]
      %v264 = vld [vmem:[%s234 + $0x48] sm:$0xf]
      %v265 = vld [vmem:[%s234 + $0x4c] sm:$0xf]
      %v266 = vld [vmem:[%s234 + $0x50] sm:$0xf]
      %v267 = vld [vmem:[%s234 + $0x54] sm:$0xf]
      %v268 = vld [vmem:[%s234 + $0x58] sm:$0xf]
      %v269 = vld [vmem:[%s234 + $0x5c] sm:$0xf]
      %v270 = vld [vmem:[%s234 + $0x60] sm:$0xf]
      %v271 = vld [vmem:[%s234 + $0x64] sm:$0xf]
      %v272 = vld [vmem:[%s234 + $0x68] sm:$0xf]
      %v273 = vld [vmem:[%s234 + $0x6c] sm:$0xf]
      %v274 = vld [vmem:[%s234 + $0x70] sm:$0xf]
      %v275 = vld [vmem:[%s234 + $0x74] sm:$0xf]
      %v276 = vld [vmem:[%s234 + $0x78] sm:$0xf]
      %v277 = vld [vmem:[%s234 + $0x7c] sm:$0xf]
      %v278 = vld [vmem:[%s2] sm:$0xf]
      %v311 = vunpack.c.l.b16 %v246
      %v312 = vunpack.c.l.b16 %v247
      %v313 = vunpack.c.l.b16 %v248
      %v314 = vunpack.c.l.b16 %v249
      %v315 = vunpack.c.l.b16 %v250
      %v316 = vunpack.c.l.b16 %v251
      %v317 = vunpack.c.l.b16 %v252
      %v318 = vunpack.c.l.b16 %v253
      %v319 = vunpack.c.l.b16 %v254
      %v320 = vunpack.c.l.b16 %v255
      %v321 = vunpack.c.l.b16 %v256
      %v322 = vunpack.c.l.b16 %v257
      %v323 = vunpack.c.l.b16 %v258
      %v324 = vunpack.c.l.b16 %v259
      %v325 = vunpack.c.l.b16 %v260
      %v326 = vunpack.c.l.b16 %v261
      %v327 = vunpack.c.l.b16 %v262
      %v328 = vunpack.c.l.b16 %v263
      %v329 = vunpack.c.l.b16 %v264
      %v330 = vunpack.c.l.b16 %v265
      %v331 = vunpack.c.l.b16 %v266
      %v332 = vunpack.c.l.b16 %v267
      %v333 = vunpack.c.l.b16 %v268
      %v334 = vunpack.c.l.b16 %v269
      %v335 = vunpack.c.l.b16 %v270
      %v336 = vunpack.c.l.b16 %v271
      %v337 = vunpack.c.l.b16 %v272
      %v338 = vunpack.c.l.b16 %v273
      %v339 = vunpack.c.l.b16 %v274
      %v340 = vunpack.c.l.b16 %v275
      %v341 = vunpack.c.l.b16 %v276
      %v342 = vunpack.c.l.b16 %v277
      %v343 = vpack.c.b16 %v312, %v311
      %v344 = vpack.c.b16 %v314, %v313
      %v345 = vpack.c.b16 %v316, %v315
      %v346 = vpack.c.b16 %v318, %v317
      %v347 = vpack.c.b16 %v320, %v319
      %v348 = vpack.c.b16 %v322, %v321
      %v349 = vpack.c.b16 %v324, %v323
      %v350 = vpack.c.b16 %v326, %v325
      %v351 = vpack.c.b16 %v328, %v327
      %v352 = vpack.c.b16 %v330, %v329
      %v353 = vpack.c.b16 %v332, %v331
      %v354 = vpack.c.b16 %v334, %v333
      %v355 = vpack.c.b16 %v336, %v335
      %v356 = vpack.c.b16 %v338, %v337
      %v357 = vpack.c.b16 %v340, %v339
      %v358 = vpack.c.b16 %v342, %v341
      %vm359 = vcmask 64512
      %v361 = vsel %vm359, %v343, 0
      %v364 = vsel %vm359, %v344, 0
      %v367 = vsel %vm359, %v345, 0
      %v370 = vsel %vm359, %v346, 0
      %v373 = vsel %vm359, %v347, 0
      %v376 = vsel %vm359, %v348, 0
      %v379 = vsel %vm359, %v349, 0
      %v382 = vsel %vm359, %v350, 0
      %v385 = vsel %vm359, %v351, 0
      %v388 = vsel %vm359, %v352, 0
      %v391 = vsel %vm359, %v353, 0
      %v394 = vsel %vm359, %v354, 0
      %v397 = vsel %vm359, %v355, 0
      %v400 = vsel %vm359, %v356, 0
      %v403 = vsel %vm359, %v357, 0
      %v406 = vsel %vm359, %v358, 0
      %vm408 = vcmask 1043456
      %v410 = vsel %vm408, %v278, 0
      %412 = vmatprep.subr.bf16.mxu0 0
      %413 = vmatpush1.bf16.msra.mxu0 %v410
      %414 = vmatprep.subr.bf16.mxu0 0
      %415 = vmatpush1.bf16.msra.mxu0 0
      %416 = vmatprep.subr.bf16.mxu0 0
      %417 = vmatpush1.bf16.msra.mxu0 0
      %418 = vmatprep.subr.bf16.mxu0 0
      %419 = vmatpush1.bf16.msra.mxu0 0
      %420 = vmatprep.subr.bf16.mxu0 0
      %421 = vmatpush1.bf16.msra.mxu0 0
      %422 = vmatprep.subr.bf16.mxu0 0
      %423 = vmatpush1.bf16.msra.mxu0 0
      %424 = vmatprep.subr.bf16.mxu0 0
      %425 = vmatpush1.bf16.msra.mxu0 0
      %426 = vmatprep.subr.bf16.mxu0 0
      %427 = vmatpush1.bf16.msra.mxu0 0
      %428 = vmatprep.subr.bf16.mxu0 0
      %429 = vmatpush1.bf16.msra.mxu0 0
      %430 = vmatprep.subr.bf16.mxu0 0
      %431 = vmatpush1.bf16.msra.mxu0 0
      %432 = vmatprep.subr.bf16.mxu0 0
      %433 = vmatpush1.bf16.msra.mxu0 0
      %434 = vmatprep.subr.bf16.mxu0 0
      %435 = vmatpush1.bf16.msra.mxu0 0
      %436 = vmatprep.subr.bf16.mxu0 0
      %437 = vmatpush1.bf16.msra.mxu0 0
      %438 = vmatprep.subr.bf16.mxu0 0
      %439 = vmatpush1.bf16.msra.mxu0 0
      %440 = vmatprep.subr.bf16.mxu0 0
      %441 = vmatpush1.bf16.msra.mxu0 0
      %442 = vmatprep.subr.bf16.mxu0 0
      %443 = vmatpush1.bf16.msra.mxu0 0
      %444 = vmatprep.mubr.bf16.mxu0 0
      %445 = vmatmul.mubr.bf16.gmra.mrb[0].mxu0 %v361
      %v446 = vpop.f32.mrb[0].mxu0
      %v447 = vadd.f32 0.0, %v446
      %v448 = vpop.f32.mrb[0].mxu0
      %v449 = vpop.f32.mrb[0].mxu0
      %v450 = vadd.f32 0.0, %v449
      %v451 = vpop.f32.mrb[0].mxu0
      %452 = vmatprep.mubr.bf16.mxu0 0
      %453 = vmatmul.mubr.bf16.gmra.mrb[0].mxu0 %v364
      %v454 = vpop.f32.mrb[0].mxu0
      %v455 = vadd.f32 0.0, %v454
      %v456 = vpop.f32.mrb[0].mxu0
      %v457 = vpop.f32.mrb[0].mxu0
      %v458 = vadd.f32 0.0, %v457
      %v459 = vpop.f32.mrb[0].mxu0
      %460 = vmatprep.mubr.bf16.mxu0 0
      %461 = vmatmul.mubr.bf16.gmra.mrb[0].mxu0 %v367
      %v462 = vpop.f32.mrb[0].mxu0
      %v463 = vadd.f32 0.0, %v462
      %v464 = vpop.f32.mrb[0].mxu0
      %v465 = vpop.f32.mrb[0].mxu0
      %v466 = vadd.f32 0.0, %v465
      %v467 = vpop.f32.mrb[0].mxu0
      %468 = vmatprep.mubr.bf16.mxu0 0
      %469 = vmatmul.mubr.bf16.gmra.mrb[0].mxu0 %v370
      %v470 = vpop.f32.mrb[0].mxu0
      %v471 = vadd.f32 0.0, %v470
      %v472 = vpop.f32.mrb[0].mxu0
      %v473 = vpop.f32.mrb[0].mxu0
      %v474 = vadd.f32 0.0, %v473
      %v475 = vpop.f32.mrb[0].mxu0
      %476 = vmatprep.mubr.bf16.mxu0 0
      %477 = vmatmul.mubr.bf16.gmra.mrb[0].mxu0 %v373
      %v478 = vpop.f32.mrb[0].mxu0
      %v479 = vadd.f32 0.0, %v478
      %v480 = vpop.f32.mrb[0].mxu0
      %v481 = vpop.f32.mrb[0].mxu0
      %v482 = vadd.f32 0.0, %v481
      %v483 = vpop.f32.mrb[0].mxu0
      %484 = vmatprep.mubr.bf16.mxu0 0
      %485 = vmatmul.mubr.bf16.gmra.mrb[0].mxu0 %v376
      %v486 = vpop.f32.mrb[0].mxu0
      %v487 = vadd.f32 0.0, %v486
      %v488 = vpop.f32.mrb[0].mxu0
      %v489 = vpop.f32.mrb[0].mxu0
      %v490 = vadd.f32 0.0, %v489
      %v491 = vpop.f32.mrb[0].mxu0
      %492 = vmatprep.mubr.bf16.mxu0 0
      %493 = vmatmul.mubr.bf16.gmra.mrb[0].mxu0 %v379
      %v494 = vpop.f32.mrb[0].mxu0
      %v495 = vadd.f32 0.0, %v494
      %v496 = vpop.f32.mrb[0].mxu0
      %v497 = vpop.f32.mrb[0].mxu0
      %v498 = vadd.f32 0.0, %v497
      %v499 = vpop.f32.mrb[0].mxu0
      %500 = vmatprep.mubr.bf16.mxu0 0
      %501 = vmatmul.mubr.bf16.gmra.mrb[0].mxu0 %v382
      %v502 = vpop.f32.mrb[0].mxu0
      %v503 = vadd.f32 0.0, %v502
      %v504 = vpop.f32.mrb[0].mxu0
      %v505 = vpop.f32.mrb[0].mxu0
      %v506 = vadd.f32 0.0, %v505
      %v507 = vpop.f32.mrb[0].mxu0
      %508 = vmatprep.mubr.bf16.mxu0 0
      %509 = vmatmul.mubr.bf16.gmra.mrb[0].mxu0 %v385
      %v510 = vpop.f32.mrb[0].mxu0
      %v511 = vadd.f32 0.0, %v510
      %v512 = vpop.f32.mrb[0].mxu0
      %v513 = vpop.f32.mrb[0].mxu0
      %v514 = vadd.f32 0.0, %v513
      %v515 = vpop.f32.mrb[0].mxu0
      %516 = vmatprep.mubr.bf16.mxu0 0
      %517 = vmatmul.mubr.bf16.gmra.mrb[0].mxu0 %v388
      %v518 = vpop.f32.mrb[0].mxu0
      %v519 = vadd.f32 0.0, %v518
      %v520 = vpop.f32.mrb[0].mxu0
      %v521 = vpop.f32.mrb[0].mxu0
      %v522 = vadd.f32 0.0, %v521
      %v523 = vpop.f32.mrb[0].mxu0
      %524 = vmatprep.mubr.bf16.mxu0 0
      %525 = vmatmul.mubr.bf16.gmra.mrb[0].mxu0 %v391
      %v526 = vpop.f32.mrb[0].mxu0
      %v527 = vadd.f32 0.0, %v526
      %v528 = vpop.f32.mrb[0].mxu0
      %v529 = vpop.f32.mrb[0].mxu0
      %v530 = vadd.f32 0.0, %v529
      %v531 = vpop.f32.mrb[0].mxu0
      %532 = vmatprep.mubr.bf16.mxu0 0
      %533 = vmatmul.mubr.bf16.gmra.mrb[0].mxu0 %v394
      %v534 = vpop.f32.mrb[0].mxu0
      %v535 = vadd.f32 0.0, %v534
      %v536 = vpop.f32.mrb[0].mxu0
      %v537 = vpop.f32.mrb[0].mxu0
      %v538 = vadd.f32 0.0, %v537
      %v539 = vpop.f32.mrb[0].mxu0
      %540 = vmatprep.mubr.bf16.mxu0 0
      %541 = vmatmul.mubr.bf16.gmra.mrb[0].mxu0 %v397
      %v542 = vpop.f32.mrb[0].mxu0
      %v543 = vadd.f32 0.0, %v542
      %v544 = vpop.f32.mrb[0].mxu0
      %v545 = vpop.f32.mrb[0].mxu0
      %v546 = vadd.f32 0.0, %v545
      %v547 = vpop.f32.mrb[0].mxu0
      %548 = vmatprep.mubr.bf16.mxu0 0
      %549 = vmatmul.mubr.bf16.gmra.mrb[0].mxu0 %v400
      %v550 = vpop.f32.mrb[0].mxu0
      %v551 = vadd.f32 0.0, %v550
      %v552 = vpop.f32.mrb[0].mxu0
      %v553 = vpop.f32.mrb[0].mxu0
      %v554 = vadd.f32 0.0, %v553
      %v555 = vpop.f32.mrb[0].mxu0
      %556 = vmatprep.mubr.bf16.mxu0 0
      %557 = vmatmul.mubr.bf16.gmra.mrb[0].mxu0 %v403
      %v558 = vpop.f32.mrb[0].mxu0
      %v559 = vadd.f32 0.0, %v558
      %v560 = vpop.f32.mrb[0].mxu0
      %v561 = vpop.f32.mrb[0].mxu0
      %v562 = vadd.f32 0.0, %v561
      %v563 = vpop.f32.mrb[0].mxu0
      %564 = vmatprep.mubr.bf16.mxu0 0
      %565 = vmatmul.mubr.bf16.gmra.mrb[0].mxu0 %v406
      %v566 = vpop.f32.mrb[0].mxu0
      %v567 = vadd.f32 0.0, %v566
      %v568 = vpop.f32.mrb[0].mxu0
      %v569 = vpop.f32.mrb[0].mxu0
      %v570 = vadd.f32 0.0, %v569
      %v571 = vpop.f32.mrb[0].mxu0
      %572 = vdwg.mxu0
      %v573 = vld [vmem:[%s239] sm:$0xf]
      %v574 = vld [vmem:[%s239 + $0x4] sm:$0xf]
      %v575 = vld [vmem:[%s239 + $0x8] sm:$0xf]
      %v576 = vld [vmem:[%s239 + $0xc] sm:$0xf]
      %v577 = vld [vmem:[%s239 + $0x10] sm:$0xf]
      %v578 = vld [vmem:[%s239 + $0x14] sm:$0xf]
      %v579 = vld [vmem:[%s239 + $0x18] sm:$0xf]
      %v580 = vld [vmem:[%s239 + $0x1c] sm:$0xf]
      %v581 = vld [vmem:[%s239 + $0x20] sm:$0xf]
      %v582 = vld [vmem:[%s239 + $0x24] sm:$0xf]
      %v583 = vld [vmem:[%s239 + $0x28] sm:$0xf]
      %v584 = vld [vmem:[%s239 + $0x2c] sm:$0xf]
      %v585 = vld [vmem:[%s239 + $0x30] sm:$0xf]
      %v586 = vld [vmem:[%s239 + $0x34] sm:$0xf]
      %v587 = vld [vmem:[%s239 + $0x38] sm:$0xf]
      %v588 = vld [vmem:[%s239 + $0x3c] sm:$0xf]
      %v589 = vld [vmem:[%s239 + $0x40] sm:$0xf]
      %v590 = vld [vmem:[%s239 + $0x44] sm:$0xf]
      %v591 = vld [vmem:[%s239 + $0x48] sm:$0xf]
      %v592 = vld [vmem:[%s239 + $0x4c] sm:$0xf]
      %v593 = vld [vmem:[%s239 + $0x50] sm:$0xf]
      %v594 = vld [vmem:[%s239 + $0x54] sm:$0xf]
      %v595 = vld [vmem:[%s239 + $0x58] sm:$0xf]
      %v596 = vld [vmem:[%s239 + $0x5c] sm:$0xf]
      %v597 = vld [vmem:[%s239 + $0x60] sm:$0xf]
      %v598 = vld [vmem:[%s239 + $0x64] sm:$0xf]
      %v599 = vld [vmem:[%s239 + $0x68] sm:$0xf]
      %v600 = vld [vmem:[%s239 + $0x6c] sm:$0xf]
      %v601 = vld [vmem:[%s239 + $0x70] sm:$0xf]
      %v602 = vld [vmem:[%s239 + $0x74] sm:$0xf]
      %v603 = vld [vmem:[%s239 + $0x78] sm:$0xf]
      %v604 = vld [vmem:[%s239 + $0x7c] sm:$0xf]
      %v605 = vld [vmem:[%s3] sm:$0xf]
      %v638 = vunpack.c.l.b16 %v573
      %v639 = vunpack.c.l.b16 %v574
      %v640 = vunpack.c.l.b16 %v575
      %v641 = vunpack.c.l.b16 %v576
      %v642 = vunpack.c.l.b16 %v577
      %v643 = vunpack.c.l.b16 %v578
      %v644 = vunpack.c.l.b16 %v579
      %v645 = vunpack.c.l.b16 %v580
      %v646 = vunpack.c.l.b16 %v581
      %v647 = vunpack.c.l.b16 %v582
      %v648 = vunpack.c.l.b16 %v583
      %v649 = vunpack.c.l.b16 %v584
      %v650 = vunpack.c.l.b16 %v585
      %v651 = vunpack.c.l.b16 %v586
      %v652 = vunpack.c.l.b16 %v587
      %v653 = vunpack.c.l.b16 %v588
      %v654 = vunpack.c.l.b16 %v589
      %v655 = vunpack.c.l.b16 %v590
      %v656 = vunpack.c.l.b16 %v591
      %v657 = vunpack.c.l.b16 %v592
      %v658 = vunpack.c.l.b16 %v593
      %v659 = vunpack.c.l.b16 %v594
      %v660 = vunpack.c.l.b16 %v595
      %v661 = vunpack.c.l.b16 %v596
      %v662 = vunpack.c.l.b16 %v597
      %v663 = vunpack.c.l.b16 %v598
      %v664 = vunpack.c.l.b16 %v599
      %v665 = vunpack.c.l.b16 %v600
      %v666 = vunpack.c.l.b16 %v601
      %v667 = vunpack.c.l.b16 %v602
      %v668 = vunpack.c.l.b16 %v603
      %v669 = vunpack.c.l.b16 %v604
      %v670 = vpack.c.b16 %v639, %v638
      %v671 = vpack.c.b16 %v641, %v640
      %v672 = vpack.c.b16 %v643, %v642
      %v673 = vpack.c.b16 %v645, %v644
      %v674 = vpack.c.b16 %v647, %v646
      %v675 = vpack.c.b16 %v649, %v648
      %v676 = vpack.c.b16 %v651, %v650
      %v677 = vpack.c.b16 %v653, %v652
      %v678 = vpack.c.b16 %v655, %v654
      %v679 = vpack.c.b16 %v657, %v656
      %v680 = vpack.c.b16 %v659, %v658
      %v681 = vpack.c.b16 %v661, %v660
      %v682 = vpack.c.b16 %v663, %v662
      %v683 = vpack.c.b16 %v665, %v664
      %v684 = vpack.c.b16 %v667, %v666
      %v685 = vpack.c.b16 %v669, %v668
      %v687 = vsel %vm359, %v670, 0
      %v690 = vsel %vm359, %v671, 0
      %v693 = vsel %vm359, %v672, 0
      %v696 = vsel %vm359, %v673, 0
      %v699 = vsel %vm359, %v674, 0
      %v702 = vsel %vm359, %v675, 0
      %v705 = vsel %vm359, %v676, 0
      %v708 = vsel %vm359, %v677, 0
      %v711 = vsel %vm359, %v678, 0
      %v714 = vsel %vm359, %v679, 0
      %v717 = vsel %vm359, %v680, 0
      %v720 = vsel %vm359, %v681, 0
      %v723 = vsel %vm359, %v682, 0
      %v726 = vsel %vm359, %v683, 0
      %v729 = vsel %vm359, %v684, 0
      %v732 = vsel %vm359, %v685, 0
      %v735 = vsel %vm408, %v605, 0
      %737 = vmatprep.subr.bf16.mxu0 0
      %738 = vmatpush1.bf16.msra.mxu0 %v735
      %739 = vmatprep.subr.bf16.mxu0 0
      %740 = vmatpush1.bf16.msra.mxu0 0
      %741 = vmatprep.subr.bf16.mxu0 0
      %742 = vmatpush1.bf16.msra.mxu0 0
      %743 = vmatprep.subr.bf16.mxu0 0
      %744 = vmatpush1.bf16.msra.mxu0 0
      %745 = vmatprep.subr.bf16.mxu0 0
      %746 = vmatpush1.bf16.msra.mxu0 0
      %747 = vmatprep.subr.bf16.mxu0 0
      %748 = vmatpush1.bf16.msra.mxu0 0
      %749 = vmatprep.subr.bf16.mxu0 0
      %750 = vmatpush1.bf16.msra.mxu0 0
      %751 = vmatprep.subr.bf16.mxu0 0
      %752 = vmatpush1.bf16.msra.mxu0 0
      %753 = vmatprep.subr.bf16.mxu0 0
      %754 = vmatpush1.bf16.msra.mxu0 0
      %755 = vmatprep.subr.bf16.mxu0 0
      %756 = vmatpush1.bf16.msra.mxu0 0
      %757 = vmatprep.subr.bf16.mxu0 0
      %758 = vmatpush1.bf16.msra.mxu0 0
      %759 = vmatprep.subr.bf16.mxu0 0
      %760 = vmatpush1.bf16.msra.mxu0 0
      %761 = vmatprep.subr.bf16.mxu0 0
      %762 = vmatpush1.bf16.msra.mxu0 0
      %763 = vmatprep.subr.bf16.mxu0 0
      %764 = vmatpush1.bf16.msra.mxu0 0
      %765 = vmatprep.subr.bf16.mxu0 0
      %766 = vmatpush1.bf16.msra.mxu0 0
      %767 = vmatprep.subr.bf16.mxu0 0
      %768 = vmatpush1.bf16.msra.mxu0 0
      %769 = vmatprep.mubr.bf16.mxu0 0
      %770 = vmatmul.mubr.bf16.gmra.mrb[0].mxu0 %v687
      %v771 = vpop.f32.mrb[0].mxu0
      %v772 = vadd.f32 0.0, %v771
      %v773 = vpop.f32.mrb[0].mxu0
      %v774 = vpop.f32.mrb[0].mxu0
      %v775 = vadd.f32 0.0, %v774
      %v776 = vpop.f32.mrb[0].mxu0
      %777 = vmatprep.mubr.bf16.mxu0 0
      %778 = vmatmul.mubr.bf16.gmra.mrb[0].mxu0 %v690
      %v779 = vpop.f32.mrb[0].mxu0
      %v780 = vadd.f32 0.0, %v779
      %v781 = vpop.f32.mrb[0].mxu0
      %v782 = vpop.f32.mrb[0].mxu0
      %v783 = vadd.f32 0.0, %v782
      %v784 = vpop.f32.mrb[0].mxu0
      %785 = vmatprep.mubr.bf16.mxu0 0
      %786 = vmatmul.mubr.bf16.gmra.mrb[0].mxu0 %v693
      %v787 = vpop.f32.mrb[0].mxu0
      %v788 = vadd.f32 0.0, %v787
      %v789 = vpop.f32.mrb[0].mxu0
      %v790 = vpop.f32.mrb[0].mxu0
      %v791 = vadd.f32 0.0, %v790
      %v792 = vpop.f32.mrb[0].mxu0
      %793 = vmatprep.mubr.bf16.mxu0 0
      %794 = vmatmul.mubr.bf16.gmra.mrb[0].mxu0 %v696
      %v795 = vpop.f32.mrb[0].mxu0
      %v796 = vadd.f32 0.0, %v795
      %v797 = vpop.f32.mrb[0].mxu0
      %v798 = vpop.f32.mrb[0].mxu0
      %v799 = vadd.f32 0.0, %v798
      %v800 = vpop.f32.mrb[0].mxu0
      %801 = vmatprep.mubr.bf16.mxu0 0
      %802 = vmatmul.mubr.bf16.gmra.mrb[0].mxu0 %v699
      %v803 = vpop.f32.mrb[0].mxu0
      %v804 = vadd.f32 0.0, %v803
      %v805 = vpop.f32.mrb[0].mxu0
      %v806 = vpop.f32.mrb[0].mxu0
      %v807 = vadd.f32 0.0, %v806
      %v808 = vpop.f32.mrb[0].mxu0
      %809 = vmatprep.mubr.bf16.mxu0 0
      %810 = vmatmul.mubr.bf16.gmra.mrb[0].mxu0 %v702
      %v811 = vpop.f32.mrb[0].mxu0
      %v812 = vadd.f32 0.0, %v811
      %v813 = vpop.f32.mrb[0].mxu0
      %v814 = vpop.f32.mrb[0].mxu0
      %v815 = vadd.f32 0.0, %v814
      %v816 = vpop.f32.mrb[0].mxu0
      %817 = vmatprep.mubr.bf16.mxu0 0
      %818 = vmatmul.mubr.bf16.gmra.mrb[0].mxu0 %v705
      %v819 = vpop.f32.mrb[0].mxu0
      %v820 = vadd.f32 0.0, %v819
      %v821 = vpop.f32.mrb[0].mxu0
      %v822 = vpop.f32.mrb[0].mxu0
      %v823 = vadd.f32 0.0, %v822
      %v824 = vpop.f32.mrb[0].mxu0
      %825 = vmatprep.mubr.bf16.mxu0 0
      %826 = vmatmul.mubr.bf16.gmra.mrb[0].mxu0 %v708
      %v827 = vpop.f32.mrb[0].mxu0
      %v828 = vadd.f32 0.0, %v827
      %v829 = vpop.f32.mrb[0].mxu0
      %v830 = vpop.f32.mrb[0].mxu0
      %v831 = vadd.f32 0.0, %v830
      %v832 = vpop.f32.mrb[0].mxu0
      %833 = vmatprep.mubr.bf16.mxu0 0
      %834 = vmatmul.mubr.bf16.gmra.mrb[0].mxu0 %v711
      %v835 = vpop.f32.mrb[0].mxu0
      %v836 = vadd.f32 0.0, %v835
      %v837 = vpop.f32.mrb[0].mxu0
      %v838 = vpop.f32.mrb[0].mxu0
      %v839 = vadd.f32 0.0, %v838
      %v840 = vpop.f32.mrb[0].mxu0
      %841 = vmatprep.mubr.bf16.mxu0 0
      %842 = vmatmul.mubr.bf16.gmra.mrb[0].mxu0 %v714
      %v843 = vpop.f32.mrb[0].mxu0
      %v844 = vadd.f32 0.0, %v843
      %v845 = vpop.f32.mrb[0].mxu0
      %v846 = vpop.f32.mrb[0].mxu0
      %v847 = vadd.f32 0.0, %v846
      %v848 = vpop.f32.mrb[0].mxu0
      %849 = vmatprep.mubr.bf16.mxu0 0
      %850 = vmatmul.mubr.bf16.gmra.mrb[0].mxu0 %v717
      %v851 = vpop.f32.mrb[0].mxu0
      %v852 = vadd.f32 0.0, %v851
      %v853 = vpop.f32.mrb[0].mxu0
      %v854 = vpop.f32.mrb[0].mxu0
      %v855 = vadd.f32 0.0, %v854
      %v856 = vpop.f32.mrb[0].mxu0
      %857 = vmatprep.mubr.bf16.mxu0 0
      %858 = vmatmul.mubr.bf16.gmra.mrb[0].mxu0 %v720
      %v859 = vpop.f32.mrb[0].mxu0
      %v860 = vadd.f32 0.0, %v859
      %v861 = vpop.f32.mrb[0].mxu0
      %v862 = vpop.f32.mrb[0].mxu0
      %v863 = vadd.f32 0.0, %v862
      %v864 = vpop.f32.mrb[0].mxu0
      %865 = vmatprep.mubr.bf16.mxu0 0
      %866 = vmatmul.mubr.bf16.gmra.mrb[0].mxu0 %v723
      %v867 = vpop.f32.mrb[0].mxu0
      %v868 = vadd.f32 0.0, %v867
      %v869 = vpop.f32.mrb[0].mxu0
      %v870 = vpop.f32.mrb[0].mxu0
      %v871 = vadd.f32 0.0, %v870
      %v872 = vpop.f32.mrb[0].mxu0
      %873 = vmatprep.mubr.bf16.mxu0 0
      %874 = vmatmul.mubr.bf16.gmra.mrb[0].mxu0 %v726
      %v875 = vpop.f32.mrb[0].mxu0
      %v876 = vadd.f32 0.0, %v875
      %v877 = vpop.f32.mrb[0].mxu0
      %v878 = vpop.f32.mrb[0].mxu0
      %v879 = vadd.f32 0.0, %v878
      %v880 = vpop.f32.mrb[0].mxu0
      %881 = vmatprep.mubr.bf16.mxu0 0
      %882 = vmatmul.mubr.bf16.gmra.mrb[0].mxu0 %v729
      %v883 = vpop.f32.mrb[0].mxu0
      %v884 = vadd.f32 0.0, %v883
      %v885 = vpop.f32.mrb[0].mxu0
      %v886 = vpop.f32.mrb[0].mxu0
      %v887 = vadd.f32 0.0, %v886
      %v888 = vpop.f32.mrb[0].mxu0
      %889 = vmatprep.mubr.bf16.mxu0 0
      %890 = vmatmul.mubr.bf16.gmra.mrb[0].mxu0 %v732
      %v891 = vpop.f32.mrb[0].mxu0
      %v892 = vadd.f32 0.0, %v891
      %v893 = vpop.f32.mrb[0].mxu0
      %v894 = vpop.f32.mrb[0].mxu0
      %v895 = vadd.f32 0.0, %v894
      %v896 = vpop.f32.mrb[0].mxu0
      %897 = vdwg.mxu0
      %930 = vrot.lane.b32.xlu0 %v772, 4
      %v931 = vpop.permute.xlu0 %930
      %932 = vrot.lane.b32.xlu0 %v775, 4
      %v933 = vpop.permute.xlu0 %932
      %934 = vrot.lane.b32.xlu0 %v780, 4
      %v935 = vpop.permute.xlu0 %934
      %936 = vrot.lane.b32.xlu0 %v783, 4
      %v937 = vpop.permute.xlu0 %936
      %938 = vrot.lane.b32.xlu0 %v788, 4
      %v939 = vpop.permute.xlu0 %938
      %940 = vrot.lane.b32.xlu0 %v791, 4
      %v941 = vpop.permute.xlu0 %940
      %942 = vrot.lane.b32.xlu0 %v796, 4
      %v943 = vpop.permute.xlu0 %942
      %944 = vrot.lane.b32.xlu0 %v799, 4
      %v945 = vpop.permute.xlu0 %944
      %946 = vrot.lane.b32.xlu0 %v804, 4
      %v947 = vpop.permute.xlu0 %946
      %948 = vrot.lane.b32.xlu0 %v807, 4
      %v949 = vpop.permute.xlu0 %948
      %950 = vrot.lane.b32.xlu0 %v812, 4
      %v951 = vpop.permute.xlu0 %950
      %952 = vrot.lane.b32.xlu0 %v815, 4
      %v953 = vpop.permute.xlu0 %952
      %954 = vrot.lane.b32.xlu0 %v820, 4
      %v955 = vpop.permute.xlu0 %954
      %956 = vrot.lane.b32.xlu0 %v823, 4
      %v957 = vpop.permute.xlu0 %956
      %958 = vrot.lane.b32.xlu0 %v828, 4
      %v959 = vpop.permute.xlu0 %958
      %960 = vrot.lane.b32.xlu0 %v831, 4
      %v961 = vpop.permute.xlu0 %960
      %962 = vrot.lane.b32.xlu0 %v836, 4
      %v963 = vpop.permute.xlu0 %962
      %964 = vrot.lane.b32.xlu0 %v839, 4
      %v965 = vpop.permute.xlu0 %964
      %966 = vrot.lane.b32.xlu0 %v844, 4
      %v967 = vpop.permute.xlu0 %966
      %968 = vrot.lane.b32.xlu0 %v847, 4
      %v969 = vpop.permute.xlu0 %968
      %970 = vrot.lane.b32.xlu0 %v852, 4
      %v971 = vpop.permute.xlu0 %970
      %972 = vrot.lane.b32.xlu0 %v855, 4
      %v973 = vpop.permute.xlu0 %972
      %974 = vrot.lane.b32.xlu0 %v860, 4
      %v975 = vpop.permute.xlu0 %974
      %976 = vrot.lane.b32.xlu0 %v863, 4
      %v977 = vpop.permute.xlu0 %976
      %978 = vrot.lane.b32.xlu0 %v868, 4
      %v979 = vpop.permute.xlu0 %978
      %980 = vrot.lane.b32.xlu0 %v871, 4
      %v981 = vpop.permute.xlu0 %980
      %982 = vrot.lane.b32.xlu0 %v876, 4
      %v983 = vpop.permute.xlu0 %982
      %984 = vrot.lane.b32.xlu0 %v879, 4
      %v985 = vpop.permute.xlu0 %984
      %986 = vrot.lane.b32.xlu0 %v884, 4
      %v987 = vpop.permute.xlu0 %986
      %988 = vrot.lane.b32.xlu0 %v887, 4
      %v989 = vpop.permute.xlu0 %988
      %990 = vrot.lane.b32.xlu0 %v892, 4
      %v991 = vpop.permute.xlu0 %990
      %992 = vrot.lane.b32.xlu0 %v895, 4
      %v993 = vpop.permute.xlu0 %992
      %vm1026 = vcmask 31744
      %v1027 = vsel %vm1026, %v447, %v931
      %v1028 = vsel %vm1026, %v450, %v933
      %v1029 = vsel %vm1026, %v455, %v935
      %v1030 = vsel %vm1026, %v458, %v937
      %v1031 = vsel %vm1026, %v463, %v939
      %v1032 = vsel %vm1026, %v466, %v941
      %v1033 = vsel %vm1026, %v471, %v943
      %v1034 = vsel %vm1026, %v474, %v945
      %v1035 = vsel %vm1026, %v479, %v947
      %v1036 = vsel %vm1026, %v482, %v949
      %v1037 = vsel %vm1026, %v487, %v951
      %v1038 = vsel %vm1026, %v490, %v953
      %v1039 = vsel %vm1026, %v495, %v955
      %v1040 = vsel %vm1026, %v498, %v957
      %v1041 = vsel %vm1026, %v503, %v959
      %v1042 = vsel %vm1026, %v506, %v961
      %v1043 = vsel %vm1026, %v511, %v963
      %v1044 = vsel %vm1026, %v514, %v965
      %v1045 = vsel %vm1026, %v519, %v967
      %v1046 = vsel %vm1026, %v522, %v969
      %v1047 = vsel %vm1026, %v527, %v971
      %v1048 = vsel %vm1026, %v530, %v973
      %v1049 = vsel %vm1026, %v535, %v975
      %v1050 = vsel %vm1026, %v538, %v977
      %v1051 = vsel %vm1026, %v543, %v979
      %v1052 = vsel %vm1026, %v546, %v981
      %v1053 = vsel %vm1026, %v551, %v983
      %v1054 = vsel %vm1026, %v554, %v985
      %v1055 = vsel %vm1026, %v559, %v987
      %v1056 = vsel %vm1026, %v562, %v989
      %v1057 = vsel %vm1026, %v567, %v991
      %v1058 = vsel %vm1026, %v570, %v993
      %v1059 = vld [vmem:[%s4] sm:$0x1]
      %v1061 = vlaneseq
      %v1062 = vshrl.u32 %v1061, 7
      %v1063 = vsub.s32 0, %v1062
      %v1064 = vrot.slane %v1059, %v1063
      %v1066 = vadd.f32 %v1027, %v1064
      %v1067 = vadd.f32 %v1028, %v1064
      %v1068 = vadd.f32 %v1029, %v1064
      %v1069 = vadd.f32 %v1030, %v1064
      %v1070 = vadd.f32 %v1031, %v1064
      %v1071 = vadd.f32 %v1032, %v1064
      %v1072 = vadd.f32 %v1033, %v1064
      %v1073 = vadd.f32 %v1034, %v1064
      %v1074 = vadd.f32 %v1035, %v1064
      %v1075 = vadd.f32 %v1036, %v1064
      %v1076 = vadd.f32 %v1037, %v1064
      %v1077 = vadd.f32 %v1038, %v1064
      %v1078 = vadd.f32 %v1039, %v1064
      %v1079 = vadd.f32 %v1040, %v1064
      %v1080 = vadd.f32 %v1041, %v1064
      %v1081 = vadd.f32 %v1042, %v1064
      %v1082 = vadd.f32 %v1043, %v1064
      %v1083 = vadd.f32 %v1044, %v1064
      %v1084 = vadd.f32 %v1045, %v1064
      %v1085 = vadd.f32 %v1046, %v1064
      %v1086 = vadd.f32 %v1047, %v1064
      %v1087 = vadd.f32 %v1048, %v1064
      %v1088 = vadd.f32 %v1049, %v1064
      %v1089 = vadd.f32 %v1050, %v1064
      %v1090 = vadd.f32 %v1051, %v1064
      %v1091 = vadd.f32 %v1052, %v1064
      %v1092 = vadd.f32 %v1053, %v1064
      %v1093 = vadd.f32 %v1054, %v1064
      %v1094 = vadd.f32 %v1055, %v1064
      %v1095 = vadd.f32 %v1056, %v1064
      %v1096 = vadd.f32 %v1057, %v1064
      %v1097 = vadd.f32 %v1058, %v1064
      %v1098 = vmax.f32 %v1066, 0.0
      %v1099 = vmax.f32 %v1067, 0.0
      %v1100 = vmax.f32 %v1068, 0.0
      %v1101 = vmax.f32 %v1069, 0.0
      %v1102 = vmax.f32 %v1070, 0.0
      %v1103 = vmax.f32 %v1071, 0.0
      %v1104 = vmax.f32 %v1072, 0.0
      %v1105 = vmax.f32 %v1073, 0.0
      %v1106 = vmax.f32 %v1074, 0.0
      %v1107 = vmax.f32 %v1075, 0.0
      %v1108 = vmax.f32 %v1076, 0.0
      %v1109 = vmax.f32 %v1077, 0.0
      %v1110 = vmax.f32 %v1078, 0.0
      %v1111 = vmax.f32 %v1079, 0.0
      %v1112 = vmax.f32 %v1080, 0.0
      %v1113 = vmax.f32 %v1081, 0.0
      %v1114 = vmax.f32 %v1082, 0.0
      %v1115 = vmax.f32 %v1083, 0.0
      %v1116 = vmax.f32 %v1084, 0.0
      %v1117 = vmax.f32 %v1085, 0.0
      %v1118 = vmax.f32 %v1086, 0.0
      %v1119 = vmax.f32 %v1087, 0.0
      %v1120 = vmax.f32 %v1088, 0.0
      %v1121 = vmax.f32 %v1089, 0.0
      %v1122 = vmax.f32 %v1090, 0.0
      %v1123 = vmax.f32 %v1091, 0.0
      %v1124 = vmax.f32 %v1092, 0.0
      %v1125 = vmax.f32 %v1093, 0.0
      %v1126 = vmax.f32 %v1094, 0.0
      %v1127 = vmax.f32 %v1095, 0.0
      %v1128 = vmax.f32 %v1096, 0.0
      %v1129 = vmax.f32 %v1097, 0.0
      %v1130 = vpack.c.bf16 %v1099, %v1098
      %v1131 = vpack.c.bf16 %v1101, %v1100
      %v1132 = vpack.c.bf16 %v1103, %v1102
      %v1133 = vpack.c.bf16 %v1105, %v1104
      %v1134 = vpack.c.bf16 %v1107, %v1106
      %v1135 = vpack.c.bf16 %v1109, %v1108
      %v1136 = vpack.c.bf16 %v1111, %v1110
      %v1137 = vpack.c.bf16 %v1113, %v1112
      %v1138 = vpack.c.bf16 %v1115, %v1114
      %v1139 = vpack.c.bf16 %v1117, %v1116
      %v1140 = vpack.c.bf16 %v1119, %v1118
      %v1141 = vpack.c.bf16 %v1121, %v1120
      %v1142 = vpack.c.bf16 %v1123, %v1122
      %v1143 = vpack.c.bf16 %v1125, %v1124
      %v1144 = vpack.c.bf16 %v1127, %v1126
      %v1145 = vpack.c.bf16 %v1129, %v1128
      %v1162 = vunpack.c.l.b16 %v1130
      %v1163 = vunpack.c.h.b16 %v1130
      %v1164 = vunpack.c.l.b16 %v1131
      %v1165 = vunpack.c.h.b16 %v1131
      %v1166 = vunpack.c.l.b16 %v1132
      %v1167 = vunpack.c.h.b16 %v1132
      %v1168 = vunpack.c.l.b16 %v1133
      %v1169 = vunpack.c.h.b16 %v1133
      %v1170 = vunpack.c.l.b16 %v1134
      %v1171 = vunpack.c.h.b16 %v1134
      %v1172 = vunpack.c.l.b16 %v1135
      %v1173 = vunpack.c.h.b16 %v1135
      %v1174 = vunpack.c.l.b16 %v1136
      %v1175 = vunpack.c.h.b16 %v1136
      %v1176 = vunpack.c.l.b16 %v1137
      %v1177 = vunpack.c.h.b16 %v1137
      %v1178 = vunpack.c.l.b16 %v1138
      %v1179 = vunpack.c.h.b16 %v1138
      %v1180 = vunpack.c.l.b16 %v1139
      %v1181 = vunpack.c.h.b16 %v1139
      %v1182 = vunpack.c.l.b16 %v1140
      %v1183 = vunpack.c.h.b16 %v1140
      %v1184 = vunpack.c.l.b16 %v1141
      %v1185 = vunpack.c.h.b16 %v1141
      %v1186 = vunpack.c.l.b16 %v1142
      %v1187 = vunpack.c.h.b16 %v1142
      %v1188 = vunpack.c.l.b16 %v1143
      %v1189 = vunpack.c.h.b16 %v1143
      %v1190 = vunpack.c.l.b16 %v1144
      %v1191 = vunpack.c.h.b16 %v1144
      %v1192 = vunpack.c.l.b16 %v1145
      %v1193 = vunpack.c.h.b16 %v1145
      %v1194 = vpack.c.b16 %v1162, %v1162
      %v1195 = vpack.c.b16 %v1163, %v1163
      %v1196 = vpack.c.b16 %v1164, %v1164
      %v1197 = vpack.c.b16 %v1165, %v1165
      %v1198 = vpack.c.b16 %v1166, %v1166
      %v1199 = vpack.c.b16 %v1167, %v1167
      %v1200 = vpack.c.b16 %v1168, %v1168
      %v1201 = vpack.c.b16 %v1169, %v1169
      %v1202 = vpack.c.b16 %v1170, %v1170
      %v1203 = vpack.c.b16 %v1171, %v1171
      %v1204 = vpack.c.b16 %v1172, %v1172
      %v1205 = vpack.c.b16 %v1173, %v1173
      %v1206 = vpack.c.b16 %v1174, %v1174
      %v1207 = vpack.c.b16 %v1175, %v1175
      %v1208 = vpack.c.b16 %v1176, %v1176
      %v1209 = vpack.c.b16 %v1177, %v1177
      %v1210 = vpack.c.b16 %v1178, %v1178
      %v1211 = vpack.c.b16 %v1179, %v1179
      %v1212 = vpack.c.b16 %v1180, %v1180
      %v1213 = vpack.c.b16 %v1181, %v1181
      %v1214 = vpack.c.b16 %v1182, %v1182
      %v1215 = vpack.c.b16 %v1183, %v1183
      %v1216 = vpack.c.b16 %v1184, %v1184
      %v1217 = vpack.c.b16 %v1185, %v1185
      %v1218 = vpack.c.b16 %v1186, %v1186
      %v1219 = vpack.c.b16 %v1187, %v1187
      %v1220 = vpack.c.b16 %v1188, %v1188
      %v1221 = vpack.c.b16 %v1189, %v1189
      %v1222 = vpack.c.b16 %v1190, %v1190
      %v1223 = vpack.c.b16 %v1191, %v1191
      %v1224 = vpack.c.b16 %v1192, %v1192
      %v1225 = vpack.c.b16 %v1193, %v1193
      %vm1258 = vcmask 60416
      %1259 = vst.msk [vmem:[%s244] sm:$0xf] %vm1258, %v1194
      %1260 = vst.msk [vmem:[%s244 + $0x4] sm:$0xf] %vm1258, %v1195
      %1261 = vst.msk [vmem:[%s244 + $0x8] sm:$0xf] %vm1258, %v1196
      %1262 = vst.msk [vmem:[%s244 + $0xc] sm:$0xf] %vm1258, %v1197
      %1263 = vst.msk [vmem:[%s244 + $0x10] sm:$0xf] %vm1258, %v1198
      %1264 = vst.msk [vmem:[%s244 + $0x14] sm:$0xf] %vm1258, %v1199
      %1265 = vst.msk [vmem:[%s244 + $0x18] sm:$0xf] %vm1258, %v1200
      %1266 = vst.msk [vmem:[%s244 + $0x1c] sm:$0xf] %vm1258, %v1201
      %1267 = vst.msk [vmem:[%s244 + $0x20] sm:$0xf] %vm1258, %v1202
      %1268 = vst.msk [vmem:[%s244 + $0x24] sm:$0xf] %vm1258, %v1203
      %1269 = vst.msk [vmem:[%s244 + $0x28] sm:$0xf] %vm1258, %v1204
      %1270 = vst.msk [vmem:[%s244 + $0x2c] sm:$0xf] %vm1258, %v1205
      %1271 = vst.msk [vmem:[%s244 + $0x30] sm:$0xf] %vm1258, %v1206
      %1272 = vst.msk [vmem:[%s244 + $0x34] sm:$0xf] %vm1258, %v1207
      %1273 = vst.msk [vmem:[%s244 + $0x38] sm:$0xf] %vm1258, %v1208
      %1274 = vst.msk [vmem:[%s244 + $0x3c] sm:$0xf] %vm1258, %v1209
      %1275 = vst.msk [vmem:[%s244 + $0x40] sm:$0xf] %vm1258, %v1210
      %1276 = vst.msk [vmem:[%s244 + $0x44] sm:$0xf] %vm1258, %v1211
      %1277 = vst.msk [vmem:[%s244 + $0x48] sm:$0xf] %vm1258, %v1212
      %1278 = vst.msk [vmem:[%s244 + $0x4c] sm:$0xf] %vm1258, %v1213
      %1279 = vst.msk [vmem:[%s244 + $0x50] sm:$0xf] %vm1258, %v1214
      %1280 = vst.msk [vmem:[%s244 + $0x54] sm:$0xf] %vm1258, %v1215
      %1281 = vst.msk [vmem:[%s244 + $0x58] sm:$0xf] %vm1258, %v1216
      %1282 = vst.msk [vmem:[%s244 + $0x5c] sm:$0xf] %vm1258, %v1217
      %1283 = vst.msk [vmem:[%s244 + $0x60] sm:$0xf] %vm1258, %v1218
      %1284 = vst.msk [vmem:[%s244 + $0x64] sm:$0xf] %vm1258, %v1219
      %1285 = vst.msk [vmem:[%s244 + $0x68] sm:$0xf] %vm1258, %v1220
      %1286 = vst.msk [vmem:[%s244 + $0x6c] sm:$0xf] %vm1258, %v1221
      %1287 = vst.msk [vmem:[%s244 + $0x70] sm:$0xf] %vm1258, %v1222
      %1288 = vst.msk [vmem:[%s244 + $0x74] sm:$0xf] %vm1258, %v1223
      %1289 = vst.msk [vmem:[%s244 + $0x78] sm:$0xf] %vm1258, %v1224
      %1290 = vst.msk [vmem:[%s244 + $0x7c] sm:$0xf] %vm1258, %v1225
      %p1291 = scmp.lt.s32.totalorder %s16, 1
      %s1292 = scalar_select %p1291, %s16, 1
      %s1293 = smul.addr %s1292, 32
      %s1294 = smul.addr %s1293, 4
      %s1295 = scalar_lea.vmem %s5, %s1294
      // Predicated region
      $region41: #{dar_forward.2} parent=39 // pred_check
        %p1296 = pneg %p149
      $region42: #{dar_forward.2} parent=39 // pred_check_branch
        %1298 = sbr.rel (%p1296) target = $region44
      $region43: #{dar_forward.2} parent=39 // pred_region
        _
      $region44: #{dar_forward.2} parent=39 // pred_fallthru
        _
    $region40: #{dar_forward.2} parent=5 // pred_fallthru
      _
    %p1299 = scmp.le.s32.totalorder 2, %s11
    // Predicated region
    $region45: #{dar_forward.2} parent=5 // pred_check
      %p1300 = pneg %p1299
    $region46: #{dar_forward.2} parent=5 // pred_check_branch
      %1302 = sbr.rel (%p1300) target = $region48
    $region47: #{dar_forward.2} parent=5 // pred_region
      %s1303 = ssub.s32 %s11, 2
      // Predicated region
      $region49: #{dar_forward.2} parent=47 // pred_check
        %p1304 = pneg %p155
      $region50: #{dar_forward.2} parent=47 // pred_check_branch
        %1306 = sbr.rel (%p1304) target = $region52
      $region51: #{dar_forward.2} parent=47 // pred_region
        %p1307 = scmp.lt.s32.totalorder %s17, 1
        %s1308 = scalar_select %p1307, %s17, 1
        %s1309 = smul.addr %s1308, 32
        %s1310 = smul.addr %s1309, 4
        %s1311 = scalar_lea.vmem %s5, %s1310
      $region52: #{dar_forward.2} parent=47 // pred_fallthru
        _
    $region48: #{dar_forward.2} parent=5 // pred_fallthru
      _
  $region6: #{dar_forward.2} parent=0 // loop_footer
    %s15 = sadd.s32 1, %s11
  $region7: #{dar_forward.2} parent=0 // loop_footer_branch
    %10 = sbr.rel target = $region3
  $region8: #{dar_forward.2} parent=0 // loop_exit
    _

// kernel: dar_forward.3
$region0: #{dar_forward.3}
  #allocation0 [shape = 'u32[]', space=smem, size = 0x4, offset = 0x4, fixed_abs, tag = 'smem constant byte address 0x4 - core index']
  #allocation1 [shape = 'u32[144,128]{1,0:T(1,128)}', space=vmem, size = 0x12000, scoped, tag = 'internal scratch']
  %s0 = inlined_call_operand.vmem [shape: bf16[2,26,26,8], index: 0, kind: input, shape index: {}]
  %s1 = inlined_call_operand.vmem [shape: bf16[72,8], index: 1, kind: input, shape index: {}]
  %s2 = inlined_call_operand.vmem [shape: f32[1,8], index: 2, kind: input, shape index: {}]
  %s3 = inlined_call_operand.vmem [shape: bf16[3,72,8], index: 3, kind: input, shape index: {}]
  %s4 = inlined_call_operand.vmem [shape: f32[3,1,8], index: 4, kind: input, shape index: {}]
  %s5 = inlined_call_operand.vmem [shape: bf16[12,4], index: 5, kind: input, shape index: {}]
  %s6 = inlined_call_operand.vmem [shape: f32[1,4], index: 6, kind: input, shape index: {}]
  %s7 = inlined_call_operand.vmem [shape: bf16[12,4], index: 7, kind: input, shape index: {}]
  %s8 = inlined_call_operand.vmem [shape: f32[1,4], index: 8, kind: input, shape index: {}]
  %s9 = inlined_call_operand.vmem [shape: bf16[4,8], index: 9, kind: input, shape index: {}]
  %s10 = inlined_call_operand.vmem [shape: f32[1,8], index: 10, kind: input, shape index: {}]
  %s11 = inlined_call_operand.vmem [shape: f32[2,256,8], index: 11, kind: output, shape index: {}]
  %s12 = sld [smem:[#allocation0]]
  $region77: #{dar_forward.3} parent=0
    _
  %s14 = ssub.s32 1, %s12
  %s15 = scalar_select 0, %s14, %s12
  loop: start=0, step=1, limit=4
  $region2: #{dar_forward.3} parent=0 // loop_pre_header
    _
  $region3: #{dar_forward.3} parent=0 // loop_header
    %s17 = sphi 0, %s21
    %p18 = scmp.ge.s32.totalorder %s17, 4
    %s27 = sphi 0, %s29
    %s30 = sphi 0, %s27
    %s31 = sphi 0, %s30
    %s47 = sphi 0, %s31
    %s51 = sphi 0, %s51
    %s53 = sphi 0, %s51
    %s54 = sphi 0, %s53
    %s68 = sphi 0, %s54
    %s72 = sphi 0, %s72
    %s74 = sphi 0, %s72
    %s75 = sphi 0, %s74
    %s89 = sphi 0, %s75
    %s93 = sphi 0, %s93
    %s95 = sphi 0, %s93
    %s96 = sphi 0, %s95
    %s110 = sphi 0, %s96
    %s114 = sphi 0, %s114
    %s116 = sphi 0, %s114
    %s117 = sphi 0, %s116
    %s131 = sphi 0, %s117
    %s135 = sphi 0, %s135
    %s137 = sphi 0, %s135
    %s138 = sphi 0, %s137
    %s152 = sphi 0, %s138
    %s156 = sphi 0, %s156
    %s158 = sphi 0, %s156
    %s159 = sphi 0, %s158
    %s173 = sphi 0, %s159
    %s177 = sphi 0, %s177
    %s179 = sphi 0, %s177
    %s180 = sphi 0, %s179
    %s194 = sphi 0, %s180
    %s198 = sphi 0, %s198
    %s200 = sphi 0, %s198
    %s201 = sphi 0, %s200
    %s215 = sphi 0, %s201
    %s219 = sphi 0, %s219
    %s221 = sphi 0, %s219
    %s222 = sphi 0, %s221
    %s236 = sphi 0, %s222
    %s240 = sphi 0, %s240
    %s242 = sphi 0, %s240
    %s243 = sphi 0, %s242
    %s257 = sphi 0, %s243
    %s263 = sphi 0, %s265
    %s266 = sphi 0, %s263
    %s267 = sphi 0, %s266
    %s283 = sphi 0, %s267
  $region4: #{dar_forward.3} parent=0 // loop_header_branch
    %20 = sbr.rel (%p18) target = $region8
  $region5: #{dar_forward.3} parent=0 // loop_body
    %s22 = ssub.s32 %s17, 1
    %s23 = ssub.s32 %s17, 2
    %s24 = sadd.s32 %s17, 1
    %s25 = ssub.s32 %s17, %s24
    %p26 = scmp.eq.s32.totalorder %s25, 0
    %s28 = sadd.s32 %s27, 1
    %s29 = scalar_select %p26, %s27, %s28
    %p32 = pneg %p26
    %p33 = scmp.eq.s32.totalorder %s17, 1
    %p34 = por %p32, %p33
    %p35 = scmp.ne.s32.totalorder %s27, %s30
    %p36 = scmp.eq.s32.totalorder %s17, 0
    %p37 = por %p35, %p36
    %p38 = scmp.ne.s32.totalorder %s27, %s30
    %p39 = scmp.eq.s32.totalorder %s22, 1
    %p40 = por %p38, %p39
    %p41 = scmp.ne.s32.totalorder %s30, %s31
    %p42 = scmp.eq.s32.totalorder %s22, 0
    %p43 = por %p41, %p42
    %p44 = scmp.ne.s32.totalorder %s30, %s31
    %p45 = scmp.eq.s32.totalorder %s23, 1
    %p46 = por %p44, %p45
    %p48 = scmp.ne.s32.totalorder %s31, %s47
    %p49 = scmp.eq.s32.totalorder %s23, 0
    %p50 = por %p48, %p49
    %s52 = sadd.s32 %s51, 1
    %p55 = scmp.eq.s32.totalorder %s17, 1
    %p56 = scmp.ne.s32.totalorder %s51, %s53
    %p57 = scmp.eq.s32.totalorder %s17, 0
    %p58 = por %p56, %p57
    %p59 = scmp.ne.s32.totalorder %s51, %s53
    %p60 = scmp.eq.s32.totalorder %s22, 1
    %p61 = por %p59, %p60
    %p62 = scmp.ne.s32.totalorder %s53, %s54
    %p63 = scmp.eq.s32.totalorder %s22, 0
    %p64 = por %p62, %p63
    %p65 = scmp.ne.s32.totalorder %s53, %s54
    %p66 = scmp.eq.s32.totalorder %s23, 1
    %p67 = por %p65, %p66
    %p69 = scmp.ne.s32.totalorder %s54, %s68
    %p70 = scmp.eq.s32.totalorder %s23, 0
    %p71 = por %p69, %p70
    %s73 = sadd.s32 %s72, 1
    %p76 = scmp.eq.s32.totalorder %s17, 1
    %p77 = scmp.ne.s32.totalorder %s72, %s74
    %p78 = scmp.eq.s32.totalorder %s17, 0
    %p79 = por %p77, %p78
    %p80 = scmp.ne.s32.totalorder %s72, %s74
    %p81 = scmp.eq.s32.totalorder %s22, 1
    %p82 = por %p80, %p81
    %p83 = scmp.ne.s32.totalorder %s74, %s75
    %p84 = scmp.eq.s32.totalorder %s22, 0
    %p85 = por %p83, %p84
    %p86 = scmp.ne.s32.totalorder %s74, %s75
    %p87 = scmp.eq.s32.totalorder %s23, 1
    %p88 = por %p86, %p87
    %p90 = scmp.ne.s32.totalorder %s75, %s89
    %p91 = scmp.eq.s32.totalorder %s23, 0
    %p92 = por %p90, %p91
    %s94 = sadd.s32 %s93, 1
    %p97 = scmp.eq.s32.totalorder %s17, 1
    %p98 = scmp.ne.s32.totalorder %s93, %s95
    %p99 = scmp.eq.s32.totalorder %s17, 0
    %p100 = por %p98, %p99
    %p101 = scmp.ne.s32.totalorder %s93, %s95
    %p102 = scmp.eq.s32.totalorder %s22, 1
    %p103 = por %p101, %p102
    %p104 = scmp.ne.s32.totalorder %s95, %s96
    %p105 = scmp.eq.s32.totalorder %s22, 0
    %p106 = por %p104, %p105
    %p107 = scmp.ne.s32.totalorder %s95, %s96
    %p108 = scmp.eq.s32.totalorder %s23, 1
    %p109 = por %p107, %p108
    %p111 = scmp.ne.s32.totalorder %s96, %s110
    %p112 = scmp.eq.s32.totalorder %s23, 0
    %p113 = por %p111, %p112
    %s115 = sadd.s32 %s114, 1
    %p118 = scmp.eq.s32.totalorder %s17, 1
    %p119 = scmp.ne.s32.totalorder %s114, %s116
    %p120 = scmp.eq.s32.totalorder %s17, 0
    %p121 = por %p119, %p120
    %p122 = scmp.ne.s32.totalorder %s114, %s116
    %p123 = scmp.eq.s32.totalorder %s22, 1
    %p124 = por %p122, %p123
    %p125 = scmp.ne.s32.totalorder %s116, %s117
    %p126 = scmp.eq.s32.totalorder %s22, 0
    %p127 = por %p125, %p126
    %p128 = scmp.ne.s32.totalorder %s116, %s117
    %p129 = scmp.eq.s32.totalorder %s23, 1
    %p130 = por %p128, %p129
    %p132 = scmp.ne.s32.totalorder %s117, %s131
    %p133 = scmp.eq.s32.totalorder %s23, 0
    %p134 = por %p132, %p133
    %s136 = sadd.s32 %s135, 1
    %p139 = scmp.eq.s32.totalorder %s17, 1
    %p140 = scmp.ne.s32.totalorder %s135, %s137
    %p141 = scmp.eq.s32.totalorder %s17, 0
    %p142 = por %p140, %p141
    %p143 = scmp.ne.s32.totalorder %s135, %s137
    %p144 = scmp.eq.s32.totalorder %s22, 1
    %p145 = por %p143, %p144
    %p146 = scmp.ne.s32.totalorder %s137, %s138
    %p147 = scmp.eq.s32.totalorder %s22, 0
    %p148 = por %p146, %p147
    %p149 = scmp.ne.s32.totalorder %s137, %s138
    %p150 = scmp.eq.s32.totalorder %s23, 1
    %p151 = por %p149, %p150
    %p153 = scmp.ne.s32.totalorder %s138, %s152
    %p154 = scmp.eq.s32.totalorder %s23, 0
    %p155 = por %p153, %p154
    %s157 = sadd.s32 %s156, 1
    %p160 = scmp.eq.s32.totalorder %s17, 1
    %p161 = scmp.ne.s32.totalorder %s156, %s158
    %p162 = scmp.eq.s32.totalorder %s17, 0
    %p163 = por %p161, %p162
    %p164 = scmp.ne.s32.totalorder %s156, %s158
    %p165 = scmp.eq.s32.totalorder %s22, 1
    %p166 = por %p164, %p165
    %p167 = scmp.ne.s32.totalorder %s158, %s159
    %p168 = scmp.eq.s32.totalorder %s22, 0
    %p169 = por %p167, %p168
    %p170 = scmp.ne.s32.totalorder %s158, %s159
    %p171 = scmp.eq.s32.totalorder %s23, 1
    %p172 = por %p170, %p171
    %p174 = scmp.ne.s32.totalorder %s159, %s173
    %p175 = scmp.eq.s32.totalorder %s23, 0
    %p176 = por %p174, %p175
    %s178 = sadd.s32 %s177, 1
    %p181 = scmp.eq.s32.totalorder %s17, 1
    %p182 = scmp.ne.s32.totalorder %s177, %s179
    %p183 = scmp.eq.s32.totalorder %s17, 0
    %p184 = por %p182, %p183
    %p185 = scmp.ne.s32.totalorder %s177, %s179
    %p186 = scmp.eq.s32.totalorder %s22, 1
    %p187 = por %p185, %p186
    %p188 = scmp.ne.s32.totalorder %s179, %s180
    %p189 = scmp.eq.s32.totalorder %s22, 0
    %p190 = por %p188, %p189
    %p191 = scmp.ne.s32.totalorder %s179, %s180
    %p192 = scmp.eq.s32.totalorder %s23, 1
    %p193 = por %p191, %p192
    %p195 = scmp.ne.s32.totalorder %s180, %s194
    %p196 = scmp.eq.s32.totalorder %s23, 0
    %p197 = por %p195, %p196
    %s199 = sadd.s32 %s198, 1
    %p202 = scmp.eq.s32.totalorder %s17, 1
    %p203 = scmp.ne.s32.totalorder %s198, %s200
    %p204 = scmp.eq.s32.totalorder %s17, 0
    %p205 = por %p203, %p204
    %p206 = scmp.ne.s32.totalorder %s198, %s200
    %p207 = scmp.eq.s32.totalorder %s22, 1
    %p208 = por %p206, %p207
    %p209 = scmp.ne.s32.totalorder %s200, %s201
    %p210 = scmp.eq.s32.totalorder %s22, 0
    %p211 = por %p209, %p210
    %p212 = scmp.ne.s32.totalorder %s200, %s201
    %p213 = scmp.eq.s32.totalorder %s23, 1
    %p214 = por %p212, %p213
    %p216 = scmp.ne.s32.totalorder %s201, %s215
    %p217 = scmp.eq.s32.totalorder %s23, 0
    %p218 = por %p216, %p217
    %s220 = sadd.s32 %s219, 1
    %p223 = scmp.eq.s32.totalorder %s17, 1
    %p224 = scmp.ne.s32.totalorder %s219, %s221
    %p225 = scmp.eq.s32.totalorder %s17, 0
    %p226 = por %p224, %p225
    %p227 = scmp.ne.s32.totalorder %s219, %s221
    %p228 = scmp.eq.s32.totalorder %s22, 1
    %p229 = por %p227, %p228
    %p230 = scmp.ne.s32.totalorder %s221, %s222
    %p231 = scmp.eq.s32.totalorder %s22, 0
    %p232 = por %p230, %p231
    %p233 = scmp.ne.s32.totalorder %s221, %s222
    %p234 = scmp.eq.s32.totalorder %s23, 1
    %p235 = por %p233, %p234
    %p237 = scmp.ne.s32.totalorder %s222, %s236
    %p238 = scmp.eq.s32.totalorder %s23, 0
    %p239 = por %p237, %p238
    %s241 = sadd.s32 %s240, 1
    %p244 = scmp.eq.s32.totalorder %s17, 1
    %p245 = scmp.ne.s32.totalorder %s240, %s242
    %p246 = scmp.eq.s32.totalorder %s17, 0
    %p247 = por %p245, %p246
    %p248 = scmp.ne.s32.totalorder %s240, %s242
    %p249 = scmp.eq.s32.totalorder %s22, 1
    %p250 = por %p248, %p249
    %p251 = scmp.ne.s32.totalorder %s242, %s243
    %p252 = scmp.eq.s32.totalorder %s22, 0
    %p253 = por %p251, %p252
    %p254 = scmp.ne.s32.totalorder %s242, %s243
    %p255 = scmp.eq.s32.totalorder %s23, 1
    %p256 = por %p254, %p255
    %p258 = scmp.ne.s32.totalorder %s243, %s257
    %p259 = scmp.eq.s32.totalorder %s23, 0
    %p260 = por %p258, %p259
    %s261 = ssub.s32 %s17, %s24
    %p262 = scmp.eq.s32.totalorder %s261, 0
    %s264 = sadd.s32 %s263, 1
    %s265 = scalar_select %p262, %s263, %s264
    %p268 = pneg %p262
    %p269 = scmp.eq.s32.totalorder %s17, 1
    %p270 = por %p268, %p269
    %p271 = scmp.ne.s32.totalorder %s263, %s266
    %p272 = scmp.eq.s32.totalorder %s17, 0
    %p273 = por %p271, %p272
    %p274 = scmp.ne.s32.totalorder %s263, %s266
    %p275 = scmp.eq.s32.totalorder %s22, 1
    %p276 = por %p274, %p275
    %p277 = scmp.ne.s32.totalorder %s266, %s267
    %p278 = scmp.eq.s32.totalorder %s22, 0
    %p279 = por %p277, %p278
    %p280 = scmp.ne.s32.totalorder %s266, %s267
    %p281 = scmp.eq.s32.totalorder %s23, 1
    %p282 = por %p280, %p281
    %p284 = scmp.ne.s32.totalorder %s267, %s283
    %p285 = scmp.eq.s32.totalorder %s23, 0
    %p286 = por %p284, %p285
    %p287 = scmp.le.s32.totalorder 1, %s17
    %p288 = scmp.lt.s32.totalorder %s17, 3
    %p289 = pnand %p287, %p288
    %p290 = pneg %p289
    // Predicated region
    $region9: #{dar_forward.3} parent=5 // pred_check
      _
    $region10: #{dar_forward.3} parent=5 // pred_check_branch
      %292 = sbr.rel (%p289) target = $region12
    $region11: #{dar_forward.3} parent=5 // pred_region
      %s293 = ssub.s32 %s17, 1
      // Predicated region
      $region13: #{dar_forward.3} parent=11 // pred_check
        %p294 = pneg %p64
      $region14: #{dar_forward.3} parent=11 // pred_check_branch
        %296 = sbr.rel (%p294) target = $region16
      $region15: #{dar_forward.3} parent=11 // pred_region
        _
      $region16: #{dar_forward.3} parent=11 // pred_fallthru
        _
      // Predicated region
      $region17: #{dar_forward.3} parent=11 // pred_check
        %p297 = pneg %p85
      $region18: #{dar_forward.3} parent=11 // pred_check_branch
        %299 = sbr.rel (%p297) target = $region20
      $region19: #{dar_forward.3} parent=11 // pred_region
        _
      $region20: #{dar_forward.3} parent=11 // pred_fallthru
        _
      // Predicated region
      $region21: #{dar_forward.3} parent=11 // pred_check
        %p300 = pneg %p106
      $region22: #{dar_forward.3} parent=11 // pred_check_branch
        %302 = sbr.rel (%p300) target = $region24
      $region23: #{dar_forward.3} parent=11 // pred_region
        _
      $region24: #{dar_forward.3} parent=11 // pred_fallthru
        _
      // Predicated region
      $region25: #{dar_forward.3} parent=11 // pred_check
        %p303 = pneg %p127
      $region26: #{dar_forward.3} parent=11 // pred_check_branch
        %305 = sbr.rel (%p303) target = $region28
      $region27: #{dar_forward.3} parent=11 // pred_region
        _
      $region28: #{dar_forward.3} parent=11 // pred_fallthru
        _
      // Predicated region
      $region29: #{dar_forward.3} parent=11 // pred_check
        %p306 = pneg %p148
      $region30: #{dar_forward.3} parent=11 // pred_check_branch
        %308 = sbr.rel (%p306) target = $region32
      $region31: #{dar_forward.3} parent=11 // pred_region
        _
      $region32: #{dar_forward.3} parent=11 // pred_fallthru
        _
      // Predicated region
      $region33: #{dar_forward.3} parent=11 // pred_check
        %p309 = pneg %p169
      $region34: #{dar_forward.3} parent=11 // pred_check_branch
        %311 = sbr.rel (%p309) target = $region36
      $region35: #{dar_forward.3} parent=11 // pred_region
        _
      $region36: #{dar_forward.3} parent=11 // pred_fallthru
        _
      // Predicated region
      $region37: #{dar_forward.3} parent=11 // pred_check
        %p312 = pneg %p190
      $region38: #{dar_forward.3} parent=11 // pred_check_branch
        %314 = sbr.rel (%p312) target = $region40
      $region39: #{dar_forward.3} parent=11 // pred_region
        _
      $region40: #{dar_forward.3} parent=11 // pred_fallthru
        _
      // Predicated region
      $region41: #{dar_forward.3} parent=11 // pred_check
        %p315 = pneg %p211
      $region42: #{dar_forward.3} parent=11 // pred_check_branch
        %317 = sbr.rel (%p315) target = $region44
      $region43: #{dar_forward.3} parent=11 // pred_region
        _
      $region44: #{dar_forward.3} parent=11 // pred_fallthru
        _
      // Predicated region
      $region45: #{dar_forward.3} parent=11 // pred_check
        %p318 = pneg %p232
      $region46: #{dar_forward.3} parent=11 // pred_check_branch
        %320 = sbr.rel (%p318) target = $region48
      $region47: #{dar_forward.3} parent=11 // pred_region
        _
      $region48: #{dar_forward.3} parent=11 // pred_fallthru
        _
      // Predicated region
      $region49: #{dar_forward.3} parent=11 // pred_check
        %p321 = pneg %p253
      $region50: #{dar_forward.3} parent=11 // pred_check_branch
        %323 = sbr.rel (%p321) target = $region52
      $region51: #{dar_forward.3} parent=11 // pred_region
        _
      $region52: #{dar_forward.3} parent=11 // pred_fallthru
        _
    $region12: #{dar_forward.3} parent=5 // pred_fallthru
      _
    %p324 = scmp.lt.s32.totalorder %s17, 2
    // Predicated region
    $region53: #{dar_forward.3} parent=5 // pred_check
      %p325 = pneg %p324
    $region54: #{dar_forward.3} parent=5 // pred_check_branch
      %327 = sbr.rel (%p325) target = $region56
    $region55: #{dar_forward.3} parent=5 // pred_region
      // Predicated region
      $region57: #{dar_forward.3} parent=55 // pred_check
        %p328 = pneg %p37
      $region58: #{dar_forward.3} parent=55 // pred_check_branch
        %330 = sbr.rel (%p328) target = $region60
      $region59: #{dar_forward.3} parent=55 // pred_region
        %p331 = scmp.lt.s32.totalorder %s17, 1
        %s332 = scalar_select %p331, %s17, 1
        %s333 = smul.addr %s332, 104
        %s334 = smul.addr %s333, 4
        %s335 = scalar_lea.vmem %s0, %s334
      $region60: #{dar_forward.3} parent=55 // pred_fallthru
        _
    $region56: #{dar_forward.3} parent=5 // pred_fallthru
      _
    %p336 = scmp.le.s32.totalorder 1, %s17
    %p337 = scmp.lt.s32.totalorder %s17, 3
    %p338 = pnand %p336, %p337
    %p339 = pneg %p338
    // Predicated region
    $region61: #{dar_forward.3} parent=5 // pred_check
      _
    $region62: #{dar_forward.3} parent=5 // pred_check_branch
      %341 = sbr.rel (%p338) target = $region64
    $region63: #{dar_forward.3} parent=5 // pred_region
      %s342 = ssub.s32 %s17, 1
      %p343 = scmp.lt.s32.totalorder %s22, 1
      %s344 = scalar_select %p343, %s22, 1
      %s345 = smul.addr %s344, 104
      %s346 = smul.addr %s345, 4
      %s347 = scalar_lea.vmem %s0, %s346
      %p348 = pneg %p43
      %p349 = pneg %p40
      %p350 = pneg %p64
      %p351 = pneg %p61
      %p352 = pneg %p85
      %p353 = pneg %p82
      %p354 = pneg %p106
      %p355 = pneg %p103
      %p356 = pneg %p127
      %p357 = pneg %p124
      %p358 = pneg %p148
      %p359 = pneg %p145
      %p360 = pneg %p169
      %p361 = pneg %p166
      %p362 = pneg %p190
      %p363 = pneg %p187
      %p364 = pneg %p211
      %p365 = pneg %p208
      %p366 = pneg %p232
      %p367 = pneg %p229
      %p368 = pneg %p253
      %p369 = pneg %p250
      %p370 = pneg %p279
      %p371 = pneg %p276
      %p372 = scmp.lt.s32.totalorder %s22, 1
      %s373 = scalar_select %p372, %s22, 1
      %s374 = smul.addr %s373, 32
      %s375 = smul.addr %s374, 8
      %s376 = scalar_lea.vmem %s11, %s375
      %p377 = scmp.lt.s32.totalorder %s22, 1
      %s378 = scalar_select %p377, %s22, 1
      %s379 = smul.addr %s378, 104
      %s380 = smul.addr %s379, 4
      %s381 = scalar_lea.vmem %s0, %s380
      %p382 = scmp.lt.s32.totalorder %s22, 1
      %s383 = scalar_select %p382, %s22, 1
      %s384 = smul.addr %s383, 32
      %s385 = smul.addr %s384, 8
      %s386 = scalar_lea.vmem %s11, %s385
      %v388 = vld [vmem:[%s381] sm:$0xf]
      %v389 = vld [vmem:[%s381 + $0x4] sm:$0xf]
      %v390 = vld [vmem:[%s381 + $0x8] sm:$0xf]
      %v391 = vld [vmem:[%s381 + $0xc] sm:$0x1]
      %v392 = vld [vmem:[%s381 + $0x10] sm:$0xf]
      %v393 = vld [vmem:[%s381 + $0x14] sm:$0xf]
      %v394 = vld [vmem:[%s381 + $0x18] sm:$0xf]
      %v395 = vld [vmem:[%s381 + $0x1c] sm:$0x1]
      %v396 = vld [vmem:[%s381 + $0x20] sm:$0xf]
      %v397 = vld [vmem:[%s381 + $0x24] sm:$0xf]
      %v398 = vld [vmem:[%s381 + $0x28] sm:$0xf]
      %v399 = vld [vmem:[%s381 + $0x2c] sm:$0x1]
      %v400 = vld [vmem:[%s381 + $0x30] sm:$0xf]
      %v401 = vld [vmem:[%s381 + $0x34] sm:$0xf]
      %v402 = vld [vmem:[%s381 + $0x38] sm:$0xf]
      %v403 = vld [vmem:[%s381 + $0x3c] sm:$0x1]
      %v404 = vld [vmem:[%s381 + $0x40] sm:$0xf]
      %v405 = vld [vmem:[%s381 + $0x44] sm:$0xf]
      %v406 = vld [vmem:[%s381 + $0x48] sm:$0xf]
      %v407 = vld [vmem:[%s381 + $0x4c] sm:$0x1]
      %v408 = vld [vmem:[%s381 + $0x50] sm:$0xf]
      %v409 = vld [vmem:[%s381 + $0x54] sm:$0xf]
      %v410 = vld [vmem:[%s381 + $0x58] sm:$0xf]
      %v411 = vld [vmem:[%s381 + $0x5c] sm:$0x1]
      %v412 = vld [vmem:[%s381 + $0x60] sm:$0xf]
      %v413 = vld [vmem:[%s381 + $0x64] sm:$0xf]
      %v414 = vld [vmem:[%s381 + $0x68] sm:$0xf]
      %v415 = vld [vmem:[%s381 + $0x6c] sm:$0x1]
      %v416 = vld [vmem:[%s381 + $0x70] sm:$0xf]
      %v417 = vld [vmem:[%s381 + $0x74] sm:$0xf]
      %v418 = vld [vmem:[%s381 + $0x78] sm:$0xf]
      %v419 = vld [vmem:[%s381 + $0x7c] sm:$0x1]
      %v420 = vld [vmem:[%s381 + $0x80] sm:$0xf]
      %v421 = vld [vmem:[%s381 + $0x84] sm:$0xf]
      %v422 = vld [vmem:[%s381 + $0x88] sm:$0xf]
      %v423 = vld [vmem:[%s381 + $0x8c] sm:$0x1]
      %v424 = vld [vmem:[%s381 + $0x90] sm:$0xf]
      %v425 = vld [vmem:[%s381 + $0x94] sm:$0xf]
      %v426 = vld [vmem:[%s381 + $0x98] sm:$0xf]
      %v427 = vld [vmem:[%s381 + $0x9c] sm:$0x1]
      %v428 = vld [vmem:[%s381 + $0xa0] sm:$0xf]
      %v429 = vld [vmem:[%s381 + $0xa4] sm:$0xf]
      %v430 = vld [vmem:[%s381 + $0xa8] sm:$0xf]
      %v431 = vld [vmem:[%s381 + $0xac] sm:$0x1]
      %v432 = vld [vmem:[%s381 + $0xb0] sm:$0xf]
      %v433 = vld [vmem:[%s381 + $0xb4] sm:$0xf]
      %v434 = vld [vmem:[%s381 + $0xb8] sm:$0xf]
      %v435 = vld [vmem:[%s381 + $0xbc] sm:$0x1]
      %v436 = vld [vmem:[%s381 + $0xc0] sm:$0xf]
      %v437 = vld [vmem:[%s381 + $0xc4] sm:$0xf]
      %v438 = vld [vmem:[%s381 + $0xc8] sm:$0xf]
      %v439 = vld [vmem:[%s381 + $0xcc] sm:$0x1]
      %v440 = vld [vmem:[%s381 + $0xd0] sm:$0xf]
      %v441 = vld [vmem:[%s381 + $0xd4] sm:$0xf]
      %v442 = vld [vmem:[%s381 + $0xd8] sm:$0xf]
      %v443 = vld [vmem:[%s381 + $0xdc] sm:$0x1]
      %v444 = vld [vmem:[%s381 + $0xe0] sm:$0xf]
      %v445 = vld [vmem:[%s381 + $0xe4] sm:$0xf]
      %v446 = vld [vmem:[%s381 + $0xe8] sm:$0xf]
      %v447 = vld [vmem:[%s381 + $0xec] sm:$0x1]
      %v448 = vld [vmem:[%s381 + $0xf0] sm:$0xf]
      %v449 = vld [vmem:[%s381 + $0xf4] sm:$0xf]
      %v450 = vld [vmem:[%s381 + $0xf8] sm:$0xf]
      %v451 = vld [vmem:[%s381 + $0xfc] sm:$0x1]
      %v452 = vld [vmem:[%s381 + $0x100] sm:$0xf]
      %v453 = vld [vmem:[%s381 + $0x104] sm:$0xf]
      %v454 = vld [vmem:[%s381 + $0x108] sm:$0xf]
      %v455 = vld [vmem:[%s381 + $0x10c] sm:$0x1]
      %v456 = vld [vmem:[%s381 + $0x110] sm:$0xf]
      %v457 = vld [vmem:[%s381 + $0x114] sm:$0xf]
      %v458 = vld [vmem:[%s381 + $0x118] sm:$0xf]
      %v459 = vld [vmem:[%s381 + $0x11c] sm:$0x1]
      %v460 = vld [vmem:[%s381 + $0x120] sm:$0xf]
      %v461 = vld [vmem:[%s381 + $0x124] sm:$0xf]
      %v462 = vld [vmem:[%s381 + $0x128] sm:$0xf]
      %v463 = vld [vmem:[%s381 + $0x12c] sm:$0x1]
      %v464 = vld [vmem:[%s381 + $0x130] sm:$0xf]
      %v465 = vld [vmem:[%s381 + $0x134] sm:$0xf]
      %v466 = vld [vmem:[%s381 + $0x138] sm:$0xf]
      %v467 = vld [vmem:[%s381 + $0x13c] sm:$0x1]
      %v468 = vld [vmem:[%s381 + $0x140] sm:$0xf]
      %v469 = vld [vmem:[%s381 + $0x144] sm:$0xf]
      %v470 = vld [vmem:[%s381 + $0x148] sm:$0xf]
      %v471 = vld [vmem:[%s381 + $0x14c] sm:$0x1]
      %v472 = vld [vmem:[%s381 + $0x150] sm:$0xf]
      %v473 = vld [vmem:[%s381 + $0x154] sm:$0xf]
      %v474 = vld [vmem:[%s381 + $0x158] sm:$0xf]
      %v475 = vld [vmem:[%s381 + $0x15c] sm:$0x1]
      %v476 = vld [vmem:[%s381 + $0x160] sm:$0xf]
      %v477 = vld [vmem:[%s381 + $0x164] sm:$0xf]
      %v478 = vld [vmem:[%s381 + $0x168] sm:$0xf]
      %v479 = vld [vmem:[%s381 + $0x16c] sm:$0x1]
      %v480 = vld [vmem:[%s381 + $0x170] sm:$0xf]
      %v481 = vld [vmem:[%s381 + $0x174] sm:$0xf]
      %v482 = vld [vmem:[%s381 + $0x178] sm:$0xf]
      %v483 = vld [vmem:[%s381 + $0x17c] sm:$0x1]
      %v484 = vld [vmem:[%s381 + $0x180] sm:$0xf]
      %v485 = vld [vmem:[%s381 + $0x184] sm:$0xf]
      %v486 = vld [vmem:[%s381 + $0x188] sm:$0xf]
      %v487 = vld [vmem:[%s381 + $0x18c] sm:$0x1]
      %v488 = vld [vmem:[%s381 + $0x190] sm:$0xf]
      %v489 = vld [vmem:[%s381 + $0x194] sm:$0xf]
      %v490 = vld [vmem:[%s381 + $0x198] sm:$0xf]
      %v491 = vld [vmem:[%s381 + $0x19c] sm:$0x1]
      %v540 = vunpack.c.l.b16 %v404
      %v541 = vunpack.c.l.b16 %v405
      %v542 = vunpack.c.l.b16 %v406
      %v543 = vunpack.c.l.b16 %v408
      %v544 = vunpack.c.l.b16 %v409
      %v545 = vunpack.c.l.b16 %v410
      %v546 = vunpack.c.l.b16 %v412
      %v547 = vunpack.c.l.b16 %v413
      %v548 = vunpack.c.l.b16 %v414
      %v549 = vunpack.c.l.b16 %v416
      %v550 = vunpack.c.l.b16 %v417
      %v551 = vunpack.c.l.b16 %v418
      %v552 = vunpack.c.l.b16 %v420
      %v553 = vunpack.c.l.b16 %v421
      %v554 = vunpack.c.l.b16 %v422
      %v555 = vunpack.c.l.b16 %v424
      %v556 = vunpack.c.l.b16 %v425
      %v557 = vunpack.c.l.b16 %v426
      %v558 = vunpack.c.l.b16 %v428
      %v559 = vunpack.c.l.b16 %v429
      %v560 = vunpack.c.l.b16 %v430
      %v561 = vunpack.c.l.b16 %v432
      %v562 = vunpack.c.l.b16 %v433
      %v563 = vunpack.c.l.b16 %v434
      %v564 = vunpack.c.l.b16 %v436
      %v565 = vunpack.c.l.b16 %v437
      %v566 = vunpack.c.l.b16 %v438
      %v567 = vunpack.c.l.b16 %v440
      %v568 = vunpack.c.l.b16 %v441
      %v569 = vunpack.c.l.b16 %v442
      %v570 = vunpack.c.l.b16 %v444
      %v571 = vunpack.c.l.b16 %v445
      %v572 = vunpack.c.l.b16 %v446
      %v573 = vunpack.c.l.b16 %v448
      %v574 = vunpack.c.l.b16 %v449
      %v575 = vunpack.c.l.b16 %v450
      %v576 = vunpack.c.l.b16 %v452
      %v577 = vunpack.c.l.b16 %v453
      %v578 = vunpack.c.l.b16 %v454
      %v579 = vunpack.c.l.b16 %v456
      %v580 = vunpack.c.l.b16 %v457
      %v581 = vunpack.c.l.b16 %v458
      %v582 = vunpack.c.l.b16 %v460
      %v583 = vunpack.c.l.b16 %v461
      %v584 = vunpack.c.l.b16 %v462
      %v585 = vunpack.c.l.b16 %v464
      %v586 = vunpack.c.l.b16 %v465
      %v587 = vunpack.c.l.b16 %v466
      %v588 = vpack.c.b16 %v541, %v540
      %v589 = vpack.c.b16 %v542, %v542
      %v590 = vpack.c.b16 %v544, %v543
      %v591 = vpack.c.b16 %v545, %v545
      %v592 = vpack.c.b16 %v547, %v546
      %v593 = vpack.c.b16 %v548, %v548
      %v594 = vpack.c.b16 %v550, %v549
      %v595 = vpack.c.b16 %v551, %v551
      %v596 = vpack.c.b16 %v553, %v552
      %v597 = vpack.c.b16 %v554, %v554
      %v598 = vpack.c.b16 %v556, %v555
      %v599 = vpack.c.b16 %v557, %v557
      %v600 = vpack.c.b16 %v559, %v558
      %v601 = vpack.c.b16 %v560, %v560
      %v602 = vpack.c.b16 %v562, %v561
      %v603 = vpack.c.b16 %v563, %v563
      %v604 = vpack.c.b16 %v565, %v564
      %v605 = vpack.c.b16 %v566, %v566
      %v606 = vpack.c.b16 %v568, %v567
      %v607 = vpack.c.b16 %v569, %v569
      %v608 = vpack.c.b16 %v571, %v570
      %v609 = vpack.c.b16 %v572, %v572
      %v610 = vpack.c.b16 %v574, %v573
      %v611 = vpack.c.b16 %v575, %v575
      %v612 = vpack.c.b16 %v577, %v576
      %v613 = vpack.c.b16 %v578, %v578
      %v614 = vpack.c.b16 %v580, %v579
      %v615 = vpack.c.b16 %v581, %v581
      %v616 = vpack.c.b16 %v583, %v582
      %v617 = vpack.c.b16 %v584, %v584
      %v618 = vpack.c.b16 %v586, %v585
      %v619 = vpack.c.b16 %v587, %v587
      %vm620 = vsmask.f32 7424
      %v622 = vshrl.u32 %v588, 16
      %v624 = vshll.u32 %v588, 16
      %v626 = vrot.slane %v624, 1
      %v627 = vor.u32 %v622, %v626
      %v629 = vshll.u32 %v589, 16
      %v631 = vrot.slane %v629, 1
      %v632 = vsel %vm620, %v627, %v631
      %v633 = vshrl.u32 %v589, 16
      %v635 = vor.u32 %v633, %v631
      %v637 = vshrl.u32 %v590, 16
      %v639 = vshll.u32 %v590, 16
      %v641 = vrot.slane %v639, 1
      %v642 = vor.u32 %v637, %v641
      %v644 = vshll.u32 %v591, 16
      %v646 = vrot.slane %v644, 1
      %v647 = vsel %vm620, %v642, %v646
      %v648 = vshrl.u32 %v591, 16
      %v650 = vor.u32 %v648, %v646
      %v652 = vshrl.u32 %v592, 16
      %v654 = vshll.u32 %v592, 16
      %v656 = vrot.slane %v654, 1
      %v657 = vor.u32 %v652, %v656
      %v659 = vshll.u32 %v593, 16
      %v661 = vrot.slane %v659, 1
      %v662 = vsel %vm620, %v657, %v661
      %v663 = vshrl.u32 %v593, 16
      %v665 = vor.u32 %v663, %v661
      %v667 = vshrl.u32 %v594, 16
      %v669 = vshll.u32 %v594, 16
      %v671 = vrot.slane %v669, 1
      %v672 = vor.u32 %v667, %v671
      %v674 = vshll.u32 %v595, 16
      %v676 = vrot.slane %v674, 1
      %v677 = vsel %vm620, %v672, %v676
      %v678 = vshrl.u32 %v595, 16
      %v680 = vor.u32 %v678, %v676
      %v682 = vshrl.u32 %v596, 16
      %v684 = vshll.u32 %v596, 16
      %v686 = vrot.slane %v684, 1
      %v687 = vor.u32 %v682, %v686
      %v689 = vshll.u32 %v597, 16
      %v691 = vrot.slane %v689, 1
      %v692 = vsel %vm620, %v687, %v691
      %v693 = vshrl.u32 %v597, 16
      %v695 = vor.u32 %v693, %v691
      %v697 = vshrl.u32 %v598, 16
      %v699 = vshll.u32 %v598, 16
      %v701 = vrot.slane %v699, 1
      %v702 = vor.u32 %v697, %v701
      %v704 = vshll.u32 %v599, 16
      %v706 = vrot.slane %v704, 1
      %v707 = vsel %vm620, %v702, %v706
      %v708 = vshrl.u32 %v599, 16
      %v710 = vor.u32 %v708, %v706
      %v712 = vshrl.u32 %v600, 16
      %v714 = vshll.u32 %v600, 16
      %v716 = vrot.slane %v714, 1
      %v717 = vor.u32 %v712, %v716
      %v719 = vshll.u32 %v601, 16
      %v721 = vrot.slane %v719, 1
      %v722 = vsel %vm620, %v717, %v721
      %v723 = vshrl.u32 %v601, 16
      %v725 = vor.u32 %v723, %v721
      %v727 = vshrl.u32 %v602, 16
      %v729 = vshll.u32 %v602, 16
      %v731 = vrot.slane %v729, 1
      %v732 = vor.u32 %v727, %v731
      %v734 = vshll.u32 %v603, 16
      %v736 = vrot.slane %v734, 1
      %v737 = vsel %vm620, %v732, %v736
      %v738 = vshrl.u32 %v603, 16
      %v740 = vor.u32 %v738, %v736
      %v742 = vshrl.u32 %v604, 16
      %v744 = vshll.u32 %v604, 16
      %v746 = vrot.slane %v744, 1
      %v747 = vor.u32 %v742, %v746
      %v749 = vshll.u32 %v605, 16
      %v751 = vrot.slane %v749, 1
      %v752 = vsel %vm620, %v747, %v751
      %v753 = vshrl.u32 %v605, 16
      %v755 = vor.u32 %v753, %v751
      %v757 = vshrl.u32 %v606, 16
      %v759 = vshll.u32 %v606, 16
      %v761 = vrot.slane %v759, 1
      %v762 = vor.u32 %v757, %v761
      %v764 = vshll.u32 %v607, 16
      %v766 = vrot.slane %v764, 1
      %v767 = vsel %vm620, %v762, %v766
      %v768 = vshrl.u32 %v607, 16
      %v770 = vor.u32 %v768, %v766
      %v772 = vshrl.u32 %v608, 16
      %v774 = vshll.u32 %v608, 16
      %v776 = vrot.slane %v774, 1
      %v777 = vor.u32 %v772, %v776
      %v779 = vshll.u32 %v609, 16
      %v781 = vrot.slane %v779, 1
      %v782 = vsel %vm620, %v777, %v781
      %v783 = vshrl.u32 %v609, 16
      %v785 = vor.u32 %v783, %v781
      %v787 = vshrl.u32 %v610, 16
      %v789 = vshll.u32 %v610, 16
      %v791 = vrot.slane %v789, 1
      %v792 = vor.u32 %v787, %v791
      %v794 = vshll.u32 %v611, 16
      %v796 = vrot.slane %v794, 1
      %v797 = vsel %vm620, %v792, %v796
      %v798 = vshrl.u32 %v611, 16
      %v800 = vor.u32 %v798, %v796
      %v802 = vshrl.u32 %v612, 16
      %v804 = vshll.u32 %v612, 16
      %v806 = vrot.slane %v804, 1
      %v807 = vor.u32 %v802, %v806
      %v809 = vshll.u32 %v613, 16
      %v811 = vrot.slane %v809, 1
      %v812 = vsel %vm620, %v807, %v811
      %v813 = vshrl.u32 %v613, 16
      %v815 = vor.u32 %v813, %v811
      %v817 = vshrl.u32 %v614, 16
      %v819 = vshll.u32 %v614, 16
      %v821 = vrot.slane %v819, 1
      %v822 = vor.u32 %v817, %v821
      %v824 = vshll.u32 %v615, 16
      %v826 = vrot.slane %v824, 1
      %v827 = vsel %vm620, %v822, %v826
      %v828 = vshrl.u32 %v615, 16
      %v830 = vor.u32 %v828, %v826
      %v832 = vshrl.u32 %v616, 16
      %v834 = vshll.u32 %v616, 16
      %v836 = vrot.slane %v834, 1
      %v837 = vor.u32 %v832, %v836
      %v839 = vshll.u32 %v617, 16
      %v841 = vrot.slane %v839, 1
      %v842 = vsel %vm620, %v837, %v841
      %v843 = vshrl.u32 %v617, 16
      %v845 = vor.u32 %v843, %v841
      %v847 = vshrl.u32 %v618, 16
      %v849 = vshll.u32 %v618, 16
      %v851 = vrot.slane %v849, 1
      %v852 = vor.u32 %v847, %v851
      %v854 = vshll.u32 %v619, 16
      %v856 = vrot.slane %v854, 1
      %v857 = vsel %vm620, %v852, %v856
      %v858 = vshrl.u32 %v619, 16
      %v860 = vor.u32 %v858, %v856
      %861 = vrot.lane.b32.xlu0 %v632, 8
      %v862 = vpop.permute.xlu0 %861
      %863 = vrot.lane.b32.xlu0 %v635, 8
      %v864 = vpop.permute.xlu0 %863
      %865 = vrot.lane.b32.xlu0 %v647, 8
      %v866 = vpop.permute.xlu0 %865
      %867 = vrot.lane.b32.xlu0 %v650, 8
      %v868 = vpop.permute.xlu0 %867
      %869 = vrot.lane.b32.xlu0 %v662, 8
      %v870 = vpop.permute.xlu0 %869
      %871 = vrot.lane.b32.xlu0 %v665, 8
      %v872 = vpop.permute.xlu0 %871
      %873 = vrot.lane.b32.xlu0 %v677, 8
      %v874 = vpop.permute.xlu0 %873
      %875 = vrot.lane.b32.xlu0 %v680, 8
      %v876 = vpop.permute.xlu0 %875
      %877 = vrot.lane.b32.xlu0 %v692, 8
      %v878 = vpop.permute.xlu0 %877
      %879 = vrot.lane.b32.xlu0 %v695, 8
      %v880 = vpop.permute.xlu0 %879
      %881 = vrot.lane.b32.xlu0 %v707, 8
      %v882 = vpop.permute.xlu0 %881
      %883 = vrot.lane.b32.xlu0 %v710, 8
      %v884 = vpop.permute.xlu0 %883
      %885 = vrot.lane.b32.xlu0 %v722, 8
      %v886 = vpop.permute.xlu0 %885
      %887 = vrot.lane.b32.xlu0 %v725, 8
      %v888 = vpop.permute.xlu0 %887
      %889 = vrot.lane.b32.xlu0 %v737, 8
      %v890 = vpop.permute.xlu0 %889
      %891 = vrot.lane.b32.xlu0 %v740, 8
      %v892 = vpop.permute.xlu0 %891
      %893 = vrot.lane.b32.xlu0 %v752, 8
      %v894 = vpop.permute.xlu0 %893
      %895 = vrot.lane.b32.xlu0 %v755, 8
      %v896 = vpop.permute.xlu0 %895
      %897 = vrot.lane.b32.xlu0 %v767, 8
      %v898 = vpop.permute.xlu0 %897
      %899 = vrot.lane.b32.xlu0 %v770, 8
      %v900 = vpop.permute.xlu0 %899
      %901 = vrot.lane.b32.xlu0 %v782, 8
      %v902 = vpop.permute.xlu0 %901
      %903 = vrot.lane.b32.xlu0 %v785, 8
      %v904 = vpop.permute.xlu0 %903
      %905 = vrot.lane.b32.xlu0 %v797, 8
      %v906 = vpop.permute.xlu0 %905
      %907 = vrot.lane.b32.xlu0 %v800, 8
      %v908 = vpop.permute.xlu0 %907
      %909 = vrot.lane.b32.xlu0 %v812, 8
      %v910 = vpop.permute.xlu0 %909
      %911 = vrot.lane.b32.xlu0 %v815, 8
      %v912 = vpop.permute.xlu0 %911
      %913 = vrot.lane.b32.xlu0 %v827, 8
      %v914 = vpop.permute.xlu0 %913
      %915 = vrot.lane.b32.xlu0 %v830, 8
      %v916 = vpop.permute.xlu0 %915
      %917 = vrot.lane.b32.xlu0 %v842, 8
      %v918 = vpop.permute.xlu0 %917
      %919 = vrot.lane.b32.xlu0 %v845, 8
      %v920 = vpop.permute.xlu0 %919
      %921 = vrot.lane.b32.xlu0 %v857, 8
      %v922 = vpop.permute.xlu0 %921
      %923 = vrot.lane.b32.xlu0 %v860, 8
      %v924 = vpop.permute.xlu0 %923
      %vm925 = vcmask 1046528
      %v926 = vrot.slane %v588, 1
      %v927 = vrot.slane %v589, 1
      %v928 = vsel %vm925, %v926, %v927
      %v929 = vrot.slane %v590, 1
      %v930 = vrot.slane %v591, 1
      %v931 = vsel %vm925, %v929, %v930
      %v932 = vrot.slane %v592, 1
      %v933 = vrot.slane %v593, 1
      %v934 = vsel %vm925, %v932, %v933
      %v935 = vrot.slane %v594, 1
      %v936 = vrot.slane %v595, 1
      %v937 = vsel %vm925, %v935, %v936
      %v938 = vrot.slane %v596, 1
      %v939 = vrot.slane %v597, 1
      %v940 = vsel %vm925, %v938, %v939
      %v941 = vrot.slane %v598, 1
      %v942 = vrot.slane %v599, 1
      %v943 = vsel %vm925, %v941, %v942
      %v944 = vrot.slane %v600, 1
      %v945 = vrot.slane %v601, 1
      %v946 = vsel %vm925, %v944, %v945
      %v947 = vrot.slane %v602, 1
      %v948 = vrot.slane %v603, 1
      %v949 = vsel %vm925, %v947, %v948
      %v950 = vrot.slane %v604, 1
      %v951 = vrot.slane %v605, 1
      %v952 = vsel %vm925, %v950, %v951
      %v953 = vrot.slane %v606, 1
      %v954 = vrot.slane %v607, 1
      %v955 = vsel %vm925, %v953, %v954
      %v956 = vrot.slane %v608, 1
      %v957 = vrot.slane %v609, 1
      %v958 = vsel %vm925, %v956, %v957
      %v959 = vrot.slane %v610, 1
      %v960 = vrot.slane %v611, 1
      %v961 = vsel %vm925, %v959, %v960
      %v962 = vrot.slane %v612, 1
      %v963 = vrot.slane %v613, 1
      %v964 = vsel %vm925, %v962, %v963
      %v965 = vrot.slane %v614, 1
      %v966 = vrot.slane %v615, 1
      %v967 = vsel %vm925, %v965, %v966
      %v968 = vrot.slane %v616, 1
      %v969 = vrot.slane %v617, 1
      %v970 = vsel %vm925, %v968, %v969
      %v971 = vrot.slane %v618, 1
      %v972 = vrot.slane %v619, 1
      %v973 = vsel %vm925, %v971, %v972
      %974 = vrot.lane.b32.xlu0 %v928, 16
      %v975 = vpop.permute.xlu0 %974
      %976 = vrot.lane.b32.xlu0 %v927, 16
      %v977 = vpop.permute.xlu0 %976
      %978 = vrot.lane.b32.xlu0 %v931, 16
      %v979 = vpop.permute.xlu0 %978
      %980 = vrot.lane.b32.xlu0 %v930, 16
      %v981 = vpop.permute.xlu0 %980
      %982 = vrot.lane.b32.xlu0 %v934, 16
      %v983 = vpop.permute.xlu0 %982
      %984 = vrot.lane.b32.xlu0 %v933, 16
      %v985 = vpop.permute.xlu0 %984
      %986 = vrot.lane.b32.xlu0 %v937, 16
      %v987 = vpop.permute.xlu0 %986
      %988 = vrot.lane.b32.xlu0 %v936, 16
      %v989 = vpop.permute.xlu0 %988
      %990 = vrot.lane.b32.xlu0 %v940, 16
      %v991 = vpop.permute.xlu0 %990
      %992 = vrot.lane.b32.xlu0 %v939, 16
      %v993 = vpop.permute.xlu0 %992
      %994 = vrot.lane.b32.xlu0 %v943, 16
      %v995 = vpop.permute.xlu0 %994
      %996 = vrot.lane.b32.xlu0 %v942, 16
      %v997 = vpop.permute.xlu0 %996
      %998 = vrot.lane.b32.xlu0 %v946, 16
      %v999 = vpop.permute.xlu0 %998
      %1000 = vrot.lane.b32.xlu0 %v945, 16
      %v1001 = vpop.permute.xlu0 %1000
      %1002 = vrot.lane.b32.xlu0 %v949, 16
      %v1003 = vpop.permute.xlu0 %1002
      %1004 = vrot.lane.b32.xlu0 %v948, 16
      %v1005 = vpop.permute.xlu0 %1004
      %1006 = vrot.lane.b32.xlu0 %v952, 16
      %v1007 = vpop.permute.xlu0 %1006
      %1008 = vrot.lane.b32.xlu0 %v951, 16
      %v1009 = vpop.permute.xlu0 %1008
      %1010 = vrot.lane.b32.xlu0 %v955, 16
      %v1011 = vpop.permute.xlu0 %1010
      %1012 = vrot.lane.b32.xlu0 %v954, 16
      %v1013 = vpop.permute.xlu0 %1012
      %1014 = vrot.lane.b32.xlu0 %v958, 16
      %v1015 = vpop.permute.xlu0 %1014
      %1016 = vrot.lane.b32.xlu0 %v957, 16
      %v1017 = vpop.permute.xlu0 %1016
      %1018 = vrot.lane.b32.xlu0 %v961, 16
      %v1019 = vpop.permute.xlu0 %1018
      %1020 = vrot.lane.b32.xlu0 %v960, 16
      %v1021 = vpop.permute.xlu0 %1020
      %1022 = vrot.lane.b32.xlu0 %v964, 16
      %v1023 = vpop.permute.xlu0 %1022
      %1024 = vrot.lane.b32.xlu0 %v963, 16
      %v1025 = vpop.permute.xlu0 %1024
      %1026 = vrot.lane.b32.xlu0 %v967, 16
      %v1027 = vpop.permute.xlu0 %1026
      %1028 = vrot.lane.b32.xlu0 %v966, 16
      %v1029 = vpop.permute.xlu0 %1028
      %1030 = vrot.lane.b32.xlu0 %v970, 16
      %v1031 = vpop.permute.xlu0 %1030
      %1032 = vrot.lane.b32.xlu0 %v969, 16
      %v1033 = vpop.permute.xlu0 %1032
      %1034 = vrot.lane.b32.xlu0 %v973, 16
      %v1035 = vpop.permute.xlu0 %1034
      %1036 = vrot.lane.b32.xlu0 %v972, 16
      %v1037 = vpop.permute.xlu0 %1036
      %v1041 = vunpack.c.l.b16 %v468
      %v1042 = vunpack.c.l.b16 %v469
      %v1043 = vunpack.c.l.b16 %v470
      %v1044 = vpack.c.b16 %v1042, %v1041
      %v1045 = vpack.c.b16 %v1043, %v1043
      %1046 = vrot.lane.b32.xlu0 %v590, 24
      %v1047 = vpop.permute.xlu0 %1046
      %1048 = vrot.lane.b32.xlu0 %v591, 24
      %v1049 = vpop.permute.xlu0 %1048
      %1050 = vrot.lane.b32.xlu0 %v592, 24
      %v1051 = vpop.permute.xlu0 %1050
      %1052 = vrot.lane.b32.xlu0 %v593, 24
      %v1053 = vpop.permute.xlu0 %1052
      %1054 = vrot.lane.b32.xlu0 %v594, 24
      %v1055 = vpop.permute.xlu0 %1054
      %1056 = vrot.lane.b32.xlu0 %v595, 24
      %v1057 = vpop.permute.xlu0 %1056
      %1058 = vrot.lane.b32.xlu0 %v596, 24
      %v1059 = vpop.permute.xlu0 %1058
      %1060 = vrot.lane.b32.xlu0 %v597, 24
      %v1061 = vpop.permute.xlu0 %1060
      %1062 = vrot.lane.b32.xlu0 %v598, 24
      %v1063 = vpop.permute.xlu0 %1062
      %1064 = vrot.lane.b32.xlu0 %v599, 24
      %v1065 = vpop.permute.xlu0 %1064
      %1066 = vrot.lane.b32.xlu0 %v600, 24
      %v1067 = vpop.permute.xlu0 %1066
      %1068 = vrot.lane.b32.xlu0 %v601, 24
      %v1069 = vpop.permute.xlu0 %1068
      %1070 = vrot.lane.b32.xlu0 %v602, 24
      %v1071 = vpop.permute.xlu0 %1070
      %1072 = vrot.lane.b32.xlu0 %v603, 24
      %v1073 = vpop.permute.xlu0 %1072
      %1074 = vrot.lane.b32.xlu0 %v604, 24
      %v1075 = vpop.permute.xlu0 %1074
      %1076 = vrot.lane.b32.xlu0 %v605, 24
      %v1077 = vpop.permute.xlu0 %1076
      %1078 = vrot.lane.b32.xlu0 %v606, 24
      %v1079 = vpop.permute.xlu0 %1078
      %1080 = vrot.lane.b32.xlu0 %v607, 24
      %v1081 = vpop.permute.xlu0 %1080
      %1082 = vrot.lane.b32.xlu0 %v608, 24
      %v1083 = vpop.permute.xlu0 %1082
      %1084 = vrot.lane.b32.xlu0 %v609, 24
      %v1085 = vpop.permute.xlu0 %1084
      %1086 = vrot.lane.b32.xlu0 %v610, 24
      %v1087 = vpop.permute.xlu0 %1086
      %1088 = vrot.lane.b32.xlu0 %v611, 24
      %v1089 = vpop.permute.xlu0 %1088
      %1090 = vrot.lane.b32.xlu0 %v612, 24
      %v1091 = vpop.permute.xlu0 %1090
      %1092 = vrot.lane.b32.xlu0 %v613, 24
      %v1093 = vpop.permute.xlu0 %1092
      %1094 = vrot.lane.b32.xlu0 %v614, 24
      %v1095 = vpop.permute.xlu0 %1094
      %1096 = vrot.lane.b32.xlu0 %v615, 24
      %v1097 = vpop.permute.xlu0 %1096
      %1098 = vrot.lane.b32.xlu0 %v616, 24
      %v1099 = vpop.permute.xlu0 %1098
      %1100 = vrot.lane.b32.xlu0 %v617, 24
      %v1101 = vpop.permute.xlu0 %1100
      %1102 = vrot.lane.b32.xlu0 %v618, 24
      %v1103 = vpop.permute.xlu0 %1102
      %1104 = vrot.lane.b32.xlu0 %v619, 24
      %v1105 = vpop.permute.xlu0 %1104
      %1106 = vrot.lane.b32.xlu0 %v1044, 24
      %v1107 = vpop.permute.xlu0 %1106
      %1108 = vrot.lane.b32.xlu0 %v1045, 24
      %v1109 = vpop.permute.xlu0 %1108
      %v1111 = vshrl.u32 %v1044, 16
      %v1113 = vshll.u32 %v1044, 16
      %v1115 = vrot.slane %v1113, 1
      %v1116 = vor.u32 %v1111, %v1115
      %v1118 = vshll.u32 %v1045, 16
      %v1120 = vrot.slane %v1118, 1
      %v1121 = vsel %vm620, %v1116, %v1120
      %v1122 = vshrl.u32 %v1045, 16
      %v1124 = vor.u32 %v1122, %v1120
      %1125 = vrot.lane.b32.xlu0 %v647, 32
      %v1126 = vpop.permute.xlu0 %1125
      %1127 = vrot.lane.b32.xlu0 %v650, 32
      %v1128 = vpop.permute.xlu0 %1127
      %1129 = vrot.lane.b32.xlu0 %v662, 32
      %v1130 = vpop.permute.xlu0 %1129
      %1131 = vrot.lane.b32.xlu0 %v665, 32
      %v1132 = vpop.permute.xlu0 %1131
      %1133 = vrot.lane.b32.xlu0 %v677, 32
      %v1134 = vpop.permute.xlu0 %1133
      %1135 = vrot.lane.b32.xlu0 %v680, 32
      %v1136 = vpop.permute.xlu0 %1135
      %1137 = vrot.lane.b32.xlu0 %v692, 32
      %v1138 = vpop.permute.xlu0 %1137
      %1139 = vrot.lane.b32.xlu0 %v695, 32
      %v1140 = vpop.permute.xlu0 %1139
      %1141 = vrot.lane.b32.xlu0 %v707, 32
      %v1142 = vpop.permute.xlu0 %1141
      %1143 = vrot.lane.b32.xlu0 %v710, 32
      %v1144 = vpop.permute.xlu0 %1143
      %1145 = vrot.lane.b32.xlu0 %v722, 32
      %v1146 = vpop.permute.xlu0 %1145
      %1147 = vrot.lane.b32.xlu0 %v725, 32
      %v1148 = vpop.permute.xlu0 %1147
      %1149 = vrot.lane.b32.xlu0 %v737, 32
      %v1150 = vpop.permute.xlu0 %1149
      %1151 = vrot.lane.b32.xlu0 %v740, 32
      %v1152 = vpop.permute.xlu0 %1151
      %1153 = vrot.lane.b32.xlu0 %v752, 32
      %v1154 = vpop.permute.xlu0 %1153
      %1155 = vrot.lane.b32.xlu0 %v755, 32
      %v1156 = vpop.permute.xlu0 %1155
      %1157 = vrot.lane.b32.xlu0 %v767, 32
      %v1158 = vpop.permute.xlu0 %1157
      %1159 = vrot.lane.b32.xlu0 %v770, 32
      %v1160 = vpop.permute.xlu0 %1159
      %1161 = vrot.lane.b32.xlu0 %v782, 32
      %v1162 = vpop.permute.xlu0 %1161
      %1163 = vrot.lane.b32.xlu0 %v785, 32
      %v1164 = vpop.permute.xlu0 %1163
      %1165 = vrot.lane.b32.xlu0 %v797, 32
      %v1166 = vpop.permute.xlu0 %1165
      %1167 = vrot.lane.b32.xlu0 %v800, 32
      %v1168 = vpop.permute.xlu0 %1167
      %1169 = vrot.lane.b32.xlu0 %v812, 32
      %v1170 = vpop.permute.xlu0 %1169
      %1171 = vrot.lane.b32.xlu0 %v815, 32
      %v1172 = vpop.permute.xlu0 %1171
      %1173 = vrot.lane.b32.xlu0 %v827, 32
      %v1174 = vpop.permute.xlu0 %1173
      %1175 = vrot.lane.b32.xlu0 %v830, 32
      %v1176 = vpop.permute.xlu0 %1175
      %1177 = vrot.lane.b32.xlu0 %v842, 32
      %v1178 = vpop.permute.xlu0 %1177
      %1179 = vrot.lane.b32.xlu0 %v845, 32
      %v1180 = vpop.permute.xlu0 %1179
      %1181 = vrot.lane.b32.xlu0 %v857, 32
      %v1182 = vpop.permute.xlu0 %1181
      %1183 = vrot.lane.b32.xlu0 %v860, 32
      %v1184 = vpop.permute.xlu0 %1183
      %1185 = vrot.lane.b32.xlu0 %v1121, 32
      %v1186 = vpop.permute.xlu0 %1185
      %1187 = vrot.lane.b32.xlu0 %v1124, 32
      %v1188 = vpop.permute.xlu0 %1187
      %v1189 = vrot.slane %v1044, 1
      %v1190 = vrot.slane %v1045, 1
      %v1191 = vsel %vm925, %v1189, %v1190
      %1192 = vrot.lane.b32.xlu0 %v931, 40
      %v1193 = vpop.permute.xlu0 %1192
      %1194 = vrot.lane.b32.xlu0 %v930, 40
      %v1195 = vpop.permute.xlu0 %1194
      %1196 = vrot.lane.b32.xlu0 %v934, 40
      %v1197 = vpop.permute.xlu0 %1196
      %1198 = vrot.lane.b32.xlu0 %v933, 40
      %v1199 = vpop.permute.xlu0 %1198
      %1200 = vrot.lane.b32.xlu0 %v937, 40
      %v1201 = vpop.permute.xlu0 %1200
      %1202 = vrot.lane.b32.xlu0 %v936, 40
      %v1203 = vpop.permute.xlu0 %1202
      %1204 = vrot.lane.b32.xlu0 %v940, 40
      %v1205 = vpop.permute.xlu0 %1204
      %1206 = vrot.lane.b32.xlu0 %v939, 40
      %v1207 = vpop.permute.xlu0 %1206
      %1208 = vrot.lane.b32.xlu0 %v943, 40
      %v1209 = vpop.permute.xlu0 %1208
      %1210 = vrot.lane.b32.xlu0 %v942, 40
      %v1211 = vpop.permute.xlu0 %1210
      %1212 = vrot.lane.b32.xlu0 %v946, 40
      %v1213 = vpop.permute.xlu0 %1212
      %1214 = vrot.lane.b32.xlu0 %v945, 40
      %v1215 = vpop.permute.xlu0 %1214
      %1216 = vrot.lane.b32.xlu0 %v949, 40
      %v1217 = vpop.permute.xlu0 %1216
      %1218 = vrot.lane.b32.xlu0 %v948, 40
      %v1219 = vpop.permute.xlu0 %1218
      %1220 = vrot.lane.b32.xlu0 %v952, 40
      %v1221 = vpop.permute.xlu0 %1220
      %1222 = vrot.lane.b32.xlu0 %v951, 40
      %v1223 = vpop.permute.xlu0 %1222
      %1224 = vrot.lane.b32.xlu0 %v955, 40
      %v1225 = vpop.permute.xlu0 %1224
      %1226 = vrot.lane.b32.xlu0 %v954, 40
      %v1227 = vpop.permute.xlu0 %1226
      %1228 = vrot.lane.b32.xlu0 %v958, 40
      %v1229 = vpop.permute.xlu0 %1228
      %1230 = vrot.lane.b32.xlu0 %v957, 40
      %v1231 = vpop.permute.xlu0 %1230
      %1232 = vrot.lane.b32.xlu0 %v961, 40
      %v1233 = vpop.permute.xlu0 %1232
      %1234 = vrot.lane.b32.xlu0 %v960, 40
      %v1235 = vpop.permute.xlu0 %1234
      %1236 = vrot.lane.b32.xlu0 %v964, 40
      %v1237 = vpop.permute.xlu0 %1236
      %1238 = vrot.lane.b32.xlu0 %v963, 40
      %v1239 = vpop.permute.xlu0 %1238
      %1240 = vrot.lane.b32.xlu0 %v967, 40
      %v1241 = vpop.permute.xlu0 %1240
      %1242 = vrot.lane.b32.xlu0 %v966, 40
      %v1243 = vpop.permute.xlu0 %1242
      %1244 = vrot.lane.b32.xlu0 %v970, 40
      %v1245 = vpop.permute.xlu0 %1244
      %1246 = vrot.lane.b32.xlu0 %v969, 40
      %v1247 = vpop.permute.xlu0 %1246
      %1248 = vrot.lane.b32.xlu0 %v973, 40
      %v1249 = vpop.permute.xlu0 %1248
      %1250 = vrot.lane.b32.xlu0 %v972, 40
      %v1251 = vpop.permute.xlu0 %1250
      %1252 = vrot.lane.b32.xlu0 %v1191, 40
      %v1253 = vpop.permute.xlu0 %1252
      %1254 = vrot.lane.b32.xlu0 %v1190, 40
      %v1255 = vpop.permute.xlu0 %1254
      %v1259 = vunpack.c.l.b16 %v472
      %v1260 = vunpack.c.l.b16 %v473
      %v1261 = vunpack.c.l.b16 %v474
      %v1262 = vpack.c.b16 %v1260, %v1259
      %v1263 = vpack.c.b16 %v1261, %v1261
      %1264 = vrot.lane.b32.xlu0 %v592, 48
      %v1265 = vpop.permute.xlu0 %1264
      %1266 = vrot.lane.b32.xlu0 %v593, 48
      %v1267 = vpop.permute.xlu0 %1266
      %1268 = vrot.lane.b32.xlu0 %v594, 48
      %v1269 = vpop.permute.xlu0 %1268
      %1270 = vrot.lane.b32.xlu0 %v595, 48
      %v1271 = vpop.permute.xlu0 %1270
      %1272 = vrot.lane.b32.xlu0 %v596, 48
      %v1273 = vpop.permute.xlu0 %1272
      %1274 = vrot.lane.b32.xlu0 %v597, 48
      %v1275 = vpop.permute.xlu0 %1274
      %1276 = vrot.lane.b32.xlu0 %v598, 48
      %v1277 = vpop.permute.xlu0 %1276
      %1278 = vrot.lane.b32.xlu0 %v599, 48
      %v1279 = vpop.permute.xlu0 %1278
      %1280 = vrot.lane.b32.xlu0 %v600, 48
      %v1281 = vpop.permute.xlu0 %1280
      %1282 = vrot.lane.b32.xlu0 %v601, 48
      %v1283 = vpop.permute.xlu0 %1282
      %1284 = vrot.lane.b32.xlu0 %v602, 48
      %v1285 = vpop.permute.xlu0 %1284
      %1286 = vrot.lane.b32.xlu0 %v603, 48
      %v1287 = vpop.permute.xlu0 %1286
      %1288 = vrot.lane.b32.xlu0 %v604, 48
      %v1289 = vpop.permute.xlu0 %1288
      %1290 = vrot.lane.b32.xlu0 %v605, 48
      %v1291 = vpop.permute.xlu0 %1290
      %1292 = vrot.lane.b32.xlu0 %v606, 48
      %v1293 = vpop.permute.xlu0 %1292
      %1294 = vrot.lane.b32.xlu0 %v607, 48
      %v1295 = vpop.permute.xlu0 %1294
      %1296 = vrot.lane.b32.xlu0 %v608, 48
      %v1297 = vpop.permute.xlu0 %1296
      %1298 = vrot.lane.b32.xlu0 %v609, 48
      %v1299 = vpop.permute.xlu0 %1298
      %1300 = vrot.lane.b32.xlu0 %v610, 48
      %v1301 = vpop.permute.xlu0 %1300
      %1302 = vrot.lane.b32.xlu0 %v611, 48
      %v1303 = vpop.permute.xlu0 %1302
      %1304 = vrot.lane.b32.xlu0 %v612, 48
      %v1305 = vpop.permute.xlu0 %1304
      %1306 = vrot.lane.b32.xlu0 %v613, 48
      %v1307 = vpop.permute.xlu0 %1306
      %1308 = vrot.lane.b32.xlu0 %v614, 48
      %v1309 = vpop.permute.xlu0 %1308
      %1310 = vrot.lane.b32.xlu0 %v615, 48
      %v1311 = vpop.permute.xlu0 %1310
      %1312 = vrot.lane.b32.xlu0 %v616, 48
      %v1313 = vpop.permute.xlu0 %1312
      %1314 = vrot.lane.b32.xlu0 %v617, 48
      %v1315 = vpop.permute.xlu0 %1314
      %1316 = vrot.lane.b32.xlu0 %v618, 48
      %v1317 = vpop.permute.xlu0 %1316
      %1318 = vrot.lane.b32.xlu0 %v619, 48
      %v1319 = vpop.permute.xlu0 %1318
      %1320 = vrot.lane.b32.xlu0 %v1044, 48
      %v1321 = vpop.permute.xlu0 %1320
      %1322 = vrot.lane.b32.xlu0 %v1045, 48
      %v1323 = vpop.permute.xlu0 %1322
      %1324 = vrot.lane.b32.xlu0 %v1262, 48
      %v1325 = vpop.permute.xlu0 %1324
      %1326 = vrot.lane.b32.xlu0 %v1263, 48
      %v1327 = vpop.permute.xlu0 %1326
      %v1329 = vshrl.u32 %v1262, 16
      %v1331 = vshll.u32 %v1262, 16
      %v1333 = vrot.slane %v1331, 1
      %v1334 = vor.u32 %v1329, %v1333
      %v1336 = vshll.u32 %v1263, 16
      %v1338 = vrot.slane %v1336, 1
      %v1339 = vsel %vm620, %v1334, %v1338
      %v1340 = vshrl.u32 %v1263, 16
      %v1342 = vor.u32 %v1340, %v1338
      %1343 = vrot.lane.b32.xlu0 %v662, 56
      %v1344 = vpop.permute.xlu0 %1343
      %1345 = vrot.lane.b32.xlu0 %v665, 56
      %v1346 = vpop.permute.xlu0 %1345
      %1347 = vrot.lane.b32.xlu0 %v677, 56
      %v1348 = vpop.permute.xlu0 %1347
      %1349 = vrot.lane.b32.xlu0 %v680, 56
      %v1350 = vpop.permute.xlu0 %1349
      %1351 = vrot.lane.b32.xlu0 %v692, 56
      %v1352 = vpop.permute.xlu0 %1351
      %1353 = vrot.lane.b32.xlu0 %v695, 56
      %v1354 = vpop.permute.xlu0 %1353
      %1355 = vrot.lane.b32.xlu0 %v707, 56
      %v1356 = vpop.permute.xlu0 %1355
      %1357 = vrot.lane.b32.xlu0 %v710, 56
      %v1358 = vpop.permute.xlu0 %1357
      %1359 = vrot.lane.b32.xlu0 %v722, 56
      %v1360 = vpop.permute.xlu0 %1359
      %1361 = vrot.lane.b32.xlu0 %v725, 56
      %v1362 = vpop.permute.xlu0 %1361
      %1363 = vrot.lane.b32.xlu0 %v737, 56
      %v1364 = vpop.permute.xlu0 %1363
      %1365 = vrot.lane.b32.xlu0 %v740, 56
      %v1366 = vpop.permute.xlu0 %1365
      %1367 = vrot.lane.b32.xlu0 %v752, 56
      %v1368 = vpop.permute.xlu0 %1367
      %1369 = vrot.lane.b32.xlu0 %v755, 56
      %v1370 = vpop.permute.xlu0 %1369
      %1371 = vrot.lane.b32.xlu0 %v767, 56
      %v1372 = vpop.permute.xlu0 %1371
      %1373 = vrot.lane.b32.xlu0 %v770, 56
      %v1374 = vpop.permute.xlu0 %1373
      %1375 = vrot.lane.b32.xlu0 %v782, 56
      %v1376 = vpop.permute.xlu0 %1375
      %1377 = vrot.lane.b32.xlu0 %v785, 56
      %v1378 = vpop.permute.xlu0 %1377
      %1379 = vrot.lane.b32.xlu0 %v797, 56
      %v1380 = vpop.permute.xlu0 %1379
      %1381 = vrot.lane.b32.xlu0 %v800, 56
      %v1382 = vpop.permute.xlu0 %1381
      %1383 = vrot.lane.b32.xlu0 %v812, 56
      %v1384 = vpop.permute.xlu0 %1383
      %1385 = vrot.lane.b32.xlu0 %v815, 56
      %v1386 = vpop.permute.xlu0 %1385
      %1387 = vrot.lane.b32.xlu0 %v827, 56
      %v1388 = vpop.permute.xlu0 %1387
      %1389 = vrot.lane.b32.xlu0 %v830, 56
      %v1390 = vpop.permute.xlu0 %1389
      %1391 = vrot.lane.b32.xlu0 %v842, 56
      %v1392 = vpop.permute.xlu0 %1391
      %1393 = vrot.lane.b32.xlu0 %v845, 56
      %v1394 = vpop.permute.xlu0 %1393
      %1395 = vrot.lane.b32.xlu0 %v857, 56
      %v1396 = vpop.permute.xlu0 %1395
      %1397 = vrot.lane.b32.xlu0 %v860, 56
      %v1398 = vpop.permute.xlu0 %1397
      %1399 = vrot.lane.b32.xlu0 %v1121, 56
      %v1400 = vpop.permute.xlu0 %1399
      %1401 = vrot.lane.b32.xlu0 %v1124, 56
      %v1402 = vpop.permute.xlu0 %1401
      %1403 = vrot.lane.b32.xlu0 %v1339, 56
      %v1404 = vpop.permute.xlu0 %1403
      %1405 = vrot.lane.b32.xlu0 %v1342, 56
      %v1406 = vpop.permute.xlu0 %1405
      %v1407 = vrot.slane %v1262, 1
      %v1408 = vrot.slane %v1263, 1
      %v1409 = vsel %vm925, %v1407, %v1408
      %1410 = vrot.lane.b32.xlu0 %v934, 64
      %v1411 = vpop.permute.xlu0 %1410
      %1412 = vrot.lane.b32.xlu0 %v933, 64
      %v1413 = vpop.permute.xlu0 %1412
      %1414 = vrot.lane.b32.xlu0 %v937, 64
      %v1415 = vpop.permute.xlu0 %1414
      %1416 = vrot.lane.b32.xlu0 %v936, 64
      %v1417 = vpop.permute.xlu0 %1416
      %1418 = vrot.lane.b32.xlu0 %v940, 64
      %v1419 = vpop.permute.xlu0 %1418
      %1420 = vrot.lane.b32.xlu0 %v939, 64
      %v1421 = vpop.permute.xlu0 %1420
      %1422 = vrot.lane.b32.xlu0 %v943, 64
      %v1423 = vpop.permute.xlu0 %1422
      %1424 = vrot.lane.b32.xlu0 %v942, 64
      %v1425 = vpop.permute.xlu0 %1424
      %1426 = vrot.lane.b32.xlu0 %v946, 64
      %v1427 = vpop.permute.xlu0 %1426
      %1428 = vrot.lane.b32.xlu0 %v945, 64
      %v1429 = vpop.permute.xlu0 %1428
      %1430 = vrot.lane.b32.xlu0 %v949, 64
      %v1431 = vpop.permute.xlu0 %1430
      %1432 = vrot.lane.b32.xlu0 %v948, 64
      %v1433 = vpop.permute.xlu0 %1432
      %1434 = vrot.lane.b32.xlu0 %v952, 64
      %v1435 = vpop.permute.xlu0 %1434
      %1436 = vrot.lane.b32.xlu0 %v951, 64
      %v1437 = vpop.permute.xlu0 %1436
      %1438 = vrot.lane.b32.xlu0 %v955, 64
      %v1439 = vpop.permute.xlu0 %1438
      %1440 = vrot.lane.b32.xlu0 %v954, 64
      %v1441 = vpop.permute.xlu0 %1440
      %1442 = vrot.lane.b32.xlu0 %v958, 64
      %v1443 = vpop.permute.xlu0 %1442
      %1444 = vrot.lane.b32.xlu0 %v957, 64
      %v1445 = vpop.permute.xlu0 %1444
      %1446 = vrot.lane.b32.xlu0 %v961, 64
      %v1447 = vpop.permute.xlu0 %1446
      %1448 = vrot.lane.b32.xlu0 %v960, 64
      %v1449 = vpop.permute.xlu0 %1448
      %1450 = vrot.lane.b32.xlu0 %v964, 64
      %v1451 = vpop.permute.xlu0 %1450
      %1452 = vrot.lane.b32.xlu0 %v963, 64
      %v1453 = vpop.permute.xlu0 %1452
      %1454 = vrot.lane.b32.xlu0 %v967, 64
      %v1455 = vpop.permute.xlu0 %1454
      %1456 = vrot.lane.b32.xlu0 %v966, 64
      %v1457 = vpop.permute.xlu0 %1456
      %1458 = vrot.lane.b32.xlu0 %v970, 64
      %v1459 = vpop.permute.xlu0 %1458
      %1460 = vrot.lane.b32.xlu0 %v969, 64
      %v1461 = vpop.permute.xlu0 %1460
      %1462 = vrot.lane.b32.xlu0 %v973, 64
      %v1463 = vpop.permute.xlu0 %1462
      %1464 = vrot.lane.b32.xlu0 %v972, 64
      %v1465 = vpop.permute.xlu0 %1464
      %1466 = vrot.lane.b32.xlu0 %v1191, 64
      %v1467 = vpop.permute.xlu0 %1466
      %1468 = vrot.lane.b32.xlu0 %v1190, 64
      %v1469 = vpop.permute.xlu0 %1468
      %1470 = vrot.lane.b32.xlu0 %v1409, 64
      %v1471 = vpop.permute.xlu0 %1470
      %1472 = vrot.lane.b32.xlu0 %v1408, 64
      %v1473 = vpop.permute.xlu0 %1472
      %vm1474 = vcmask 64512
      %v1476 = vsel %vm1474, %v588, %v862
      %v1478 = vsel %vm1474, %v589, %v864
      %v1480 = vsel %vm1474, %v590, %v866
      %v1482 = vsel %vm1474, %v591, %v868
      %v1484 = vsel %vm1474, %v592, %v870
      %v1486 = vsel %vm1474, %v593, %v872
      %v1488 = vsel %vm1474, %v594, %v874
      %v1490 = vsel %vm1474, %v595, %v876
      %v1492 = vsel %vm1474, %v596, %v878
      %v1494 = vsel %vm1474, %v597, %v880
      %v1496 = vsel %vm1474, %v598, %v882
      %v1498 = vsel %vm1474, %v599, %v884
      %v1500 = vsel %vm1474, %v600, %v886
      %v1502 = vsel %vm1474, %v601, %v888
      %v1504 = vsel %vm1474, %v602, %v890
      %v1506 = vsel %vm1474, %v603, %v892
      %v1508 = vsel %vm1474, %v604, %v894
      %v1510 = vsel %vm1474, %v605, %v896
      %v1512 = vsel %vm1474, %v606, %v898
      %v1514 = vsel %vm1474, %v607, %v900
      %v1516 = vsel %vm1474, %v608, %v902
      %v1518 = vsel %vm1474, %v609, %v904
      %v1520 = vsel %vm1474, %v610, %v906
      %v1522 = vsel %vm1474, %v611, %v908
      %v1524 = vsel %vm1474, %v612, %v910
      %v1526 = vsel %vm1474, %v613, %v912
      %v1528 = vsel %vm1474, %v614, %v914
      %v1530 = vsel %vm1474, %v615, %v916
      %v1532 = vsel %vm1474, %v616, %v918
      %v1534 = vsel %vm1474, %v617, %v920
      %v1536 = vsel %vm1474, %v618, %v922
      %v1538 = vsel %vm1474, %v619, %v924
      %vm1539 = vcmask 130048
      %v1541 = vsel %vm1539, %v1476, %v975
      %v1543 = vsel %vm1539, %v1478, %v977
      %v1545 = vsel %vm1539, %v1480, %v979
      %v1547 = vsel %vm1539, %v1482, %v981
      %v1549 = vsel %vm1539, %v1484, %v983
      %v1551 = vsel %vm1539, %v1486, %v985
      %v1553 = vsel %vm1539, %v1488, %v987
      %v1555 = vsel %vm1539, %v1490, %v989
      %v1557 = vsel %vm1539, %v1492, %v991
      %v1559 = vsel %vm1539, %v1494, %v993
      %v1561 = vsel %vm1539, %v1496, %v995
      %v1563 = vsel %vm1539, %v1498, %v997
      %v1565 = vsel %vm1539, %v1500, %v999
      %v1567 = vsel %vm1539, %v1502, %v1001
      %v1569 = vsel %vm1539, %v1504, %v1003
      %v1571 = vsel %vm1539, %v1506, %v1005
      %v1573 = vsel %vm1539, %v1508, %v1007
      %v1575 = vsel %vm1539, %v1510, %v1009
      %v1577 = vsel %vm1539, %v1512, %v1011
      %v1579 = vsel %vm1539, %v1514, %v1013
      %v1581 = vsel %vm1539, %v1516, %v1015
      %v1583 = vsel %vm1539, %v1518, %v1017
      %v1585 = vsel %vm1539, %v1520, %v1019
      %v1587 = vsel %vm1539, %v1522, %v1021
      %v1589 = vsel %vm1539, %v1524, %v1023
      %v1591 = vsel %vm1539, %v1526, %v1025
      %v1593 = vsel %vm1539, %v1528, %v1027
      %v1595 = vsel %vm1539, %v1530, %v1029
      %v1597 = vsel %vm1539, %v1532, %v1031
      %v1599 = vsel %vm1539, %v1534, %v1033
      %v1601 = vsel %vm1539, %v1536, %v1035
      %v1603 = vsel %vm1539, %v1538, %v1037
      %vm1604 = vcmask 195584
      %v1606 = vsel %vm1604, %v1541, %v1047
      %v1608 = vsel %vm1604, %v1543, %v1049
      %v1610 = vsel %vm1604, %v1545, %v1051
      %v1612 = vsel %vm1604, %v1547, %v1053
      %v1614 = vsel %vm1604, %v1549, %v1055
      %v1616 = vsel %vm1604, %v1551, %v1057
      %v1618 = vsel %vm1604, %v1553, %v1059
      %v1620 = vsel %vm1604, %v1555, %v1061
      %v1622 = vsel %vm1604, %v1557, %v1063
      %v1624 = vsel %vm1604, %v1559, %v1065
      %v1626 = vsel %vm1604, %v1561, %v1067
      %v1628 = vsel %vm1604, %v1563, %v1069
      %v1630 = vsel %vm1604, %v1565, %v1071
      %v1632 = vsel %vm1604, %v1567, %v1073
      %v1634 = vsel %vm1604, %v1569, %v1075
      %v1636 = vsel %vm1604, %v1571, %v1077
      %v1638 = vsel %vm1604, %v1573, %v1079
      %v1640 = vsel %vm1604, %v1575, %v1081
      %v1642 = vsel %vm1604, %v1577, %v1083
      %v1644 = vsel %vm1604, %v1579, %v1085
      %v1646 = vsel %vm1604, %v1581, %v1087
      %v1648 = vsel %vm1604, %v1583, %v1089
      %v1650 = vsel %vm1604, %v1585, %v1091
      %v1652 = vsel %vm1604, %v1587, %v1093
      %v1654 = vsel %vm1604, %v1589, %v1095
      %v1656 = vsel %vm1604, %v1591, %v1097
      %v1658 = vsel %vm1604, %v1593, %v1099
      %v1660 = vsel %vm1604, %v1595, %v1101
      %v1662 = vsel %vm1604, %v1597, %v1103
      %v1664 = vsel %vm1604, %v1599, %v1105
      %v1666 = vsel %vm1604, %v1601, %v1107
      %v1668 = vsel %vm1604, %v1603, %v1109
      %vm1669 = vcmask 261120
      %v1671 = vsel %vm1669, %v1606, %v1126
      %v1673 = vsel %vm1669, %v1608, %v1128
      %v1675 = vsel %vm1669, %v1610, %v1130
      %v1677 = vsel %vm1669, %v1612, %v1132
      %v1679 = vsel %vm1669, %v1614, %v1134
      %v1681 = vsel %vm1669, %v1616, %v1136
      %v1683 = vsel %vm1669, %v1618, %v1138
      %v1685 = vsel %vm1669, %v1620, %v1140
      %v1687 = vsel %vm1669, %v1622, %v1142
      %v1689 = vsel %vm1669, %v1624, %v1144
      %v1691 = vsel %vm1669, %v1626, %v1146
      %v1693 = vsel %vm1669, %v1628, %v1148
      %v1695 = vsel %vm1669, %v1630, %v1150
      %v1697 = vsel %vm1669, %v1632, %v1152
      %v1699 = vsel %vm1669, %v1634, %v1154
      %v1701 = vsel %vm1669, %v1636, %v1156
      %v1703 = vsel %vm1669, %v1638, %v1158
      %v1705 = vsel %vm1669, %v1640, %v1160
      %v1707 = vsel %vm1669, %v1642, %v1162
      %v1709 = vsel %vm1669, %v1644, %v1164
      %v1711 = vsel %vm1669, %v1646, %v1166
      %v1713 = vsel %vm1669, %v1648, %v1168
      %v1715 = vsel %vm1669, %v1650, %v1170
      %v1717 = vsel %vm1669, %v1652, %v1172
      %v1719 = vsel %vm1669, %v1654, %v1174
      %v1721 = vsel %vm1669, %v1656, %v1176
      %v1723 = vsel %vm1669, %v1658, %v1178
      %v1725 = vsel %vm1669, %v1660, %v1180
      %v1727 = vsel %vm1669, %v1662, %v1182
      %v1729 = vsel %vm1669, %v1664, %v1184
      %v1731 = vsel %vm1669, %v1666, %v1186
      %v1733 = vsel %vm1669, %v1668, %v1188
      %vm1734 = vcmask 326656
      %v1736 = vsel %vm1734, %v1671, %v1193
      %v1738 = vsel %vm1734, %v1673, %v1195
      %v1740 = vsel %vm1734, %v1675, %v1197
      %v1742 = vsel %vm1734, %v1677, %v1199
      %v1744 = vsel %vm1734, %v1679, %v1201
      %v1746 = vsel %vm1734, %v1681, %v1203
      %v1748 = vsel %vm1734, %v1683, %v1205
      %v1750 = vsel %vm1734, %v1685, %v1207
      %v1752 = vsel %vm1734, %v1687, %v1209
      %v1754 = vsel %vm1734, %v1689, %v1211
      %v1756 = vsel %vm1734, %v1691, %v1213
      %v1758 = vsel %vm1734, %v1693, %v1215
      %v1760 = vsel %vm1734, %v1695, %v1217
      %v1762 = vsel %vm1734, %v1697, %v1219
      %v1764 = vsel %vm1734, %v1699, %v1221
      %v1766 = vsel %vm1734, %v1701, %v1223
      %v1768 = vsel %vm1734, %v1703, %v1225
      %v1770 = vsel %vm1734, %v1705, %v1227
      %v1772 = vsel %vm1734, %v1707, %v1229
      %v1774 = vsel %vm1734, %v1709, %v1231
      %v1776 = vsel %vm1734, %v1711, %v1233
      %v1778 = vsel %vm1734, %v1713, %v1235
      %v1780 = vsel %vm1734, %v1715, %v1237
      %v1782 = vsel %vm1734, %v1717, %v1239
      %v1784 = vsel %vm1734, %v1719, %v1241
      %v1786 = vsel %vm1734, %v1721, %v1243
      %v1788 = vsel %vm1734, %v1723, %v1245
      %v1790 = vsel %vm1734, %v1725, %v1247
      %v1792 = vsel %vm1734, %v1727, %v1249
      %v1794 = vsel %vm1734, %v1729, %v1251
      %v1796 = vsel %vm1734, %v1731, %v1253
      %v1798 = vsel %vm1734, %v1733, %v1255
      %vm1799 = vcmask 392192
      %v1801 = vsel %vm1799, %v1736, %v1265
      %v1803 = vsel %vm1799, %v1738, %v1267
      %v1805 = vsel %vm1799, %v1740, %v1269
      %v1807 = vsel %vm1799, %v1742, %v1271
      %v1809 = vsel %vm1799, %v1744, %v1273
      %v1811 = vsel %vm1799, %v1746, %v1275
      %v1813 = vsel %vm1799, %v1748, %v1277
      %v1815 = vsel %vm1799, %v1750, %v1279
      %v1817 = vsel %vm1799, %v1752, %v1281
      %v1819 = vsel %vm1799, %v1754, %v1283
      %v1821 = vsel %vm1799, %v1756, %v1285
      %v1823 = vsel %vm1799, %v1758, %v1287
      %v1825 = vsel %vm1799, %v1760, %v1289
      %v1827 = vsel %vm1799, %v1762, %v1291
      %v1829 = vsel %vm1799, %v1764, %v1293
      %v1831 = vsel %vm1799, %v1766, %v1295
      %v1833 = vsel %vm1799, %v1768, %v1297
      %v1835 = vsel %vm1799, %v1770, %v1299
      %v1837 = vsel %vm1799, %v1772, %v1301
      %v1839 = vsel %vm1799, %v1774, %v1303
      %v1841 = vsel %vm1799, %v1776, %v1305
      %v1843 = vsel %vm1799, %v1778, %v1307
      %v1845 = vsel %vm1799, %v1780, %v1309
      %v1847 = vsel %vm1799, %v1782, %v1311
      %v1849 = vsel %vm1799, %v1784, %v1313
      %v1851 = vsel %vm1799, %v1786, %v1315
      %v1853 = vsel %vm1799, %v1788, %v1317
      %v1855 = vsel %vm1799, %v1790, %v1319
      %v1857 = vsel %vm1799, %v1792, %v1321
      %v1859 = vsel %vm1799, %v1794, %v1323
      %v1861 = vsel %vm1799, %v1796, %v1325
      %v1863 = vsel %vm1799, %v1798, %v1327
      %vm1864 = vcmask 457728
      %v1866 = vsel %vm1864, %v1801, %v1344
      %v1868 = vsel %vm1864, %v1803, %v1346
      %v1870 = vsel %vm1864, %v1805, %v1348
      %v1872 = vsel %vm1864, %v1807, %v1350
      %v1874 = vsel %vm1864, %v1809, %v1352
      %v1876 = vsel %vm1864, %v1811, %v1354
      %v1878 = vsel %vm1864, %v1813, %v1356
      %v1880 = vsel %vm1864, %v1815, %v1358
      %v1882 = vsel %vm1864, %v1817, %v1360
      %v1884 = vsel %vm1864, %v1819, %v1362
      %v1886 = vsel %vm1864, %v1821, %v1364
      %v1888 = vsel %vm1864, %v1823, %v1366
      %v1890 = vsel %vm1864, %v1825, %v1368
      %v1892 = vsel %vm1864, %v1827, %v1370
      %v1894 = vsel %vm1864, %v1829, %v1372
      %v1896 = vsel %vm1864, %v1831, %v1374
      %v1898 = vsel %vm1864, %v1833, %v1376
      %v1900 = vsel %vm1864, %v1835, %v1378
      %v1902 = vsel %vm1864, %v1837, %v1380
      %v1904 = vsel %vm1864, %v1839, %v1382
      %v1906 = vsel %vm1864, %v1841, %v1384
      %v1908 = vsel %vm1864, %v1843, %v1386
      %v1910 = vsel %vm1864, %v1845, %v1388
      %v1912 = vsel %vm1864, %v1847, %v1390
      %v1914 = vsel %vm1864, %v1849, %v1392
      %v1916 = vsel %vm1864, %v1851, %v1394
      %v1918 = vsel %vm1864, %v1853, %v1396
      %v1920 = vsel %vm1864, %v1855, %v1398
      %v1922 = vsel %vm1864, %v1857, %v1400
      %v1924 = vsel %vm1864, %v1859, %v1402
      %v1926 = vsel %vm1864, %v1861, %v1404
      %v1928 = vsel %vm1864, %v1863, %v1406
      %vm1929 = vcmask 523264
      %v1931 = vsel %vm1929, %v1866, %v1411
      %v1933 = vsel %vm1929, %v1868, %v1413
      %v1935 = vsel %vm1929, %v1870, %v1415
      %v1937 = vsel %vm1929, %v1872, %v1417
      %v1939 = vsel %vm1929, %v1874, %v1419
      %v1941 = vsel %vm1929, %v1876, %v1421
      %v1943 = vsel %vm1929, %v1878, %v1423
      %v1945 = vsel %vm1929, %v1880, %v1425
      %v1947 = vsel %vm1929, %v1882, %v1427
      %v1949 = vsel %vm1929, %v1884, %v1429
      %v1951 = vsel %vm1929, %v1886, %v1431
      %v1953 = vsel %vm1929, %v1888, %v1433
      %v1955 = vsel %vm1929, %v1890, %v1435
      %v1957 = vsel %vm1929, %v1892, %v1437
      %v1959 = vsel %vm1929, %v1894, %v1439
      %v1961 = vsel %vm1929, %v1896, %v1441
      %v1963 = vsel %vm1929, %v1898, %v1443
      %v1965 = vsel %vm1929, %v1900, %v1445
      %v1967 = vsel %vm1929, %v1902, %v1447
      %v1969 = vsel %vm1929, %v1904, %v1449
      %v1971 = vsel %vm1929, %v1906, %v1451
      %v1973 = vsel %vm1929, %v1908, %v1453
      %v1975 = vsel %vm1929, %v1910, %v1455
      %v1977 = vsel %vm1929, %v1912, %v1457
      %v1979 = vsel %vm1929, %v1914, %v1459
      %v1981 = vsel %vm1929, %v1916, %v1461
      %v1983 = vsel %vm1929, %v1918, %v1463
      %v1985 = vsel %vm1929, %v1920, %v1465
      %v1987 = vsel %vm1929, %v1922, %v1467
      %v1989 = vsel %vm1929, %v1924, %v1469
      %v1991 = vsel %vm1929, %v1926, %v1471
      %v1993 = vsel %vm1929, %v1928, %v1473
      %vm2026 = vcmask 1045504
      %v2027 = vrot.slane %v1931, 2
      %v2028 = vrot.slane %v1933, 2
      %v2029 = vsel %vm2026, %v2027, %v2028
      %v2030 = vrot.slane %v1935, 2
      %v2031 = vrot.slane %v1937, 2
      %v2032 = vsel %vm2026, %v2030, %v2031
      %v2033 = vrot.slane %v1939, 2
      %v2034 = vrot.slane %v1941, 2
      %v2035 = vsel %vm2026, %v2033, %v2034
      %v2036 = vrot.slane %v1943, 2
      %v2037 = vrot.slane %v1945, 2
      %v2038 = vsel %vm2026, %v2036, %v2037
      %v2039 = vrot.slane %v1947, 2
      %v2040 = vrot.slane %v1949, 2
      %v2041 = vsel %vm2026, %v2039, %v2040
      %v2042 = vrot.slane %v1951, 2
      %v2043 = vrot.slane %v1953, 2
      %v2044 = vsel %vm2026, %v2042, %v2043
      %v2045 = vrot.slane %v1955, 2
      %v2046 = vrot.slane %v1957, 2
      %v2047 = vsel %vm2026, %v2045, %v2046
      %v2048 = vrot.slane %v1959, 2
      %v2049 = vrot.slane %v1961, 2
      %v2050 = vsel %vm2026, %v2048, %v2049
      %v2051 = vrot.slane %v1963, 2
      %v2052 = vrot.slane %v1965, 2
      %v2053 = vsel %vm2026, %v2051, %v2052
      %v2054 = vrot.slane %v1967, 2
      %v2055 = vrot.slane %v1969, 2
      %v2056 = vsel %vm2026, %v2054, %v2055
      %v2057 = vrot.slane %v1971, 2
      %v2058 = vrot.slane %v1973, 2
      %v2059 = vsel %vm2026, %v2057, %v2058
      %v2060 = vrot.slane %v1975, 2
      %v2061 = vrot.slane %v1977, 2
      %v2062 = vsel %vm2026, %v2060, %v2061
      %v2063 = vrot.slane %v1979, 2
      %v2064 = vrot.slane %v1981, 2
      %v2065 = vsel %vm2026, %v2063, %v2064
      %v2066 = vrot.slane %v1983, 2
      %v2067 = vrot.slane %v1985, 2
      %v2068 = vsel %vm2026, %v2066, %v2067
      %v2069 = vrot.slane %v1987, 2
      %v2070 = vrot.slane %v1989, 2
      %v2071 = vsel %vm2026, %v2069, %v2070
      %v2072 = vrot.slane %v1991, 2
      %v2073 = vrot.slane %v1993, 2
      %v2074 = vsel %vm2026, %v2072, %v2073
      %v2075 = vld [vmem:[%s1] sm:$0xf]
      %v2076 = vld [vmem:[%s1 + $0x4] sm:$0xf]
      %v2077 = vld [vmem:[%s1 + $0x8] sm:$0xf]
      %v2078 = vld [vmem:[%s1 + $0xc] sm:$0xf]
      %v2079 = vld [vmem:[%s1 + $0x10] sm:$0xf]
      %v2080 = vld [vmem:[%s1 + $0x14] sm:$0xf]
      %v2081 = vld [vmem:[%s1 + $0x18] sm:$0xf]
      %v2082 = vld [vmem:[%s1 + $0x1c] sm:$0xf]
      %v2083 = vld [vmem:[%s1 + $0x20] sm:$0xf]
      %v2084 = vld [vmem:[%s2] sm:$0x1]
      %v2086 = vlaneseq
      %v2087 = vshrl.u32 %v2086, 7
      %v2088 = vsub.s32 0, %v2087
      %v2089 = vrot.slane %v2084, %v2088
      %v2100 = vunpack.c.l.b16 %v2075
      %v2101 = vunpack.c.l.b16 %v2076
      %v2102 = vunpack.c.l.b16 %v2077
      %v2103 = vunpack.c.l.b16 %v2078
      %v2104 = vunpack.c.l.b16 %v2079
      %v2105 = vunpack.c.l.b16 %v2080
      %v2106 = vunpack.c.l.b16 %v2081
      %v2107 = vunpack.c.l.b16 %v2082
      %v2108 = vunpack.c.l.b16 %v2083
      %v2109 = vpack.c.b16 %v2101, %v2100
      %v2110 = vpack.c.b16 %v2103, %v2102
      %v2111 = vpack.c.b16 %v2105, %v2104
      %v2112 = vpack.c.b16 %v2107, %v2106
      %v2113 = vpack.c.b16 %v2108, %v2108
      %vm2118 = vcmask 588800
      %v2120 = vsel %vm2118, %v2029, 0
      %v2123 = vsel %vm2118, %v2032, 0
      %v2126 = vsel %vm2118, %v2035, 0
      %v2129 = vsel %vm2118, %v2038, 0
      %v2132 = vsel %vm2118, %v2041, 0
      %v2135 = vsel %vm2118, %v2044, 0
      %v2138 = vsel %vm2118, %v2047, 0
      %v2141 = vsel %vm2118, %v2050, 0
      %v2144 = vsel %vm2118, %v2053, 0
      %v2147 = vsel %vm2118, %v2056, 0
      %v2150 = vsel %vm2118, %v2059, 0
      %v2153 = vsel %vm2118, %v2062, 0
      %v2156 = vsel %vm2118, %v2065, 0
      %v2159 = vsel %vm2118, %v2068, 0
      %v2162 = vsel %vm2118, %v2071, 0
      %v2165 = vsel %vm2118, %v2074, 0
      %vm2167 = vcmask 1043456
      %v2169 = vsel %vm2167, %v2113, 0
      %2171 = vmatprep.subr.bf16.mxu0 0
      %2172 = vmatpush1.bf16.msra.mxu0 %v2109
      %2173 = vmatprep.subr.bf16.mxu0 0
      %2174 = vmatpush1.bf16.msra.mxu0 %v2110
      %2175 = vmatprep.subr.bf16.mxu0 0
      %2176 = vmatpush1.bf16.msra.mxu0 %v2111
      %2177 = vmatprep.subr.bf16.mxu0 0
      %2178 = vmatpush1.bf16.msra.mxu0 %v2112
      %2179 = vmatprep.subr.bf16.mxu0 0
      %2180 = vmatpush1.bf16.msra.mxu0 %v2169
      %2181 = vmatprep.subr.bf16.mxu0 0
      %2182 = vmatpush1.bf16.msra.mxu0 0
      %2183 = vmatprep.subr.bf16.mxu0 0
      %2184 = vmatpush1.bf16.msra.mxu0 0
      %2185 = vmatprep.subr.bf16.mxu0 0
      %2186 = vmatpush1.bf16.msra.mxu0 0
      %2187 = vmatprep.subr.bf16.mxu0 0
      %2188 = vmatpush1.bf16.msra.mxu0 0
      %2189 = vmatprep.subr.bf16.mxu0 0
      %2190 = vmatpush1.bf16.msra.mxu0 0
      %2191 = vmatprep.subr.bf16.mxu0 0
      %2192 = vmatpush1.bf16.msra.mxu0 0
      %2193 = vmatprep.subr.bf16.mxu0 0
      %2194 = vmatpush1.bf16.msra.mxu0 0
      %2195 = vmatprep.subr.bf16.mxu0 0
      %2196 = vmatpush1.bf16.msra.mxu0 0
      %2197 = vmatprep.subr.bf16.mxu0 0
      %2198 = vmatpush1.bf16.msra.mxu0 0
      %2199 = vmatprep.subr.bf16.mxu0 0
      %2200 = vmatpush1.bf16.msra.mxu0 0
      %2201 = vmatprep.subr.bf16.mxu0 0
      %2202 = vmatpush1.bf16.msra.mxu0 0
      %2203 = vmatprep.mubr.bf16.mxu0 0
      %2204 = vmatmul.mubr.bf16.gmra.mrb[0].mxu0 %v2120
      %v2205 = vpop.f32.mrb[0].mxu0
      %v2206 = vadd.f32 %v2089, %v2205
      %v2207 = vpop.f32.mrb[0].mxu0
      %v2208 = vpop.f32.mrb[0].mxu0
      %v2209 = vadd.f32 %v2089, %v2208
      %v2210 = vpop.f32.mrb[0].mxu0
      %2211 = vmatprep.mubr.bf16.mxu0 0
      %2212 = vmatmul.mubr.bf16.gmra.mrb[0].mxu0 %v2123
      %v2213 = vpop.f32.mrb[0].mxu0
      %v2214 = vadd.f32 %v2089, %v2213
      %v2215 = vpop.f32.mrb[0].mxu0
      %v2216 = vpop.f32.mrb[0].mxu0
      %v2217 = vadd.f32 %v2089, %v2216
      %v2218 = vpop.f32.mrb[0].mxu0
      %2219 = vmatprep.mubr.bf16.mxu0 0
      %2220 = vmatmul.mubr.bf16.gmra.mrb[0].mxu0 %v2126
      %v2221 = vpop.f32.mrb[0].mxu0
      %v2222 = vadd.f32 %v2089, %v2221
      %v2223 = vpop.f32.mrb[0].mxu0
      %v2224 = vpop.f32.mrb[0].mxu0
      %v2225 = vadd.f32 %v2089, %v2224
      %v2226 = vpop.f32.mrb[0].mxu0
      %2227 = vmatprep.mubr.bf16.mxu0 0
      %2228 = vmatmul.mubr.bf16.gmra.mrb[0].mxu0 %v2129
      %v2229 = vpop.f32.mrb[0].mxu0
      %v2230 = vadd.f32 %v2089, %v2229
      %v2231 = vpop.f32.mrb[0].mxu0
      %v2232 = vpop.f32.mrb[0].mxu0
      %v2233 = vadd.f32 %v2089, %v2232
      %v2234 = vpop.f32.mrb[0].mxu0
      %2235 = vmatprep.mubr.bf16.mxu0 0
      %2236 = vmatmul.mubr.bf16.gmra.mrb[0].mxu0 %v2132
      %v2237 = vpop.f32.mrb[0].mxu0
      %v2238 = vadd.f32 %v2089, %v2237
      %v2239 = vpop.f32.mrb[0].mxu0
      %v2240 = vpop.f32.mrb[0].mxu0
      %v2241 = vadd.f32 %v2089, %v2240
      %v2242 = vpop.f32.mrb[0].mxu0
      %2243 = vmatprep.mubr.bf16.mxu0 0
      %2244 = vmatmul.mubr.bf16.gmra.mrb[0].mxu0 %v2135
      %v2245 = vpop.f32.mrb[0].mxu0
      %v2246 = vadd.f32 %v2089, %v2245
      %v2247 = vpop.f32.mrb[0].mxu0
      %v2248 = vpop.f32.mrb[0].mxu0
      %v2249 = vadd.f32 %v2089, %v2248
      %v2250 = vpop.f32.mrb[0].mxu0
      %2251 = vmatprep.mubr.bf16.mxu0 0
      %2252 = vmatmul.mubr.bf16.gmra.mrb[0].mxu0 %v2138
      %v2253 = vpop.f32.mrb[0].mxu0
      %v2254 = vadd.f32 %v2089, %v2253
      %v2255 = vpop.f32.mrb[0].mxu0
      %v2256 = vpop.f32.mrb[0].mxu0
      %v2257 = vadd.f32 %v2089, %v2256
      %v2258 = vpop.f32.mrb[0].mxu0
      %2259 = vmatprep.mubr.bf16.mxu0 0
      %2260 = vmatmul.mubr.bf16.gmra.mrb[0].mxu0 %v2141
      %v2261 = vpop.f32.mrb[0].mxu0
      %v2262 = vadd.f32 %v2089, %v2261
      %v2263 = vpop.f32.mrb[0].mxu0
      %v2264 = vpop.f32.mrb[0].mxu0
      %v2265 = vadd.f32 %v2089, %v2264
      %v2266 = vpop.f32.mrb[0].mxu0
      %2267 = vmatprep.mubr.bf16.mxu0 0
      %2268 = vmatmul.mubr.bf16.gmra.mrb[0].mxu0 %v2144
      %v2269 = vpop.f32.mrb[0].mxu0
      %v2270 = vadd.f32 %v2089, %v2269
      %v2271 = vpop.f32.mrb[0].mxu0
      %v2272 = vpop.f32.mrb[0].mxu0
      %v2273 = vadd.f32 %v2089, %v2272
      %v2274 = vpop.f32.mrb[0].mxu0
      %2275 = vmatprep.mubr.bf16.mxu0 0
      %2276 = vmatmul.mubr.bf16.gmra.mrb[0].mxu0 %v2147
      %v2277 = vpop.f32.mrb[0].mxu0
      %v2278 = vadd.f32 %v2089, %v2277
      %v2279 = vpop.f32.mrb[0].mxu0
      %v2280 = vpop.f32.mrb[0].mxu0
      %v2281 = vadd.f32 %v2089, %v2280
      %v2282 = vpop.f32.mrb[0].mxu0
      %2283 = vmatprep.mubr.bf16.mxu0 0
      %2284 = vmatmul.mubr.bf16.gmra.mrb[0].mxu0 %v2150
      %v2285 = vpop.f32.mrb[0].mxu0
      %v2286 = vadd.f32 %v2089, %v2285
      %v2287 = vpop.f32.mrb[0].mxu0
      %v2288 = vpop.f32.mrb[0].mxu0
      %v2289 = vadd.f32 %v2089, %v2288
      %v2290 = vpop.f32.mrb[0].mxu0
      %2291 = vmatprep.mubr.bf16.mxu0 0
      %2292 = vmatmul.mubr.bf16.gmra.mrb[0].mxu0 %v2153
      %v2293 = vpop.f32.mrb[0].mxu0
      %v2294 = vadd.f32 %v2089, %v2293
      %v2295 = vpop.f32.mrb[0].mxu0
      %v2296 = vpop.f32.mrb[0].mxu0
      %v2297 = vadd.f32 %v2089, %v2296
      %v2298 = vpop.f32.mrb[0].mxu0
      %2299 = vmatprep.mubr.bf16.mxu0 0
      %2300 = vmatmul.mubr.bf16.gmra.mrb[0].mxu0 %v2156
      %v2301 = vpop.f32.mrb[0].mxu0
      %v2302 = vadd.f32 %v2089, %v2301
      %v2303 = vpop.f32.mrb[0].mxu0
      %v2304 = vpop.f32.mrb[0].mxu0
      %v2305 = vadd.f32 %v2089, %v2304
      %v2306 = vpop.f32.mrb[0].mxu0
      %2307 = vmatprep.mubr.bf16.mxu0 0
      %2308 = vmatmul.mubr.bf16.gmra.mrb[0].mxu0 %v2159
      %v2309 = vpop.f32.mrb[0].mxu0
      %v2310 = vadd.f32 %v2089, %v2309
      %v2311 = vpop.f32.mrb[0].mxu0
      %v2312 = vpop.f32.mrb[0].mxu0
      %v2313 = vadd.f32 %v2089, %v2312
      %v2314 = vpop.f32.mrb[0].mxu0
      %2315 = vmatprep.mubr.bf16.mxu0 0
      %2316 = vmatmul.mubr.bf16.gmra.mrb[0].mxu0 %v2162
      %v2317 = vpop.f32.mrb[0].mxu0
      %v2318 = vadd.f32 %v2089, %v2317
      %v2319 = vpop.f32.mrb[0].mxu0
      %v2320 = vpop.f32.mrb[0].mxu0
      %v2321 = vadd.f32 %v2089, %v2320
      %v2322 = vpop.f32.mrb[0].mxu0
      %2323 = vmatprep.mubr.bf16.mxu0 0
      %2324 = vmatmul.mubr.bf16.gmra.mrb[0].mxu0 %v2165
      %v2325 = vpop.f32.mrb[0].mxu0
      %v2326 = vadd.f32 %v2089, %v2325
      %v2327 = vpop.f32.mrb[0].mxu0
      %v2328 = vpop.f32.mrb[0].mxu0
      %v2329 = vadd.f32 %v2089, %v2328
      %v2330 = vpop.f32.mrb[0].mxu0
      %2331 = vdwg.mxu0
      %v2332 = vmax.f32 %v2206, 0.0
      %v2333 = vmax.f32 %v2209, 0.0
      %v2334 = vmax.f32 %v2214, 0.0
      %v2335 = vmax.f32 %v2217, 0.0
      %v2336 = vmax.f32 %v2222, 0.0
      %v2337 = vmax.f32 %v2225, 0.0
      %v2338 = vmax.f32 %v2230, 0.0
      %v2339 = vmax.f32 %v2233, 0.0
      %v2340 = vmax.f32 %v2238, 0.0
      %v2341 = vmax.f32 %v2241, 0.0
      %v2342 = vmax.f32 %v2246, 0.0
      %v2343 = vmax.f32 %v2249, 0.0
      %v2344 = vmax.f32 %v2254, 0.0
      %v2345 = vmax.f32 %v2257, 0.0
      %v2346 = vmax.f32 %v2262, 0.0
      %v2347 = vmax.f32 %v2265, 0.0
      %v2348 = vmax.f32 %v2270, 0.0
      %v2349 = vmax.f32 %v2273, 0.0
      %v2350 = vmax.f32 %v2278, 0.0
      %v2351 = vmax.f32 %v2281, 0.0
      %v2352 = vmax.f32 %v2286, 0.0
      %v2353 = vmax.f32 %v2289, 0.0
      %v2354 = vmax.f32 %v2294, 0.0
      %v2355 = vmax.f32 %v2297, 0.0
      %v2356 = vmax.f32 %v2302, 0.0
      %v2357 = vmax.f32 %v2305, 0.0
      %v2358 = vmax.f32 %v2310, 0.0
      %v2359 = vmax.f32 %v2313, 0.0
      %v2360 = vmax.f32 %v2318, 0.0
      %v2361 = vmax.f32 %v2321, 0.0
      %v2362 = vmax.f32 %v2326, 0.0
      %v2363 = vmax.f32 %v2329, 0.0
      %v2364 = vld [vmem:[%s3] sm:$0xf]
      %v2365 = vld [vmem:[%s3 + $0x4] sm:$0xf]
      %v2366 = vld [vmem:[%s3 + $0x8] sm:$0xf]
      %v2367 = vld [vmem:[%s3 + $0xc] sm:$0xf]
      %v2368 = vld [vmem:[%s3 + $0x10] sm:$0xf]
      %v2369 = vld [vmem:[%s3 + $0x14] sm:$0xf]
      %v2370 = vld [vmem:[%s3 + $0x18] sm:$0xf]
      %v2371 = vld [vmem:[%s3 + $0x1c] sm:$0xf]
      %v2372 = vld [vmem:[%s3 + $0x20] sm:$0xf]
      %v2373 = vld [vmem:[%s4] sm:$0x1]
      %v2375 = vlaneseq
      %v2376 = vshrl.u32 %v2375, 7
      %v2377 = vsub.s32 0, %v2376
      %v2378 = vrot.slane %v2373, %v2377
      %v2389 = vunpack.c.l.b16 %v2364
      %v2390 = vunpack.c.l.b16 %v2365
      %v2391 = vunpack.c.l.b16 %v2366
      %v2392 = vunpack.c.l.b16 %v2367
      %v2393 = vunpack.c.l.b16 %v2368
      %v2394 = vunpack.c.l.b16 %v2369
      %v2395 = vunpack.c.l.b16 %v2370
      %v2396 = vunpack.c.l.b16 %v2371
      %v2397 = vunpack.c.l.b16 %v2372
      %v2398 = vpack.c.b16 %v2390, %v2389
      %v2399 = vpack.c.b16 %v2392, %v2391
      %v2400 = vpack.c.b16 %v2394, %v2393
      %v2401 = vpack.c.b16 %v2396, %v2395
      %v2402 = vpack.c.b16 %v2397, %v2397
      %v2408 = vsel %vm2167, %v2402, 0
      %2410 = vmatprep.subr.bf16.mxu0 0
      %2411 = vmatpush1.bf16.msra.mxu0 %v2398
      %2412 = vmatprep.subr.bf16.mxu0 0
      %2413 = vmatpush1.bf16.msra.mxu0 %v2399
      %2414 = vmatprep.subr.bf16.mxu0 0
      %2415 = vmatpush1.bf16.msra.mxu0 %v2400
      %2416 = vmatprep.subr.bf16.mxu0 0
      %2417 = vmatpush1.bf16.msra.mxu0 %v2401
      %2418 = vmatprep.subr.bf16.mxu0 0
      %2419 = vmatpush1.bf16.msra.mxu0 %v2408
      %2420 = vmatprep.subr.bf16.mxu0 0
      %2421 = vmatpush1.bf16.msra.mxu0 0
      %2422 = vmatprep.subr.bf16.mxu0 0
      %2423 = vmatpush1.bf16.msra.mxu0 0
      %2424 = vmatprep.subr.bf16.mxu0 0
      %2425 = vmatpush1.bf16.msra.mxu0 0
      %2426 = vmatprep.subr.bf16.mxu0 0
      %2427 = vmatpush1.bf16.msra.mxu0 0
      %2428 = vmatprep.subr.bf16.mxu0 0
      %2429 = vmatpush1.bf16.msra.mxu0 0
      %2430 = vmatprep.subr.bf16.mxu0 0
      %2431 = vmatpush1.bf16.msra.mxu0 0
      %2432 = vmatprep.subr.bf16.mxu0 0
      %2433 = vmatpush1.bf16.msra.mxu0 0
      %2434 = vmatprep.subr.bf16.mxu0 0
      %2435 = vmatpush1.bf16.msra.mxu0 0
      %2436 = vmatprep.subr.bf16.mxu0 0
      %2437 = vmatpush1.bf16.msra.mxu0 0
      %2438 = vmatprep.subr.bf16.mxu0 0
      %2439 = vmatpush1.bf16.msra.mxu0 0
      %2440 = vmatprep.subr.bf16.mxu0 0
      %2441 = vmatpush1.bf16.msra.mxu0 0
      %2442 = vmatprep.mubr.bf16.mxu0 0
      %2443 = vmatmul.mubr.bf16.gmra.mrb[0].mxu0 %v2120
      %v2444 = vpop.f32.mrb[0].mxu0
      %v2445 = vadd.f32 %v2378, %v2444
      %v2446 = vpop.f32.mrb[0].mxu0
      %v2447 = vpop.f32.mrb[0].mxu0
      %v2448 = vadd.f32 %v2378, %v2447
      %v2449 = vpop.f32.mrb[0].mxu0
      %2450 = vmatprep.mubr.bf16.mxu0 0
      %2451 = vmatmul.mubr.bf16.gmra.mrb[0].mxu0 %v2123
      %v2452 = vpop.f32.mrb[0].mxu0
      %v2453 = vadd.f32 %v2378, %v2452
      %v2454 = vpop.f32.mrb[0].mxu0
      %v2455 = vpop.f32.mrb[0].mxu0
      %v2456 = vadd.f32 %v2378, %v2455
      %v2457 = vpop.f32.mrb[0].mxu0
      %2458 = vmatprep.mubr.bf16.mxu0 0
      %2459 = vmatmul.mubr.bf16.gmra.mrb[0].mxu0 %v2126
      %v2460 = vpop.f32.mrb[0].mxu0
      %v2461 = vadd.f32 %v2378, %v2460
      %v2462 = vpop.f32.mrb[0].mxu0
      %v2463 = vpop.f32.mrb[0].mxu0
      %v2464 = vadd.f32 %v2378, %v2463
      %v2465 = vpop.f32.mrb[0].mxu0
      %2466 = vmatprep.mubr.bf16.mxu0 0
      %2467 = vmatmul.mubr.bf16.gmra.mrb[0].mxu0 %v2129
      %v2468 = vpop.f32.mrb[0].mxu0
      %v2469 = vadd.f32 %v2378, %v2468
      %v2470 = vpop.f32.mrb[0].mxu0
      %v2471 = vpop.f32.mrb[0].mxu0
      %v2472 = vadd.f32 %v2378, %v2471
      %v2473 = vpop.f32.mrb[0].mxu0
      %2474 = vmatprep.mubr.bf16.mxu0 0
      %2475 = vmatmul.mubr.bf16.gmra.mrb[0].mxu0 %v2132
      %v2476 = vpop.f32.mrb[0].mxu0
      %v2477 = vadd.f32 %v2378, %v2476
      %v2478 = vpop.f32.mrb[0].mxu0
      %v2479 = vpop.f32.mrb[0].mxu0
      %v2480 = vadd.f32 %v2378, %v2479
      %v2481 = vpop.f32.mrb[0].mxu0
      %2482 = vmatprep.mubr.bf16.mxu0 0
      %2483 = vmatmul.mubr.bf16.gmra.mrb[0].mxu0 %v2135
      %v2484 = vpop.f32.mrb[0].mxu0
      %v2485 = vadd.f32 %v2378, %v2484
      %v2486 = vpop.f32.mrb[0].mxu0
      %v2487 = vpop.f32.mrb[0].mxu0
      %v2488 = vadd.f32 %v2378, %v2487
      %v2489 = vpop.f32.mrb[0].mxu0
      %2490 = vmatprep.mubr.bf16.mxu0 0
      %2491 = vmatmul.mubr.bf16.gmra.mrb[0].mxu0 %v2138
      %v2492 = vpop.f32.mrb[0].mxu0
      %v2493 = vadd.f32 %v2378, %v2492
      %v2494 = vpop.f32.mrb[0].mxu0
      %v2495 = vpop.f32.mrb[0].mxu0
      %v2496 = vadd.f32 %v2378, %v2495
      %v2497 = vpop.f32.mrb[0].mxu0
      %2498 = vmatprep.mubr.bf16.mxu0 0
      %2499 = vmatmul.mubr.bf16.gmra.mrb[0].mxu0 %v2141
      %v2500 = vpop.f32.mrb[0].mxu0
      %v2501 = vadd.f32 %v2378, %v2500
      %v2502 = vpop.f32.mrb[0].mxu0
      %v2503 = vpop.f32.mrb[0].mxu0
      %v2504 = vadd.f32 %v2378, %v2503
      %v2505 = vpop.f32.mrb[0].mxu0
      %2506 = vmatprep.mubr.bf16.mxu0 0
      %2507 = vmatmul.mubr.bf16.gmra.mrb[0].mxu0 %v2144
      %v2508 = vpop.f32.mrb[0].mxu0
      %v2509 = vadd.f32 %v2378, %v2508
      %v2510 = vpop.f32.mrb[0].mxu0
      %v2511 = vpop.f32.mrb[0].mxu0
      %v2512 = vadd.f32 %v2378, %v2511
      %v2513 = vpop.f32.mrb[0].mxu0
      %2514 = vmatprep.mubr.bf16.mxu0 0
      %2515 = vmatmul.mubr.bf16.gmra.mrb[0].mxu0 %v2147
      %v2516 = vpop.f32.mrb[0].mxu0
      %v2517 = vadd.f32 %v2378, %v2516
      %v2518 = vpop.f32.mrb[0].mxu0
      %v2519 = vpop.f32.mrb[0].mxu0
      %v2520 = vadd.f32 %v2378, %v2519
      %v2521 = vpop.f32.mrb[0].mxu0
      %2522 = vmatprep.mubr.bf16.mxu0 0
      %2523 = vmatmul.mubr.bf16.gmra.mrb[0].mxu0 %v2150
      %v2524 = vpop.f32.mrb[0].mxu0
      %v2525 = vadd.f32 %v2378, %v2524
      %v2526 = vpop.f32.mrb[0].mxu0
      %v2527 = vpop.f32.mrb[0].mxu0
      %v2528 = vadd.f32 %v2378, %v2527
      %v2529 = vpop.f32.mrb[0].mxu0
      %2530 = vmatprep.mubr.bf16.mxu0 0
      %2531 = vmatmul.mubr.bf16.gmra.mrb[0].mxu0 %v2153
      %v2532 = vpop.f32.mrb[0].mxu0
      %v2533 = vadd.f32 %v2378, %v2532
      %v2534 = vpop.f32.mrb[0].mxu0
      %v2535 = vpop.f32.mrb[0].mxu0
      %v2536 = vadd.f32 %v2378, %v2535
      %v2537 = vpop.f32.mrb[0].mxu0
      %2538 = vmatprep.mubr.bf16.mxu0 0
      %2539 = vmatmul.mubr.bf16.gmra.mrb[0].mxu0 %v2156
      %v2540 = vpop.f32.mrb[0].mxu0
      %v2541 = vadd.f32 %v2378, %v2540
      %v2542 = vpop.f32.mrb[0].mxu0
      %v2543 = vpop.f32.mrb[0].mxu0
      %v2544 = vadd.f32 %v2378, %v2543
      %v2545 = vpop.f32.mrb[0].mxu0
      %2546 = vmatprep.mubr.bf16.mxu0 0
      %2547 = vmatmul.mubr.bf16.gmra.mrb[0].mxu0 %v2159
      %v2548 = vpop.f32.mrb[0].mxu0
      %v2549 = vadd.f32 %v2378, %v2548
      %v2550 = vpop.f32.mrb[0].mxu0
      %v2551 = vpop.f32.mrb[0].mxu0
      %v2552 = vadd.f32 %v2378, %v2551
      %v2553 = vpop.f32.mrb[0].mxu0
      %2554 = vmatprep.mubr.bf16.mxu0 0
      %2555 = vmatmul.mubr.bf16.gmra.mrb[0].mxu0 %v2162
      %v2556 = vpop.f32.mrb[0].mxu0
      %v2557 = vadd.f32 %v2378, %v2556
      %v2558 = vpop.f32.mrb[0].mxu0
      %v2559 = vpop.f32.mrb[0].mxu0
      %v2560 = vadd.f32 %v2378, %v2559
      %v2561 = vpop.f32.mrb[0].mxu0
      %2562 = vmatprep.mubr.bf16.mxu0 0
      %2563 = vmatmul.mubr.bf16.gmra.mrb[0].mxu0 %v2165
      %v2564 = vpop.f32.mrb[0].mxu0
      %v2565 = vadd.f32 %v2378, %v2564
      %v2566 = vpop.f32.mrb[0].mxu0
      %v2567 = vpop.f32.mrb[0].mxu0
      %v2568 = vadd.f32 %v2378, %v2567
      %v2569 = vpop.f32.mrb[0].mxu0
      %2570 = vdwg.mxu0
      %v2571 = vmax.f32 %v2445, 0.0
      %v2572 = vmax.f32 %v2448, 0.0
      %v2573 = vmax.f32 %v2453, 0.0
      %v2574 = vmax.f32 %v2456, 0.0
      %v2575 = vmax.f32 %v2461, 0.0
      %v2576 = vmax.f32 %v2464, 0.0
      %v2577 = vmax.f32 %v2469, 0.0
      %v2578 = vmax.f32 %v2472, 0.0
      %v2579 = vmax.f32 %v2477, 0.0
      %v2580 = vmax.f32 %v2480, 0.0
      %v2581 = vmax.f32 %v2485, 0.0
      %v2582 = vmax.f32 %v2488, 0.0
      %v2583 = vmax.f32 %v2493, 0.0
      %v2584 = vmax.f32 %v2496, 0.0
      %v2585 = vmax.f32 %v2501, 0.0
      %v2586 = vmax.f32 %v2504, 0.0
      %v2587 = vmax.f32 %v2509, 0.0
      %v2588 = vmax.f32 %v2512, 0.0
      %v2589 = vmax.f32 %v2517, 0.0
      %v2590 = vmax.f32 %v2520, 0.0
      %v2591 = vmax.f32 %v2525, 0.0
      %v2592 = vmax.f32 %v2528, 0.0
      %v2593 = vmax.f32 %v2533, 0.0
      %v2594 = vmax.f32 %v2536, 0.0
      %v2595 = vmax.f32 %v2541, 0.0
      %v2596 = vmax.f32 %v2544, 0.0
      %v2597 = vmax.f32 %v2549, 0.0
      %v2598 = vmax.f32 %v2552, 0.0
      %v2599 = vmax.f32 %v2557, 0.0
      %v2600 = vmax.f32 %v2560, 0.0
      %v2601 = vmax.f32 %v2565, 0.0
      %v2602 = vmax.f32 %v2568, 0.0
      %v2603 = vsel %vm1474, %v2571, 0.0
      %v2604 = vsel %vm1474, %v2572, 0.0
      %v2605 = vadd.f32 %v2603, %v2604
      %v2606 = vsel %vm1474, %v2573, 0.0
      %v2607 = vadd.f32 %v2605, %v2606
      %v2608 = vsel %vm1474, %v2574, 0.0
      %v2609 = vadd.f32 %v2607, %v2608
      %v2610 = vsel %vm1474, %v2575, 0.0
      %v2611 = vadd.f32 %v2609, %v2610
      %v2612 = vsel %vm1474, %v2576, 0.0
      %v2613 = vadd.f32 %v2611, %v2612
      %v2614 = vsel %vm1474, %v2577, 0.0
      %v2615 = vadd.f32 %v2613, %v2614
      %v2616 = vsel %vm1474, %v2578, 0.0
      %v2617 = vadd.f32 %v2615, %v2616
      %v2618 = vsel %vm1474, %v2579, 0.0
      %v2619 = vadd.f32 %v2617, %v2618
      %v2620 = vsel %vm1474, %v2580, 0.0
      %v2621 = vadd.f32 %v2619, %v2620
      %v2622 = vsel %vm1474, %v2581, 0.0
      %v2623 = vadd.f32 %v2621, %v2622
      %v2624 = vsel %vm1474, %v2582, 0.0
      %v2625 = vadd.f32 %v2623, %v2624
      %v2626 = vsel %vm1474, %v2583, 0.0
      %v2627 = vadd.f32 %v2625, %v2626
      %v2628 = vsel %vm1474, %v2584, 0.0
      %v2629 = vadd.f32 %v2627, %v2628
      %v2630 = vsel %vm1474, %v2585, 0.0
      %v2631 = vadd.f32 %v2629, %v2630
      %v2632 = vsel %vm1474, %v2586, 0.0
      %v2633 = vadd.f32 %v2631, %v2632
      %v2634 = vsel %vm1474, %v2587, 0.0
      %v2635 = vadd.f32 %v2633, %v2634
      %v2636 = vsel %vm1474, %v2588, 0.0
      %v2637 = vadd.f32 %v2635, %v2636
      %v2638 = vsel %vm1474, %v2589, 0.0
      %v2639 = vadd.f32 %v2637, %v2638
      %v2640 = vsel %vm1474, %v2590, 0.0
      %v2641 = vadd.f32 %v2639, %v2640
      %v2642 = vsel %vm1474, %v2591, 0.0
      %v2643 = vadd.f32 %v2641, %v2642
      %v2644 = vsel %vm1474, %v2592, 0.0
      %v2645 = vadd.f32 %v2643, %v2644
      %v2646 = vsel %vm1474, %v2593, 0.0
      %v2647 = vadd.f32 %v2645, %v2646
      %v2648 = vsel %vm1474, %v2594, 0.0
      %v2649 = vadd.f32 %v2647, %v2648
      %v2650 = vsel %vm1474, %v2595, 0.0
      %v2651 = vadd.f32 %v2649, %v2650
      %v2652 = vsel %vm1474, %v2596, 0.0
      %v2653 = vadd.f32 %v2651, %v2652
      %v2654 = vsel %vm1474, %v2597, 0.0
      %v2655 = vadd.f32 %v2653, %v2654
      %v2656 = vsel %vm1474, %v2598, 0.0
      %v2657 = vadd.f32 %v2655, %v2656
      %v2658 = vsel %vm1474, %v2599, 0.0
      %v2659 = vadd.f32 %v2657, %v2658
      %v2660 = vsel %vm1474, %v2600, 0.0
      %v2661 = vadd.f32 %v2659, %v2660
      %v2662 = vsel %vm1474, %v2601, 0.0
      %v2663 = vadd.f32 %v2661, %v2662
      %v2664 = vsel %vm1474, %v2602, 0.0
      %v2665 = vadd.f32 %v2663, %v2664
      %v2666 = vrot.slane %v2665, 4
      %v2667 = vadd.f32 %v2665, %v2666
      %v2668 = vrot.slane %v2667, 2
      %v2669 = vadd.f32 %v2667, %v2668
      %v2670 = vrot.slane %v2669, 1
      %v2671 = vadd.f32 %v2669, %v2670
      %v2672 = vrcp.pop 256.0
      %v2673 = vmul.f32 %v2671, %v2672
      %v2680 = vunpack.c.l.b16 %v396
      %v2681 = vunpack.c.l.b16 %v397
      %v2682 = vunpack.c.l.b16 %v398
      %v2683 = vunpack.c.l.b16 %v400
      %v2684 = vunpack.c.l.b16 %v401
      %v2685 = vunpack.c.l.b16 %v402
      %v2686 = vpack.c.b16 %v2681, %v2680
      %v2687 = vpack.c.b16 %v2682, %v2682
      %v2688 = vpack.c.b16 %v2684, %v2683
      %v2689 = vpack.c.b16 %v2685, %v2685
      %vm2690 = vsmask.f32 6400
      %v2692 = vshrl.u32 %v2686, 16
      %v2694 = vrot.slane %v2692, 1
      %v2695 = vshll.u32 %v2686, 16
      %v2697 = vrot.slane %v2695, 2
      %v2698 = vor.u32 %v2694, %v2697
      %v2700 = vshrl.u32 %v2687, 16
      %v2702 = vrot.slane %v2700, 1
      %v2703 = vshll.u32 %v2687, 16
      %v2705 = vrot.slane %v2703, 2
      %v2706 = vor.u32 %v2702, %v2705
      %v2707 = vsel %vm2690, %v2698, %v2706
      %v2709 = vshrl.u32 %v2688, 16
      %v2711 = vrot.slane %v2709, 1
      %v2712 = vshll.u32 %v2688, 16
      %v2714 = vrot.slane %v2712, 2
      %v2715 = vor.u32 %v2711, %v2714
      %v2717 = vshrl.u32 %v2689, 16
      %v2719 = vrot.slane %v2717, 1
      %v2720 = vshll.u32 %v2689, 16
      %v2722 = vrot.slane %v2720, 2
      %v2723 = vor.u32 %v2719, %v2722
      %v2724 = vsel %vm2690, %v2715, %v2723
      %v2725 = vrot.slane %v622, 1
      %v2726 = vrot.slane %v624, 2
      %v2727 = vor.u32 %v2725, %v2726
      %v2728 = vrot.slane %v633, 1
      %v2729 = vrot.slane %v629, 2
      %v2730 = vor.u32 %v2728, %v2729
      %v2731 = vsel %vm2690, %v2727, %v2730
      %v2732 = vrot.slane %v637, 1
      %v2733 = vrot.slane %v639, 2
      %v2734 = vor.u32 %v2732, %v2733
      %v2735 = vrot.slane %v648, 1
      %v2736 = vrot.slane %v644, 2
      %v2737 = vor.u32 %v2735, %v2736
      %v2738 = vsel %vm2690, %v2734, %v2737
      %v2739 = vrot.slane %v652, 1
      %v2740 = vrot.slane %v654, 2
      %v2741 = vor.u32 %v2739, %v2740
      %v2742 = vrot.slane %v663, 1
      %v2743 = vrot.slane %v659, 2
      %v2744 = vor.u32 %v2742, %v2743
      %v2745 = vsel %vm2690, %v2741, %v2744
      %v2746 = vrot.slane %v667, 1
      %v2747 = vrot.slane %v669, 2
      %v2748 = vor.u32 %v2746, %v2747
      %v2749 = vrot.slane %v678, 1
      %v2750 = vrot.slane %v674, 2
      %v2751 = vor.u32 %v2749, %v2750
      %v2752 = vsel %vm2690, %v2748, %v2751
      %v2753 = vrot.slane %v682, 1
      %v2754 = vrot.slane %v684, 2
      %v2755 = vor.u32 %v2753, %v2754
      %v2756 = vrot.slane %v693, 1
      %v2757 = vrot.slane %v689, 2
      %v2758 = vor.u32 %v2756, %v2757
      %v2759 = vsel %vm2690, %v2755, %v2758
      %v2760 = vrot.slane %v697, 1
      %v2761 = vrot.slane %v699, 2
      %v2762 = vor.u32 %v2760, %v2761
      %v2763 = vrot.slane %v708, 1
      %v2764 = vrot.slane %v704, 2
      %v2765 = vor.u32 %v2763, %v2764
      %v2766 = vsel %vm2690, %v2762, %v2765
      %v2767 = vrot.slane %v712, 1
      %v2768 = vrot.slane %v714, 2
      %v2769 = vor.u32 %v2767, %v2768
      %v2770 = vrot.slane %v723, 1
      %v2771 = vrot.slane %v719, 2
      %v2772 = vor.u32 %v2770, %v2771
      %v2773 = vsel %vm2690, %v2769, %v2772
      %v2774 = vrot.slane %v727, 1
      %v2775 = vrot.slane %v729, 2
      %v2776 = vor.u32 %v2774, %v2775
      %v2777 = vrot.slane %v738, 1
      %v2778 = vrot.slane %v734, 2
      %v2779 = vor.u32 %v2777, %v2778
      %v2780 = vsel %vm2690, %v2776, %v2779
      %v2781 = vrot.slane %v742, 1
      %v2782 = vrot.slane %v744, 2
      %v2783 = vor.u32 %v2781, %v2782
      %v2784 = vrot.slane %v753, 1
      %v2785 = vrot.slane %v749, 2
      %v2786 = vor.u32 %v2784, %v2785
      %v2787 = vsel %vm2690, %v2783, %v2786
      %v2788 = vrot.slane %v757, 1
      %v2789 = vrot.slane %v759, 2
      %v2790 = vor.u32 %v2788, %v2789
      %v2791 = vrot.slane %v768, 1
      %v2792 = vrot.slane %v764, 2
      %v2793 = vor.u32 %v2791, %v2792
      %v2794 = vsel %vm2690, %v2790, %v2793
      %v2795 = vrot.slane %v772, 1
      %v2796 = vrot.slane %v774, 2
      %v2797 = vor.u32 %v2795, %v2796
      %v2798 = vrot.slane %v783, 1
      %v2799 = vrot.slane %v779, 2
      %v2800 = vor.u32 %v2798, %v2799
      %v2801 = vsel %vm2690, %v2797, %v2800
      %v2802 = vrot.slane %v787, 1
      %v2803 = vrot.slane %v789, 2
      %v2804 = vor.u32 %v2802, %v2803
      %v2805 = vrot.slane %v798, 1
      %v2806 = vrot.slane %v794, 2
      %v2807 = vor.u32 %v2805, %v2806
      %v2808 = vsel %vm2690, %v2804, %v2807
      %v2809 = vrot.slane %v802, 1
      %v2810 = vrot.slane %v804, 2
      %v2811 = vor.u32 %v2809, %v2810
      %v2812 = vrot.slane %v813, 1
      %v2813 = vrot.slane %v809, 2
      %v2814 = vor.u32 %v2812, %v2813
      %v2815 = vsel %vm2690, %v2811, %v2814
      %v2816 = vrot.slane %v817, 1
      %v2817 = vrot.slane %v819, 2
      %v2818 = vor.u32 %v2816, %v2817
      %v2819 = vrot.slane %v828, 1
      %v2820 = vrot.slane %v824, 2
      %v2821 = vor.u32 %v2819, %v2820
      %v2822 = vsel %vm2690, %v2818, %v2821
      %2823 = vrot.lane.b32.xlu0 %v2707, 8
      %v2824 = vpop.permute.xlu0 %2823
      %2825 = vrot.lane.b32.xlu0 %v2706, 8
      %v2826 = vpop.permute.xlu0 %2825
      %2827 = vrot.lane.b32.xlu0 %v2724, 8
      %v2828 = vpop.permute.xlu0 %2827
      %2829 = vrot.lane.b32.xlu0 %v2723, 8
      %v2830 = vpop.permute.xlu0 %2829
      %2831 = vrot.lane.b32.xlu0 %v2731, 8
      %v2832 = vpop.permute.xlu0 %2831
      %2833 = vrot.lane.b32.xlu0 %v2730, 8
      %v2834 = vpop.permute.xlu0 %2833
      %2835 = vrot.lane.b32.xlu0 %v2738, 8
      %v2836 = vpop.permute.xlu0 %2835
      %2837 = vrot.lane.b32.xlu0 %v2737, 8
      %v2838 = vpop.permute.xlu0 %2837
      %2839 = vrot.lane.b32.xlu0 %v2745, 8
      %v2840 = vpop.permute.xlu0 %2839
      %2841 = vrot.lane.b32.xlu0 %v2744, 8
      %v2842 = vpop.permute.xlu0 %2841
      %2843 = vrot.lane.b32.xlu0 %v2752, 8
      %v2844 = vpop.permute.xlu0 %2843
      %2845 = vrot.lane.b32.xlu0 %v2751, 8
      %v2846 = vpop.permute.xlu0 %2845
      %2847 = vrot.lane.b32.xlu0 %v2759, 8
      %v2848 = vpop.permute.xlu0 %2847
      %2849 = vrot.lane.b32.xlu0 %v2758, 8
      %v2850 = vpop.permute.xlu0 %2849
      %2851 = vrot.lane.b32.xlu0 %v2766, 8
      %v2852 = vpop.permute.xlu0 %2851
      %2853 = vrot.lane.b32.xlu0 %v2765, 8
      %v2854 = vpop.permute.xlu0 %2853
      %2855 = vrot.lane.b32.xlu0 %v2773, 8
      %v2856 = vpop.permute.xlu0 %2855
      %2857 = vrot.lane.b32.xlu0 %v2772, 8
      %v2858 = vpop.permute.xlu0 %2857
      %2859 = vrot.lane.b32.xlu0 %v2780, 8
      %v2860 = vpop.permute.xlu0 %2859
      %2861 = vrot.lane.b32.xlu0 %v2779, 8
      %v2862 = vpop.permute.xlu0 %2861
      %2863 = vrot.lane.b32.xlu0 %v2787, 8
      %v2864 = vpop.permute.xlu0 %2863
      %2865 = vrot.lane.b32.xlu0 %v2786, 8
      %v2866 = vpop.permute.xlu0 %2865
      %2867 = vrot.lane.b32.xlu0 %v2794, 8
      %v2868 = vpop.permute.xlu0 %2867
      %2869 = vrot.lane.b32.xlu0 %v2793, 8
      %v2870 = vpop.permute.xlu0 %2869
      %2871 = vrot.lane.b32.xlu0 %v2801, 8
      %v2872 = vpop.permute.xlu0 %2871
      %2873 = vrot.lane.b32.xlu0 %v2800, 8
      %v2874 = vpop.permute.xlu0 %2873
      %2875 = vrot.lane.b32.xlu0 %v2808, 8
      %v2876 = vpop.permute.xlu0 %2875
      %2877 = vrot.lane.b32.xlu0 %v2807, 8
      %v2878 = vpop.permute.xlu0 %2877
      %2879 = vrot.lane.b32.xlu0 %v2815, 8
      %v2880 = vpop.permute.xlu0 %2879
      %2881 = vrot.lane.b32.xlu0 %v2814, 8
      %v2882 = vpop.permute.xlu0 %2881
      %2883 = vrot.lane.b32.xlu0 %v2822, 8
      %v2884 = vpop.permute.xlu0 %2883
      %2885 = vrot.lane.b32.xlu0 %v2821, 8
      %v2886 = vpop.permute.xlu0 %2885
      %v2887 = vpack.c.b16 %v2682, %v2681
      %v2888 = vpack.c.b16 %v2685, %v2684
      %v2889 = vpack.c.b16 %v542, %v541
      %v2890 = vpack.c.b16 %v545, %v544
      %v2891 = vpack.c.b16 %v548, %v547
      %v2892 = vpack.c.b16 %v551, %v550
      %v2893 = vpack.c.b16 %v554, %v553
      %v2894 = vpack.c.b16 %v557, %v556
      %v2895 = vpack.c.b16 %v560, %v559
      %v2896 = vpack.c.b16 %v563, %v562
      %v2897 = vpack.c.b16 %v566, %v565
      %v2898 = vpack.c.b16 %v569, %v568
      %v2899 = vpack.c.b16 %v572, %v571
      %v2900 = vpack.c.b16 %v575, %v574
      %v2901 = vpack.c.b16 %v578, %v577
      %v2902 = vpack.c.b16 %v581, %v580
      %v2903 = vrot.slane %v2887, 7
      %v2904 = vrot.slane %v2888, 7
      %v2905 = vrot.slane %v2889, 7
      %v2906 = vrot.slane %v2890, 7
      %v2907 = vrot.slane %v2891, 7
      %v2908 = vrot.slane %v2892, 7
      %v2909 = vrot.slane %v2893, 7
      %v2910 = vrot.slane %v2894, 7
      %v2911 = vrot.slane %v2895, 7
      %v2912 = vrot.slane %v2896, 7
      %v2913 = vrot.slane %v2897, 7
      %v2914 = vrot.slane %v2898, 7
      %v2915 = vrot.slane %v2899, 7
      %v2916 = vrot.slane %v2900, 7
      %v2917 = vrot.slane %v2901, 7
      %v2918 = vrot.slane %v2902, 7
      %2919 = vrot.lane.b32.xlu0 %v2903, 16
      %v2920 = vpop.permute.xlu0 %2919
      %2921 = vrot.lane.b32.xlu0 %v2904, 16
      %v2922 = vpop.permute.xlu0 %2921
      %2923 = vrot.lane.b32.xlu0 %v2905, 16
      %v2924 = vpop.permute.xlu0 %2923
      %2925 = vrot.lane.b32.xlu0 %v2906, 16
      %v2926 = vpop.permute.xlu0 %2925
      %2927 = vrot.lane.b32.xlu0 %v2907, 16
      %v2928 = vpop.permute.xlu0 %2927
      %2929 = vrot.lane.b32.xlu0 %v2908, 16
      %v2930 = vpop.permute.xlu0 %2929
      %2931 = vrot.lane.b32.xlu0 %v2909, 16
      %v2932 = vpop.permute.xlu0 %2931
      %2933 = vrot.lane.b32.xlu0 %v2910, 16
      %v2934 = vpop.permute.xlu0 %2933
      %2935 = vrot.lane.b32.xlu0 %v2911, 16
      %v2936 = vpop.permute.xlu0 %2935
      %2937 = vrot.lane.b32.xlu0 %v2912, 16
      %v2938 = vpop.permute.xlu0 %2937
      %2939 = vrot.lane.b32.xlu0 %v2913, 16
      %v2940 = vpop.permute.xlu0 %2939
      %2941 = vrot.lane.b32.xlu0 %v2914, 16
      %v2942 = vpop.permute.xlu0 %2941
      %2943 = vrot.lane.b32.xlu0 %v2915, 16
      %v2944 = vpop.permute.xlu0 %2943
      %2945 = vrot.lane.b32.xlu0 %v2916, 16
      %v2946 = vpop.permute.xlu0 %2945
      %2947 = vrot.lane.b32.xlu0 %v2917, 16
      %v2948 = vpop.permute.xlu0 %2947
      %2949 = vrot.lane.b32.xlu0 %v2918, 16
      %v2950 = vpop.permute.xlu0 %2949
      %v2951 = vrot.slane %v832, 1
      %v2952 = vrot.slane %v834, 2
      %v2953 = vor.u32 %v2951, %v2952
      %v2954 = vrot.slane %v843, 1
      %v2955 = vrot.slane %v839, 2
      %v2956 = vor.u32 %v2954, %v2955
      %v2957 = vsel %vm2690, %v2953, %v2956
      %v2958 = vrot.slane %v847, 1
      %v2959 = vrot.slane %v849, 2
      %v2960 = vor.u32 %v2958, %v2959
      %v2961 = vrot.slane %v858, 1
      %v2962 = vrot.slane %v854, 2
      %v2963 = vor.u32 %v2961, %v2962
      %v2964 = vsel %vm2690, %v2960, %v2963
      %v2965 = vrot.slane %v1111, 1
      %v2966 = vrot.slane %v1113, 2
      %v2967 = vor.u32 %v2965, %v2966
      %v2968 = vrot.slane %v1122, 1
      %v2969 = vrot.slane %v1118, 2
      %v2970 = vor.u32 %v2968, %v2969
      %v2971 = vsel %vm2690, %v2967, %v2970
      %2972 = vrot.lane.b32.xlu0 %v2738, 32
      %v2973 = vpop.permute.xlu0 %2972
      %2974 = vrot.lane.b32.xlu0 %v2737, 32
      %v2975 = vpop.permute.xlu0 %2974
      %2976 = vrot.lane.b32.xlu0 %v2745, 32
      %v2977 = vpop.permute.xlu0 %2976
      %2978 = vrot.lane.b32.xlu0 %v2744, 32
      %v2979 = vpop.permute.xlu0 %2978
      %2980 = vrot.lane.b32.xlu0 %v2752, 32
      %v2981 = vpop.permute.xlu0 %2980
      %2982 = vrot.lane.b32.xlu0 %v2751, 32
      %v2983 = vpop.permute.xlu0 %2982
      %2984 = vrot.lane.b32.xlu0 %v2759, 32
      %v2985 = vpop.permute.xlu0 %2984
      %2986 = vrot.lane.b32.xlu0 %v2758, 32
      %v2987 = vpop.permute.xlu0 %2986
      %2988 = vrot.lane.b32.xlu0 %v2766, 32
      %v2989 = vpop.permute.xlu0 %2988
      %2990 = vrot.lane.b32.xlu0 %v2765, 32
      %v2991 = vpop.permute.xlu0 %2990
      %2992 = vrot.lane.b32.xlu0 %v2773, 32
      %v2993 = vpop.permute.xlu0 %2992
      %2994 = vrot.lane.b32.xlu0 %v2772, 32
      %v2995 = vpop.permute.xlu0 %2994
      %2996 = vrot.lane.b32.xlu0 %v2780, 32
      %v2997 = vpop.permute.xlu0 %2996
      %2998 = vrot.lane.b32.xlu0 %v2779, 32
      %v2999 = vpop.permute.xlu0 %2998
      %3000 = vrot.lane.b32.xlu0 %v2787, 32
      %v3001 = vpop.permute.xlu0 %3000
      %3002 = vrot.lane.b32.xlu0 %v2786, 32
      %v3003 = vpop.permute.xlu0 %3002
      %3004 = vrot.lane.b32.xlu0 %v2794, 32
      %v3005 = vpop.permute.xlu0 %3004
      %3006 = vrot.lane.b32.xlu0 %v2793, 32
      %v3007 = vpop.permute.xlu0 %3006
      %3008 = vrot.lane.b32.xlu0 %v2801, 32
      %v3009 = vpop.permute.xlu0 %3008
      %3010 = vrot.lane.b32.xlu0 %v2800, 32
      %v3011 = vpop.permute.xlu0 %3010
      %3012 = vrot.lane.b32.xlu0 %v2808, 32
      %v3013 = vpop.permute.xlu0 %3012
      %3014 = vrot.lane.b32.xlu0 %v2807, 32
      %v3015 = vpop.permute.xlu0 %3014
      %3016 = vrot.lane.b32.xlu0 %v2815, 32
      %v3017 = vpop.permute.xlu0 %3016
      %3018 = vrot.lane.b32.xlu0 %v2814, 32
      %v3019 = vpop.permute.xlu0 %3018
      %3020 = vrot.lane.b32.xlu0 %v2822, 32
      %v3021 = vpop.permute.xlu0 %3020
      %3022 = vrot.lane.b32.xlu0 %v2821, 32
      %v3023 = vpop.permute.xlu0 %3022
      %3024 = vrot.lane.b32.xlu0 %v2957, 32
      %v3025 = vpop.permute.xlu0 %3024
      %3026 = vrot.lane.b32.xlu0 %v2956, 32
      %v3027 = vpop.permute.xlu0 %3026
      %3028 = vrot.lane.b32.xlu0 %v2964, 32
      %v3029 = vpop.permute.xlu0 %3028
      %3030 = vrot.lane.b32.xlu0 %v2963, 32
      %v3031 = vpop.permute.xlu0 %3030
      %3032 = vrot.lane.b32.xlu0 %v2971, 32
      %v3033 = vpop.permute.xlu0 %3032
      %3034 = vrot.lane.b32.xlu0 %v2970, 32
      %v3035 = vpop.permute.xlu0 %3034
      %v3036 = vpack.c.b16 %v584, %v583
      %v3037 = vpack.c.b16 %v587, %v586
      %v3038 = vpack.c.b16 %v1043, %v1042
      %v3039 = vrot.slane %v3036, 7
      %v3040 = vrot.slane %v3037, 7
      %v3041 = vrot.slane %v3038, 7
      %3042 = vrot.lane.b32.xlu0 %v2906, 40
      %v3043 = vpop.permute.xlu0 %3042
      %3044 = vrot.lane.b32.xlu0 %v2907, 40
      %v3045 = vpop.permute.xlu0 %3044
      %3046 = vrot.lane.b32.xlu0 %v2908, 40
      %v3047 = vpop.permute.xlu0 %3046
      %3048 = vrot.lane.b32.xlu0 %v2909, 40
      %v3049 = vpop.permute.xlu0 %3048
      %3050 = vrot.lane.b32.xlu0 %v2910, 40
      %v3051 = vpop.permute.xlu0 %3050
      %3052 = vrot.lane.b32.xlu0 %v2911, 40
      %v3053 = vpop.permute.xlu0 %3052
      %3054 = vrot.lane.b32.xlu0 %v2912, 40
      %v3055 = vpop.permute.xlu0 %3054
      %3056 = vrot.lane.b32.xlu0 %v2913, 40
      %v3057 = vpop.permute.xlu0 %3056
      %3058 = vrot.lane.b32.xlu0 %v2914, 40
      %v3059 = vpop.permute.xlu0 %3058
      %3060 = vrot.lane.b32.xlu0 %v2915, 40
      %v3061 = vpop.permute.xlu0 %3060
      %3062 = vrot.lane.b32.xlu0 %v2916, 40
      %v3063 = vpop.permute.xlu0 %3062
      %3064 = vrot.lane.b32.xlu0 %v2917, 40
      %v3065 = vpop.permute.xlu0 %3064
      %3066 = vrot.lane.b32.xlu0 %v2918, 40
      %v3067 = vpop.permute.xlu0 %3066
      %3068 = vrot.lane.b32.xlu0 %v3039, 40
      %v3069 = vpop.permute.xlu0 %3068
      %3070 = vrot.lane.b32.xlu0 %v3040, 40
      %v3071 = vpop.permute.xlu0 %3070
      %3072 = vrot.lane.b32.xlu0 %v3041, 40
      %v3073 = vpop.permute.xlu0 %3072
      %v3080 = vunpack.c.l.b16 %v476
      %v3081 = vunpack.c.l.b16 %v477
      %v3082 = vunpack.c.l.b16 %v478
      %v3083 = vunpack.c.l.b16 %v480
      %v3084 = vunpack.c.l.b16 %v481
      %v3085 = vunpack.c.l.b16 %v482
      %v3086 = vpack.c.b16 %v3081, %v3080
      %v3087 = vpack.c.b16 %v3082, %v3082
      %v3088 = vpack.c.b16 %v3084, %v3083
      %v3089 = vpack.c.b16 %v3085, %v3085
      %3090 = vrot.lane.b32.xlu0 %v3086, 48
      %v3091 = vpop.permute.xlu0 %3090
      %3092 = vrot.lane.b32.xlu0 %v3087, 48
      %v3093 = vpop.permute.xlu0 %3092
      %3094 = vrot.lane.b32.xlu0 %v3088, 48
      %v3095 = vpop.permute.xlu0 %3094
      %3096 = vrot.lane.b32.xlu0 %v3089, 48
      %v3097 = vpop.permute.xlu0 %3096
      %v3098 = vrot.slane %v1329, 1
      %v3099 = vrot.slane %v1331, 2
      %v3100 = vor.u32 %v3098, %v3099
      %v3101 = vrot.slane %v1340, 1
      %v3102 = vrot.slane %v1336, 2
      %v3103 = vor.u32 %v3101, %v3102
      %v3104 = vsel %vm2690, %v3100, %v3103
      %v3106 = vshrl.u32 %v3086, 16
      %v3108 = vrot.slane %v3106, 1
      %v3109 = vshll.u32 %v3086, 16
      %v3111 = vrot.slane %v3109, 2
      %v3112 = vor.u32 %v3108, %v3111
      %v3114 = vshrl.u32 %v3087, 16
      %v3116 = vrot.slane %v3114, 1
      %v3117 = vshll.u32 %v3087, 16
      %v3119 = vrot.slane %v3117, 2
      %v3120 = vor.u32 %v3116, %v3119
      %v3121 = vsel %vm2690, %v3112, %v3120
      %v3123 = vshrl.u32 %v3088, 16
      %v3125 = vrot.slane %v3123, 1
      %v3126 = vshll.u32 %v3088, 16
      %v3128 = vrot.slane %v3126, 2
      %v3129 = vor.u32 %v3125, %v3128
      %v3131 = vshrl.u32 %v3089, 16
      %v3133 = vrot.slane %v3131, 1
      %v3134 = vshll.u32 %v3089, 16
      %v3136 = vrot.slane %v3134, 2
      %v3137 = vor.u32 %v3133, %v3136
      %v3138 = vsel %vm2690, %v3129, %v3137
      %3139 = vrot.lane.b32.xlu0 %v2759, 56
      %v3140 = vpop.permute.xlu0 %3139
      %3141 = vrot.lane.b32.xlu0 %v2758, 56
      %v3142 = vpop.permute.xlu0 %3141
      %3143 = vrot.lane.b32.xlu0 %v2766, 56
      %v3144 = vpop.permute.xlu0 %3143
      %3145 = vrot.lane.b32.xlu0 %v2765, 56
      %v3146 = vpop.permute.xlu0 %3145
      %3147 = vrot.lane.b32.xlu0 %v2773, 56
      %v3148 = vpop.permute.xlu0 %3147
      %3149 = vrot.lane.b32.xlu0 %v2772, 56
      %v3150 = vpop.permute.xlu0 %3149
      %3151 = vrot.lane.b32.xlu0 %v2780, 56
      %v3152 = vpop.permute.xlu0 %3151
      %3153 = vrot.lane.b32.xlu0 %v2779, 56
      %v3154 = vpop.permute.xlu0 %3153
      %3155 = vrot.lane.b32.xlu0 %v2787, 56
      %v3156 = vpop.permute.xlu0 %3155
      %3157 = vrot.lane.b32.xlu0 %v2786, 56
      %v3158 = vpop.permute.xlu0 %3157
      %3159 = vrot.lane.b32.xlu0 %v2794, 56
      %v3160 = vpop.permute.xlu0 %3159
      %3161 = vrot.lane.b32.xlu0 %v2793, 56
      %v3162 = vpop.permute.xlu0 %3161
      %3163 = vrot.lane.b32.xlu0 %v2801, 56
      %v3164 = vpop.permute.xlu0 %3163
      %3165 = vrot.lane.b32.xlu0 %v2800, 56
      %v3166 = vpop.permute.xlu0 %3165
      %3167 = vrot.lane.b32.xlu0 %v2808, 56
      %v3168 = vpop.permute.xlu0 %3167
      %3169 = vrot.lane.b32.xlu0 %v2807, 56
      %v3170 = vpop.permute.xlu0 %3169
      %3171 = vrot.lane.b32.xlu0 %v2815, 56
      %v3172 = vpop.permute.xlu0 %3171
      %3173 = vrot.lane.b32.xlu0 %v2814, 56
      %v3174 = vpop.permute.xlu0 %3173
      %3175 = vrot.lane.b32.xlu0 %v2822, 56
      %v3176 = vpop.permute.xlu0 %3175
      %3177 = vrot.lane.b32.xlu0 %v2821, 56
      %v3178 = vpop.permute.xlu0 %3177
      %3179 = vrot.lane.b32.xlu0 %v2957, 56
      %v3180 = vpop.permute.xlu0 %3179
      %3181 = vrot.lane.b32.xlu0 %v2956, 56
      %v3182 = vpop.permute.xlu0 %3181
      %3183 = vrot.lane.b32.xlu0 %v2964, 56
      %v3184 = vpop.permute.xlu0 %3183
      %3185 = vrot.lane.b32.xlu0 %v2963, 56
      %v3186 = vpop.permute.xlu0 %3185
      %3187 = vrot.lane.b32.xlu0 %v2971, 56
      %v3188 = vpop.permute.xlu0 %3187
      %3189 = vrot.lane.b32.xlu0 %v2970, 56
      %v3190 = vpop.permute.xlu0 %3189
      %3191 = vrot.lane.b32.xlu0 %v3104, 56
      %v3192 = vpop.permute.xlu0 %3191
      %3193 = vrot.lane.b32.xlu0 %v3103, 56
      %v3194 = vpop.permute.xlu0 %3193
      %3195 = vrot.lane.b32.xlu0 %v3121, 56
      %v3196 = vpop.permute.xlu0 %3195
      %3197 = vrot.lane.b32.xlu0 %v3120, 56
      %v3198 = vpop.permute.xlu0 %3197
      %3199 = vrot.lane.b32.xlu0 %v3138, 56
      %v3200 = vpop.permute.xlu0 %3199
      %3201 = vrot.lane.b32.xlu0 %v3137, 56
      %v3202 = vpop.permute.xlu0 %3201
      %v3203 = vpack.c.b16 %v1261, %v1260
      %v3204 = vpack.c.b16 %v3082, %v3081
      %v3205 = vpack.c.b16 %v3085, %v3084
      %v3206 = vrot.slane %v3203, 7
      %v3207 = vrot.slane %v3204, 7
      %v3208 = vrot.slane %v3205, 7
      %3209 = vrot.lane.b32.xlu0 %v2909, 64
      %v3210 = vpop.permute.xlu0 %3209
      %3211 = vrot.lane.b32.xlu0 %v2910, 64
      %v3212 = vpop.permute.xlu0 %3211
      %3213 = vrot.lane.b32.xlu0 %v2911, 64
      %v3214 = vpop.permute.xlu0 %3213
      %3215 = vrot.lane.b32.xlu0 %v2912, 64
      %v3216 = vpop.permute.xlu0 %3215
      %3217 = vrot.lane.b32.xlu0 %v2913, 64
      %v3218 = vpop.permute.xlu0 %3217
      %3219 = vrot.lane.b32.xlu0 %v2914, 64
      %v3220 = vpop.permute.xlu0 %3219
      %3221 = vrot.lane.b32.xlu0 %v2915, 64
      %v3222 = vpop.permute.xlu0 %3221
      %3223 = vrot.lane.b32.xlu0 %v2916, 64
      %v3224 = vpop.permute.xlu0 %3223
      %3225 = vrot.lane.b32.xlu0 %v2917, 64
      %v3226 = vpop.permute.xlu0 %3225
      %3227 = vrot.lane.b32.xlu0 %v2918, 64
      %v3228 = vpop.permute.xlu0 %3227
      %3229 = vrot.lane.b32.xlu0 %v3039, 64
      %v3230 = vpop.permute.xlu0 %3229
      %3231 = vrot.lane.b32.xlu0 %v3040, 64
      %v3232 = vpop.permute.xlu0 %3231
      %3233 = vrot.lane.b32.xlu0 %v3041, 64
      %v3234 = vpop.permute.xlu0 %3233
      %3235 = vrot.lane.b32.xlu0 %v3206, 64
      %v3236 = vpop.permute.xlu0 %3235
      %3237 = vrot.lane.b32.xlu0 %v3207, 64
      %v3238 = vpop.permute.xlu0 %3237
      %3239 = vrot.lane.b32.xlu0 %v3208, 64
      %v3240 = vpop.permute.xlu0 %3239
      %v3242 = vsel %vm1474, %v2686, %v2824
      %v3244 = vsel %vm1474, %v2687, %v2826
      %v3246 = vsel %vm1474, %v2688, %v2828
      %v3248 = vsel %vm1474, %v2689, %v2830
      %v3250 = vsel %vm1474, %v588, %v2832
      %v3252 = vsel %vm1474, %v589, %v2834
      %v3254 = vsel %vm1474, %v590, %v2836
      %v3256 = vsel %vm1474, %v591, %v2838
      %v3258 = vsel %vm1474, %v592, %v2840
      %v3260 = vsel %vm1474, %v593, %v2842
      %v3262 = vsel %vm1474, %v594, %v2844
      %v3264 = vsel %vm1474, %v595, %v2846
      %v3266 = vsel %vm1474, %v596, %v2848
      %v3268 = vsel %vm1474, %v597, %v2850
      %v3270 = vsel %vm1474, %v598, %v2852
      %v3272 = vsel %vm1474, %v599, %v2854
      %v3274 = vsel %vm1474, %v600, %v2856
      %v3276 = vsel %vm1474, %v601, %v2858
      %v3278 = vsel %vm1474, %v602, %v2860
      %v3280 = vsel %vm1474, %v603, %v2862
      %v3282 = vsel %vm1474, %v604, %v2864
      %v3284 = vsel %vm1474, %v605, %v2866
      %v3286 = vsel %vm1474, %v606, %v2868
      %v3288 = vsel %vm1474, %v607, %v2870
      %v3290 = vsel %vm1474, %v608, %v2872
      %v3292 = vsel %vm1474, %v609, %v2874
      %v3294 = vsel %vm1474, %v610, %v2876
      %v3296 = vsel %vm1474, %v611, %v2878
      %v3298 = vsel %vm1474, %v612, %v2880
      %v3300 = vsel %vm1474, %v613, %v2882
      %v3302 = vsel %vm1474, %v614, %v2884
      %v3304 = vsel %vm1474, %v615, %v2886
      %v3306 = vsel %vm1539, %v3242, %v2920
      %v3307 = vsel %vm1539, %v3244, %v2920
      %v3309 = vsel %vm1539, %v3246, %v2922
      %v3310 = vsel %vm1539, %v3248, %v2922
      %v3312 = vsel %vm1539, %v3250, %v2924
      %v3313 = vsel %vm1539, %v3252, %v2924
      %v3315 = vsel %vm1539, %v3254, %v2926
      %v3316 = vsel %vm1539, %v3256, %v2926
      %v3318 = vsel %vm1539, %v3258, %v2928
      %v3319 = vsel %vm1539, %v3260, %v2928
      %v3321 = vsel %vm1539, %v3262, %v2930
      %v3322 = vsel %vm1539, %v3264, %v2930
      %v3324 = vsel %vm1539, %v3266, %v2932
      %v3325 = vsel %vm1539, %v3268, %v2932
      %v3327 = vsel %vm1539, %v3270, %v2934
      %v3328 = vsel %vm1539, %v3272, %v2934
      %v3330 = vsel %vm1539, %v3274, %v2936
      %v3331 = vsel %vm1539, %v3276, %v2936
      %v3333 = vsel %vm1539, %v3278, %v2938
      %v3334 = vsel %vm1539, %v3280, %v2938
      %v3336 = vsel %vm1539, %v3282, %v2940
      %v3337 = vsel %vm1539, %v3284, %v2940
      %v3339 = vsel %vm1539, %v3286, %v2942
      %v3340 = vsel %vm1539, %v3288, %v2942
      %v3342 = vsel %vm1539, %v3290, %v2944
      %v3343 = vsel %vm1539, %v3292, %v2944
      %v3345 = vsel %vm1539, %v3294, %v2946
      %v3346 = vsel %vm1539, %v3296, %v2946
      %v3348 = vsel %vm1539, %v3298, %v2948
      %v3349 = vsel %vm1539, %v3300, %v2948
      %v3351 = vsel %vm1539, %v3302, %v2950
      %v3352 = vsel %vm1539, %v3304, %v2950
      %v3353 = vsel %vm1604, %v3306, %v1047
      %v3354 = vsel %vm1604, %v3307, %v1049
      %v3355 = vsel %vm1604, %v3309, %v1051
      %v3356 = vsel %vm1604, %v3310, %v1053
      %v3357 = vsel %vm1604, %v3312, %v1055
      %v3358 = vsel %vm1604, %v3313, %v1057
      %v3359 = vsel %vm1604, %v3315, %v1059
      %v3360 = vsel %vm1604, %v3316, %v1061
      %v3361 = vsel %vm1604, %v3318, %v1063
      %v3362 = vsel %vm1604, %v3319, %v1065
      %v3363 = vsel %vm1604, %v3321, %v1067
      %v3364 = vsel %vm1604, %v3322, %v1069
      %v3365 = vsel %vm1604, %v3324, %v1071
      %v3366 = vsel %vm1604, %v3325, %v1073
      %v3367 = vsel %vm1604, %v3327, %v1075
      %v3368 = vsel %vm1604, %v3328, %v1077
      %v3369 = vsel %vm1604, %v3330, %v1079
      %v3370 = vsel %vm1604, %v3331, %v1081
      %v3371 = vsel %vm1604, %v3333, %v1083
      %v3372 = vsel %vm1604, %v3334, %v1085
      %v3373 = vsel %vm1604, %v3336, %v1087
      %v3374 = vsel %vm1604, %v3337, %v1089
      %v3375 = vsel %vm1604, %v3339, %v1091
      %v3376 = vsel %vm1604, %v3340, %v1093
      %v3377 = vsel %vm1604, %v3342, %v1095
      %v3378 = vsel %vm1604, %v3343, %v1097
      %v3379 = vsel %vm1604, %v3345, %v1099
      %v3380 = vsel %vm1604, %v3346, %v1101
      %v3381 = vsel %vm1604, %v3348, %v1103
      %v3382 = vsel %vm1604, %v3349, %v1105
      %v3383 = vsel %vm1604, %v3351, %v1107
      %v3384 = vsel %vm1604, %v3352, %v1109
      %v3386 = vsel %vm1669, %v3353, %v2973
      %v3388 = vsel %vm1669, %v3354, %v2975
      %v3390 = vsel %vm1669, %v3355, %v2977
      %v3392 = vsel %vm1669, %v3356, %v2979
      %v3394 = vsel %vm1669, %v3357, %v2981
      %v3396 = vsel %vm1669, %v3358, %v2983
      %v3398 = vsel %vm1669, %v3359, %v2985
      %v3400 = vsel %vm1669, %v3360, %v2987
      %v3402 = vsel %vm1669, %v3361, %v2989
      %v3404 = vsel %vm1669, %v3362, %v2991
      %v3406 = vsel %vm1669, %v3363, %v2993
      %v3408 = vsel %vm1669, %v3364, %v2995
      %v3410 = vsel %vm1669, %v3365, %v2997
      %v3412 = vsel %vm1669, %v3366, %v2999
      %v3414 = vsel %vm1669, %v3367, %v3001
      %v3416 = vsel %vm1669, %v3368, %v3003
      %v3418 = vsel %vm1669, %v3369, %v3005
      %v3420 = vsel %vm1669, %v3370, %v3007
      %v3422 = vsel %vm1669, %v3371, %v3009
      %v3424 = vsel %vm1669, %v3372, %v3011
      %v3426 = vsel %vm1669, %v3373, %v3013
      %v3428 = vsel %vm1669, %v3374, %v3015
      %v3430 = vsel %vm1669, %v3375, %v3017
      %v3432 = vsel %vm1669, %v3376, %v3019
      %v3434 = vsel %vm1669, %v3377, %v3021
      %v3436 = vsel %vm1669, %v3378, %v3023
      %v3438 = vsel %vm1669, %v3379, %v3025
      %v3440 = vsel %vm1669, %v3380, %v3027
      %v3442 = vsel %vm1669, %v3381, %v3029
      %v3444 = vsel %vm1669, %v3382, %v3031
      %v3446 = vsel %vm1669, %v3383, %v3033
      %v3448 = vsel %vm1669, %v3384, %v3035
      %v3450 = vsel %vm1734, %v3386, %v3043
      %v3451 = vsel %vm1734, %v3388, %v3043
      %v3453 = vsel %vm1734, %v3390, %v3045
      %v3454 = vsel %vm1734, %v3392, %v3045
      %v3456 = vsel %vm1734, %v3394, %v3047
      %v3457 = vsel %vm1734, %v3396, %v3047
      %v3459 = vsel %vm1734, %v3398, %v3049
      %v3460 = vsel %vm1734, %v3400, %v3049
      %v3462 = vsel %vm1734, %v3402, %v3051
      %v3463 = vsel %vm1734, %v3404, %v3051
      %v3465 = vsel %vm1734, %v3406, %v3053
      %v3466 = vsel %vm1734, %v3408, %v3053
      %v3468 = vsel %vm1734, %v3410, %v3055
      %v3469 = vsel %vm1734, %v3412, %v3055
      %v3471 = vsel %vm1734, %v3414, %v3057
      %v3472 = vsel %vm1734, %v3416, %v3057
      %v3474 = vsel %vm1734, %v3418, %v3059
      %v3475 = vsel %vm1734, %v3420, %v3059
      %v3477 = vsel %vm1734, %v3422, %v3061
      %v3478 = vsel %vm1734, %v3424, %v3061
      %v3480 = vsel %vm1734, %v3426, %v3063
      %v3481 = vsel %vm1734, %v3428, %v3063
      %v3483 = vsel %vm1734, %v3430, %v3065
      %v3484 = vsel %vm1734, %v3432, %v3065
      %v3486 = vsel %vm1734, %v3434, %v3067
      %v3487 = vsel %vm1734, %v3436, %v3067
      %v3489 = vsel %vm1734, %v3438, %v3069
      %v3490 = vsel %vm1734, %v3440, %v3069
      %v3492 = vsel %vm1734, %v3442, %v3071
      %v3493 = vsel %vm1734, %v3444, %v3071
      %v3495 = vsel %vm1734, %v3446, %v3073
      %v3496 = vsel %vm1734, %v3448, %v3073
      %v3497 = vsel %vm1799, %v3450, %v1273
      %v3498 = vsel %vm1799, %v3451, %v1275
      %v3499 = vsel %vm1799, %v3453, %v1277
      %v3500 = vsel %vm1799, %v3454, %v1279
      %v3501 = vsel %vm1799, %v3456, %v1281
      %v3502 = vsel %vm1799, %v3457, %v1283
      %v3503 = vsel %vm1799, %v3459, %v1285
      %v3504 = vsel %vm1799, %v3460, %v1287
      %v3505 = vsel %vm1799, %v3462, %v1289
      %v3506 = vsel %vm1799, %v3463, %v1291
      %v3507 = vsel %vm1799, %v3465, %v1293
      %v3508 = vsel %vm1799, %v3466, %v1295
      %v3509 = vsel %vm1799, %v3468, %v1297
      %v3510 = vsel %vm1799, %v3469, %v1299
      %v3511 = vsel %vm1799, %v3471, %v1301
      %v3512 = vsel %vm1799, %v3472, %v1303
      %v3513 = vsel %vm1799, %v3474, %v1305
      %v3514 = vsel %vm1799, %v3475, %v1307
      %v3515 = vsel %vm1799, %v3477, %v1309
      %v3516 = vsel %vm1799, %v3478, %v1311
      %v3517 = vsel %vm1799, %v3480, %v1313
      %v3518 = vsel %vm1799, %v3481, %v1315
      %v3519 = vsel %vm1799, %v3483, %v1317
      %v3520 = vsel %vm1799, %v3484, %v1319
      %v3521 = vsel %vm1799, %v3486, %v1321
      %v3522 = vsel %vm1799, %v3487, %v1323
      %v3523 = vsel %vm1799, %v3489, %v1325
      %v3524 = vsel %vm1799, %v3490, %v1327
      %v3526 = vsel %vm1799, %v3492, %v3091
      %v3528 = vsel %vm1799, %v3493, %v3093
      %v3530 = vsel %vm1799, %v3495, %v3095
      %v3532 = vsel %vm1799, %v3496, %v3097
      %v3534 = vsel %vm1864, %v3497, %v3140
      %v3536 = vsel %vm1864, %v3498, %v3142
      %v3538 = vsel %vm1864, %v3499, %v3144
      %v3540 = vsel %vm1864, %v3500, %v3146
      %v3542 = vsel %vm1864, %v3501, %v3148
      %v3544 = vsel %vm1864, %v3502, %v3150
      %v3546 = vsel %vm1864, %v3503, %v3152
      %v3548 = vsel %vm1864, %v3504, %v3154
      %v3550 = vsel %vm1864, %v3505, %v3156
      %v3552 = vsel %vm1864, %v3506, %v3158
      %v3554 = vsel %vm1864, %v3507, %v3160
      %v3556 = vsel %vm1864, %v3508, %v3162
      %v3558 = vsel %vm1864, %v3509, %v3164
      %v3560 = vsel %vm1864, %v3510, %v3166
      %v3562 = vsel %vm1864, %v3511, %v3168
      %v3564 = vsel %vm1864, %v3512, %v3170
      %v3566 = vsel %vm1864, %v3513, %v3172
      %v3568 = vsel %vm1864, %v3514, %v3174
      %v3570 = vsel %vm1864, %v3515, %v3176
      %v3572 = vsel %vm1864, %v3516, %v3178
      %v3574 = vsel %vm1864, %v3517, %v3180
      %v3576 = vsel %vm1864, %v3518, %v3182
      %v3578 = vsel %vm1864, %v3519, %v3184
      %v3580 = vsel %vm1864, %v3520, %v3186
      %v3582 = vsel %vm1864, %v3521, %v3188
      %v3584 = vsel %vm1864, %v3522, %v3190
      %v3586 = vsel %vm1864, %v3523, %v3192
      %v3588 = vsel %vm1864, %v3524, %v3194
      %v3590 = vsel %vm1864, %v3526, %v3196
      %v3592 = vsel %vm1864, %v3528, %v3198
      %v3594 = vsel %vm1864, %v3530, %v3200
      %v3596 = vsel %vm1864, %v3532, %v3202
      %v3598 = vsel %vm1929, %v3534, %v3210
      %v3599 = vsel %vm1929, %v3536, %v3210
      %v3601 = vsel %vm1929, %v3538, %v3212
      %v3602 = vsel %vm1929, %v3540, %v3212
      %v3604 = vsel %vm1929, %v3542, %v3214
      %v3605 = vsel %vm1929, %v3544, %v3214
      %v3607 = vsel %vm1929, %v3546, %v3216
      %v3608 = vsel %vm1929, %v3548, %v3216
      %v3610 = vsel %vm1929, %v3550, %v3218
      %v3611 = vsel %vm1929, %v3552, %v3218
      %v3613 = vsel %vm1929, %v3554, %v3220
      %v3614 = vsel %vm1929, %v3556, %v3220
      %v3616 = vsel %vm1929, %v3558, %v3222
      %v3617 = vsel %vm1929, %v3560, %v3222
      %v3619 = vsel %vm1929, %v3562, %v3224
      %v3620 = vsel %vm1929, %v3564, %v3224
      %v3622 = vsel %vm1929, %v3566, %v3226
      %v3623 = vsel %vm1929, %v3568, %v3226
      %v3625 = vsel %vm1929, %v3570, %v3228
      %v3626 = vsel %vm1929, %v3572, %v3228
      %v3628 = vsel %vm1929, %v3574, %v3230
      %v3629 = vsel %vm1929, %v3576, %v3230
      %v3631 = vsel %vm1929, %v3578, %v3232
      %v3632 = vsel %vm1929, %v3580, %v3232
      %v3634 = vsel %vm1929, %v3582, %v3234
      %v3635 = vsel %vm1929, %v3584, %v3234
      %v3637 = vsel %vm1929, %v3586, %v3236
      %v3638 = vsel %vm1929, %v3588, %v3236
      %v3640 = vsel %vm1929, %v3590, %v3238
      %v3641 = vsel %vm1929, %v3592, %v3238
      %v3643 = vsel %vm1929, %v3594, %v3240
      %v3644 = vsel %vm1929, %v3596, %v3240
      %v3677 = vrot.slane %v3598, 1
      %v3678 = vrot.slane %v3599, 1
      %v3679 = vsel %vm925, %v3677, %v3678
      %v3680 = vrot.slane %v3601, 1
      %v3681 = vrot.slane %v3602, 1
      %v3682 = vsel %vm925, %v3680, %v3681
      %v3683 = vrot.slane %v3604, 1
      %v3684 = vrot.slane %v3605, 1
      %v3685 = vsel %vm925, %v3683, %v3684
      %v3686 = vrot.slane %v3607, 1
      %v3687 = vrot.slane %v3608, 1
      %v3688 = vsel %vm925, %v3686, %v3687
      %v3689 = vrot.slane %v3610, 1
      %v3690 = vrot.slane %v3611, 1
      %v3691 = vsel %vm925, %v3689, %v3690
      %v3692 = vrot.slane %v3613, 1
      %v3693 = vrot.slane %v3614, 1
      %v3694 = vsel %vm925, %v3692, %v3693
      %v3695 = vrot.slane %v3616, 1
      %v3696 = vrot.slane %v3617, 1
      %v3697 = vsel %vm925, %v3695, %v3696
      %v3698 = vrot.slane %v3619, 1
      %v3699 = vrot.slane %v3620, 1
      %v3700 = vsel %vm925, %v3698, %v3699
      %v3701 = vrot.slane %v3622, 1
      %v3702 = vrot.slane %v3623, 1
      %v3703 = vsel %vm925, %v3701, %v3702
      %v3704 = vrot.slane %v3625, 1
      %v3705 = vrot.slane %v3626, 1
      %v3706 = vsel %vm925, %v3704, %v3705
      %v3707 = vrot.slane %v3628, 1
      %v3708 = vrot.slane %v3629, 1
      %v3709 = vsel %vm925, %v3707, %v3708
      %v3710 = vrot.slane %v3631, 1
      %v3711 = vrot.slane %v3632, 1
      %v3712 = vsel %vm925, %v3710, %v3711
      %v3713 = vrot.slane %v3634, 1
      %v3714 = vrot.slane %v3635, 1
      %v3715 = vsel %vm925, %v3713, %v3714
      %v3716 = vrot.slane %v3637, 1
      %v3717 = vrot.slane %v3638, 1
      %v3718 = vsel %vm925, %v3716, %v3717
      %v3719 = vrot.slane %v3640, 1
      %v3720 = vrot.slane %v3641, 1
      %v3721 = vsel %vm925, %v3719, %v3720
      %v3722 = vrot.slane %v3643, 1
      %v3723 = vrot.slane %v3644, 1
      %v3724 = vsel %vm925, %v3722, %v3723
      %s3725 = scalar_lea.vmem %s3, 36
      %v3726 = vld [vmem:[%s3725] sm:$0xf]
      %v3727 = vld [vmem:[%s3725 + $0x4] sm:$0xf]
      %v3728 = vld [vmem:[%s3725 + $0x8] sm:$0xf]
      %v3729 = vld [vmem:[%s3725 + $0xc] sm:$0xf]
      %v3730 = vld [vmem:[%s3725 + $0x10] sm:$0xf]
      %v3731 = vld [vmem:[%s3725 + $0x14] sm:$0xf]
      %v3732 = vld [vmem:[%s3725 + $0x18] sm:$0xf]
      %v3733 = vld [vmem:[%s3725 + $0x1c] sm:$0xf]
      %v3734 = vld [vmem:[%s3725 + $0x20] sm:$0xf]
      %s3735 = scalar_lea.vmem %s4, 1
      %v3736 = vld [vmem:[%s3735] sm:$0x1]
      %v3738 = vlaneseq
      %v3739 = vshrl.u32 %v3738, 7
      %v3740 = vsub.s32 0, %v3739
      %v3741 = vrot.slane %v3736, %v3740
      %v3752 = vunpack.c.l.b16 %v3726
      %v3753 = vunpack.c.l.b16 %v3727
      %v3754 = vunpack.c.l.b16 %v3728
      %v3755 = vunpack.c.l.b16 %v3729
      %v3756 = vunpack.c.l.b16 %v3730
      %v3757 = vunpack.c.l.b16 %v3731
      %v3758 = vunpack.c.l.b16 %v3732
      %v3759 = vunpack.c.l.b16 %v3733
      %v3760 = vunpack.c.l.b16 %v3734
      %v3761 = vpack.c.b16 %v3753, %v3752
      %v3762 = vpack.c.b16 %v3755, %v3754
      %v3763 = vpack.c.b16 %v3757, %v3756
      %v3764 = vpack.c.b16 %v3759, %v3758
      %v3765 = vpack.c.b16 %v3760, %v3760
      %v3771 = vsel %vm2118, %v3679, 0
      %v3774 = vsel %vm2118, %v3682, 0
      %v3777 = vsel %vm2118, %v3685, 0
      %v3780 = vsel %vm2118, %v3688, 0
      %v3783 = vsel %vm2118, %v3691, 0
      %v3786 = vsel %vm2118, %v3694, 0
      %v3789 = vsel %vm2118, %v3697, 0
      %v3792 = vsel %vm2118, %v3700, 0
      %v3795 = vsel %vm2118, %v3703, 0
      %v3798 = vsel %vm2118, %v3706, 0
      %v3801 = vsel %vm2118, %v3709, 0
      %v3804 = vsel %vm2118, %v3712, 0
      %v3807 = vsel %vm2118, %v3715, 0
      %v3810 = vsel %vm2118, %v3718, 0
      %v3813 = vsel %vm2118, %v3721, 0
      %v3816 = vsel %vm2118, %v3724, 0
      %v3819 = vsel %vm2167, %v3765, 0
      %3821 = vmatprep.subr.bf16.mxu0 0
      %3822 = vmatpush1.bf16.msra.mxu0 %v3761
      %3823 = vmatprep.subr.bf16.mxu0 0
      %3824 = vmatpush1.bf16.msra.mxu0 %v3762
      %3825 = vmatprep.subr.bf16.mxu0 0
      %3826 = vmatpush1.bf16.msra.mxu0 %v3763
      %3827 = vmatprep.subr.bf16.mxu0 0
      %3828 = vmatpush1.bf16.msra.mxu0 %v3764
      %3829 = vmatprep.subr.bf16.mxu0 0
      %3830 = vmatpush1.bf16.msra.mxu0 %v3819
      %3831 = vmatprep.subr.bf16.mxu0 0
      %3832 = vmatpush1.bf16.msra.mxu0 0
      %3833 = vmatprep.subr.bf16.mxu0 0
      %3834 = vmatpush1.bf16.msra.mxu0 0
      %3835 = vmatprep.subr.bf16.mxu0 0
      %3836 = vmatpush1.bf16.msra.mxu0 0
      %3837 = vmatprep.subr.bf16.mxu0 0
      %3838 = vmatpush1.bf16.msra.mxu0 0
      %3839 = vmatprep.subr.bf16.mxu0 0
      %3840 = vmatpush1.bf16.msra.mxu0 0
      %3841 = vmatprep.subr.bf16.mxu0 0
      %3842 = vmatpush1.bf16.msra.mxu0 0
      %3843 = vmatprep.subr.bf16.mxu0 0
      %3844 = vmatpush1.bf16.msra.mxu0 0
      %3845 = vmatprep.subr.bf16.mxu0 0
      %3846 = vmatpush1.bf16.msra.mxu0 0
      %3847 = vmatprep.subr.bf16.mxu0 0
      %3848 = vmatpush1.bf16.msra.mxu0 0
      %3849 = vmatprep.subr.bf16.mxu0 0
      %3850 = vmatpush1.bf16.msra.mxu0 0
      %3851 = vmatprep.subr.bf16.mxu0 0
      %3852 = vmatpush1.bf16.msra.mxu0 0
      %3853 = vmatprep.mubr.bf16.mxu0 0
      %3854 = vmatmul.mubr.bf16.gmra.mrb[0].mxu0 %v3771
      %v3855 = vpop.f32.mrb[0].mxu0
      %v3856 = vadd.f32 %v3741, %v3855
      %v3857 = vpop.f32.mrb[0].mxu0
      %v3858 = vpop.f32.mrb[0].mxu0
      %v3859 = vadd.f32 %v3741, %v3858
      %v3860 = vpop.f32.mrb[0].mxu0
      %3861 = vmatprep.mubr.bf16.mxu0 0
      %3862 = vmatmul.mubr.bf16.gmra.mrb[0].mxu0 %v3774
      %v3863 = vpop.f32.mrb[0].mxu0
      %v3864 = vadd.f32 %v3741, %v3863
      %v3865 = vpop.f32.mrb[0].mxu0
      %v3866 = vpop.f32.mrb[0].mxu0
      %v3867 = vadd.f32 %v3741, %v3866
      %v3868 = vpop.f32.mrb[0].mxu0
      %3869 = vmatprep.mubr.bf16.mxu0 0
      %3870 = vmatmul.mubr.bf16.gmra.mrb[0].mxu0 %v3777
      %v3871 = vpop.f32.mrb[0].mxu0
      %v3872 = vadd.f32 %v3741, %v3871
      %v3873 = vpop.f32.mrb[0].mxu0
      %v3874 = vpop.f32.mrb[0].mxu0
      %v3875 = vadd.f32 %v3741, %v3874
      %v3876 = vpop.f32.mrb[0].mxu0
      %3877 = vmatprep.mubr.bf16.mxu0 0
      %3878 = vmatmul.mubr.bf16.gmra.mrb[0].mxu0 %v3780
      %v3879 = vpop.f32.mrb[0].mxu0
      %v3880 = vadd.f32 %v3741, %v3879
      %v3881 = vpop.f32.mrb[0].mxu0
      %v3882 = vpop.f32.mrb[0].mxu0
      %v3883 = vadd.f32 %v3741, %v3882
      %v3884 = vpop.f32.mrb[0].mxu0
      %3885 = vmatprep.mubr.bf16.mxu0 0
      %3886 = vmatmul.mubr.bf16.gmra.mrb[0].mxu0 %v3783
      %v3887 = vpop.f32.mrb[0].mxu0
      %v3888 = vadd.f32 %v3741, %v3887
      %v3889 = vpop.f32.mrb[0].mxu0
      %v3890 = vpop.f32.mrb[0].mxu0
      %v3891 = vadd.f32 %v3741, %v3890
      %v3892 = vpop.f32.mrb[0].mxu0
      %3893 = vmatprep.mubr.bf16.mxu0 0
      %3894 = vmatmul.mubr.bf16.gmra.mrb[0].mxu0 %v3786
      %v3895 = vpop.f32.mrb[0].mxu0
      %v3896 = vadd.f32 %v3741, %v3895
      %v3897 = vpop.f32.mrb[0].mxu0
      %v3898 = vpop.f32.mrb[0].mxu0
      %v3899 = vadd.f32 %v3741, %v3898
      %v3900 = vpop.f32.mrb[0].mxu0
      %3901 = vmatprep.mubr.bf16.mxu0 0
      %3902 = vmatmul.mubr.bf16.gmra.mrb[0].mxu0 %v3789
      %v3903 = vpop.f32.mrb[0].mxu0
      %v3904 = vadd.f32 %v3741, %v3903
      %v3905 = vpop.f32.mrb[0].mxu0
      %v3906 = vpop.f32.mrb[0].mxu0
      %v3907 = vadd.f32 %v3741, %v3906
      %v3908 = vpop.f32.mrb[0].mxu0
      %3909 = vmatprep.mubr.bf16.mxu0 0
      %3910 = vmatmul.mubr.bf16.gmra.mrb[0].mxu0 %v3792
      %v3911 = vpop.f32.mrb[0].mxu0
      %v3912 = vadd.f32 %v3741, %v3911
      %v3913 = vpop.f32.mrb[0].mxu0
      %v3914 = vpop.f32.mrb[0].mxu0
      %v3915 = vadd.f32 %v3741, %v3914
      %v3916 = vpop.f32.mrb[0].mxu0
      %3917 = vmatprep.mubr.bf16.mxu0 0
      %3918 = vmatmul.mubr.bf16.gmra.mrb[0].mxu0 %v3795
      %v3919 = vpop.f32.mrb[0].mxu0
      %v3920 = vadd.f32 %v3741, %v3919
      %v3921 = vpop.f32.mrb[0].mxu0
      %v3922 = vpop.f32.mrb[0].mxu0
      %v3923 = vadd.f32 %v3741, %v3922
      %v3924 = vpop.f32.mrb[0].mxu0
      %3925 = vmatprep.mubr.bf16.mxu0 0
      %3926 = vmatmul.mubr.bf16.gmra.mrb[0].mxu0 %v3798
      %v3927 = vpop.f32.mrb[0].mxu0
      %v3928 = vadd.f32 %v3741, %v3927
      %v3929 = vpop.f32.mrb[0].mxu0
      %v3930 = vpop.f32.mrb[0].mxu0
      %v3931 = vadd.f32 %v3741, %v3930
      %v3932 = vpop.f32.mrb[0].mxu0
      %3933 = vmatprep.mubr.bf16.mxu0 0
      %3934 = vmatmul.mubr.bf16.gmra.mrb[0].mxu0 %v3801
      %v3935 = vpop.f32.mrb[0].mxu0
      %v3936 = vadd.f32 %v3741, %v3935
      %v3937 = vpop.f32.mrb[0].mxu0
      %v3938 = vpop.f32.mrb[0].mxu0
      %v3939 = vadd.f32 %v3741, %v3938
      %v3940 = vpop.f32.mrb[0].mxu0
      %3941 = vmatprep.mubr.bf16.mxu0 0
      %3942 = vmatmul.mubr.bf16.gmra.mrb[0].mxu0 %v3804
      %v3943 = vpop.f32.mrb[0].mxu0
      %v3944 = vadd.f32 %v3741, %v3943
      %v3945 = vpop.f32.mrb[0].mxu0
      %v3946 = vpop.f32.mrb[0].mxu0
      %v3947 = vadd.f32 %v3741, %v3946
      %v3948 = vpop.f32.mrb[0].mxu0
      %3949 = vmatprep.mubr.bf16.mxu0 0
      %3950 = vmatmul.mubr.bf16.gmra.mrb[0].mxu0 %v3807
      %v3951 = vpop.f32.mrb[0].mxu0
      %v3952 = vadd.f32 %v3741, %v3951
      %v3953 = vpop.f32.mrb[0].mxu0
      %v3954 = vpop.f32.mrb[0].mxu0
      %v3955 = vadd.f32 %v3741, %v3954
      %v3956 = vpop.f32.mrb[0].mxu0
      %3957 = vmatprep.mubr.bf16.mxu0 0
      %3958 = vmatmul.mubr.bf16.gmra.mrb[0].mxu0 %v3810
      %v3959 = vpop.f32.mrb[0].mxu0
      %v3960 = vadd.f32 %v3741, %v3959
      %v3961 = vpop.f32.mrb[0].mxu0
      %v3962 = vpop.f32.mrb[0].mxu0
      %v3963 = vadd.f32 %v3741, %v3962
      %v3964 = vpop.f32.mrb[0].mxu0
      %3965 = vmatprep.mubr.bf16.mxu0 0
      %3966 = vmatmul.mubr.bf16.gmra.mrb[0].mxu0 %v3813
      %v3967 = vpop.f32.mrb[0].mxu0
      %v3968 = vadd.f32 %v3741, %v3967
      %v3969 = vpop.f32.mrb[0].mxu0
      %v3970 = vpop.f32.mrb[0].mxu0
      %v3971 = vadd.f32 %v3741, %v3970
      %v3972 = vpop.f32.mrb[0].mxu0
      %3973 = vmatprep.mubr.bf16.mxu0 0
      %3974 = vmatmul.mubr.bf16.gmra.mrb[0].mxu0 %v3816
      %v3975 = vpop.f32.mrb[0].mxu0
      %v3976 = vadd.f32 %v3741, %v3975
      %v3977 = vpop.f32.mrb[0].mxu0
      %v3978 = vpop.f32.mrb[0].mxu0
      %v3979 = vadd.f32 %v3741, %v3978
      %v3980 = vpop.f32.mrb[0].mxu0
      %3981 = vdwg.mxu0
      %v3982 = vmax.f32 %v3856, 0.0
      %v3983 = vmax.f32 %v3859, 0.0
      %v3984 = vmax.f32 %v3864, 0.0
      %v3985 = vmax.f32 %v3867, 0.0
      %v3986 = vmax.f32 %v3872, 0.0
      %v3987 = vmax.f32 %v3875, 0.0
      %v3988 = vmax.f32 %v3880, 0.0
      %v3989 = vmax.f32 %v3883, 0.0
      %v3990 = vmax.f32 %v3888, 0.0
      %v3991 = vmax.f32 %v3891, 0.0
      %v3992 = vmax.f32 %v3896, 0.0
      %v3993 = vmax.f32 %v3899, 0.0
      %v3994 = vmax.f32 %v3904, 0.0
      %v3995 = vmax.f32 %v3907, 0.0
      %v3996 = vmax.f32 %v3912, 0.0
      %v3997 = vmax.f32 %v3915, 0.0
      %v3998 = vmax.f32 %v3920, 0.0
      %v3999 = vmax.f32 %v3923, 0.0
      %v4000 = vmax.f32 %v3928, 0.0
      %v4001 = vmax.f32 %v3931, 0.0
      %v4002 = vmax.f32 %v3936, 0.0
      %v4003 = vmax.f32 %v3939, 0.0
      %v4004 = vmax.f32 %v3944, 0.0
      %v4005 = vmax.f32 %v3947, 0.0
      %v4006 = vmax.f32 %v3952, 0.0
      %v4007 = vmax.f32 %v3955, 0.0
      %v4008 = vmax.f32 %v3960, 0.0
      %v4009 = vmax.f32 %v3963, 0.0
      %v4010 = vmax.f32 %v3968, 0.0
      %v4011 = vmax.f32 %v3971, 0.0
      %v4012 = vmax.f32 %v3976, 0.0
      %v4013 = vmax.f32 %v3979, 0.0
      %v4014 = vsel %vm1474, %v3982, 0.0
      %v4015 = vsel %vm1474, %v3983, 0.0
      %v4016 = vadd.f32 %v4014, %v4015
      %v4017 = vsel %vm1474, %v3984, 0.0
      %v4018 = vadd.f32 %v4016, %v4017
      %v4019 = vsel %vm1474, %v3985, 0.0
      %v4020 = vadd.f32 %v4018, %v4019
      %v4021 = vsel %vm1474, %v3986, 0.0
      %v4022 = vadd.f32 %v4020, %v4021
      %v4023 = vsel %vm1474, %v3987, 0.0
      %v4024 = vadd.f32 %v4022, %v4023
      %v4025 = vsel %vm1474, %v3988, 0.0
      %v4026 = vadd.f32 %v4024, %v4025
      %v4027 = vsel %vm1474, %v3989, 0.0
      %v4028 = vadd.f32 %v4026, %v4027
      %v4029 = vsel %vm1474, %v3990, 0.0
      %v4030 = vadd.f32 %v4028, %v4029
      %v4031 = vsel %vm1474, %v3991, 0.0
      %v4032 = vadd.f32 %v4030, %v4031
      %v4033 = vsel %vm1474, %v3992, 0.0
      %v4034 = vadd.f32 %v4032, %v4033
      %v4035 = vsel %vm1474, %v3993, 0.0
      %v4036 = vadd.f32 %v4034, %v4035
      %v4037 = vsel %vm1474, %v3994, 0.0
      %v4038 = vadd.f32 %v4036, %v4037
      %v4039 = vsel %vm1474, %v3995, 0.0
      %v4040 = vadd.f32 %v4038, %v4039
      %v4041 = vsel %vm1474, %v3996, 0.0
      %v4042 = vadd.f32 %v4040, %v4041
      %v4043 = vsel %vm1474, %v3997, 0.0
      %v4044 = vadd.f32 %v4042, %v4043
      %v4045 = vsel %vm1474, %v3998, 0.0
      %v4046 = vadd.f32 %v4044, %v4045
      %v4047 = vsel %vm1474, %v3999, 0.0
      %v4048 = vadd.f32 %v4046, %v4047
      %v4049 = vsel %vm1474, %v4000, 0.0
      %v4050 = vadd.f32 %v4048, %v4049
      %v4051 = vsel %vm1474, %v4001, 0.0
      %v4052 = vadd.f32 %v4050, %v4051
      %v4053 = vsel %vm1474, %v4002, 0.0
      %v4054 = vadd.f32 %v4052, %v4053
      %v4055 = vsel %vm1474, %v4003, 0.0
      %v4056 = vadd.f32 %v4054, %v4055
      %v4057 = vsel %vm1474, %v4004, 0.0
      %v4058 = vadd.f32 %v4056, %v4057
      %v4059 = vsel %vm1474, %v4005, 0.0
      %v4060 = vadd.f32 %v4058, %v4059
      %v4061 = vsel %vm1474, %v4006, 0.0
      %v4062 = vadd.f32 %v4060, %v4061
      %v4063 = vsel %vm1474, %v4007, 0.0
      %v4064 = vadd.f32 %v4062, %v4063
      %v4065 = vsel %vm1474, %v4008, 0.0
      %v4066 = vadd.f32 %v4064, %v4065
      %v4067 = vsel %vm1474, %v4009, 0.0
      %v4068 = vadd.f32 %v4066, %v4067
      %v4069 = vsel %vm1474, %v4010, 0.0
      %v4070 = vadd.f32 %v4068, %v4069
      %v4071 = vsel %vm1474, %v4011, 0.0
      %v4072 = vadd.f32 %v4070, %v4071
      %v4073 = vsel %vm1474, %v4012, 0.0
      %v4074 = vadd.f32 %v4072, %v4073
      %v4075 = vsel %vm1474, %v4013, 0.0
      %v4076 = vadd.f32 %v4074, %v4075
      %v4077 = vrot.slane %v4076, 4
      %v4078 = vadd.f32 %v4076, %v4077
      %v4079 = vrot.slane %v4078, 2
      %v4080 = vadd.f32 %v4078, %v4079
      %v4081 = vrot.slane %v4080, 1
      %v4082 = vadd.f32 %v4080, %v4081
      %v4083 = vmul.f32 %v4082, %v2672
      %v4088 = vunpack.c.l.b16 %v388
      %v4089 = vunpack.c.l.b16 %v389
      %v4090 = vunpack.c.l.b16 %v392
      %v4091 = vunpack.c.l.b16 %v393
      %v4092 = vpack.c.b16 %v4089, %v4088
      %v4093 = vpack.c.b16 %v4091, %v4090
      %v4096 = vunpack.c.l.b16 %v390
      %v4097 = vunpack.c.l.b16 %v394
      %v4098 = vpack.c.b16 %v4096, %v4096
      %v4099 = vpack.c.b16 %v4097, %v4097
      %vm4100 = vsmask.f32 5376
      %v4102 = vshrl.u32 %v4092, 16
      %v4104 = vrot.slane %v4102, 2
      %v4105 = vshll.u32 %v4092, 16
      %v4107 = vrot.slane %v4105, 3
      %v4108 = vor.u32 %v4104, %v4107
      %v4110 = vshrl.u32 %v4098, 16
      %v4112 = vrot.slane %v4110, 2
      %v4113 = vshll.u32 %v4098, 16
      %v4115 = vrot.slane %v4113, 3
      %v4116 = vor.u32 %v4112, %v4115
      %v4117 = vsel %vm4100, %v4108, %v4116
      %v4119 = vshrl.u32 %v4093, 16
      %v4121 = vrot.slane %v4119, 2
      %v4122 = vshll.u32 %v4093, 16
      %v4124 = vrot.slane %v4122, 3
      %v4125 = vor.u32 %v4121, %v4124
      %v4127 = vshrl.u32 %v4099, 16
      %v4129 = vrot.slane %v4127, 2
      %v4130 = vshll.u32 %v4099, 16
      %v4132 = vrot.slane %v4130, 3
      %v4133 = vor.u32 %v4129, %v4132
      %v4134 = vsel %vm4100, %v4125, %v4133
      %v4135 = vrot.slane %v2692, 2
      %v4136 = vrot.slane %v2695, 3
      %v4137 = vor.u32 %v4135, %v4136
      %v4138 = vrot.slane %v2700, 2
      %v4139 = vrot.slane %v2703, 3
      %v4140 = vor.u32 %v4138, %v4139
      %v4141 = vsel %vm4100, %v4137, %v4140
      %v4142 = vrot.slane %v2709, 2
      %v4143 = vrot.slane %v2712, 3
      %v4144 = vor.u32 %v4142, %v4143
      %v4145 = vrot.slane %v2717, 2
      %v4146 = vrot.slane %v2720, 3
      %v4147 = vor.u32 %v4145, %v4146
      %v4148 = vsel %vm4100, %v4144, %v4147
      %v4149 = vrot.slane %v622, 2
      %v4150 = vrot.slane %v624, 3
      %v4151 = vor.u32 %v4149, %v4150
      %v4152 = vrot.slane %v633, 2
      %v4153 = vrot.slane %v629, 3
      %v4154 = vor.u32 %v4152, %v4153
      %v4155 = vsel %vm4100, %v4151, %v4154
      %v4156 = vrot.slane %v637, 2
      %v4157 = vrot.slane %v639, 3
      %v4158 = vor.u32 %v4156, %v4157
      %v4159 = vrot.slane %v648, 2
      %v4160 = vrot.slane %v644, 3
      %v4161 = vor.u32 %v4159, %v4160
      %v4162 = vsel %vm4100, %v4158, %v4161
      %v4163 = vrot.slane %v652, 2
      %v4164 = vrot.slane %v654, 3
      %v4165 = vor.u32 %v4163, %v4164
      %v4166 = vrot.slane %v663, 2
      %v4167 = vrot.slane %v659, 3
      %v4168 = vor.u32 %v4166, %v4167
      %v4169 = vsel %vm4100, %v4165, %v4168
      %v4170 = vrot.slane %v667, 2
      %v4171 = vrot.slane %v669, 3
      %v4172 = vor.u32 %v4170, %v4171
      %v4173 = vrot.slane %v678, 2
      %v4174 = vrot.slane %v674, 3
      %v4175 = vor.u32 %v4173, %v4174
      %v4176 = vsel %vm4100, %v4172, %v4175
      %v4177 = vrot.slane %v682, 2
      %v4178 = vrot.slane %v684, 3
      %v4179 = vor.u32 %v4177, %v4178
      %v4180 = vrot.slane %v693, 2
      %v4181 = vrot.slane %v689, 3
      %v4182 = vor.u32 %v4180, %v4181
      %v4183 = vsel %vm4100, %v4179, %v4182
      %v4184 = vrot.slane %v697, 2
      %v4185 = vrot.slane %v699, 3
      %v4186 = vor.u32 %v4184, %v4185
      %v4187 = vrot.slane %v708, 2
      %v4188 = vrot.slane %v704, 3
      %v4189 = vor.u32 %v4187, %v4188
      %v4190 = vsel %vm4100, %v4186, %v4189
      %v4191 = vrot.slane %v712, 2
      %v4192 = vrot.slane %v714, 3
      %v4193 = vor.u32 %v4191, %v4192
      %v4194 = vrot.slane %v723, 2
      %v4195 = vrot.slane %v719, 3
      %v4196 = vor.u32 %v4194, %v4195
      %v4197 = vsel %vm4100, %v4193, %v4196
      %v4198 = vrot.slane %v727, 2
      %v4199 = vrot.slane %v729, 3
      %v4200 = vor.u32 %v4198, %v4199
      %v4201 = vrot.slane %v738, 2
      %v4202 = vrot.slane %v734, 3
      %v4203 = vor.u32 %v4201, %v4202
      %v4204 = vsel %vm4100, %v4200, %v4203
      %v4205 = vrot.slane %v742, 2
      %v4206 = vrot.slane %v744, 3
      %v4207 = vor.u32 %v4205, %v4206
      %v4208 = vrot.slane %v753, 2
      %v4209 = vrot.slane %v749, 3
      %v4210 = vor.u32 %v4208, %v4209
      %v4211 = vsel %vm4100, %v4207, %v4210
      %v4212 = vrot.slane %v757, 2
      %v4213 = vrot.slane %v759, 3
      %v4214 = vor.u32 %v4212, %v4213
      %v4215 = vrot.slane %v768, 2
      %v4216 = vrot.slane %v764, 3
      %v4217 = vor.u32 %v4215, %v4216
      %v4218 = vsel %vm4100, %v4214, %v4217
      %v4219 = vrot.slane %v772, 2
      %v4220 = vrot.slane %v774, 3
      %v4221 = vor.u32 %v4219, %v4220
      %v4222 = vrot.slane %v783, 2
      %v4223 = vrot.slane %v779, 3
      %v4224 = vor.u32 %v4222, %v4223
      %v4225 = vsel %vm4100, %v4221, %v4224
      %v4226 = vrot.slane %v787, 2
      %v4227 = vrot.slane %v789, 3
      %v4228 = vor.u32 %v4226, %v4227
      %v4229 = vrot.slane %v798, 2
      %v4230 = vrot.slane %v794, 3
      %v4231 = vor.u32 %v4229, %v4230
      %v4232 = vsel %vm4100, %v4228, %v4231
      %4233 = vrot.lane.b32.xlu0 %v4117, 8
      %v4234 = vpop.permute.xlu0 %4233
      %4235 = vrot.lane.b32.xlu0 %v4134, 8
      %v4236 = vpop.permute.xlu0 %4235
      %4237 = vrot.lane.b32.xlu0 %v4141, 8
      %v4238 = vpop.permute.xlu0 %4237
      %4239 = vrot.lane.b32.xlu0 %v4148, 8
      %v4240 = vpop.permute.xlu0 %4239
      %4241 = vrot.lane.b32.xlu0 %v4155, 8
      %v4242 = vpop.permute.xlu0 %4241
      %4243 = vrot.lane.b32.xlu0 %v4162, 8
      %v4244 = vpop.permute.xlu0 %4243
      %4245 = vrot.lane.b32.xlu0 %v4169, 8
      %v4246 = vpop.permute.xlu0 %4245
      %4247 = vrot.lane.b32.xlu0 %v4176, 8
      %v4248 = vpop.permute.xlu0 %4247
      %4249 = vrot.lane.b32.xlu0 %v4183, 8
      %v4250 = vpop.permute.xlu0 %4249
      %4251 = vrot.lane.b32.xlu0 %v4190, 8
      %v4252 = vpop.permute.xlu0 %4251
      %4253 = vrot.lane.b32.xlu0 %v4197, 8
      %v4254 = vpop.permute.xlu0 %4253
      %4255 = vrot.lane.b32.xlu0 %v4204, 8
      %v4256 = vpop.permute.xlu0 %4255
      %4257 = vrot.lane.b32.xlu0 %v4211, 8
      %v4258 = vpop.permute.xlu0 %4257
      %4259 = vrot.lane.b32.xlu0 %v4218, 8
      %v4260 = vpop.permute.xlu0 %4259
      %4261 = vrot.lane.b32.xlu0 %v4225, 8
      %v4262 = vpop.permute.xlu0 %4261
      %4263 = vrot.lane.b32.xlu0 %v4232, 8
      %v4264 = vpop.permute.xlu0 %4263
      %v4281 = vunpack.c.l.b16 %v391
      %v4282 = vunpack.c.l.b16 %v395
      %v4283 = vunpack.c.l.b16 %v399
      %v4284 = vunpack.c.l.b16 %v403
      %v4285 = vunpack.c.l.b16 %v407
      %v4286 = vunpack.c.l.b16 %v411
      %v4287 = vunpack.c.l.b16 %v415
      %v4288 = vunpack.c.l.b16 %v419
      %v4289 = vunpack.c.l.b16 %v423
      %v4290 = vunpack.c.l.b16 %v427
      %v4291 = vunpack.c.l.b16 %v431
      %v4292 = vunpack.c.l.b16 %v435
      %v4293 = vunpack.c.l.b16 %v439
      %v4294 = vunpack.c.l.b16 %v443
      %v4295 = vunpack.c.l.b16 %v447
      %v4296 = vunpack.c.l.b16 %v451
      %v4297 = vpack.c.b16 %v4096, %v4089
      %v4298 = vpack.c.b16 %v4281, %v4281
      %v4299 = vpack.c.b16 %v4097, %v4091
      %v4300 = vpack.c.b16 %v4282, %v4282
      %v4301 = vpack.c.b16 %v4283, %v4283
      %v4302 = vpack.c.b16 %v4284, %v4284
      %v4303 = vpack.c.b16 %v4285, %v4285
      %v4304 = vpack.c.b16 %v4286, %v4286
      %v4305 = vpack.c.b16 %v4287, %v4287
      %v4306 = vpack.c.b16 %v4288, %v4288
      %v4307 = vpack.c.b16 %v4289, %v4289
      %v4308 = vpack.c.b16 %v4290, %v4290
      %v4309 = vpack.c.b16 %v4291, %v4291
      %v4310 = vpack.c.b16 %v4292, %v4292
      %v4311 = vpack.c.b16 %v4293, %v4293
      %v4312 = vpack.c.b16 %v4294, %v4294
      %v4313 = vpack.c.b16 %v4295, %v4295
      %v4314 = vpack.c.b16 %v4296, %v4296
      %v4315 = vrot.slane %v4297, 1
      %v4316 = vrot.slane %v4298, 1
      %v4317 = vsel %vm925, %v4315, %v4316
      %v4318 = vrot.slane %v4299, 1
      %v4319 = vrot.slane %v4300, 1
      %v4320 = vsel %vm925, %v4318, %v4319
      %v4321 = vrot.slane %v2887, 1
      %v4322 = vrot.slane %v4301, 1
      %v4323 = vsel %vm925, %v4321, %v4322
      %v4324 = vrot.slane %v2888, 1
      %v4325 = vrot.slane %v4302, 1
      %v4326 = vsel %vm925, %v4324, %v4325
      %v4327 = vrot.slane %v2889, 1
      %v4328 = vrot.slane %v4303, 1
      %v4329 = vsel %vm925, %v4327, %v4328
      %v4330 = vrot.slane %v2890, 1
      %v4331 = vrot.slane %v4304, 1
      %v4332 = vsel %vm925, %v4330, %v4331
      %v4333 = vrot.slane %v2891, 1
      %v4334 = vrot.slane %v4305, 1
      %v4335 = vsel %vm925, %v4333, %v4334
      %v4336 = vrot.slane %v2892, 1
      %v4337 = vrot.slane %v4306, 1
      %v4338 = vsel %vm925, %v4336, %v4337
      %v4339 = vrot.slane %v2893, 1
      %v4340 = vrot.slane %v4307, 1
      %v4341 = vsel %vm925, %v4339, %v4340
      %v4342 = vrot.slane %v2894, 1
      %v4343 = vrot.slane %v4308, 1
      %v4344 = vsel %vm925, %v4342, %v4343
      %v4345 = vrot.slane %v2895, 1
      %v4346 = vrot.slane %v4309, 1
      %v4347 = vsel %vm925, %v4345, %v4346
      %v4348 = vrot.slane %v2896, 1
      %v4349 = vrot.slane %v4310, 1
      %v4350 = vsel %vm925, %v4348, %v4349
      %v4351 = vrot.slane %v2897, 1
      %v4352 = vrot.slane %v4311, 1
      %v4353 = vsel %vm925, %v4351, %v4352
      %v4354 = vrot.slane %v2898, 1
      %v4355 = vrot.slane %v4312, 1
      %v4356 = vsel %vm925, %v4354, %v4355
      %v4357 = vrot.slane %v2899, 1
      %v4358 = vrot.slane %v4313, 1
      %v4359 = vsel %vm925, %v4357, %v4358
      %v4360 = vrot.slane %v2900, 1
      %v4361 = vrot.slane %v4314, 1
      %v4362 = vsel %vm925, %v4360, %v4361
      %4363 = vrot.lane.b32.xlu0 %v4317, 16
      %v4364 = vpop.permute.xlu0 %4363
      %4365 = vrot.lane.b32.xlu0 %v4320, 16
      %v4366 = vpop.permute.xlu0 %4365
      %4367 = vrot.lane.b32.xlu0 %v4323, 16
      %v4368 = vpop.permute.xlu0 %4367
      %4369 = vrot.lane.b32.xlu0 %v4326, 16
      %v4370 = vpop.permute.xlu0 %4369
      %4371 = vrot.lane.b32.xlu0 %v4329, 16
      %v4372 = vpop.permute.xlu0 %4371
      %4373 = vrot.lane.b32.xlu0 %v4332, 16
      %v4374 = vpop.permute.xlu0 %4373
      %4375 = vrot.lane.b32.xlu0 %v4335, 16
      %v4376 = vpop.permute.xlu0 %4375
      %4377 = vrot.lane.b32.xlu0 %v4338, 16
      %v4378 = vpop.permute.xlu0 %4377
      %4379 = vrot.lane.b32.xlu0 %v4341, 16
      %v4380 = vpop.permute.xlu0 %4379
      %4381 = vrot.lane.b32.xlu0 %v4344, 16
      %v4382 = vpop.permute.xlu0 %4381
      %4383 = vrot.lane.b32.xlu0 %v4347, 16
      %v4384 = vpop.permute.xlu0 %4383
      %4385 = vrot.lane.b32.xlu0 %v4350, 16
      %v4386 = vpop.permute.xlu0 %4385
      %4387 = vrot.lane.b32.xlu0 %v4353, 16
      %v4388 = vpop.permute.xlu0 %4387
      %4389 = vrot.lane.b32.xlu0 %v4356, 16
      %v4390 = vpop.permute.xlu0 %4389
      %4391 = vrot.lane.b32.xlu0 %v4359, 16
      %v4392 = vpop.permute.xlu0 %4391
      %4393 = vrot.lane.b32.xlu0 %v4362, 16
      %v4394 = vpop.permute.xlu0 %4393
      %v4395 = vrot.slane %v802, 2
      %v4396 = vrot.slane %v804, 3
      %v4397 = vor.u32 %v4395, %v4396
      %v4398 = vrot.slane %v813, 2
      %v4399 = vrot.slane %v809, 3
      %v4400 = vor.u32 %v4398, %v4399
      %v4401 = vsel %vm4100, %v4397, %v4400
      %v4402 = vrot.slane %v817, 2
      %v4403 = vrot.slane %v819, 3
      %v4404 = vor.u32 %v4402, %v4403
      %v4405 = vrot.slane %v828, 2
      %v4406 = vrot.slane %v824, 3
      %v4407 = vor.u32 %v4405, %v4406
      %v4408 = vsel %vm4100, %v4404, %v4407
      %v4409 = vrot.slane %v832, 2
      %v4410 = vrot.slane %v834, 3
      %v4411 = vor.u32 %v4409, %v4410
      %v4412 = vrot.slane %v843, 2
      %v4413 = vrot.slane %v839, 3
      %v4414 = vor.u32 %v4412, %v4413
      %v4415 = vsel %vm4100, %v4411, %v4414
      %v4416 = vrot.slane %v847, 2
      %v4417 = vrot.slane %v849, 3
      %v4418 = vor.u32 %v4416, %v4417
      %v4419 = vrot.slane %v858, 2
      %v4420 = vrot.slane %v854, 3
      %v4421 = vor.u32 %v4419, %v4420
      %v4422 = vsel %vm4100, %v4418, %v4421
      %v4423 = vrot.slane %v1111, 2
      %v4424 = vrot.slane %v1113, 3
      %v4425 = vor.u32 %v4423, %v4424
      %v4426 = vrot.slane %v1122, 2
      %v4427 = vrot.slane %v1118, 3
      %v4428 = vor.u32 %v4426, %v4427
      %v4429 = vsel %vm4100, %v4425, %v4428
      %4430 = vrot.lane.b32.xlu0 %v4162, 32
      %v4431 = vpop.permute.xlu0 %4430
      %4432 = vrot.lane.b32.xlu0 %v4169, 32
      %v4433 = vpop.permute.xlu0 %4432
      %4434 = vrot.lane.b32.xlu0 %v4176, 32
      %v4435 = vpop.permute.xlu0 %4434
      %4436 = vrot.lane.b32.xlu0 %v4183, 32
      %v4437 = vpop.permute.xlu0 %4436
      %4438 = vrot.lane.b32.xlu0 %v4190, 32
      %v4439 = vpop.permute.xlu0 %4438
      %4440 = vrot.lane.b32.xlu0 %v4197, 32
      %v4441 = vpop.permute.xlu0 %4440
      %4442 = vrot.lane.b32.xlu0 %v4204, 32
      %v4443 = vpop.permute.xlu0 %4442
      %4444 = vrot.lane.b32.xlu0 %v4211, 32
      %v4445 = vpop.permute.xlu0 %4444
      %4446 = vrot.lane.b32.xlu0 %v4218, 32
      %v4447 = vpop.permute.xlu0 %4446
      %4448 = vrot.lane.b32.xlu0 %v4225, 32
      %v4449 = vpop.permute.xlu0 %4448
      %4450 = vrot.lane.b32.xlu0 %v4232, 32
      %v4451 = vpop.permute.xlu0 %4450
      %4452 = vrot.lane.b32.xlu0 %v4401, 32
      %v4453 = vpop.permute.xlu0 %4452
      %4454 = vrot.lane.b32.xlu0 %v4408, 32
      %v4455 = vpop.permute.xlu0 %4454
      %4456 = vrot.lane.b32.xlu0 %v4415, 32
      %v4457 = vpop.permute.xlu0 %4456
      %4458 = vrot.lane.b32.xlu0 %v4422, 32
      %v4459 = vpop.permute.xlu0 %4458
      %4460 = vrot.lane.b32.xlu0 %v4429, 32
      %v4461 = vpop.permute.xlu0 %4460
      %v4467 = vunpack.c.l.b16 %v455
      %v4468 = vunpack.c.l.b16 %v459
      %v4469 = vunpack.c.l.b16 %v463
      %v4470 = vunpack.c.l.b16 %v467
      %v4471 = vunpack.c.l.b16 %v471
      %v4472 = vpack.c.b16 %v4467, %v4467
      %v4473 = vpack.c.b16 %v4468, %v4468
      %v4474 = vpack.c.b16 %v4469, %v4469
      %v4475 = vpack.c.b16 %v4470, %v4470
      %v4476 = vpack.c.b16 %v4471, %v4471
      %v4477 = vrot.slane %v2901, 1
      %v4478 = vrot.slane %v4472, 1
      %v4479 = vsel %vm925, %v4477, %v4478
      %v4480 = vrot.slane %v2902, 1
      %v4481 = vrot.slane %v4473, 1
      %v4482 = vsel %vm925, %v4480, %v4481
      %v4483 = vrot.slane %v3036, 1
      %v4484 = vrot.slane %v4474, 1
      %v4485 = vsel %vm925, %v4483, %v4484
      %v4486 = vrot.slane %v3037, 1
      %v4487 = vrot.slane %v4475, 1
      %v4488 = vsel %vm925, %v4486, %v4487
      %v4489 = vrot.slane %v3038, 1
      %v4490 = vrot.slane %v4476, 1
      %v4491 = vsel %vm925, %v4489, %v4490
      %4492 = vrot.lane.b32.xlu0 %v4332, 40
      %v4493 = vpop.permute.xlu0 %4492
      %4494 = vrot.lane.b32.xlu0 %v4335, 40
      %v4495 = vpop.permute.xlu0 %4494
      %4496 = vrot.lane.b32.xlu0 %v4338, 40
      %v4497 = vpop.permute.xlu0 %4496
      %4498 = vrot.lane.b32.xlu0 %v4341, 40
      %v4499 = vpop.permute.xlu0 %4498
      %4500 = vrot.lane.b32.xlu0 %v4344, 40
      %v4501 = vpop.permute.xlu0 %4500
      %4502 = vrot.lane.b32.xlu0 %v4347, 40
      %v4503 = vpop.permute.xlu0 %4502
      %4504 = vrot.lane.b32.xlu0 %v4350, 40
      %v4505 = vpop.permute.xlu0 %4504
      %4506 = vrot.lane.b32.xlu0 %v4353, 40
      %v4507 = vpop.permute.xlu0 %4506
      %4508 = vrot.lane.b32.xlu0 %v4356, 40
      %v4509 = vpop.permute.xlu0 %4508
      %4510 = vrot.lane.b32.xlu0 %v4359, 40
      %v4511 = vpop.permute.xlu0 %4510
      %4512 = vrot.lane.b32.xlu0 %v4362, 40
      %v4513 = vpop.permute.xlu0 %4512
      %4514 = vrot.lane.b32.xlu0 %v4479, 40
      %v4515 = vpop.permute.xlu0 %4514
      %4516 = vrot.lane.b32.xlu0 %v4482, 40
      %v4517 = vpop.permute.xlu0 %4516
      %4518 = vrot.lane.b32.xlu0 %v4485, 40
      %v4519 = vpop.permute.xlu0 %4518
      %4520 = vrot.lane.b32.xlu0 %v4488, 40
      %v4521 = vpop.permute.xlu0 %4520
      %4522 = vrot.lane.b32.xlu0 %v4491, 40
      %v4523 = vpop.permute.xlu0 %4522
      %v4528 = vunpack.c.l.b16 %v484
      %v4529 = vunpack.c.l.b16 %v485
      %v4530 = vunpack.c.l.b16 %v488
      %v4531 = vunpack.c.l.b16 %v489
      %v4532 = vpack.c.b16 %v4529, %v4528
      %v4533 = vpack.c.b16 %v4531, %v4530
      %4534 = vrot.lane.b32.xlu0 %v4532, 48
      %v4535 = vpop.permute.xlu0 %4534
      %4536 = vrot.lane.b32.xlu0 %v4533, 48
      %v4537 = vpop.permute.xlu0 %4536
      %v4540 = vunpack.c.l.b16 %v486
      %v4541 = vunpack.c.l.b16 %v490
      %v4542 = vpack.c.b16 %v4540, %v4540
      %v4543 = vpack.c.b16 %v4541, %v4541
      %v4544 = vrot.slane %v1329, 2
      %v4545 = vrot.slane %v1331, 3
      %v4546 = vor.u32 %v4544, %v4545
      %v4547 = vrot.slane %v1340, 2
      %v4548 = vrot.slane %v1336, 3
      %v4549 = vor.u32 %v4547, %v4548
      %v4550 = vsel %vm4100, %v4546, %v4549
      %v4551 = vrot.slane %v3106, 2
      %v4552 = vrot.slane %v3109, 3
      %v4553 = vor.u32 %v4551, %v4552
      %v4554 = vrot.slane %v3114, 2
      %v4555 = vrot.slane %v3117, 3
      %v4556 = vor.u32 %v4554, %v4555
      %v4557 = vsel %vm4100, %v4553, %v4556
      %v4558 = vrot.slane %v3123, 2
      %v4559 = vrot.slane %v3126, 3
      %v4560 = vor.u32 %v4558, %v4559
      %v4561 = vrot.slane %v3131, 2
      %v4562 = vrot.slane %v3134, 3
      %v4563 = vor.u32 %v4561, %v4562
      %v4564 = vsel %vm4100, %v4560, %v4563
      %v4566 = vshrl.u32 %v4532, 16
      %v4568 = vrot.slane %v4566, 2
      %v4569 = vshll.u32 %v4532, 16
      %v4571 = vrot.slane %v4569, 3
      %v4572 = vor.u32 %v4568, %v4571
      %v4574 = vshrl.u32 %v4542, 16
      %v4576 = vrot.slane %v4574, 2
      %v4577 = vshll.u32 %v4542, 16
      %v4579 = vrot.slane %v4577, 3
      %v4580 = vor.u32 %v4576, %v4579
      %v4581 = vsel %vm4100, %v4572, %v4580
      %v4583 = vshrl.u32 %v4533, 16
      %v4585 = vrot.slane %v4583, 2
      %v4586 = vshll.u32 %v4533, 16
      %v4588 = vrot.slane %v4586, 3
      %v4589 = vor.u32 %v4585, %v4588
      %v4591 = vshrl.u32 %v4543, 16
      %v4593 = vrot.slane %v4591, 2
      %v4594 = vshll.u32 %v4543, 16
      %v4596 = vrot.slane %v4594, 3
      %v4597 = vor.u32 %v4593, %v4596
      %v4598 = vsel %vm4100, %v4589, %v4597
      %4599 = vrot.lane.b32.xlu0 %v4197, 56
      %v4600 = vpop.permute.xlu0 %4599
      %4601 = vrot.lane.b32.xlu0 %v4204, 56
      %v4602 = vpop.permute.xlu0 %4601
      %4603 = vrot.lane.b32.xlu0 %v4211, 56
      %v4604 = vpop.permute.xlu0 %4603
      %4605 = vrot.lane.b32.xlu0 %v4218, 56
      %v4606 = vpop.permute.xlu0 %4605
      %4607 = vrot.lane.b32.xlu0 %v4225, 56
      %v4608 = vpop.permute.xlu0 %4607
      %4609 = vrot.lane.b32.xlu0 %v4232, 56
      %v4610 = vpop.permute.xlu0 %4609
      %4611 = vrot.lane.b32.xlu0 %v4401, 56
      %v4612 = vpop.permute.xlu0 %4611
      %4613 = vrot.lane.b32.xlu0 %v4408, 56
      %v4614 = vpop.permute.xlu0 %4613
      %4615 = vrot.lane.b32.xlu0 %v4415, 56
      %v4616 = vpop.permute.xlu0 %4615
      %4617 = vrot.lane.b32.xlu0 %v4422, 56
      %v4618 = vpop.permute.xlu0 %4617
      %4619 = vrot.lane.b32.xlu0 %v4429, 56
      %v4620 = vpop.permute.xlu0 %4619
      %4621 = vrot.lane.b32.xlu0 %v4550, 56
      %v4622 = vpop.permute.xlu0 %4621
      %4623 = vrot.lane.b32.xlu0 %v4557, 56
      %v4624 = vpop.permute.xlu0 %4623
      %4625 = vrot.lane.b32.xlu0 %v4564, 56
      %v4626 = vpop.permute.xlu0 %4625
      %4627 = vrot.lane.b32.xlu0 %v4581, 56
      %v4628 = vpop.permute.xlu0 %4627
      %4629 = vrot.lane.b32.xlu0 %v4598, 56
      %v4630 = vpop.permute.xlu0 %4629
      %v4636 = vunpack.c.l.b16 %v475
      %v4637 = vunpack.c.l.b16 %v479
      %v4638 = vunpack.c.l.b16 %v483
      %v4639 = vunpack.c.l.b16 %v487
      %v4640 = vunpack.c.l.b16 %v491
      %v4641 = vpack.c.b16 %v4636, %v4636
      %v4642 = vpack.c.b16 %v4637, %v4637
      %v4643 = vpack.c.b16 %v4638, %v4638
      %v4644 = vpack.c.b16 %v4540, %v4529
      %v4645 = vpack.c.b16 %v4639, %v4639
      %v4646 = vpack.c.b16 %v4541, %v4531
      %v4647 = vpack.c.b16 %v4640, %v4640
      %v4648 = vrot.slane %v3203, 1
      %v4649 = vrot.slane %v4641, 1
      %v4650 = vsel %vm925, %v4648, %v4649
      %v4651 = vrot.slane %v3204, 1
      %v4652 = vrot.slane %v4642, 1
      %v4653 = vsel %vm925, %v4651, %v4652
      %v4654 = vrot.slane %v3205, 1
      %v4655 = vrot.slane %v4643, 1
      %v4656 = vsel %vm925, %v4654, %v4655
      %v4657 = vrot.slane %v4644, 1
      %v4658 = vrot.slane %v4645, 1
      %v4659 = vsel %vm925, %v4657, %v4658
      %v4660 = vrot.slane %v4646, 1
      %v4661 = vrot.slane %v4647, 1
      %v4662 = vsel %vm925, %v4660, %v4661
      %4663 = vrot.lane.b32.xlu0 %v4347, 64
      %v4664 = vpop.permute.xlu0 %4663
      %4665 = vrot.lane.b32.xlu0 %v4350, 64
      %v4666 = vpop.permute.xlu0 %4665
      %4667 = vrot.lane.b32.xlu0 %v4353, 64
      %v4668 = vpop.permute.xlu0 %4667
      %4669 = vrot.lane.b32.xlu0 %v4356, 64
      %v4670 = vpop.permute.xlu0 %4669
      %4671 = vrot.lane.b32.xlu0 %v4359, 64
      %v4672 = vpop.permute.xlu0 %4671
      %4673 = vrot.lane.b32.xlu0 %v4362, 64
      %v4674 = vpop.permute.xlu0 %4673
      %4675 = vrot.lane.b32.xlu0 %v4479, 64
      %v4676 = vpop.permute.xlu0 %4675
      %4677 = vrot.lane.b32.xlu0 %v4482, 64
      %v4678 = vpop.permute.xlu0 %4677
      %4679 = vrot.lane.b32.xlu0 %v4485, 64
      %v4680 = vpop.permute.xlu0 %4679
      %4681 = vrot.lane.b32.xlu0 %v4488, 64
      %v4682 = vpop.permute.xlu0 %4681
      %4683 = vrot.lane.b32.xlu0 %v4491, 64
      %v4684 = vpop.permute.xlu0 %4683
      %4685 = vrot.lane.b32.xlu0 %v4650, 64
      %v4686 = vpop.permute.xlu0 %4685
      %4687 = vrot.lane.b32.xlu0 %v4653, 64
      %v4688 = vpop.permute.xlu0 %4687
      %4689 = vrot.lane.b32.xlu0 %v4656, 64
      %v4690 = vpop.permute.xlu0 %4689
      %4691 = vrot.lane.b32.xlu0 %v4659, 64
      %v4692 = vpop.permute.xlu0 %4691
      %4693 = vrot.lane.b32.xlu0 %v4662, 64
      %v4694 = vpop.permute.xlu0 %4693
      %v4696 = vsel %vm1474, %v4092, %v4234
      %v4698 = vsel %vm1474, %v4093, %v4236
      %v4700 = vsel %vm1474, %v2686, %v4238
      %v4702 = vsel %vm1474, %v2688, %v4240
      %v4704 = vsel %vm1474, %v588, %v4242
      %v4706 = vsel %vm1474, %v590, %v4244
      %v4708 = vsel %vm1474, %v592, %v4246
      %v4710 = vsel %vm1474, %v594, %v4248
      %v4712 = vsel %vm1474, %v596, %v4250
      %v4714 = vsel %vm1474, %v598, %v4252
      %v4716 = vsel %vm1474, %v600, %v4254
      %v4718 = vsel %vm1474, %v602, %v4256
      %v4720 = vsel %vm1474, %v604, %v4258
      %v4722 = vsel %vm1474, %v606, %v4260
      %v4724 = vsel %vm1474, %v608, %v4262
      %v4726 = vsel %vm1474, %v610, %v4264
      %v4728 = vsel %vm1539, %v4696, %v4364
      %v4730 = vsel %vm1539, %v4698, %v4366
      %v4732 = vsel %vm1539, %v4700, %v4368
      %v4734 = vsel %vm1539, %v4702, %v4370
      %v4736 = vsel %vm1539, %v4704, %v4372
      %v4738 = vsel %vm1539, %v4706, %v4374
      %v4740 = vsel %vm1539, %v4708, %v4376
      %v4742 = vsel %vm1539, %v4710, %v4378
      %v4744 = vsel %vm1539, %v4712, %v4380
      %v4746 = vsel %vm1539, %v4714, %v4382
      %v4748 = vsel %vm1539, %v4716, %v4384
      %v4750 = vsel %vm1539, %v4718, %v4386
      %v4752 = vsel %vm1539, %v4720, %v4388
      %v4754 = vsel %vm1539, %v4722, %v4390
      %v4756 = vsel %vm1539, %v4724, %v4392
      %v4758 = vsel %vm1539, %v4726, %v4394
      %v4759 = vsel %vm1604, %v4728, %v1047
      %v4760 = vsel %vm1604, %v4730, %v1051
      %v4761 = vsel %vm1604, %v4732, %v1055
      %v4762 = vsel %vm1604, %v4734, %v1059
      %v4763 = vsel %vm1604, %v4736, %v1063
      %v4764 = vsel %vm1604, %v4738, %v1067
      %v4765 = vsel %vm1604, %v4740, %v1071
      %v4766 = vsel %vm1604, %v4742, %v1075
      %v4767 = vsel %vm1604, %v4744, %v1079
      %v4768 = vsel %vm1604, %v4746, %v1083
      %v4769 = vsel %vm1604, %v4748, %v1087
      %v4770 = vsel %vm1604, %v4750, %v1091
      %v4771 = vsel %vm1604, %v4752, %v1095
      %v4772 = vsel %vm1604, %v4754, %v1099
      %v4773 = vsel %vm1604, %v4756, %v1103
      %v4774 = vsel %vm1604, %v4758, %v1107
      %v4776 = vsel %vm1669, %v4759, %v4431
      %v4778 = vsel %vm1669, %v4760, %v4433
      %v4780 = vsel %vm1669, %v4761, %v4435
      %v4782 = vsel %vm1669, %v4762, %v4437
      %v4784 = vsel %vm1669, %v4763, %v4439
      %v4786 = vsel %vm1669, %v4764, %v4441
      %v4788 = vsel %vm1669, %v4765, %v4443
      %v4790 = vsel %vm1669, %v4766, %v4445
      %v4792 = vsel %vm1669, %v4767, %v4447
      %v4794 = vsel %vm1669, %v4768, %v4449
      %v4796 = vsel %vm1669, %v4769, %v4451
      %v4798 = vsel %vm1669, %v4770, %v4453
      %v4800 = vsel %vm1669, %v4771, %v4455
      %v4802 = vsel %vm1669, %v4772, %v4457
      %v4804 = vsel %vm1669, %v4773, %v4459
      %v4806 = vsel %vm1669, %v4774, %v4461
      %v4808 = vsel %vm1734, %v4776, %v4493
      %v4810 = vsel %vm1734, %v4778, %v4495
      %v4812 = vsel %vm1734, %v4780, %v4497
      %v4814 = vsel %vm1734, %v4782, %v4499
      %v4816 = vsel %vm1734, %v4784, %v4501
      %v4818 = vsel %vm1734, %v4786, %v4503
      %v4820 = vsel %vm1734, %v4788, %v4505
      %v4822 = vsel %vm1734, %v4790, %v4507
      %v4824 = vsel %vm1734, %v4792, %v4509
      %v4826 = vsel %vm1734, %v4794, %v4511
      %v4828 = vsel %vm1734, %v4796, %v4513
      %v4830 = vsel %vm1734, %v4798, %v4515
      %v4832 = vsel %vm1734, %v4800, %v4517
      %v4834 = vsel %vm1734, %v4802, %v4519
      %v4836 = vsel %vm1734, %v4804, %v4521
      %v4838 = vsel %vm1734, %v4806, %v4523
      %v4839 = vsel %vm1799, %v4808, %v1281
      %v4840 = vsel %vm1799, %v4810, %v1285
      %v4841 = vsel %vm1799, %v4812, %v1289
      %v4842 = vsel %vm1799, %v4814, %v1293
      %v4843 = vsel %vm1799, %v4816, %v1297
      %v4844 = vsel %vm1799, %v4818, %v1301
      %v4845 = vsel %vm1799, %v4820, %v1305
      %v4846 = vsel %vm1799, %v4822, %v1309
      %v4847 = vsel %vm1799, %v4824, %v1313
      %v4848 = vsel %vm1799, %v4826, %v1317
      %v4849 = vsel %vm1799, %v4828, %v1321
      %v4850 = vsel %vm1799, %v4830, %v1325
      %v4851 = vsel %vm1799, %v4832, %v3091
      %v4852 = vsel %vm1799, %v4834, %v3095
      %v4854 = vsel %vm1799, %v4836, %v4535
      %v4856 = vsel %vm1799, %v4838, %v4537
      %v4858 = vsel %vm1864, %v4839, %v4600
      %v4860 = vsel %vm1864, %v4840, %v4602
      %v4862 = vsel %vm1864, %v4841, %v4604
      %v4864 = vsel %vm1864, %v4842, %v4606
      %v4866 = vsel %vm1864, %v4843, %v4608
      %v4868 = vsel %vm1864, %v4844, %v4610
      %v4870 = vsel %vm1864, %v4845, %v4612
      %v4872 = vsel %vm1864, %v4846, %v4614
      %v4874 = vsel %vm1864, %v4847, %v4616
      %v4876 = vsel %vm1864, %v4848, %v4618
      %v4878 = vsel %vm1864, %v4849, %v4620
      %v4880 = vsel %vm1864, %v4850, %v4622
      %v4882 = vsel %vm1864, %v4851, %v4624
      %v4884 = vsel %vm1864, %v4852, %v4626
      %v4886 = vsel %vm1864, %v4854, %v4628
      %v4888 = vsel %vm1864, %v4856, %v4630
      %v4890 = vsel %vm1929, %v4858, %v4664
      %v4892 = vsel %vm1929, %v4860, %v4666
      %v4894 = vsel %vm1929, %v4862, %v4668
      %v4896 = vsel %vm1929, %v4864, %v4670
      %v4898 = vsel %vm1929, %v4866, %v4672
      %v4900 = vsel %vm1929, %v4868, %v4674
      %v4902 = vsel %vm1929, %v4870, %v4676
      %v4904 = vsel %vm1929, %v4872, %v4678
      %v4906 = vsel %vm1929, %v4874, %v4680
      %v4908 = vsel %vm1929, %v4876, %v4682
      %v4910 = vsel %vm1929, %v4878, %v4684
      %v4912 = vsel %vm1929, %v4880, %v4686
      %v4914 = vsel %vm1929, %v4882, %v4688
      %v4916 = vsel %vm1929, %v4884, %v4690
      %v4918 = vsel %vm1929, %v4886, %v4692
      %v4920 = vsel %vm1929, %v4888, %v4694
      %s4921 = scalar_lea.vmem %s3, 72
      %v4922 = vld [vmem:[%s4921] sm:$0xf]
      %v4923 = vld [vmem:[%s4921 + $0x4] sm:$0xf]
      %v4924 = vld [vmem:[%s4921 + $0x8] sm:$0xf]
      %v4925 = vld [vmem:[%s4921 + $0xc] sm:$0xf]
      %v4926 = vld [vmem:[%s4921 + $0x10] sm:$0xf]
      %v4927 = vld [vmem:[%s4921 + $0x14] sm:$0xf]
      %v4928 = vld [vmem:[%s4921 + $0x18] sm:$0xf]
      %v4929 = vld [vmem:[%s4921 + $0x1c] sm:$0xf]
      %v4930 = vld [vmem:[%s4921 + $0x20] sm:$0xf]
      %s4931 = scalar_lea.vmem %s4, 2
      %v4932 = vld [vmem:[%s4931] sm:$0x1]
      %v4934 = vlaneseq
      %v4935 = vshrl.u32 %v4934, 7
      %v4936 = vsub.s32 0, %v4935
      %v4937 = vrot.slane %v4932, %v4936
      %v4948 = vunpack.c.l.b16 %v4922
      %v4949 = vunpack.c.l.b16 %v4923
      %v4950 = vunpack.c.l.b16 %v4924
      %v4951 = vunpack.c.l.b16 %v4925
      %v4952 = vunpack.c.l.b16 %v4926
      %v4953 = vunpack.c.l.b16 %v4927
      %v4954 = vunpack.c.l.b16 %v4928
      %v4955 = vunpack.c.l.b16 %v4929
      %v4956 = vunpack.c.l.b16 %v4930
      %v4957 = vpack.c.b16 %v4949, %v4948
      %v4958 = vpack.c.b16 %v4951, %v4950
      %v4959 = vpack.c.b16 %v4953, %v4952
      %v4960 = vpack.c.b16 %v4955, %v4954
      %v4961 = vpack.c.b16 %v4956, %v4956
      %v4966 = vsel %vm2118, %v4890, 0
      %v4968 = vsel %vm2118, %v4892, 0
      %v4970 = vsel %vm2118, %v4894, 0
      %v4972 = vsel %vm2118, %v4896, 0
      %v4974 = vsel %vm2118, %v4898, 0
      %v4976 = vsel %vm2118, %v4900, 0
      %v4978 = vsel %vm2118, %v4902, 0
      %v4980 = vsel %vm2118, %v4904, 0
      %v4982 = vsel %vm2118, %v4906, 0
      %v4984 = vsel %vm2118, %v4908, 0
      %v4986 = vsel %vm2118, %v4910, 0
      %v4988 = vsel %vm2118, %v4912, 0
      %v4990 = vsel %vm2118, %v4914, 0
      %v4992 = vsel %vm2118, %v4916, 0
      %v4994 = vsel %vm2118, %v4918, 0
      %v4996 = vsel %vm2118, %v4920, 0
      %v4999 = vsel %vm2167, %v4961, 0
      %5001 = vmatprep.subr.bf16.mxu0 0
      %5002 = vmatpush1.bf16.msra.mxu0 %v4957
      %5003 = vmatprep.subr.bf16.mxu0 0
      %5004 = vmatpush1.bf16.msra.mxu0 %v4958
      %5005 = vmatprep.subr.bf16.mxu0 0
      %5006 = vmatpush1.bf16.msra.mxu0 %v4959
      %5007 = vmatprep.subr.bf16.mxu0 0
      %5008 = vmatpush1.bf16.msra.mxu0 %v4960
      %5009 = vmatprep.subr.bf16.mxu0 0
      %5010 = vmatpush1.bf16.msra.mxu0 %v4999
      %5011 = vmatprep.subr.bf16.mxu0 0
      %5012 = vmatpush1.bf16.msra.mxu0 0
      %5013 = vmatprep.subr.bf16.mxu0 0
      %5014 = vmatpush1.bf16.msra.mxu0 0
      %5015 = vmatprep.subr.bf16.mxu0 0
      %5016 = vmatpush1.bf16.msra.mxu0 0
      %5017 = vmatprep.subr.bf16.mxu0 0
      %5018 = vmatpush1.bf16.msra.mxu0 0
      %5019 = vmatprep.subr.bf16.mxu0 0
      %5020 = vmatpush1.bf16.msra.mxu0 0
      %5021 = vmatprep.subr.bf16.mxu0 0
      %5022 = vmatpush1.bf16.msra.mxu0 0
      %5023 = vmatprep.subr.bf16.mxu0 0
      %5024 = vmatpush1.bf16.msra.mxu0 0
      %5025 = vmatprep.subr.bf16.mxu0 0
      %5026 = vmatpush1.bf16.msra.mxu0 0
      %5027 = vmatprep.subr.bf16.mxu0 0
      %5028 = vmatpush1.bf16.msra.mxu0 0
      %5029 = vmatprep.subr.bf16.mxu0 0
      %5030 = vmatpush1.bf16.msra.mxu0 0
      %5031 = vmatprep.subr.bf16.mxu0 0
      %5032 = vmatpush1.bf16.msra.mxu0 0
      %5033 = vmatprep.mubr.bf16.mxu0 0
      %5034 = vmatmul.mubr.bf16.gmra.mrb[0].mxu0 %v4966
      %v5035 = vpop.f32.mrb[0].mxu0
      %v5036 = vadd.f32 %v4937, %v5035
      %v5037 = vpop.f32.mrb[0].mxu0
      %v5038 = vpop.f32.mrb[0].mxu0
      %v5039 = vadd.f32 %v4937, %v5038
      %v5040 = vpop.f32.mrb[0].mxu0
      %5041 = vmatprep.mubr.bf16.mxu0 0
      %5042 = vmatmul.mubr.bf16.gmra.mrb[0].mxu0 %v4968
      %v5043 = vpop.f32.mrb[0].mxu0
      %v5044 = vadd.f32 %v4937, %v5043
      %v5045 = vpop.f32.mrb[0].mxu0
      %v5046 = vpop.f32.mrb[0].mxu0
      %v5047 = vadd.f32 %v4937, %v5046
      %v5048 = vpop.f32.mrb[0].mxu0
      %5049 = vmatprep.mubr.bf16.mxu0 0
      %5050 = vmatmul.mubr.bf16.gmra.mrb[0].mxu0 %v4970
      %v5051 = vpop.f32.mrb[0].mxu0
      %v5052 = vadd.f32 %v4937, %v5051
      %v5053 = vpop.f32.mrb[0].mxu0
      %v5054 = vpop.f32.mrb[0].mxu0
      %v5055 = vadd.f32 %v4937, %v5054
      %v5056 = vpop.f32.mrb[0].mxu0
      %5057 = vmatprep.mubr.bf16.mxu0 0
      %5058 = vmatmul.mubr.bf16.gmra.mrb[0].mxu0 %v4972
      %v5059 = vpop.f32.mrb[0].mxu0
      %v5060 = vadd.f32 %v4937, %v5059
      %v5061 = vpop.f32.mrb[0].mxu0
      %v5062 = vpop.f32.mrb[0].mxu0
      %v5063 = vadd.f32 %v4937, %v5062
      %v5064 = vpop.f32.mrb[0].mxu0
      %5065 = vmatprep.mubr.bf16.mxu0 0
      %5066 = vmatmul.mubr.bf16.gmra.mrb[0].mxu0 %v4974
      %v5067 = vpop.f32.mrb[0].mxu0
      %v5068 = vadd.f32 %v4937, %v5067
      %v5069 = vpop.f32.mrb[0].mxu0
      %v5070 = vpop.f32.mrb[0].mxu0
      %v5071 = vadd.f32 %v4937, %v5070
      %v5072 = vpop.f32.mrb[0].mxu0
      %5073 = vmatprep.mubr.bf16.mxu0 0
      %5074 = vmatmul.mubr.bf16.gmra.mrb[0].mxu0 %v4976
      %v5075 = vpop.f32.mrb[0].mxu0
      %v5076 = vadd.f32 %v4937, %v5075
      %v5077 = vpop.f32.mrb[0].mxu0
      %v5078 = vpop.f32.mrb[0].mxu0
      %v5079 = vadd.f32 %v4937, %v5078
      %v5080 = vpop.f32.mrb[0].mxu0
      %5081 = vmatprep.mubr.bf16.mxu0 0
      %5082 = vmatmul.mubr.bf16.gmra.mrb[0].mxu0 %v4978
      %v5083 = vpop.f32.mrb[0].mxu0
      %v5084 = vadd.f32 %v4937, %v5083
      %v5085 = vpop.f32.mrb[0].mxu0
      %v5086 = vpop.f32.mrb[0].mxu0
      %v5087 = vadd.f32 %v4937, %v5086
      %v5088 = vpop.f32.mrb[0].mxu0
      %5089 = vmatprep.mubr.bf16.mxu0 0
      %5090 = vmatmul.mubr.bf16.gmra.mrb[0].mxu0 %v4980
      %v5091 = vpop.f32.mrb[0].mxu0
      %v5092 = vadd.f32 %v4937, %v5091
      %v5093 = vpop.f32.mrb[0].mxu0
      %v5094 = vpop.f32.mrb[0].mxu0
      %v5095 = vadd.f32 %v4937, %v5094
      %v5096 = vpop.f32.mrb[0].mxu0
      %5097 = vmatprep.mubr.bf16.mxu0 0
      %5098 = vmatmul.mubr.bf16.gmra.mrb[0].mxu0 %v4982
      %v5099 = vpop.f32.mrb[0].mxu0
      %v5100 = vadd.f32 %v4937, %v5099
      %v5101 = vpop.f32.mrb[0].mxu0
      %v5102 = vpop.f32.mrb[0].mxu0
      %v5103 = vadd.f32 %v4937, %v5102
      %v5104 = vpop.f32.mrb[0].mxu0
      %5105 = vmatprep.mubr.bf16.mxu0 0
      %5106 = vmatmul.mubr.bf16.gmra.mrb[0].mxu0 %v4984
      %v5107 = vpop.f32.mrb[0].mxu0
      %v5108 = vadd.f32 %v4937, %v5107
      %v5109 = vpop.f32.mrb[0].mxu0
      %v5110 = vpop.f32.mrb[0].mxu0
      %v5111 = vadd.f32 %v4937, %v5110
      %v5112 = vpop.f32.mrb[0].mxu0
      %5113 = vmatprep.mubr.bf16.mxu0 0
      %5114 = vmatmul.mubr.bf16.gmra.mrb[0].mxu0 %v4986
      %v5115 = vpop.f32.mrb[0].mxu0
      %v5116 = vadd.f32 %v4937, %v5115
      %v5117 = vpop.f32.mrb[0].mxu0
      %v5118 = vpop.f32.mrb[0].mxu0
      %v5119 = vadd.f32 %v4937, %v5118
      %v5120 = vpop.f32.mrb[0].mxu0
      %5121 = vmatprep.mubr.bf16.mxu0 0
      %5122 = vmatmul.mubr.bf16.gmra.mrb[0].mxu0 %v4988
      %v5123 = vpop.f32.mrb[0].mxu0
      %v5124 = vadd.f32 %v4937, %v5123
      %v5125 = vpop.f32.mrb[0].mxu0
      %v5126 = vpop.f32.mrb[0].mxu0
      %v5127 = vadd.f32 %v4937, %v5126
      %v5128 = vpop.f32.mrb[0].mxu0
      %5129 = vmatprep.mubr.bf16.mxu0 0
      %5130 = vmatmul.mubr.bf16.gmra.mrb[0].mxu0 %v4990
      %v5131 = vpop.f32.mrb[0].mxu0
      %v5132 = vadd.f32 %v4937, %v5131
      %v5133 = vpop.f32.mrb[0].mxu0
      %v5134 = vpop.f32.mrb[0].mxu0
      %v5135 = vadd.f32 %v4937, %v5134
      %v5136 = vpop.f32.mrb[0].mxu0
      %5137 = vmatprep.mubr.bf16.mxu0 0
      %5138 = vmatmul.mubr.bf16.gmra.mrb[0].mxu0 %v4992
      %v5139 = vpop.f32.mrb[0].mxu0
      %v5140 = vadd.f32 %v4937, %v5139
      %v5141 = vpop.f32.mrb[0].mxu0
      %v5142 = vpop.f32.mrb[0].mxu0
      %v5143 = vadd.f32 %v4937, %v5142
      %v5144 = vpop.f32.mrb[0].mxu0
      %5145 = vmatprep.mubr.bf16.mxu0 0
      %5146 = vmatmul.mubr.bf16.gmra.mrb[0].mxu0 %v4994
      %v5147 = vpop.f32.mrb[0].mxu0
      %v5148 = vadd.f32 %v4937, %v5147
      %v5149 = vpop.f32.mrb[0].mxu0
      %v5150 = vpop.f32.mrb[0].mxu0
      %v5151 = vadd.f32 %v4937, %v5150
      %v5152 = vpop.f32.mrb[0].mxu0
      %5153 = vmatprep.mubr.bf16.mxu0 0
      %5154 = vmatmul.mubr.bf16.gmra.mrb[0].mxu0 %v4996
      %v5155 = vpop.f32.mrb[0].mxu0
      %v5156 = vadd.f32 %v4937, %v5155
      %v5157 = vpop.f32.mrb[0].mxu0
      %v5158 = vpop.f32.mrb[0].mxu0
      %v5159 = vadd.f32 %v4937, %v5158
      %v5160 = vpop.f32.mrb[0].mxu0
      %5161 = vdwg.mxu0
      %v5162 = vmax.f32 %v5036, 0.0
      %v5163 = vmax.f32 %v5039, 0.0
      %v5164 = vmax.f32 %v5044, 0.0
      %v5165 = vmax.f32 %v5047, 0.0
      %v5166 = vmax.f32 %v5052, 0.0
      %v5167 = vmax.f32 %v5055, 0.0
      %v5168 = vmax.f32 %v5060, 0.0
      %v5169 = vmax.f32 %v5063, 0.0
      %v5170 = vmax.f32 %v5068, 0.0
      %v5171 = vmax.f32 %v5071, 0.0
      %v5172 = vmax.f32 %v5076, 0.0
      %v5173 = vmax.f32 %v5079, 0.0
      %v5174 = vmax.f32 %v5084, 0.0
      %v5175 = vmax.f32 %v5087, 0.0
      %v5176 = vmax.f32 %v5092, 0.0
      %v5177 = vmax.f32 %v5095, 0.0
      %v5178 = vmax.f32 %v5100, 0.0
      %v5179 = vmax.f32 %v5103, 0.0
      %v5180 = vmax.f32 %v5108, 0.0
      %v5181 = vmax.f32 %v5111, 0.0
      %v5182 = vmax.f32 %v5116, 0.0
      %v5183 = vmax.f32 %v5119, 0.0
      %v5184 = vmax.f32 %v5124, 0.0
      %v5185 = vmax.f32 %v5127, 0.0
      %v5186 = vmax.f32 %v5132, 0.0
      %v5187 = vmax.f32 %v5135, 0.0
      %v5188 = vmax.f32 %v5140, 0.0
      %v5189 = vmax.f32 %v5143, 0.0
      %v5190 = vmax.f32 %v5148, 0.0
      %v5191 = vmax.f32 %v5151, 0.0
      %v5192 = vmax.f32 %v5156, 0.0
      %v5193 = vmax.f32 %v5159, 0.0
      %v5194 = vsel %vm1474, %v5162, 0.0
      %v5195 = vsel %vm1474, %v5163, 0.0
      %v5196 = vadd.f32 %v5194, %v5195
      %v5197 = vsel %vm1474, %v5164, 0.0
      %v5198 = vadd.f32 %v5196, %v5197
      %v5199 = vsel %vm1474, %v5165, 0.0
      %v5200 = vadd.f32 %v5198, %v5199
      %v5201 = vsel %vm1474, %v5166, 0.0
      %v5202 = vadd.f32 %v5200, %v5201
      %v5203 = vsel %vm1474, %v5167, 0.0
      %v5204 = vadd.f32 %v5202, %v5203
      %v5205 = vsel %vm1474, %v5168, 0.0
      %v5206 = vadd.f32 %v5204, %v5205
      %v5207 = vsel %vm1474, %v5169, 0.0
      %v5208 = vadd.f32 %v5206, %v5207
      %v5209 = vsel %vm1474, %v5170, 0.0
      %v5210 = vadd.f32 %v5208, %v5209
      %v5211 = vsel %vm1474, %v5171, 0.0
      %v5212 = vadd.f32 %v5210, %v5211
      %v5213 = vsel %vm1474, %v5172, 0.0
      %v5214 = vadd.f32 %v5212, %v5213
      %v5215 = vsel %vm1474, %v5173, 0.0
      %v5216 = vadd.f32 %v5214, %v5215
      %v5217 = vsel %vm1474, %v5174, 0.0
      %v5218 = vadd.f32 %v5216, %v5217
      %v5219 = vsel %vm1474, %v5175, 0.0
      %v5220 = vadd.f32 %v5218, %v5219
      %v5221 = vsel %vm1474, %v5176, 0.0
      %v5222 = vadd.f32 %v5220, %v5221
      %v5223 = vsel %vm1474, %v5177, 0.0
      %v5224 = vadd.f32 %v5222, %v5223
      %v5225 = vsel %vm1474, %v5178, 0.0
      %v5226 = vadd.f32 %v5224, %v5225
      %v5227 = vsel %vm1474, %v5179, 0.0
      %v5228 = vadd.f32 %v5226, %v5227
      %v5229 = vsel %vm1474, %v5180, 0.0
      %v5230 = vadd.f32 %v5228, %v5229
      %v5231 = vsel %vm1474, %v5181, 0.0
      %v5232 = vadd.f32 %v5230, %v5231
      %v5233 = vsel %vm1474, %v5182, 0.0
      %v5234 = vadd.f32 %v5232, %v5233
      %v5235 = vsel %vm1474, %v5183, 0.0
      %v5236 = vadd.f32 %v5234, %v5235
      %v5237 = vsel %vm1474, %v5184, 0.0
      %v5238 = vadd.f32 %v5236, %v5237
      %v5239 = vsel %vm1474, %v5185, 0.0
      %v5240 = vadd.f32 %v5238, %v5239
      %v5241 = vsel %vm1474, %v5186, 0.0
      %v5242 = vadd.f32 %v5240, %v5241
      %v5243 = vsel %vm1474, %v5187, 0.0
      %v5244 = vadd.f32 %v5242, %v5243
      %v5245 = vsel %vm1474, %v5188, 0.0
      %v5246 = vadd.f32 %v5244, %v5245
      %v5247 = vsel %vm1474, %v5189, 0.0
      %v5248 = vadd.f32 %v5246, %v5247
      %v5249 = vsel %vm1474, %v5190, 0.0
      %v5250 = vadd.f32 %v5248, %v5249
      %v5251 = vsel %vm1474, %v5191, 0.0
      %v5252 = vadd.f32 %v5250, %v5251
      %v5253 = vsel %vm1474, %v5192, 0.0
      %v5254 = vadd.f32 %v5252, %v5253
      %v5255 = vsel %vm1474, %v5193, 0.0
      %v5256 = vadd.f32 %v5254, %v5255
      %v5257 = vrot.slane %v5256, 4
      %v5258 = vadd.f32 %v5256, %v5257
      %v5259 = vrot.slane %v5258, 2
      %v5260 = vadd.f32 %v5258, %v5259
      %v5261 = vrot.slane %v5260, 1
      %v5262 = vadd.f32 %v5260, %v5261
      %v5263 = vmul.f32 %v5262, %v2672
      %5265 = vrot.lane.b32.xlu0 %v4083, 4
      %v5266 = vpop.permute.xlu0 %5265
      %5269 = vrot.lane.b32.xlu0 %v5263, 8
      %v5270 = vpop.permute.xlu0 %5269
      %vm5272 = vcmask 31744
      %v5273 = vsel %vm5272, %v2673, %v5266
      %v5274 = vsel %vm1474, %v5273, %v5270
      %5276 = vrot.lane.b32.xlu0 %v2673, 124
      %v5277 = vpop.permute.xlu0 %5276
      %5279 = vrot.lane.b32.xlu0 %v5263, 4
      %v5280 = vpop.permute.xlu0 %5279
      %v5282 = vsel %vm5272, %v5277, %v4083
      %v5283 = vsel %vm1474, %v5282, %v5280
      %v5284 = vpack.c.bf16 %v5274, %v5274
      %v5285 = vld [vmem:[%s5] sm:$0xf]
      %v5286 = vld [vmem:[%s5 + $0x4] sm:$0x3]
      %v5287 = vld [vmem:[%s6] sm:$0x1]
      %v5290 = vunpack.c.l.b16 %v5285
      %v5291 = vunpack.c.l.b16 %v5286
      %v5292 = vpack.c.b16 %v5291, %v5290
      %vm5293 = vcmask 97280
      %v5295 = vsel %vm5293, %v5284, 0
      %vm5297 = vcmask 1045504
      %v5299 = vsel %vm5297, %v5292, 0
      %5301 = vmatprep.subr.bf16.mxu0 0
      %5302 = vmatpush1.bf16.msra.mxu0 %v5299
      %5303 = vmatprep.subr.bf16.mxu0 0
      %5304 = vmatpush1.bf16.msra.mxu0 0
      %5305 = vmatprep.subr.bf16.mxu0 0
      %5306 = vmatpush1.bf16.msra.mxu0 0
      %5307 = vmatprep.subr.bf16.mxu0 0
      %5308 = vmatpush1.bf16.msra.mxu0 0
      %5309 = vmatprep.subr.bf16.mxu0 0
      %5310 = vmatpush1.bf16.msra.mxu0 0
      %5311 = vmatprep.subr.bf16.mxu0 0
      %5312 = vmatpush1.bf16.msra.mxu0 0
      %5313 = vmatprep.subr.bf16.mxu0 0
      %5314 = vmatpush1.bf16.msra.mxu0 0
      %5315 = vmatprep.subr.bf16.mxu0 0
      %5316 = vmatpush1.bf16.msra.mxu0 0
      %5317 = vmatprep.subr.bf16.mxu0 0
      %5318 = vmatpush1.bf16.msra.mxu0 0
      %5319 = vmatprep.subr.bf16.mxu0 0
      %5320 = vmatpush1.bf16.msra.mxu0 0
      %5321 = vmatprep.subr.bf16.mxu0 0
      %5322 = vmatpush1.bf16.msra.mxu0 0
      %5323 = vmatprep.subr.bf16.mxu0 0
      %5324 = vmatpush1.bf16.msra.mxu0 0
      %5325 = vmatprep.subr.bf16.mxu0 0
      %5326 = vmatpush1.bf16.msra.mxu0 0
      %5327 = vmatprep.subr.bf16.mxu0 0
      %5328 = vmatpush1.bf16.msra.mxu0 0
      %5329 = vmatprep.subr.bf16.mxu0 0
      %5330 = vmatpush1.bf16.msra.mxu0 0
      %5331 = vmatprep.subr.bf16.mxu0 0
      %5332 = vmatpush1.bf16.msra.mxu0 0
      %5333 = vmatprep.mubr.bf16.mxu0 0
      %5334 = vmatmul.mubr.bf16.gmra.mrb[0].mxu0 %v5295
      %v5335 = vpop.f32.mrb[0].mxu0
      %v5336 = vadd.f32 %v5287, %v5335
      %v5337 = vpop.f32.mrb[0].mxu0
      %v5338 = vpop.f32.mrb[0].mxu0
      %v5339 = vpop.f32.mrb[0].mxu0
      %5340 = vdwg.mxu0
      %v5341 = vmax.f32 %v5336, 0.0
      %v5342 = vpack.c.bf16 %v5283, %v5283
      %v5343 = vld [vmem:[%s7] sm:$0xf]
      %v5344 = vld [vmem:[%s7 + $0x4] sm:$0x3]
      %v5345 = vld [vmem:[%s8] sm:$0x1]
      %v5348 = vunpack.c.l.b16 %v5343
      %v5349 = vunpack.c.l.b16 %v5344
      %v5350 = vpack.c.b16 %v5349, %v5348
      %v5352 = vsel %vm5293, %v5342, 0
      %v5355 = vsel %vm5297, %v5350, 0
      %5357 = vmatprep.subr.bf16.mxu0 0
      %5358 = vmatpush1.bf16.msra.mxu0 %v5355
      %5359 = vmatprep.subr.bf16.mxu0 0
      %5360 = vmatpush1.bf16.msra.mxu0 0
      %5361 = vmatprep.subr.bf16.mxu0 0
      %5362 = vmatpush1.bf16.msra.mxu0 0
      %5363 = vmatprep.subr.bf16.mxu0 0
      %5364 = vmatpush1.bf16.msra.mxu0 0
      %5365 = vmatprep.subr.bf16.mxu0 0
      %5366 = vmatpush1.bf16.msra.mxu0 0
      %5367 = vmatprep.subr.bf16.mxu0 0
      %5368 = vmatpush1.bf16.msra.mxu0 0
      %5369 = vmatprep.subr.bf16.mxu0 0
      %5370 = vmatpush1.bf16.msra.mxu0 0
      %5371 = vmatprep.subr.bf16.mxu0 0
      %5372 = vmatpush1.bf16.msra.mxu0 0
      %5373 = vmatprep.subr.bf16.mxu0 0
      %5374 = vmatpush1.bf16.msra.mxu0 0
      %5375 = vmatprep.subr.bf16.mxu0 0
      %5376 = vmatpush1.bf16.msra.mxu0 0
      %5377 = vmatprep.subr.bf16.mxu0 0
      %5378 = vmatpush1.bf16.msra.mxu0 0
      %5379 = vmatprep.subr.bf16.mxu0 0
      %5380 = vmatpush1.bf16.msra.mxu0 0
      %5381 = vmatprep.subr.bf16.mxu0 0
      %5382 = vmatpush1.bf16.msra.mxu0 0
      %5383 = vmatprep.subr.bf16.mxu0 0
      %5384 = vmatpush1.bf16.msra.mxu0 0
      %5385 = vmatprep.subr.bf16.mxu0 0
      %5386 = vmatpush1.bf16.msra.mxu0 0
      %5387 = vmatprep.subr.bf16.mxu0 0
      %5388 = vmatpush1.bf16.msra.mxu0 0
      %5389 = vmatprep.mubr.bf16.mxu0 0
      %5390 = vmatmul.mubr.bf16.gmra.mrb[0].mxu0 %v5352
      %v5391 = vpop.f32.mrb[0].mxu0
      %v5392 = vadd.f32 %v5345, %v5391
      %v5393 = vpop.f32.mrb[0].mxu0
      %v5394 = vpop.f32.mrb[0].mxu0
      %v5395 = vpop.f32.mrb[0].mxu0
      %5396 = vdwg.mxu0
      %v5397 = vmax.f32 %v5392, 0.0
      %v5398 = vpack.c.bf16 %v5397, %v5397
      %v5399 = vld [vmem:[%s9] sm:$0x3]
      %v5401 = vsel %vm5272, %v5398, 0
      %vm5403 = vcmask 1041408
      %v5405 = vsel %vm5403, %v5399, 0
      %5407 = vmatprep.subr.bf16.mxu0 0
      %5408 = vmatpush1.bf16.msra.mxu0 %v5405
      %5409 = vmatprep.subr.bf16.mxu0 0
      %5410 = vmatpush1.bf16.msra.mxu0 0
      %5411 = vmatprep.subr.bf16.mxu0 0
      %5412 = vmatpush1.bf16.msra.mxu0 0
      %5413 = vmatprep.subr.bf16.mxu0 0
      %5414 = vmatpush1.bf16.msra.mxu0 0
      %5415 = vmatprep.subr.bf16.mxu0 0
      %5416 = vmatpush1.bf16.msra.mxu0 0
      %5417 = vmatprep.subr.bf16.mxu0 0
      %5418 = vmatpush1.bf16.msra.mxu0 0
      %5419 = vmatprep.subr.bf16.mxu0 0
      %5420 = vmatpush1.bf16.msra.mxu0 0
      %5421 = vmatprep.subr.bf16.mxu0 0
      %5422 = vmatpush1.bf16.msra.mxu0 0
      %5423 = vmatprep.subr.bf16.mxu0 0
      %5424 = vmatpush1.bf16.msra.mxu0 0
      %5425 = vmatprep.subr.bf16.mxu0 0
      %5426 = vmatpush1.bf16.msra.mxu0 0
      %5427 = vmatprep.subr.bf16.mxu0 0
      %5428 = vmatpush1.bf16.msra.mxu0 0
      %5429 = vmatprep.subr.bf16.mxu0 0
      %5430 = vmatpush1.bf16.msra.mxu0 0
      %5431 = vmatprep.subr.bf16.mxu0 0
      %5432 = vmatpush1.bf16.msra.mxu0 0
      %5433 = vmatprep.subr.bf16.mxu0 0
      %5434 = vmatpush1.bf16.msra.mxu0 0
      %5435 = vmatprep.subr.bf16.mxu0 0
      %5436 = vmatpush1.bf16.msra.mxu0 0
      %5437 = vmatprep.subr.bf16.mxu0 0
      %5438 = vmatpush1.bf16.msra.mxu0 0
      %5439 = vmatprep.mubr.bf16.mxu0 0
      %5440 = vmatmul.mubr.bf16.gmra.mrb[0].mxu0 %v5401
      %v5441 = vpop.f32.mrb[0].mxu0
      %v5442 = vadd.f32 0.0, %v5441
      %v5443 = vpop.f32.mrb[0].mxu0
      %v5444 = vpop.f32.mrb[0].mxu0
      %v5445 = vpop.f32.mrb[0].mxu0
      %5446 = vdwg.mxu0
      %v5447 = vlaneseq
      %v5448 = vshrl.u32 %v5447, 7
      %v5449 = vsub.s32 0, %v5448
      %v5450 = vrot.slane %v5341, %v5449
      %v5451 = vmul.f32 %v2332, %v5450
      %v5452 = vmul.f32 %v2333, %v5450
      %v5453 = vmul.f32 %v2334, %v5450
      %v5454 = vmul.f32 %v2335, %v5450
      %v5455 = vmul.f32 %v2336, %v5450
      %v5456 = vmul.f32 %v2337, %v5450
      %v5457 = vmul.f32 %v2338, %v5450
      %v5458 = vmul.f32 %v2339, %v5450
      %v5459 = vmul.f32 %v2340, %v5450
      %v5460 = vmul.f32 %v2341, %v5450
      %v5461 = vmul.f32 %v2342, %v5450
      %v5462 = vmul.f32 %v2343, %v5450
      %v5463 = vmul.f32 %v2344, %v5450
      %v5464 = vmul.f32 %v2345, %v5450
      %v5465 = vmul.f32 %v2346, %v5450
      %v5466 = vmul.f32 %v2347, %v5450
      %v5467 = vmul.f32 %v2348, %v5450
      %v5468 = vmul.f32 %v2349, %v5450
      %v5469 = vmul.f32 %v2350, %v5450
      %v5470 = vmul.f32 %v2351, %v5450
      %v5471 = vmul.f32 %v2352, %v5450
      %v5472 = vmul.f32 %v2353, %v5450
      %v5473 = vmul.f32 %v2354, %v5450
      %v5474 = vmul.f32 %v2355, %v5450
      %v5475 = vmul.f32 %v2356, %v5450
      %v5476 = vmul.f32 %v2357, %v5450
      %v5477 = vmul.f32 %v2358, %v5450
      %v5478 = vmul.f32 %v2359, %v5450
      %v5479 = vmul.f32 %v2360, %v5450
      %v5480 = vmul.f32 %v2361, %v5450
      %v5481 = vmul.f32 %v2362, %v5450
      %v5482 = vmul.f32 %v2363, %v5450
      %v5483 = vsel %vm5272, %v5451, 0.0
      %5484 = vadd.xlane.f32.xlu0 %v5483
      %v5485 = vpop.xlane.xlu0 %5484
      %v5486 = vsel %vm5272, %v5452, 0.0
      %5487 = vadd.xlane.f32.xlu0 %v5486
      %v5488 = vpop.xlane.xlu0 %5487
      %v5489 = vsel %vm5272, %v5453, 0.0
      %5490 = vadd.xlane.f32.xlu0 %v5489
      %v5491 = vpop.xlane.xlu0 %5490
      %v5492 = vsel %vm5272, %v5454, 0.0
      %5493 = vadd.xlane.f32.xlu0 %v5492
      %v5494 = vpop.xlane.xlu0 %5493
      %v5495 = vsel %vm5272, %v5455, 0.0
      %5496 = vadd.xlane.f32.xlu0 %v5495
      %v5497 = vpop.xlane.xlu0 %5496
      %v5498 = vsel %vm5272, %v5456, 0.0
      %5499 = vadd.xlane.f32.xlu0 %v5498
      %v5500 = vpop.xlane.xlu0 %5499
      %v5501 = vsel %vm5272, %v5457, 0.0
      %5502 = vadd.xlane.f32.xlu0 %v5501
      %v5503 = vpop.xlane.xlu0 %5502
      %v5504 = vsel %vm5272, %v5458, 0.0
      %5505 = vadd.xlane.f32.xlu0 %v5504
      %v5506 = vpop.xlane.xlu0 %5505
      %v5507 = vsel %vm5272, %v5459, 0.0
      %5508 = vadd.xlane.f32.xlu0 %v5507
      %v5509 = vpop.xlane.xlu0 %5508
      %v5510 = vsel %vm5272, %v5460, 0.0
      %5511 = vadd.xlane.f32.xlu0 %v5510
      %v5512 = vpop.xlane.xlu0 %5511
      %v5513 = vsel %vm5272, %v5461, 0.0
      %5514 = vadd.xlane.f32.xlu0 %v5513
      %v5515 = vpop.xlane.xlu0 %5514
      %v5516 = vsel %vm5272, %v5462, 0.0
      %5517 = vadd.xlane.f32.xlu0 %v5516
      %v5518 = vpop.xlane.xlu0 %5517
      %v5519 = vsel %vm5272, %v5463, 0.0
      %5520 = vadd.xlane.f32.xlu0 %v5519
      %v5521 = vpop.xlane.xlu0 %5520
      %v5522 = vsel %vm5272, %v5464, 0.0
      %5523 = vadd.xlane.f32.xlu0 %v5522
      %v5524 = vpop.xlane.xlu0 %5523
      %v5525 = vsel %vm5272, %v5465, 0.0
      %5526 = vadd.xlane.f32.xlu0 %v5525
      %v5527 = vpop.xlane.xlu0 %5526
      %v5528 = vsel %vm5272, %v5466, 0.0
      %5529 = vadd.xlane.f32.xlu0 %v5528
      %v5530 = vpop.xlane.xlu0 %5529
      %v5531 = vsel %vm5272, %v5467, 0.0
      %5532 = vadd.xlane.f32.xlu0 %v5531
      %v5533 = vpop.xlane.xlu0 %5532
      %v5534 = vsel %vm5272, %v5468, 0.0
      %5535 = vadd.xlane.f32.xlu0 %v5534
      %v5536 = vpop.xlane.xlu0 %5535
      %v5537 = vsel %vm5272, %v5469, 0.0
      %5538 = vadd.xlane.f32.xlu0 %v5537
      %v5539 = vpop.xlane.xlu0 %5538
      %v5540 = vsel %vm5272, %v5470, 0.0
      %5541 = vadd.xlane.f32.xlu0 %v5540
      %v5542 = vpop.xlane.xlu0 %5541
      %v5543 = vsel %vm5272, %v5471, 0.0
      %5544 = vadd.xlane.f32.xlu0 %v5543
      %v5545 = vpop.xlane.xlu0 %5544
      %v5546 = vsel %vm5272, %v5472, 0.0
      %5547 = vadd.xlane.f32.xlu0 %v5546
      %v5548 = vpop.xlane.xlu0 %5547
      %v5549 = vsel %vm5272, %v5473, 0.0
      %5550 = vadd.xlane.f32.xlu0 %v5549
      %v5551 = vpop.xlane.xlu0 %5550
      %v5552 = vsel %vm5272, %v5474, 0.0
      %5553 = vadd.xlane.f32.xlu0 %v5552
      %v5554 = vpop.xlane.xlu0 %5553
      %v5555 = vsel %vm5272, %v5475, 0.0
      %5556 = vadd.xlane.f32.xlu0 %v5555
      %v5557 = vpop.xlane.xlu0 %5556
      %v5558 = vsel %vm5272, %v5476, 0.0
      %5559 = vadd.xlane.f32.xlu0 %v5558
      %v5560 = vpop.xlane.xlu0 %5559
      %v5561 = vsel %vm5272, %v5477, 0.0
      %5562 = vadd.xlane.f32.xlu0 %v5561
      %v5563 = vpop.xlane.xlu0 %5562
      %v5564 = vsel %vm5272, %v5478, 0.0
      %5565 = vadd.xlane.f32.xlu0 %v5564
      %v5566 = vpop.xlane.xlu0 %5565
      %v5567 = vsel %vm5272, %v5479, 0.0
      %5568 = vadd.xlane.f32.xlu0 %v5567
      %v5569 = vpop.xlane.xlu0 %5568
      %v5570 = vsel %vm5272, %v5480, 0.0
      %5571 = vadd.xlane.f32.xlu0 %v5570
      %v5572 = vpop.xlane.xlu0 %5571
      %v5573 = vsel %vm5272, %v5481, 0.0
      %5574 = vadd.xlane.f32.xlu0 %v5573
      %v5575 = vpop.xlane.xlu0 %5574
      %v5576 = vsel %vm5272, %v5482, 0.0
      %5577 = vadd.xlane.f32.xlu0 %v5576
      %v5578 = vpop.xlane.xlu0 %5577
      %v5579 = vxor.u32 %v5485, 2147483648
      %v5580 = vxor.u32 %v5488, 2147483648
      %v5581 = vxor.u32 %v5491, 2147483648
      %v5582 = vxor.u32 %v5494, 2147483648
      %v5583 = vxor.u32 %v5497, 2147483648
      %v5584 = vxor.u32 %v5500, 2147483648
      %v5585 = vxor.u32 %v5503, 2147483648
      %v5586 = vxor.u32 %v5506, 2147483648
      %v5587 = vxor.u32 %v5509, 2147483648
      %v5588 = vxor.u32 %v5512, 2147483648
      %v5589 = vxor.u32 %v5515, 2147483648
      %v5590 = vxor.u32 %v5518, 2147483648
      %v5591 = vxor.u32 %v5521, 2147483648
      %v5592 = vxor.u32 %v5524, 2147483648
      %v5593 = vxor.u32 %v5527, 2147483648
      %v5594 = vxor.u32 %v5530, 2147483648
      %v5595 = vxor.u32 %v5533, 2147483648
      %v5596 = vxor.u32 %v5536, 2147483648
      %v5597 = vxor.u32 %v5539, 2147483648
      %v5598 = vxor.u32 %v5542, 2147483648
      %v5599 = vxor.u32 %v5545, 2147483648
      %v5600 = vxor.u32 %v5548, 2147483648
      %v5601 = vxor.u32 %v5551, 2147483648
      %v5602 = vxor.u32 %v5554, 2147483648
      %v5603 = vxor.u32 %v5557, 2147483648
      %v5604 = vxor.u32 %v5560, 2147483648
      %v5605 = vxor.u32 %v5563, 2147483648
      %v5606 = vxor.u32 %v5566, 2147483648
      %v5607 = vxor.u32 %v5569, 2147483648
      %v5608 = vxor.u32 %v5572, 2147483648
      %v5609 = vxor.u32 %v5575, 2147483648
      %v5610 = vxor.u32 %v5578, 2147483648
      %v5611 = vmul.f32 %v5579, 1.442695
      %v5612 = vpow.pop %v5611
      %v5613 = vmul.f32 %v5580, 1.442695
      %v5614 = vpow.pop %v5613
      %v5615 = vmul.f32 %v5581, 1.442695
      %v5616 = vpow.pop %v5615
      %v5617 = vmul.f32 %v5582, 1.442695
      %v5618 = vpow.pop %v5617
      %v5619 = vmul.f32 %v5583, 1.442695
      %v5620 = vpow.pop %v5619
      %v5621 = vmul.f32 %v5584, 1.442695
      %v5622 = vpow.pop %v5621
      %v5623 = vmul.f32 %v5585, 1.442695
      %v5624 = vpow.pop %v5623
      %v5625 = vmul.f32 %v5586, 1.442695
      %v5626 = vpow.pop %v5625
      %v5627 = vmul.f32 %v5587, 1.442695
      %v5628 = vpow.pop %v5627
      %v5629 = vmul.f32 %v5588, 1.442695
      %v5630 = vpow.pop %v5629
      %v5631 = vmul.f32 %v5589, 1.442695
      %v5632 = vpow.pop %v5631
      %v5633 = vmul.f32 %v5590, 1.442695
      %v5634 = vpow.pop %v5633
      %v5635 = vmul.f32 %v5591, 1.442695
      %v5636 = vpow.pop %v5635
      %v5637 = vmul.f32 %v5592, 1.442695
      %v5638 = vpow.pop %v5637
      %v5639 = vmul.f32 %v5593, 1.442695
      %v5640 = vpow.pop %v5639
      %v5641 = vmul.f32 %v5594, 1.442695
      %v5642 = vpow.pop %v5641
      %v5643 = vmul.f32 %v5595, 1.442695
      %v5644 = vpow.pop %v5643
      %v5645 = vmul.f32 %v5596, 1.442695
      %v5646 = vpow.pop %v5645
      %v5647 = vmul.f32 %v5597, 1.442695
      %v5648 = vpow.pop %v5647
      %v5649 = vmul.f32 %v5598, 1.442695
      %v5650 = vpow.pop %v5649
      %v5651 = vmul.f32 %v5599, 1.442695
      %v5652 = vpow.pop %v5651
      %v5653 = vmul.f32 %v5600, 1.442695
      %v5654 = vpow.pop %v5653
      %v5655 = vmul.f32 %v5601, 1.442695
      %v5656 = vpow.pop %v5655
      %v5657 = vmul.f32 %v5602, 1.442695
      %v5658 = vpow.pop %v5657
      %v5659 = vmul.f32 %v5603, 1.442695
      %v5660 = vpow.pop %v5659
      %v5661 = vmul.f32 %v5604, 1.442695
      %v5662 = vpow.pop %v5661
      %v5663 = vmul.f32 %v5605, 1.442695
      %v5664 = vpow.pop %v5663
      %v5665 = vmul.f32 %v5606, 1.442695
      %v5666 = vpow.pop %v5665
      %v5667 = vmul.f32 %v5607, 1.442695
      %v5668 = vpow.pop %v5667
      %v5669 = vmul.f32 %v5608, 1.442695
      %v5670 = vpow.pop %v5669
      %v5671 = vmul.f32 %v5609, 1.442695
      %v5672 = vpow.pop %v5671
      %v5673 = vmul.f32 %v5610, 1.442695
      %v5674 = vpow.pop %v5673
      %v5675 = vadd.f32 %v5612, 1.0
      %v5676 = vadd.f32 %v5614, 1.0
      %v5677 = vadd.f32 %v5616, 1.0
      %v5678 = vadd.f32 %v5618, 1.0
      %v5679 = vadd.f32 %v5620, 1.0
      %v5680 = vadd.f32 %v5622, 1.0
      %v5681 = vadd.f32 %v5624, 1.0
      %v5682 = vadd.f32 %v5626, 1.0
      %v5683 = vadd.f32 %v5628, 1.0
      %v5684 = vadd.f32 %v5630, 1.0
      %v5685 = vadd.f32 %v5632, 1.0
      %v5686 = vadd.f32 %v5634, 1.0
      %v5687 = vadd.f32 %v5636, 1.0
      %v5688 = vadd.f32 %v5638, 1.0
      %v5689 = vadd.f32 %v5640, 1.0
      %v5690 = vadd.f32 %v5642, 1.0
      %v5691 = vadd.f32 %v5644, 1.0
      %v5692 = vadd.f32 %v5646, 1.0
      %v5693 = vadd.f32 %v5648, 1.0
      %v5694 = vadd.f32 %v5650, 1.0
      %v5695 = vadd.f32 %v5652, 1.0
      %v5696 = vadd.f32 %v5654, 1.0
      %v5697 = vadd.f32 %v5656, 1.0
      %v5698 = vadd.f32 %v5658, 1.0
      %v5699 = vadd.f32 %v5660, 1.0
      %v5700 = vadd.f32 %v5662, 1.0
      %v5701 = vadd.f32 %v5664, 1.0
      %v5702 = vadd.f32 %v5666, 1.0
      %v5703 = vadd.f32 %v5668, 1.0
      %v5704 = vadd.f32 %v5670, 1.0
      %v5705 = vadd.f32 %v5672, 1.0
      %v5706 = vadd.f32 %v5674, 1.0
      %v5707 = vrcp.pop %v5675
      %v5708 = vmul.f32 1.0, %v5707
      %v5709 = vrcp.pop %v5676
      %v5710 = vmul.f32 1.0, %v5709
      %v5711 = vrcp.pop %v5677
      %v5712 = vmul.f32 1.0, %v5711
      %v5713 = vrcp.pop %v5678
      %v5714 = vmul.f32 1.0, %v5713
      %v5715 = vrcp.pop %v5679
      %v5716 = vmul.f32 1.0, %v5715
      %v5717 = vrcp.pop %v5680
      %v5718 = vmul.f32 1.0, %v5717
      %v5719 = vrcp.pop %v5681
      %v5720 = vmul.f32 1.0, %v5719
      %v5721 = vrcp.pop %v5682
      %v5722 = vmul.f32 1.0, %v5721
      %v5723 = vrcp.pop %v5683
      %v5724 = vmul.f32 1.0, %v5723
      %v5725 = vrcp.pop %v5684
      %v5726 = vmul.f32 1.0, %v5725
      %v5727 = vrcp.pop %v5685
      %v5728 = vmul.f32 1.0, %v5727
      %v5729 = vrcp.pop %v5686
      %v5730 = vmul.f32 1.0, %v5729
      %v5731 = vrcp.pop %v5687
      %v5732 = vmul.f32 1.0, %v5731
      %v5733 = vrcp.pop %v5688
      %v5734 = vmul.f32 1.0, %v5733
      %v5735 = vrcp.pop %v5689
      %v5736 = vmul.f32 1.0, %v5735
      %v5737 = vrcp.pop %v5690
      %v5738 = vmul.f32 1.0, %v5737
      %v5739 = vrcp.pop %v5691
      %v5740 = vmul.f32 1.0, %v5739
      %v5741 = vrcp.pop %v5692
      %v5742 = vmul.f32 1.0, %v5741
      %v5743 = vrcp.pop %v5693
      %v5744 = vmul.f32 1.0, %v5743
      %v5745 = vrcp.pop %v5694
      %v5746 = vmul.f32 1.0, %v5745
      %v5747 = vrcp.pop %v5695
      %v5748 = vmul.f32 1.0, %v5747
      %v5749 = vrcp.pop %v5696
      %v5750 = vmul.f32 1.0, %v5749
      %v5751 = vrcp.pop %v5697
      %v5752 = vmul.f32 1.0, %v5751
      %v5753 = vrcp.pop %v5698
      %v5754 = vmul.f32 1.0, %v5753
      %v5755 = vrcp.pop %v5699
      %v5756 = vmul.f32 1.0, %v5755
      %v5757 = vrcp.pop %v5700
      %v5758 = vmul.f32 1.0, %v5757
      %v5759 = vrcp.pop %v5701
      %v5760 = vmul.f32 1.0, %v5759
      %v5761 = vrcp.pop %v5702
      %v5762 = vmul.f32 1.0, %v5761
      %v5763 = vrcp.pop %v5703
      %v5764 = vmul.f32 1.0, %v5763
      %v5765 = vrcp.pop %v5704
      %v5766 = vmul.f32 1.0, %v5765
      %v5767 = vrcp.pop %v5705
      %v5768 = vmul.f32 1.0, %v5767
      %v5769 = vrcp.pop %v5706
      %v5770 = vmul.f32 1.0, %v5769
      %v5771 = vlaneseq
      %v5772 = vshrl.u32 %v5771, 7
      %v5773 = vsub.s32 0, %v5772
      %v5774 = vrot.slane %v5442, %v5773
      %v5775 = vmul.f32 %v5708, %v5774
      %v5776 = vmul.f32 %v5710, %v5774
      %v5777 = vmul.f32 %v5712, %v5774
      %v5778 = vmul.f32 %v5714, %v5774
      %v5779 = vmul.f32 %v5716, %v5774
      %v5780 = vmul.f32 %v5718, %v5774
      %v5781 = vmul.f32 %v5720, %v5774
      %v5782 = vmul.f32 %v5722, %v5774
      %v5783 = vmul.f32 %v5724, %v5774
      %v5784 = vmul.f32 %v5726, %v5774
      %v5785 = vmul.f32 %v5728, %v5774
      %v5786 = vmul.f32 %v5730, %v5774
      %v5787 = vmul.f32 %v5732, %v5774
      %v5788 = vmul.f32 %v5734, %v5774
      %v5789 = vmul.f32 %v5736, %v5774
      %v5790 = vmul.f32 %v5738, %v5774
      %v5791 = vmul.f32 %v5740, %v5774
      %v5792 = vmul.f32 %v5742, %v5774
      %v5793 = vmul.f32 %v5744, %v5774
      %v5794 = vmul.f32 %v5746, %v5774
      %v5795 = vmul.f32 %v5748, %v5774
      %v5796 = vmul.f32 %v5750, %v5774
      %v5797 = vmul.f32 %v5752, %v5774
      %v5798 = vmul.f32 %v5754, %v5774
      %v5799 = vmul.f32 %v5756, %v5774
      %v5800 = vmul.f32 %v5758, %v5774
      %v5801 = vmul.f32 %v5760, %v5774
      %v5802 = vmul.f32 %v5762, %v5774
      %v5803 = vmul.f32 %v5764, %v5774
      %v5804 = vmul.f32 %v5766, %v5774
      %v5805 = vmul.f32 %v5768, %v5774
      %v5806 = vmul.f32 %v5770, %v5774
      %v5807 = vld [vmem:[%s10] sm:$0x1]
      %v5809 = vlaneseq
      %v5810 = vshrl.u32 %v5809, 7
      %v5811 = vsub.s32 0, %v5810
      %v5812 = vrot.slane %v5807, %v5811
      %v5814 = vadd.f32 %v5775, %v5812
      %v5815 = vadd.f32 %v5776, %v5812
      %v5816 = vadd.f32 %v5777, %v5812
      %v5817 = vadd.f32 %v5778, %v5812
      %v5818 = vadd.f32 %v5779, %v5812
      %v5819 = vadd.f32 %v5780, %v5812
      %v5820 = vadd.f32 %v5781, %v5812
      %v5821 = vadd.f32 %v5782, %v5812
      %v5822 = vadd.f32 %v5783, %v5812
      %v5823 = vadd.f32 %v5784, %v5812
      %v5824 = vadd.f32 %v5785, %v5812
      %v5825 = vadd.f32 %v5786, %v5812
      %v5826 = vadd.f32 %v5787, %v5812
      %v5827 = vadd.f32 %v5788, %v5812
      %v5828 = vadd.f32 %v5789, %v5812
      %v5829 = vadd.f32 %v5790, %v5812
      %v5830 = vadd.f32 %v5791, %v5812
      %v5831 = vadd.f32 %v5792, %v5812
      %v5832 = vadd.f32 %v5793, %v5812
      %v5833 = vadd.f32 %v5794, %v5812
      %v5834 = vadd.f32 %v5795, %v5812
      %v5835 = vadd.f32 %v5796, %v5812
      %v5836 = vadd.f32 %v5797, %v5812
      %v5837 = vadd.f32 %v5798, %v5812
      %v5838 = vadd.f32 %v5799, %v5812
      %v5839 = vadd.f32 %v5800, %v5812
      %v5840 = vadd.f32 %v5801, %v5812
      %v5841 = vadd.f32 %v5802, %v5812
      %v5842 = vadd.f32 %v5803, %v5812
      %v5843 = vadd.f32 %v5804, %v5812
      %v5844 = vadd.f32 %v5805, %v5812
      %v5845 = vadd.f32 %v5806, %v5812
      %v5846 = vmax.f32 %v5814, 0.0
      %v5847 = vmax.f32 %v5815, 0.0
      %v5848 = vmax.f32 %v5816, 0.0
      %v5849 = vmax.f32 %v5817, 0.0
      %v5850 = vmax.f32 %v5818, 0.0
      %v5851 = vmax.f32 %v5819, 0.0
      %v5852 = vmax.f32 %v5820, 0.0
      %v5853 = vmax.f32 %v5821, 0.0
      %v5854 = vmax.f32 %v5822, 0.0
      %v5855 = vmax.f32 %v5823, 0.0
      %v5856 = vmax.f32 %v5824, 0.0
      %v5857 = vmax.f32 %v5825, 0.0
      %v5858 = vmax.f32 %v5826, 0.0
      %v5859 = vmax.f32 %v5827, 0.0
      %v5860 = vmax.f32 %v5828, 0.0
      %v5861 = vmax.f32 %v5829, 0.0
      %v5862 = vmax.f32 %v5830, 0.0
      %v5863 = vmax.f32 %v5831, 0.0
      %v5864 = vmax.f32 %v5832, 0.0
      %v5865 = vmax.f32 %v5833, 0.0
      %v5866 = vmax.f32 %v5834, 0.0
      %v5867 = vmax.f32 %v5835, 0.0
      %v5868 = vmax.f32 %v5836, 0.0
      %v5869 = vmax.f32 %v5837, 0.0
      %v5870 = vmax.f32 %v5838, 0.0
      %v5871 = vmax.f32 %v5839, 0.0
      %v5872 = vmax.f32 %v5840, 0.0
      %v5873 = vmax.f32 %v5841, 0.0
      %v5874 = vmax.f32 %v5842, 0.0
      %v5875 = vmax.f32 %v5843, 0.0
      %v5876 = vmax.f32 %v5844, 0.0
      %v5877 = vmax.f32 %v5845, 0.0
      %v5878 = vmul.f32 %v5846, 0.2
      %v5879 = vmul.f32 %v5847, 0.2
      %v5880 = vmul.f32 %v5848, 0.2
      %v5881 = vmul.f32 %v5849, 0.2
      %v5882 = vmul.f32 %v5850, 0.2
      %v5883 = vmul.f32 %v5851, 0.2
      %v5884 = vmul.f32 %v5852, 0.2
      %v5885 = vmul.f32 %v5853, 0.2
      %v5886 = vmul.f32 %v5854, 0.2
      %v5887 = vmul.f32 %v5855, 0.2
      %v5888 = vmul.f32 %v5856, 0.2
      %v5889 = vmul.f32 %v5857, 0.2
      %v5890 = vmul.f32 %v5858, 0.2
      %v5891 = vmul.f32 %v5859, 0.2
      %v5892 = vmul.f32 %v5860, 0.2
      %v5893 = vmul.f32 %v5861, 0.2
      %v5894 = vmul.f32 %v5862, 0.2
      %v5895 = vmul.f32 %v5863, 0.2
      %v5896 = vmul.f32 %v5864, 0.2
      %v5897 = vmul.f32 %v5865, 0.2
      %v5898 = vmul.f32 %v5866, 0.2
      %v5899 = vmul.f32 %v5867, 0.2
      %v5900 = vmul.f32 %v5868, 0.2
      %v5901 = vmul.f32 %v5869, 0.2
      %v5902 = vmul.f32 %v5870, 0.2
      %v5903 = vmul.f32 %v5871, 0.2
      %v5904 = vmul.f32 %v5872, 0.2
      %v5905 = vmul.f32 %v5873, 0.2
      %v5906 = vmul.f32 %v5874, 0.2
      %v5907 = vmul.f32 %v5875, 0.2
      %v5908 = vmul.f32 %v5876, 0.2
      %v5909 = vmul.f32 %v5877, 0.2
      %v5910 = vadd.f32 %v5878, %v2332
      %v5911 = vadd.f32 %v5879, %v2333
      %v5912 = vadd.f32 %v5880, %v2334
      %v5913 = vadd.f32 %v5881, %v2335
      %v5914 = vadd.f32 %v5882, %v2336
      %v5915 = vadd.f32 %v5883, %v2337
      %v5916 = vadd.f32 %v5884, %v2338
      %v5917 = vadd.f32 %v5885, %v2339
      %v5918 = vadd.f32 %v5886, %v2340
      %v5919 = vadd.f32 %v5887, %v2341
      %v5920 = vadd.f32 %v5888, %v2342
      %v5921 = vadd.f32 %v5889, %v2343
      %v5922 = vadd.f32 %v5890, %v2344
      %v5923 = vadd.f32 %v5891, %v2345
      %v5924 = vadd.f32 %v5892, %v2346
      %v5925 = vadd.f32 %v5893, %v2347
      %v5926 = vadd.f32 %v5894, %v2348
      %v5927 = vadd.f32 %v5895, %v2349
      %v5928 = vadd.f32 %v5896, %v2350
      %v5929 = vadd.f32 %v5897, %v2351
      %v5930 = vadd.f32 %v5898, %v2352
      %v5931 = vadd.f32 %v5899, %v2353
      %v5932 = vadd.f32 %v5900, %v2354
      %v5933 = vadd.f32 %v5901, %v2355
      %v5934 = vadd.f32 %v5902, %v2356
      %v5935 = vadd.f32 %v5903, %v2357
      %v5936 = vadd.f32 %v5904, %v2358
      %v5937 = vadd.f32 %v5905, %v2359
      %v5938 = vadd.f32 %v5906, %v2360
      %v5939 = vadd.f32 %v5907, %v2361
      %v5940 = vadd.f32 %v5908, %v2362
      %v5941 = vadd.f32 %v5909, %v2363
      %5942 = vst.msk [vmem:[%s386] sm:$0xff] %vm1474, %v5910
      %5943 = vst.msk [vmem:[%s386 + $0x8] sm:$0xff] %vm1474, %v5911
      %5944 = vst.msk [vmem:[%s386 + $0x10] sm:$0xff] %vm1474, %v5912
      %5945 = vst.msk [vmem:[%s386 + $0x18] sm:$0xff] %vm1474, %v5913
      %5946 = vst.msk [vmem:[%s386 + $0x20] sm:$0xff] %vm1474, %v5914
      %5947 = vst.msk [vmem:[%s386 + $0x28] sm:$0xff] %vm1474, %v5915
      %5948 = vst.msk [vmem:[%s386 + $0x30] sm:$0xff] %vm1474, %v5916
      %5949 = vst.msk [vmem:[%s386 + $0x38] sm:$0xff] %vm1474, %v5917
      %5950 = vst.msk [vmem:[%s386 + $0x40] sm:$0xff] %vm1474, %v5918
      %5951 = vst.msk [vmem:[%s386 + $0x48] sm:$0xff] %vm1474, %v5919
      %5952 = vst.msk [vmem:[%s386 + $0x50] sm:$0xff] %vm1474, %v5920
      %5953 = vst.msk [vmem:[%s386 + $0x58] sm:$0xff] %vm1474, %v5921
      %5954 = vst.msk [vmem:[%s386 + $0x60] sm:$0xff] %vm1474, %v5922
      %5955 = vst.msk [vmem:[%s386 + $0x68] sm:$0xff] %vm1474, %v5923
      %5956 = vst.msk [vmem:[%s386 + $0x70] sm:$0xff] %vm1474, %v5924
      %5957 = vst.msk [vmem:[%s386 + $0x78] sm:$0xff] %vm1474, %v5925
      %5958 = vst.msk [vmem:[%s386 + $0x80] sm:$0xff] %vm1474, %v5926
      %5959 = vst.msk [vmem:[%s386 + $0x88] sm:$0xff] %vm1474, %v5927
      %5960 = vst.msk [vmem:[%s386 + $0x90] sm:$0xff] %vm1474, %v5928
      %5961 = vst.msk [vmem:[%s386 + $0x98] sm:$0xff] %vm1474, %v5929
      %5962 = vst.msk [vmem:[%s386 + $0xa0] sm:$0xff] %vm1474, %v5930
      %5963 = vst.msk [vmem:[%s386 + $0xa8] sm:$0xff] %vm1474, %v5931
      %5964 = vst.msk [vmem:[%s386 + $0xb0] sm:$0xff] %vm1474, %v5932
      %5965 = vst.msk [vmem:[%s386 + $0xb8] sm:$0xff] %vm1474, %v5933
      %5966 = vst.msk [vmem:[%s386 + $0xc0] sm:$0xff] %vm1474, %v5934
      %5967 = vst.msk [vmem:[%s386 + $0xc8] sm:$0xff] %vm1474, %v5935
      %5968 = vst.msk [vmem:[%s386 + $0xd0] sm:$0xff] %vm1474, %v5936
      %5969 = vst.msk [vmem:[%s386 + $0xd8] sm:$0xff] %vm1474, %v5937
      %5970 = vst.msk [vmem:[%s386 + $0xe0] sm:$0xff] %vm1474, %v5938
      %5971 = vst.msk [vmem:[%s386 + $0xe8] sm:$0xff] %vm1474, %v5939
      %5972 = vst.msk [vmem:[%s386 + $0xf0] sm:$0xff] %vm1474, %v5940
      %5973 = vst.msk [vmem:[%s386 + $0xf8] sm:$0xff] %vm1474, %v5941
      %p5974 = scmp.lt.s32.totalorder %s22, 1
      %s5975 = scalar_select %p5974, %s22, 1
      %s5976 = smul.addr %s5975, 32
      %s5977 = smul.addr %s5976, 8
      %s5978 = scalar_lea.vmem %s11, %s5977
      // Predicated region
      $region65: #{dar_forward.3} parent=63 // pred_check
        %p5979 = pneg %p276
      $region66: #{dar_forward.3} parent=63 // pred_check_branch
        %5981 = sbr.rel (%p5979) target = $region68
      $region67: #{dar_forward.3} parent=63 // pred_region
        _
      $region68: #{dar_forward.3} parent=63 // pred_fallthru
        _
    $region64: #{dar_forward.3} parent=5 // pred_fallthru
      _
    %p5982 = scmp.le.s32.totalorder 2, %s17
    // Predicated region
    $region69: #{dar_forward.3} parent=5 // pred_check
      %p5983 = pneg %p5982
    $region70: #{dar_forward.3} parent=5 // pred_check_branch
      %5985 = sbr.rel (%p5983) target = $region72
    $region71: #{dar_forward.3} parent=5 // pred_region
      %s5986 = ssub.s32 %s17, 2
      // Predicated region
      $region73: #{dar_forward.3} parent=71 // pred_check
        %p5987 = pneg %p282
      $region74: #{dar_forward.3} parent=71 // pred_check_branch
        %5989 = sbr.rel (%p5987) target = $region76
      $region75: #{dar_forward.3} parent=71 // pred_region
        %p5990 = scmp.lt.s32.totalorder %s23, 1
        %s5991 = scalar_select %p5990, %s23, 1
        %s5992 = smul.addr %s5991, 32
        %s5993 = smul.addr %s5992, 8
        %s5994 = scalar_lea.vmem %s11, %s5993
      $region76: #{dar_forward.3} parent=71 // pred_fallthru
        _
    $region72: #{dar_forward.3} parent=5 // pred_fallthru
      _
  $region6: #{dar_forward.3} parent=0 // loop_footer
    %s21 = sadd.s32 1, %s17
  $region7: #{dar_forward.3} parent=0 // loop_footer_branch
    %16 = sbr.rel target = $region3
  $region8: #{dar_forward.3} parent=0 // loop_exit
    _

</llo_original>
